<compile_context>
chip_gen: v7x
topology: tpu7x:2x2x1
jax: 0.10.0
libtpu: 0.0.40
codegen_flags: <defaults>
</compile_context>

<pallas_src>
import functools

import jax
import jax.numpy as jnp
from jax.experimental import pallas as pl
from jax.experimental.pallas import tpu as pltpu

# ----- scaled-down ViT config (ViT-base is D=768, depth=12, heads=12) --------
IMG = 32
PATCH = 16
IN_CH = 3
EMBED = 32
DEPTH = 2
HEADS = 4
HEAD_DIM = EMBED // HEADS
MLP_HID = EMBED * 4
NUM_CLASSES = 8
N_PATCH = (IMG // PATCH) ** 2
SEQ = N_PATCH + 1
PDIM = IN_CH * PATCH * PATCH
LN_EPS = 1e-6  # timm ViT uses LayerNorm(eps=1e-6)

# Fixed ordering of the weight inputs to the fused kernel.
_PARAM_NAMES = (
    "patch_w", "cls_pos", "pos_rest",
    "ln1_g", "ln1_b",
    "q_w", "q_b", "k_w", "k_b", "v_w", "v_b",
    "proj_w", "proj_b",
    "ln2_g", "ln2_b",
    "fc1_w", "fc1_b", "fc2_w", "fc2_b",
    "norm_g", "norm_b", "head_w", "head_b",
)


# ----------------------------- in-kernel math helpers -------------------------
def _erf(x):
    # Abramowitz & Stegun 7.1.26 (max abs err ~1.5e-7); stands in for the exact
    # erf of torch.nn.GELU (lax.erf may not lower inside Mosaic).
    p = 0.3275911
    a1, a2, a3, a4, a5 = (0.254829592, -0.284496736, 1.421413741,
                          -1.453152027, 1.061405429)
    ax = jnp.abs(x)
    t = 1.0 / (1.0 + p * ax)
    poly = ((((a5 * t + a4) * t + a3) * t + a2) * t + a1) * t
    y = 1.0 - poly * jnp.exp(-ax * ax)
    return jnp.where(x >= 0, y, -y)


def _gelu_exact(x):
    return 0.5 * x * (1.0 + _erf(x * 0.7071067811865476))


def _layernorm(x, g, b):
    mean = jnp.mean(x, axis=-1, keepdims=True)
    xc = x - mean
    var = jnp.mean(xc * xc, axis=-1, keepdims=True)
    return xc * jax.lax.rsqrt(var + LN_EPS) * g + b


# ----------------------------- fused ViT kernel -------------------------------
def _vit_kernel(*refs, batch):
    """One grid step == full ViT forward for one image's batch of `batch` samples.

    refs = (patches_ref, *weight_refs, out_ref). All tensors are tiny (< a few
    vregs), so everything lives in VMEM/vregs for the whole network.
    """
    patch_ref = refs[0]
    out_ref = refs[-1]
    w = dict(zip(_PARAM_NAMES, refs[1:-1]))

    # ---- patch embedding: (B*Np, PDIM) @ (PDIM, D); conv bias folded in pos --
    patches = patch_ref[0]                                          # (B*Np, PDIM)
    tok = jnp.dot(patches, w["patch_w"][...],
                  preferred_element_type=jnp.float32)               # (B*Np, D)

    # ---- prepend cls token and add positional embedding (single batched op) --
    tok = tok.reshape(batch, N_PATCH, EMBED) + w["pos_rest"][...]   # (B, Np, D)
    cls = jnp.broadcast_to(w["cls_pos"][...].reshape(1, 1, EMBED),
                           (batch, 1, EMBED))                       # cls + pos[0]
    h = jnp.concatenate([cls, tok], axis=1).reshape(batch * SEQ, EMBED)

    scale = HEAD_DIM ** -0.5

    # ---- transformer blocks (all resident in VMEM/vregs) --------------------
    for d in range(DEPTH):
        # pre-LN multi-head attention
        n1 = _layernorm(h, w["ln1_g"][d], w["ln1_b"][d])
        q = (jnp.dot(n1, w["q_w"][d], preferred_element_type=jnp.float32)
             + w["q_b"][d]) * scale                                 # scale folded into q
        k = jnp.dot(n1, w["k_w"][d], preferred_element_type=jnp.float32) + w["k_b"][d]
        v = jnp.dot(n1, w["v_w"][d], preferred_element_type=jnp.float32) + w["v_b"][d]

        q3 = q.reshape(batch, SEQ, EMBED)
        k3 = k.reshape(batch, SEQ, EMBED)
        v3 = v.reshape(batch, SEQ, EMBED)

        # per head, batched over all samples (batched 3-D einsums on the MXU)
        head_outs = []
        for hh in range(HEADS):
            c0 = hh * HEAD_DIM
            qh = q3[:, :, c0:c0 + HEAD_DIM]                         # (B, S, Dh)
            kh = k3[:, :, c0:c0 + HEAD_DIM]
            vh = v3[:, :, c0:c0 + HEAD_DIM]
            s = jnp.einsum('bqd,bkd->bqk', qh, kh,
                           preferred_element_type=jnp.float32)      # (B, S, S)
            s = s - jnp.max(s, axis=-1, keepdims=True)
            p = jnp.exp(s)
            p = p * pl.reciprocal(jnp.sum(p, axis=-1, keepdims=True), approx=True)
            head_outs.append(jnp.einsum('bqk,bkd->bqd', p, vh,
                                        preferred_element_type=jnp.float32))
        attn = jnp.concatenate(head_outs, axis=-1).reshape(batch * SEQ, EMBED)

        proj = jnp.dot(attn, w["proj_w"][d],
                       preferred_element_type=jnp.float32) + w["proj_b"][d]
        h = h + proj

        # pre-LN MLP with exact-erf GELU (kept in f32: v5e has no bf16 VPU/EUP)
        n2 = _layernorm(h, w["ln2_g"][d], w["ln2_b"][d])
        f1 = _gelu_exact(jnp.dot(n2, w["fc1_w"][d],
                                 preferred_element_type=jnp.float32) + w["fc1_b"][d])
        f2 = jnp.dot(f1, w["fc2_w"][d],
                     preferred_element_type=jnp.float32) + w["fc2_b"][d]
        h = h + f2

    # ---- final LayerNorm + head (LN is per-token, so only cls rows needed) --
    cls_rows = h.reshape(batch, SEQ, EMBED)[:, 0, :]                # (B, D)
    cls_n = _layernorm(cls_rows, w["norm_g"][...], w["norm_b"][...])
    logits = jnp.dot(cls_n, w["head_w"][...],
                     preferred_element_type=jnp.float32) + w["head_b"][...]
    out_ref[0] = logits.astype(out_ref.dtype)                       # (B, NUM_CLASSES)


def _full_spec(shape):
    """Whole-array block, constant index map -> weight stays VMEM-resident."""
    ndim = len(shape)
    return pl.BlockSpec(shape, lambda g, _nd=ndim: (0,) * _nd)


def _vit_pallas(patches2, params, batch):
    """patches2: (2, batch*N_PATCH, PDIM) -> features (2, batch, NUM_CLASSES)."""
    weights = [params[name] for name in _PARAM_NAMES]
    in_specs = [pl.BlockSpec((1, batch * N_PATCH, PDIM), lambda g: (g, 0, 0))]
    in_specs += [_full_spec(tuple(arr.shape)) for arr in weights]
    return pl.pallas_call(
        functools.partial(_vit_kernel, batch=batch),
        out_shape=jax.ShapeDtypeStruct((2, batch, NUM_CLASSES), jnp.float32),
        grid=(2,),                                   # one step per image (x1 / x2)
        in_specs=in_specs,
        out_specs=pl.BlockSpec((1, batch, NUM_CLASSES), lambda g: (g, 0, 0)),
        compiler_params=pltpu.CompilerParams(
            dimension_semantics=("parallel",)),      # shards images across v7x's 2 TCs
    )(patches2, *weights)


# ----------------------------- model orchestration ---------------------------
def extract_patches(x):
    # NCHW -> (N, num_patches, C*ph*pw), row-major over the patch grid
    # (exactly the Conv2d(stride=patch) + flatten(2).transpose(1,2) of PatchEmbed).
    N, C, H, W = x.shape
    Hp, Wp = H // PATCH, W // PATCH
    x = x.reshape(N, C, Hp, PATCH, Wp, PATCH)
    x = x.transpose(0, 2, 4, 1, 3, 5)
    return x.reshape(N, Hp * Wp, C * PATCH * PATCH)


@jax.jit
def _features(params, x1, x2):
    B = x1.shape[0]
    x = jnp.concatenate([x1, x2], axis=0)             # (2B, C, H, W): batch both images
    patches = extract_patches(x)                      # (2B, Np, PDIM)
    patches = patches.reshape(2, B * N_PATCH, PDIM)   # group by image for the grid
    feats = _vit_pallas(patches, params, B)           # (2, B, NUM_CLASSES)
    return jnp.concatenate([feats[0], feats[1]], axis=1)  # torch.cat((x1, x2), 1)


def mae_model_nolevel_forward(params, x1, x2, len_list):
    x = _features(params, x1, x2)
    # torch.split(x, len_list, 0) + sort by descending chunk size (stable)
    pieces, off = [], 0
    for n in len_list:
        pieces.append(x[off:off + n])
        off += n
    pieces.sort(key=lambda t: -t.shape[0])
    return pieces


# ----------------------------- deterministic params --------------------------
def init_params(key):
    keys = iter(jax.random.split(key, 64))

    def w(shape, std=0.02):
        return std * jax.random.normal(next(keys), shape, jnp.float32)

    cls_token = w((1, EMBED))
    pos_embed = w((SEQ, EMBED))
    qkv_w = w((DEPTH, EMBED, 3 * EMBED))   # split at init -> no interleave transpose
    patch_b = jnp.zeros((1, EMBED), jnp.float32)   # conv bias; folded into pos_rest

    params = dict(
        patch_w=w((PDIM, EMBED)),
        # cls token + its positional embedding, folded at init
        cls_pos=cls_token + pos_embed[0:1],
        # patch positional rows + patch-embed bias, folded at init
        pos_rest=pos_embed[1:] + patch_b,              # (N_PATCH, EMBED)
        ln1_g=jnp.ones((DEPTH, 1, EMBED), jnp.float32),
        ln1_b=jnp.zeros((DEPTH, 1, EMBED), jnp.float32),
        q_w=qkv_w[:, :, 0:EMBED],
        k_w=qkv_w[:, :, EMBED:2 * EMBED],
        v_w=qkv_w[:, :, 2 * EMBED:3 * EMBED],
        q_b=jnp.zeros((DEPTH, 1, EMBED), jnp.float32),
        k_b=jnp.zeros((DEPTH, 1, EMBED), jnp.float32),
        v_b=jnp.zeros((DEPTH, 1, EMBED), jnp.float32),
        proj_w=w((DEPTH, EMBED, EMBED)),
        proj_b=jnp.zeros((DEPTH, 1, EMBED), jnp.float32),
        ln2_g=jnp.ones((DEPTH, 1, EMBED), jnp.float32),
        ln2_b=jnp.zeros((DEPTH, 1, EMBED), jnp.float32),
        fc1_w=w((DEPTH, EMBED, MLP_HID)),
        fc1_b=jnp.zeros((DEPTH, 1, MLP_HID), jnp.float32),
        fc2_w=w((DEPTH, MLP_HID, EMBED)),
        fc2_b=jnp.zeros((DEPTH, 1, EMBED), jnp.float32),
        norm_g=jnp.ones((1, EMBED), jnp.float32),
        norm_b=jnp.zeros((1, EMBED), jnp.float32),
        head_w=w((EMBED, NUM_CLASSES), std=0.01),      # trunc_normal_(std=0.01) stand-in
        head_b=jnp.zeros((1, NUM_CLASSES), jnp.float32),
    )
    return params


if __name__ == "__main__":
    key = jax.random.PRNGKey(0)
    pkey, k1, k2 = jax.random.split(key, 3)
    params = init_params(pkey)

    B = 3
    x1 = jax.random.normal(k1, (B, IN_CH, IMG, IMG), jnp.float32)
    x2 = jax.random.normal(k2, (B, IN_CH, IMG, IMG), jnp.float32)
    len_list = [1, 2]

    out = mae_model_nolevel_forward(params, x1, x2, len_list)
    for t in out:
        jax.block_until_ready(t)

    # after sort by descending batch size: [(2, 2*NUM_CLASSES), (1, 2*NUM_CLASSES)]
    assert out[0].shape == (2, 2 * NUM_CLASSES)
    assert out[1].shape == (1, 2 * NUM_CLASSES)
    assert all(t.dtype == jnp.float32 for t in out)
    print("KERNEL_OK")
</pallas_src>

<mosaic_0001>
module attributes {stable_mosaic.version = 11 : i64} {
  func.func @_vit_kernel(%arg0: i32, %arg1: memref<1x12x768xf32, #tpu.memory_space<vmem>>, %arg2: memref<768x32xf32, #tpu.memory_space<vmem>>, %arg3: memref<1x32xf32, #tpu.memory_space<vmem>>, %arg4: memref<4x32xf32, #tpu.memory_space<vmem>>, %arg5: memref<2x1x32xf32, #tpu.memory_space<vmem>>, %arg6: memref<2x1x32xf32, #tpu.memory_space<vmem>>, %arg7: memref<2x32x32xf32, #tpu.memory_space<vmem>>, %arg8: memref<2x1x32xf32, #tpu.memory_space<vmem>>, %arg9: memref<2x32x32xf32, #tpu.memory_space<vmem>>, %arg10: memref<2x1x32xf32, #tpu.memory_space<vmem>>, %arg11: memref<2x32x32xf32, #tpu.memory_space<vmem>>, %arg12: memref<2x1x32xf32, #tpu.memory_space<vmem>>, %arg13: memref<2x32x32xf32, #tpu.memory_space<vmem>>, %arg14: memref<2x1x32xf32, #tpu.memory_space<vmem>>, %arg15: memref<2x1x32xf32, #tpu.memory_space<vmem>>, %arg16: memref<2x1x32xf32, #tpu.memory_space<vmem>>, %arg17: memref<2x32x128xf32, #tpu.memory_space<vmem>>, %arg18: memref<2x1x128xf32, #tpu.memory_space<vmem>>, %arg19: memref<2x128x32xf32, #tpu.memory_space<vmem>>, %arg20: memref<2x1x32xf32, #tpu.memory_space<vmem>>, %arg21: memref<1x32xf32, #tpu.memory_space<vmem>>, %arg22: memref<1x32xf32, #tpu.memory_space<vmem>>, %arg23: memref<32x8xf32, #tpu.memory_space<vmem>>, %arg24: memref<1x8xf32, #tpu.memory_space<vmem>>, %arg25: memref<1x3x8xf32, #tpu.memory_space<vmem>>) attributes {dimension_semantics = [#tpu.dimension_semantics<parallel>], iteration_bounds = array<i64: 2>, scalar_prefetch = 0 : i64, scratch_operands = 0 : i64, tpu.core_type = #tpu.core_type<tc>, window_params = [{transform_indices = @transform_0, window_bounds = array<i64: 1, 12, 768>}, {pipeline_mode = #tpu.pipeline_mode<synchronous>, transform_indices = @transform_1, window_bounds = array<i64: 768, 32>}, {pipeline_mode = #tpu.pipeline_mode<synchronous>, transform_indices = @transform_2, window_bounds = array<i64: 1, 32>}, {pipeline_mode = #tpu.pipeline_mode<synchronous>, transform_indices = @transform_3, window_bounds = array<i64: 4, 32>}, {pipeline_mode = #tpu.pipeline_mode<synchronous>, transform_indices = @transform_4, window_bounds = array<i64: 2, 1, 32>}, {pipeline_mode = #tpu.pipeline_mode<synchronous>, transform_indices = @transform_5, window_bounds = array<i64: 2, 1, 32>}, {pipeline_mode = #tpu.pipeline_mode<synchronous>, transform_indices = @transform_6, window_bounds = array<i64: 2, 32, 32>}, {pipeline_mode = #tpu.pipeline_mode<synchronous>, transform_indices = @transform_7, window_bounds = array<i64: 2, 1, 32>}, {pipeline_mode = #tpu.pipeline_mode<synchronous>, transform_indices = @transform_8, window_bounds = array<i64: 2, 32, 32>}, {pipeline_mode = #tpu.pipeline_mode<synchronous>, transform_indices = @transform_9, window_bounds = array<i64: 2, 1, 32>}, {pipeline_mode = #tpu.pipeline_mode<synchronous>, transform_indices = @transform_10, window_bounds = array<i64: 2, 32, 32>}, {pipeline_mode = #tpu.pipeline_mode<synchronous>, transform_indices = @transform_11, window_bounds = array<i64: 2, 1, 32>}, {pipeline_mode = #tpu.pipeline_mode<synchronous>, transform_indices = @transform_12, window_bounds = array<i64: 2, 32, 32>}, {pipeline_mode = #tpu.pipeline_mode<synchronous>, transform_indices = @transform_13, window_bounds = array<i64: 2, 1, 32>}, {pipeline_mode = #tpu.pipeline_mode<synchronous>, transform_indices = @transform_14, window_bounds = array<i64: 2, 1, 32>}, {pipeline_mode = #tpu.pipeline_mode<synchronous>, transform_indices = @transform_15, window_bounds = array<i64: 2, 1, 32>}, {pipeline_mode = #tpu.pipeline_mode<synchronous>, transform_indices = @transform_16, window_bounds = array<i64: 2, 32, 128>}, {pipeline_mode = #tpu.pipeline_mode<synchronous>, transform_indices = @transform_17, window_bounds = array<i64: 2, 1, 128>}, {pipeline_mode = #tpu.pipeline_mode<synchronous>, transform_indices = @transform_18, window_bounds = array<i64: 2, 128, 32>}, {pipeline_mode = #tpu.pipeline_mode<synchronous>, transform_indices = @transform_19, window_bounds = array<i64: 2, 1, 32>}, {pipeline_mode = #tpu.pipeline_mode<synchronous>, transform_indices = @transform_20, window_bounds = array<i64: 1, 32>}, {pipeline_mode = #tpu.pipeline_mode<synchronous>, transform_indices = @transform_21, window_bounds = array<i64: 1, 32>}, {pipeline_mode = #tpu.pipeline_mode<synchronous>, transform_indices = @transform_22, window_bounds = array<i64: 32, 8>}, {pipeline_mode = #tpu.pipeline_mode<synchronous>, transform_indices = @transform_23, window_bounds = array<i64: 1, 8>}, {transform_indices = @transform_24, window_bounds = array<i64: 1, 3, 8>}]} {
    %c0 = arith.constant 0 : index
    %c0_0 = arith.constant 0 : index
    %c0_1 = arith.constant 0 : index
    %0 = vector.load %arg1[%c0, %c0_0, %c0_1] : memref<1x12x768xf32, #tpu.memory_space<vmem>>, vector<1x12x768xf32>
    %1 = vector.shape_cast %0 : vector<1x12x768xf32> to vector<12x768xf32>
    %c0_2 = arith.constant 0 : index
    %c0_3 = arith.constant 0 : index
    %2 = vector.load %arg2[%c0_2, %c0_3] : memref<768x32xf32, #tpu.memory_space<vmem>>, vector<768x32xf32>
    %cst = arith.constant dense<0.000000e+00> : vector<12x32xf32>
    %3 = tpu.matmul %1, %2, %cst {dimension_numbers = #tpu.dot_dimension_numbers<[1], [0], [0], [1], [0, 0, 1, 1], [], []>} : vector<12x768xf32>, vector<768x32xf32>, vector<12x32xf32> -> vector<12x32xf32>
    %4 = vector.shape_cast %3 : vector<12x32xf32> to vector<3x4x32xf32>
    %c0_4 = arith.constant 0 : index
    %c0_5 = arith.constant 0 : index
    %5 = vector.load %arg4[%c0_4, %c0_5] : memref<4x32xf32, #tpu.memory_space<vmem>>, vector<4x32xf32>
    %6 = vector.shape_cast %5 : vector<4x32xf32> to vector<1x4x32xf32>
    %7 = vector.broadcast %6 : vector<1x4x32xf32> to vector<3x4x32xf32>
    %8 = arith.addf %4, %7 : vector<3x4x32xf32>
    %c0_6 = arith.constant 0 : index
    %c0_7 = arith.constant 0 : index
    %9 = vector.load %arg3[%c0_6, %c0_7] : memref<1x32xf32, #tpu.memory_space<vmem>>, vector<1x32xf32>
    %10 = vector.shape_cast %9 : vector<1x32xf32> to vector<1x1x32xf32>
    %11 = vector.shape_cast %10 : vector<1x1x32xf32> to vector<1x1x32xf32>
    %12 = vector.broadcast %11 : vector<1x1x32xf32> to vector<3x1x32xf32>
    %13 = tpu.concatenate %12, %8 in 1 : vector<3x1x32xf32>, vector<3x4x32xf32> -> vector<3x5x32xf32>
    %14 = vector.shape_cast %13 : vector<3x5x32xf32> to vector<15x32xf32>
    %c0_8 = arith.constant 0 : index
    %c0_9 = arith.constant 0 : index
    %c0_10 = arith.constant 0 : index
    %15 = vector.load %arg5[%c0_8, %c0_9, %c0_10] : memref<2x1x32xf32, #tpu.memory_space<vmem>>, vector<1x1x32xf32>
    %16 = vector.shape_cast %15 : vector<1x1x32xf32> to vector<1x32xf32>
    %c0_11 = arith.constant 0 : index
    %c0_12 = arith.constant 0 : index
    %c0_13 = arith.constant 0 : index
    %17 = vector.load %arg6[%c0_11, %c0_12, %c0_13] : memref<2x1x32xf32, #tpu.memory_space<vmem>>, vector<1x1x32xf32>
    %18 = vector.shape_cast %17 : vector<1x1x32xf32> to vector<1x32xf32>
    %cst_14 = arith.constant dense<0.000000e+00> : vector<15xf32>
    %19 = vector.multi_reduction <add>, %14, %cst_14 [1] : vector<15x32xf32> to vector<15xf32>
    %20 = vector.shape_cast %19 : vector<15xf32> to vector<15x1xf32>
    %cst_15 = arith.constant 3.200000e+01 : f32
    %21 = vector.broadcast %cst_15 : f32 to vector<15x1xf32>
    %22 = arith.divf %20, %21 : vector<15x1xf32>
    %23 = vector.broadcast %22 : vector<15x1xf32> to vector<15x32xf32>
    %24 = arith.subf %14, %23 : vector<15x32xf32>
    %25 = arith.mulf %24, %24 : vector<15x32xf32>
    %cst_16 = arith.constant dense<0.000000e+00> : vector<15xf32>
    %26 = vector.multi_reduction <add>, %25, %cst_16 [1] : vector<15x32xf32> to vector<15xf32>
    %27 = vector.shape_cast %26 : vector<15xf32> to vector<15x1xf32>
    %cst_17 = arith.constant 3.200000e+01 : f32
    %28 = vector.broadcast %cst_17 : f32 to vector<15x1xf32>
    %29 = arith.divf %27, %28 : vector<15x1xf32>
    %cst_18 = arith.constant 9.99999997E-7 : f32
    %30 = vector.broadcast %cst_18 : f32 to vector<15x1xf32>
    %31 = arith.addf %29, %30 : vector<15x1xf32>
    %32 = math.rsqrt %31 : vector<15x1xf32>
    %33 = vector.broadcast %32 : vector<15x1xf32> to vector<15x32xf32>
    %34 = arith.mulf %24, %33 : vector<15x32xf32>
    %35 = vector.broadcast %16 : vector<1x32xf32> to vector<15x32xf32>
    %36 = arith.mulf %34, %35 : vector<15x32xf32>
    %37 = vector.broadcast %18 : vector<1x32xf32> to vector<15x32xf32>
    %38 = arith.addf %36, %37 : vector<15x32xf32>
    %c0_19 = arith.constant 0 : index
    %c0_20 = arith.constant 0 : index
    %c0_21 = arith.constant 0 : index
    %39 = vector.load %arg7[%c0_19, %c0_20, %c0_21] : memref<2x32x32xf32, #tpu.memory_space<vmem>>, vector<1x32x32xf32>
    %40 = vector.shape_cast %39 : vector<1x32x32xf32> to vector<32x32xf32>
    %cst_22 = arith.constant dense<0.000000e+00> : vector<15x32xf32>
    %41 = tpu.matmul %38, %40, %cst_22 {dimension_numbers = #tpu.dot_dimension_numbers<[1], [0], [0], [1], [0, 0, 1, 1], [], []>} : vector<15x32xf32>, vector<32x32xf32>, vector<15x32xf32> -> vector<15x32xf32>
    %c0_23 = arith.constant 0 : index
    %c0_24 = arith.constant 0 : index
    %c0_25 = arith.constant 0 : index
    %42 = vector.load %arg8[%c0_23, %c0_24, %c0_25] : memref<2x1x32xf32, #tpu.memory_space<vmem>>, vector<1x1x32xf32>
    %43 = vector.shape_cast %42 : vector<1x1x32xf32> to vector<1x32xf32>
    %44 = vector.broadcast %43 : vector<1x32xf32> to vector<15x32xf32>
    %45 = arith.addf %41, %44 : vector<15x32xf32>
    %cst_26 = arith.constant 0.353553385 : f32
    %46 = vector.broadcast %cst_26 : f32 to vector<15x32xf32>
    %47 = arith.mulf %45, %46 : vector<15x32xf32>
    %c0_27 = arith.constant 0 : index
    %c0_28 = arith.constant 0 : index
    %c0_29 = arith.constant 0 : index
    %48 = vector.load %arg9[%c0_27, %c0_28, %c0_29] : memref<2x32x32xf32, #tpu.memory_space<vmem>>, vector<1x32x32xf32>
    %49 = vector.shape_cast %48 : vector<1x32x32xf32> to vector<32x32xf32>
    %cst_30 = arith.constant dense<0.000000e+00> : vector<15x32xf32>
    %50 = tpu.matmul %38, %49, %cst_30 {dimension_numbers = #tpu.dot_dimension_numbers<[1], [0], [0], [1], [0, 0, 1, 1], [], []>} : vector<15x32xf32>, vector<32x32xf32>, vector<15x32xf32> -> vector<15x32xf32>
    %c0_31 = arith.constant 0 : index
    %c0_32 = arith.constant 0 : index
    %c0_33 = arith.constant 0 : index
    %51 = vector.load %arg10[%c0_31, %c0_32, %c0_33] : memref<2x1x32xf32, #tpu.memory_space<vmem>>, vector<1x1x32xf32>
    %52 = vector.shape_cast %51 : vector<1x1x32xf32> to vector<1x32xf32>
    %53 = vector.broadcast %52 : vector<1x32xf32> to vector<15x32xf32>
    %54 = arith.addf %50, %53 : vector<15x32xf32>
    %c0_34 = arith.constant 0 : index
    %c0_35 = arith.constant 0 : index
    %c0_36 = arith.constant 0 : index
    %55 = vector.load %arg11[%c0_34, %c0_35, %c0_36] : memref<2x32x32xf32, #tpu.memory_space<vmem>>, vector<1x32x32xf32>
    %56 = vector.shape_cast %55 : vector<1x32x32xf32> to vector<32x32xf32>
    %cst_37 = arith.constant dense<0.000000e+00> : vector<15x32xf32>
    %57 = tpu.matmul %38, %56, %cst_37 {dimension_numbers = #tpu.dot_dimension_numbers<[1], [0], [0], [1], [0, 0, 1, 1], [], []>} : vector<15x32xf32>, vector<32x32xf32>, vector<15x32xf32> -> vector<15x32xf32>
    %c0_38 = arith.constant 0 : index
    %c0_39 = arith.constant 0 : index
    %c0_40 = arith.constant 0 : index
    %58 = vector.load %arg12[%c0_38, %c0_39, %c0_40] : memref<2x1x32xf32, #tpu.memory_space<vmem>>, vector<1x1x32xf32>
    %59 = vector.shape_cast %58 : vector<1x1x32xf32> to vector<1x32xf32>
    %60 = vector.broadcast %59 : vector<1x32xf32> to vector<15x32xf32>
    %61 = arith.addf %57, %60 : vector<15x32xf32>
    %62 = vector.shape_cast %47 : vector<15x32xf32> to vector<3x5x32xf32>
    %63 = vector.shape_cast %54 : vector<15x32xf32> to vector<3x5x32xf32>
    %64 = vector.shape_cast %61 : vector<15x32xf32> to vector<3x5x32xf32>
    %65 = vector.extract_strided_slice %62 {offsets = [0, 0, 0], sizes = [3, 5, 8], strides = [1, 1, 1]} : vector<3x5x32xf32> to vector<3x5x8xf32>
    %66 = vector.extract_strided_slice %63 {offsets = [0, 0, 0], sizes = [3, 5, 8], strides = [1, 1, 1]} : vector<3x5x32xf32> to vector<3x5x8xf32>
    %67 = vector.extract_strided_slice %64 {offsets = [0, 0, 0], sizes = [3, 5, 8], strides = [1, 1, 1]} : vector<3x5x32xf32> to vector<3x5x8xf32>
    "tpu.trace_start"() <{level = 10 : i32, message = "bqd,bkd->bqk"}> : () -> ()
    %cst_41 = arith.constant dense<0.000000e+00> : vector<3x5x5xf32>
    %68 = tpu.matmul %65, %66, %cst_41 {dimension_numbers = #tpu.dot_dimension_numbers<[2], [2], [1], [1], [0, 0, 0, 1, 1, 1], [0], [0]>} : vector<3x5x8xf32>, vector<3x5x8xf32>, vector<3x5x5xf32> -> vector<3x5x5xf32>
    "tpu.trace_stop"() : () -> ()
    %cst_42 = arith.constant dense<0xFF800000> : vector<3x5xf32>
    %69 = vector.multi_reduction <maximumf>, %68, %cst_42 [2] : vector<3x5x5xf32> to vector<3x5xf32>
    %70 = vector.shape_cast %69 : vector<3x5xf32> to vector<3x5x1xf32>
    %71 = vector.broadcast %70 : vector<3x5x1xf32> to vector<3x5x5xf32>
    %72 = arith.subf %68, %71 : vector<3x5x5xf32>
    %73 = math.exp %72 : vector<3x5x5xf32>
    %cst_43 = arith.constant dense<0.000000e+00> : vector<3x5xf32>
    %74 = vector.multi_reduction <add>, %73, %cst_43 [2] : vector<3x5x5xf32> to vector<3x5xf32>
    %75 = vector.shape_cast %74 : vector<3x5xf32> to vector<3x5x1xf32>
    %76 = tpu.reciprocal %75 {approx = true} : vector<3x5x1xf32> -> vector<3x5x1xf32>
    %77 = vector.broadcast %76 : vector<3x5x1xf32> to vector<3x5x5xf32>
    %78 = arith.mulf %73, %77 : vector<3x5x5xf32>
    "tpu.trace_start"() <{level = 10 : i32, message = "bqk,bkd->bqd"}> : () -> ()
    %cst_44 = arith.constant dense<0.000000e+00> : vector<3x5x8xf32>
    %79 = tpu.matmul %78, %67, %cst_44 {dimension_numbers = #tpu.dot_dimension_numbers<[2], [1], [1], [2], [0, 0, 0, 1, 1, 2], [0], [0]>} : vector<3x5x5xf32>, vector<3x5x8xf32>, vector<3x5x8xf32> -> vector<3x5x8xf32>
    "tpu.trace_stop"() : () -> ()
    %80 = vector.extract_strided_slice %62 {offsets = [0, 0, 8], sizes = [3, 5, 8], strides = [1, 1, 1]} : vector<3x5x32xf32> to vector<3x5x8xf32>
    %81 = vector.extract_strided_slice %63 {offsets = [0, 0, 8], sizes = [3, 5, 8], strides = [1, 1, 1]} : vector<3x5x32xf32> to vector<3x5x8xf32>
    %82 = vector.extract_strided_slice %64 {offsets = [0, 0, 8], sizes = [3, 5, 8], strides = [1, 1, 1]} : vector<3x5x32xf32> to vector<3x5x8xf32>
    "tpu.trace_start"() <{level = 10 : i32, message = "bqd,bkd->bqk"}> : () -> ()
    %cst_45 = arith.constant dense<0.000000e+00> : vector<3x5x5xf32>
    %83 = tpu.matmul %80, %81, %cst_45 {dimension_numbers = #tpu.dot_dimension_numbers<[2], [2], [1], [1], [0, 0, 0, 1, 1, 1], [0], [0]>} : vector<3x5x8xf32>, vector<3x5x8xf32>, vector<3x5x5xf32> -> vector<3x5x5xf32>
    "tpu.trace_stop"() : () -> ()
    %cst_46 = arith.constant dense<0xFF800000> : vector<3x5xf32>
    %84 = vector.multi_reduction <maximumf>, %83, %cst_46 [2] : vector<3x5x5xf32> to vector<3x5xf32>
    %85 = vector.shape_cast %84 : vector<3x5xf32> to vector<3x5x1xf32>
    %86 = vector.broadcast %85 : vector<3x5x1xf32> to vector<3x5x5xf32>
    %87 = arith.subf %83, %86 : vector<3x5x5xf32>
    %88 = math.exp %87 : vector<3x5x5xf32>
    %cst_47 = arith.constant dense<0.000000e+00> : vector<3x5xf32>
    %89 = vector.multi_reduction <add>, %88, %cst_47 [2] : vector<3x5x5xf32> to vector<3x5xf32>
    %90 = vector.shape_cast %89 : vector<3x5xf32> to vector<3x5x1xf32>
    %91 = tpu.reciprocal %90 {approx = true} : vector<3x5x1xf32> -> vector<3x5x1xf32>
    %92 = vector.broadcast %91 : vector<3x5x1xf32> to vector<3x5x5xf32>
    %93 = arith.mulf %88, %92 : vector<3x5x5xf32>
    "tpu.trace_start"() <{level = 10 : i32, message = "bqk,bkd->bqd"}> : () -> ()
    %cst_48 = arith.constant dense<0.000000e+00> : vector<3x5x8xf32>
    %94 = tpu.matmul %93, %82, %cst_48 {dimension_numbers = #tpu.dot_dimension_numbers<[2], [1], [1], [2], [0, 0, 0, 1, 1, 2], [0], [0]>} : vector<3x5x5xf32>, vector<3x5x8xf32>, vector<3x5x8xf32> -> vector<3x5x8xf32>
    "tpu.trace_stop"() : () -> ()
    %95 = vector.extract_strided_slice %62 {offsets = [0, 0, 16], sizes = [3, 5, 8], strides = [1, 1, 1]} : vector<3x5x32xf32> to vector<3x5x8xf32>
    %96 = vector.extract_strided_slice %63 {offsets = [0, 0, 16], sizes = [3, 5, 8], strides = [1, 1, 1]} : vector<3x5x32xf32> to vector<3x5x8xf32>
    %97 = vector.extract_strided_slice %64 {offsets = [0, 0, 16], sizes = [3, 5, 8], strides = [1, 1, 1]} : vector<3x5x32xf32> to vector<3x5x8xf32>
    "tpu.trace_start"() <{level = 10 : i32, message = "bqd,bkd->bqk"}> : () -> ()
    %cst_49 = arith.constant dense<0.000000e+00> : vector<3x5x5xf32>
    %98 = tpu.matmul %95, %96, %cst_49 {dimension_numbers = #tpu.dot_dimension_numbers<[2], [2], [1], [1], [0, 0, 0, 1, 1, 1], [0], [0]>} : vector<3x5x8xf32>, vector<3x5x8xf32>, vector<3x5x5xf32> -> vector<3x5x5xf32>
    "tpu.trace_stop"() : () -> ()
    %cst_50 = arith.constant dense<0xFF800000> : vector<3x5xf32>
    %99 = vector.multi_reduction <maximumf>, %98, %cst_50 [2] : vector<3x5x5xf32> to vector<3x5xf32>
    %100 = vector.shape_cast %99 : vector<3x5xf32> to vector<3x5x1xf32>
    %101 = vector.broadcast %100 : vector<3x5x1xf32> to vector<3x5x5xf32>
    %102 = arith.subf %98, %101 : vector<3x5x5xf32>
    %103 = math.exp %102 : vector<3x5x5xf32>
    %cst_51 = arith.constant dense<0.000000e+00> : vector<3x5xf32>
    %104 = vector.multi_reduction <add>, %103, %cst_51 [2] : vector<3x5x5xf32> to vector<3x5xf32>
    %105 = vector.shape_cast %104 : vector<3x5xf32> to vector<3x5x1xf32>
    %106 = tpu.reciprocal %105 {approx = true} : vector<3x5x1xf32> -> vector<3x5x1xf32>
    %107 = vector.broadcast %106 : vector<3x5x1xf32> to vector<3x5x5xf32>
    %108 = arith.mulf %103, %107 : vector<3x5x5xf32>
    "tpu.trace_start"() <{level = 10 : i32, message = "bqk,bkd->bqd"}> : () -> ()
    %cst_52 = arith.constant dense<0.000000e+00> : vector<3x5x8xf32>
    %109 = tpu.matmul %108, %97, %cst_52 {dimension_numbers = #tpu.dot_dimension_numbers<[2], [1], [1], [2], [0, 0, 0, 1, 1, 2], [0], [0]>} : vector<3x5x5xf32>, vector<3x5x8xf32>, vector<3x5x8xf32> -> vector<3x5x8xf32>
    "tpu.trace_stop"() : () -> ()
    %110 = vector.extract_strided_slice %62 {offsets = [0, 0, 24], sizes = [3, 5, 8], strides = [1, 1, 1]} : vector<3x5x32xf32> to vector<3x5x8xf32>
    %111 = vector.extract_strided_slice %63 {offsets = [0, 0, 24], sizes = [3, 5, 8], strides = [1, 1, 1]} : vector<3x5x32xf32> to vector<3x5x8xf32>
    %112 = vector.extract_strided_slice %64 {offsets = [0, 0, 24], sizes = [3, 5, 8], strides = [1, 1, 1]} : vector<3x5x32xf32> to vector<3x5x8xf32>
    "tpu.trace_start"() <{level = 10 : i32, message = "bqd,bkd->bqk"}> : () -> ()
    %cst_53 = arith.constant dense<0.000000e+00> : vector<3x5x5xf32>
    %113 = tpu.matmul %110, %111, %cst_53 {dimension_numbers = #tpu.dot_dimension_numbers<[2], [2], [1], [1], [0, 0, 0, 1, 1, 1], [0], [0]>} : vector<3x5x8xf32>, vector<3x5x8xf32>, vector<3x5x5xf32> -> vector<3x5x5xf32>
    "tpu.trace_stop"() : () -> ()
    %cst_54 = arith.constant dense<0xFF800000> : vector<3x5xf32>
    %114 = vector.multi_reduction <maximumf>, %113, %cst_54 [2] : vector<3x5x5xf32> to vector<3x5xf32>
    %115 = vector.shape_cast %114 : vector<3x5xf32> to vector<3x5x1xf32>
    %116 = vector.broadcast %115 : vector<3x5x1xf32> to vector<3x5x5xf32>
    %117 = arith.subf %113, %116 : vector<3x5x5xf32>
    %118 = math.exp %117 : vector<3x5x5xf32>
    %cst_55 = arith.constant dense<0.000000e+00> : vector<3x5xf32>
    %119 = vector.multi_reduction <add>, %118, %cst_55 [2] : vector<3x5x5xf32> to vector<3x5xf32>
    %120 = vector.shape_cast %119 : vector<3x5xf32> to vector<3x5x1xf32>
    %121 = tpu.reciprocal %120 {approx = true} : vector<3x5x1xf32> -> vector<3x5x1xf32>
    %122 = vector.broadcast %121 : vector<3x5x1xf32> to vector<3x5x5xf32>
    %123 = arith.mulf %118, %122 : vector<3x5x5xf32>
    "tpu.trace_start"() <{level = 10 : i32, message = "bqk,bkd->bqd"}> : () -> ()
    %cst_56 = arith.constant dense<0.000000e+00> : vector<3x5x8xf32>
    %124 = tpu.matmul %123, %112, %cst_56 {dimension_numbers = #tpu.dot_dimension_numbers<[2], [1], [1], [2], [0, 0, 0, 1, 1, 2], [0], [0]>} : vector<3x5x5xf32>, vector<3x5x8xf32>, vector<3x5x8xf32> -> vector<3x5x8xf32>
    "tpu.trace_stop"() : () -> ()
    %125 = tpu.concatenate %79, %94, %109, %124 in 2 : vector<3x5x8xf32>, vector<3x5x8xf32>, vector<3x5x8xf32>, vector<3x5x8xf32> -> vector<3x5x32xf32>
    %126 = vector.shape_cast %125 : vector<3x5x32xf32> to vector<15x32xf32>
    %c0_57 = arith.constant 0 : index
    %c0_58 = arith.constant 0 : index
    %c0_59 = arith.constant 0 : index
    %127 = vector.load %arg13[%c0_57, %c0_58, %c0_59] : memref<2x32x32xf32, #tpu.memory_space<vmem>>, vector<1x32x32xf32>
    %128 = vector.shape_cast %127 : vector<1x32x32xf32> to vector<32x32xf32>
    %cst_60 = arith.constant dense<0.000000e+00> : vector<15x32xf32>
    %129 = tpu.matmul %126, %128, %cst_60 {dimension_numbers = #tpu.dot_dimension_numbers<[1], [0], [0], [1], [0, 0, 1, 1], [], []>} : vector<15x32xf32>, vector<32x32xf32>, vector<15x32xf32> -> vector<15x32xf32>
    %c0_61 = arith.constant 0 : index
    %c0_62 = arith.constant 0 : index
    %c0_63 = arith.constant 0 : index
    %130 = vector.load %arg14[%c0_61, %c0_62, %c0_63] : memref<2x1x32xf32, #tpu.memory_space<vmem>>, vector<1x1x32xf32>
    %131 = vector.shape_cast %130 : vector<1x1x32xf32> to vector<1x32xf32>
    %132 = vector.broadcast %131 : vector<1x32xf32> to vector<15x32xf32>
    %133 = arith.addf %129, %132 : vector<15x32xf32>
    %134 = arith.addf %14, %133 : vector<15x32xf32>
    %c0_64 = arith.constant 0 : index
    %c0_65 = arith.constant 0 : index
    %c0_66 = arith.constant 0 : index
    %135 = vector.load %arg15[%c0_64, %c0_65, %c0_66] : memref<2x1x32xf32, #tpu.memory_space<vmem>>, vector<1x1x32xf32>
    %136 = vector.shape_cast %135 : vector<1x1x32xf32> to vector<1x32xf32>
    %c0_67 = arith.constant 0 : index
    %c0_68 = arith.constant 0 : index
    %c0_69 = arith.constant 0 : index
    %137 = vector.load %arg16[%c0_67, %c0_68, %c0_69] : memref<2x1x32xf32, #tpu.memory_space<vmem>>, vector<1x1x32xf32>
    %138 = vector.shape_cast %137 : vector<1x1x32xf32> to vector<1x32xf32>
    %cst_70 = arith.constant dense<0.000000e+00> : vector<15xf32>
    %139 = vector.multi_reduction <add>, %134, %cst_70 [1] : vector<15x32xf32> to vector<15xf32>
    %140 = vector.shape_cast %139 : vector<15xf32> to vector<15x1xf32>
    %cst_71 = arith.constant 3.200000e+01 : f32
    %141 = vector.broadcast %cst_71 : f32 to vector<15x1xf32>
    %142 = arith.divf %140, %141 : vector<15x1xf32>
    %143 = vector.broadcast %142 : vector<15x1xf32> to vector<15x32xf32>
    %144 = arith.subf %134, %143 : vector<15x32xf32>
    %145 = arith.mulf %144, %144 : vector<15x32xf32>
    %cst_72 = arith.constant dense<0.000000e+00> : vector<15xf32>
    %146 = vector.multi_reduction <add>, %145, %cst_72 [1] : vector<15x32xf32> to vector<15xf32>
    %147 = vector.shape_cast %146 : vector<15xf32> to vector<15x1xf32>
    %cst_73 = arith.constant 3.200000e+01 : f32
    %148 = vector.broadcast %cst_73 : f32 to vector<15x1xf32>
    %149 = arith.divf %147, %148 : vector<15x1xf32>
    %cst_74 = arith.constant 9.99999997E-7 : f32
    %150 = vector.broadcast %cst_74 : f32 to vector<15x1xf32>
    %151 = arith.addf %149, %150 : vector<15x1xf32>
    %152 = math.rsqrt %151 : vector<15x1xf32>
    %153 = vector.broadcast %152 : vector<15x1xf32> to vector<15x32xf32>
    %154 = arith.mulf %144, %153 : vector<15x32xf32>
    %155 = vector.broadcast %136 : vector<1x32xf32> to vector<15x32xf32>
    %156 = arith.mulf %154, %155 : vector<15x32xf32>
    %157 = vector.broadcast %138 : vector<1x32xf32> to vector<15x32xf32>
    %158 = arith.addf %156, %157 : vector<15x32xf32>
    %c0_75 = arith.constant 0 : index
    %c0_76 = arith.constant 0 : index
    %c0_77 = arith.constant 0 : index
    %159 = vector.load %arg17[%c0_75, %c0_76, %c0_77] : memref<2x32x128xf32, #tpu.memory_space<vmem>>, vector<1x32x128xf32>
    %160 = vector.shape_cast %159 : vector<1x32x128xf32> to vector<32x128xf32>
    %cst_78 = arith.constant dense<0.000000e+00> : vector<15x128xf32>
    %161 = tpu.matmul %158, %160, %cst_78 {dimension_numbers = #tpu.dot_dimension_numbers<[1], [0], [0], [1], [0, 0, 1, 1], [], []>} : vector<15x32xf32>, vector<32x128xf32>, vector<15x128xf32> -> vector<15x128xf32>
    %c0_79 = arith.constant 0 : index
    %c0_80 = arith.constant 0 : index
    %c0_81 = arith.constant 0 : index
    %162 = vector.load %arg18[%c0_79, %c0_80, %c0_81] : memref<2x1x128xf32, #tpu.memory_space<vmem>>, vector<1x1x128xf32>
    %163 = vector.shape_cast %162 : vector<1x1x128xf32> to vector<1x128xf32>
    %164 = vector.broadcast %163 : vector<1x128xf32> to vector<15x128xf32>
    %165 = arith.addf %161, %164 : vector<15x128xf32>
    %cst_82 = arith.constant 5.000000e-01 : f32
    %166 = vector.broadcast %cst_82 : f32 to vector<15x128xf32>
    %167 = arith.mulf %166, %165 : vector<15x128xf32>
    %cst_83 = arith.constant 0.707106769 : f32
    %168 = vector.broadcast %cst_83 : f32 to vector<15x128xf32>
    %169 = arith.mulf %165, %168 : vector<15x128xf32>
    %170 = math.absf %169 : vector<15x128xf32>
    %cst_84 = arith.constant 0.327591091 : f32
    %171 = vector.broadcast %cst_84 : f32 to vector<15x128xf32>
    %172 = arith.mulf %171, %170 : vector<15x128xf32>
    %cst_85 = arith.constant 1.000000e+00 : f32
    %173 = vector.broadcast %cst_85 : f32 to vector<15x128xf32>
    %174 = arith.addf %173, %172 : vector<15x128xf32>
    %cst_86 = arith.constant 1.000000e+00 : f32
    %175 = vector.broadcast %cst_86 : f32 to vector<15x128xf32>
    %176 = arith.divf %175, %174 : vector<15x128xf32>
    %cst_87 = arith.constant 1.06140542 : f32
    %177 = vector.broadcast %cst_87 : f32 to vector<15x128xf32>
    %178 = arith.mulf %177, %176 : vector<15x128xf32>
    %cst_88 = arith.constant -1.45315206 : f32
    %179 = vector.broadcast %cst_88 : f32 to vector<15x128xf32>
    %180 = arith.addf %178, %179 : vector<15x128xf32>
    %181 = arith.mulf %180, %176 : vector<15x128xf32>
    %cst_89 = arith.constant 1.42141378 : f32
    %182 = vector.broadcast %cst_89 : f32 to vector<15x128xf32>
    %183 = arith.addf %181, %182 : vector<15x128xf32>
    %184 = arith.mulf %183, %176 : vector<15x128xf32>
    %cst_90 = arith.constant -0.284496725 : f32
    %185 = vector.broadcast %cst_90 : f32 to vector<15x128xf32>
    %186 = arith.addf %184, %185 : vector<15x128xf32>
    %187 = arith.mulf %186, %176 : vector<15x128xf32>
    %cst_91 = arith.constant 0.254829586 : f32
    %188 = vector.broadcast %cst_91 : f32 to vector<15x128xf32>
    %189 = arith.addf %187, %188 : vector<15x128xf32>
    %190 = arith.mulf %189, %176 : vector<15x128xf32>
    %cst_92 = arith.constant 0.000000e+00 : f32
    %191 = vector.broadcast %cst_92 : f32 to vector<15x128xf32>
    %192 = arith.subf %191, %170 : vector<15x128xf32>
    %193 = arith.mulf %192, %170 : vector<15x128xf32>
    %194 = math.exp %193 : vector<15x128xf32>
    %195 = arith.mulf %190, %194 : vector<15x128xf32>
    %cst_93 = arith.constant 1.000000e+00 : f32
    %196 = vector.broadcast %cst_93 : f32 to vector<15x128xf32>
    %197 = arith.subf %196, %195 : vector<15x128xf32>
    %cst_94 = arith.constant 0.000000e+00 : f32
    %198 = vector.broadcast %cst_94 : f32 to vector<15x128xf32>
    %199 = arith.cmpf oge, %169, %198 : vector<15x128xf32>
    %cst_95 = arith.constant 0.000000e+00 : f32
    %200 = vector.broadcast %cst_95 : f32 to vector<15x128xf32>
    %201 = arith.subf %200, %197 : vector<15x128xf32>
    %202 = arith.select %199, %197, %201 : vector<15x128xi1>, vector<15x128xf32>
    %cst_96 = arith.constant 1.000000e+00 : f32
    %203 = vector.broadcast %cst_96 : f32 to vector<15x128xf32>
    %204 = arith.addf %203, %202 : vector<15x128xf32>
    %205 = arith.mulf %167, %204 : vector<15x128xf32>
    %c0_97 = arith.constant 0 : index
    %c0_98 = arith.constant 0 : index
    %c0_99 = arith.constant 0 : index
    %206 = vector.load %arg19[%c0_97, %c0_98, %c0_99] : memref<2x128x32xf32, #tpu.memory_space<vmem>>, vector<1x128x32xf32>
    %207 = vector.shape_cast %206 : vector<1x128x32xf32> to vector<128x32xf32>
    %cst_100 = arith.constant dense<0.000000e+00> : vector<15x32xf32>
    %208 = tpu.matmul %205, %207, %cst_100 {dimension_numbers = #tpu.dot_dimension_numbers<[1], [0], [0], [1], [0, 0, 1, 1], [], []>} : vector<15x128xf32>, vector<128x32xf32>, vector<15x32xf32> -> vector<15x32xf32>
    %c0_101 = arith.constant 0 : index
    %c0_102 = arith.constant 0 : index
    %c0_103 = arith.constant 0 : index
    %209 = vector.load %arg20[%c0_101, %c0_102, %c0_103] : memref<2x1x32xf32, #tpu.memory_space<vmem>>, vector<1x1x32xf32>
    %210 = vector.shape_cast %209 : vector<1x1x32xf32> to vector<1x32xf32>
    %211 = vector.broadcast %210 : vector<1x32xf32> to vector<15x32xf32>
    %212 = arith.addf %208, %211 : vector<15x32xf32>
    %213 = arith.addf %134, %212 : vector<15x32xf32>
    %c1 = arith.constant 1 : index
    %c0_104 = arith.constant 0 : index
    %c0_105 = arith.constant 0 : index
    %214 = vector.load %arg5[%c1, %c0_104, %c0_105] : memref<2x1x32xf32, #tpu.memory_space<vmem>>, vector<1x1x32xf32>
    %215 = vector.shape_cast %214 : vector<1x1x32xf32> to vector<1x32xf32>
    %c1_106 = arith.constant 1 : index
    %c0_107 = arith.constant 0 : index
    %c0_108 = arith.constant 0 : index
    %216 = vector.load %arg6[%c1_106, %c0_107, %c0_108] : memref<2x1x32xf32, #tpu.memory_space<vmem>>, vector<1x1x32xf32>
    %217 = vector.shape_cast %216 : vector<1x1x32xf32> to vector<1x32xf32>
    %cst_109 = arith.constant dense<0.000000e+00> : vector<15xf32>
    %218 = vector.multi_reduction <add>, %213, %cst_109 [1] : vector<15x32xf32> to vector<15xf32>
    %219 = vector.shape_cast %218 : vector<15xf32> to vector<15x1xf32>
    %cst_110 = arith.constant 3.200000e+01 : f32
    %220 = vector.broadcast %cst_110 : f32 to vector<15x1xf32>
    %221 = arith.divf %219, %220 : vector<15x1xf32>
    %222 = vector.broadcast %221 : vector<15x1xf32> to vector<15x32xf32>
    %223 = arith.subf %213, %222 : vector<15x32xf32>
    %224 = arith.mulf %223, %223 : vector<15x32xf32>
    %cst_111 = arith.constant dense<0.000000e+00> : vector<15xf32>
    %225 = vector.multi_reduction <add>, %224, %cst_111 [1] : vector<15x32xf32> to vector<15xf32>
    %226 = vector.shape_cast %225 : vector<15xf32> to vector<15x1xf32>
    %cst_112 = arith.constant 3.200000e+01 : f32
    %227 = vector.broadcast %cst_112 : f32 to vector<15x1xf32>
    %228 = arith.divf %226, %227 : vector<15x1xf32>
    %cst_113 = arith.constant 9.99999997E-7 : f32
    %229 = vector.broadcast %cst_113 : f32 to vector<15x1xf32>
    %230 = arith.addf %228, %229 : vector<15x1xf32>
    %231 = math.rsqrt %230 : vector<15x1xf32>
    %232 = vector.broadcast %231 : vector<15x1xf32> to vector<15x32xf32>
    %233 = arith.mulf %223, %232 : vector<15x32xf32>
    %234 = vector.broadcast %215 : vector<1x32xf32> to vector<15x32xf32>
    %235 = arith.mulf %233, %234 : vector<15x32xf32>
    %236 = vector.broadcast %217 : vector<1x32xf32> to vector<15x32xf32>
    %237 = arith.addf %235, %236 : vector<15x32xf32>
    %c1_114 = arith.constant 1 : index
    %c0_115 = arith.constant 0 : index
    %c0_116 = arith.constant 0 : index
    %238 = vector.load %arg7[%c1_114, %c0_115, %c0_116] : memref<2x32x32xf32, #tpu.memory_space<vmem>>, vector<1x32x32xf32>
    %239 = vector.shape_cast %238 : vector<1x32x32xf32> to vector<32x32xf32>
    %cst_117 = arith.constant dense<0.000000e+00> : vector<15x32xf32>
    %240 = tpu.matmul %237, %239, %cst_117 {dimension_numbers = #tpu.dot_dimension_numbers<[1], [0], [0], [1], [0, 0, 1, 1], [], []>} : vector<15x32xf32>, vector<32x32xf32>, vector<15x32xf32> -> vector<15x32xf32>
    %c1_118 = arith.constant 1 : index
    %c0_119 = arith.constant 0 : index
    %c0_120 = arith.constant 0 : index
    %241 = vector.load %arg8[%c1_118, %c0_119, %c0_120] : memref<2x1x32xf32, #tpu.memory_space<vmem>>, vector<1x1x32xf32>
    %242 = vector.shape_cast %241 : vector<1x1x32xf32> to vector<1x32xf32>
    %243 = vector.broadcast %242 : vector<1x32xf32> to vector<15x32xf32>
    %244 = arith.addf %240, %243 : vector<15x32xf32>
    %cst_121 = arith.constant 0.353553385 : f32
    %245 = vector.broadcast %cst_121 : f32 to vector<15x32xf32>
    %246 = arith.mulf %244, %245 : vector<15x32xf32>
    %c1_122 = arith.constant 1 : index
    %c0_123 = arith.constant 0 : index
    %c0_124 = arith.constant 0 : index
    %247 = vector.load %arg9[%c1_122, %c0_123, %c0_124] : memref<2x32x32xf32, #tpu.memory_space<vmem>>, vector<1x32x32xf32>
    %248 = vector.shape_cast %247 : vector<1x32x32xf32> to vector<32x32xf32>
    %cst_125 = arith.constant dense<0.000000e+00> : vector<15x32xf32>
    %249 = tpu.matmul %237, %248, %cst_125 {dimension_numbers = #tpu.dot_dimension_numbers<[1], [0], [0], [1], [0, 0, 1, 1], [], []>} : vector<15x32xf32>, vector<32x32xf32>, vector<15x32xf32> -> vector<15x32xf32>
    %c1_126 = arith.constant 1 : index
    %c0_127 = arith.constant 0 : index
    %c0_128 = arith.constant 0 : index
    %250 = vector.load %arg10[%c1_126, %c0_127, %c0_128] : memref<2x1x32xf32, #tpu.memory_space<vmem>>, vector<1x1x32xf32>
    %251 = vector.shape_cast %250 : vector<1x1x32xf32> to vector<1x32xf32>
    %252 = vector.broadcast %251 : vector<1x32xf32> to vector<15x32xf32>
    %253 = arith.addf %249, %252 : vector<15x32xf32>
    %c1_129 = arith.constant 1 : index
    %c0_130 = arith.constant 0 : index
    %c0_131 = arith.constant 0 : index
    %254 = vector.load %arg11[%c1_129, %c0_130, %c0_131] : memref<2x32x32xf32, #tpu.memory_space<vmem>>, vector<1x32x32xf32>
    %255 = vector.shape_cast %254 : vector<1x32x32xf32> to vector<32x32xf32>
    %cst_132 = arith.constant dense<0.000000e+00> : vector<15x32xf32>
    %256 = tpu.matmul %237, %255, %cst_132 {dimension_numbers = #tpu.dot_dimension_numbers<[1], [0], [0], [1], [0, 0, 1, 1], [], []>} : vector<15x32xf32>, vector<32x32xf32>, vector<15x32xf32> -> vector<15x32xf32>
    %c1_133 = arith.constant 1 : index
    %c0_134 = arith.constant 0 : index
    %c0_135 = arith.constant 0 : index
    %257 = vector.load %arg12[%c1_133, %c0_134, %c0_135] : memref<2x1x32xf32, #tpu.memory_space<vmem>>, vector<1x1x32xf32>
    %258 = vector.shape_cast %257 : vector<1x1x32xf32> to vector<1x32xf32>
    %259 = vector.broadcast %258 : vector<1x32xf32> to vector<15x32xf32>
    %260 = arith.addf %256, %259 : vector<15x32xf32>
    %261 = vector.shape_cast %246 : vector<15x32xf32> to vector<3x5x32xf32>
    %262 = vector.shape_cast %253 : vector<15x32xf32> to vector<3x5x32xf32>
    %263 = vector.shape_cast %260 : vector<15x32xf32> to vector<3x5x32xf32>
    %264 = vector.extract_strided_slice %261 {offsets = [0, 0, 0], sizes = [3, 5, 8], strides = [1, 1, 1]} : vector<3x5x32xf32> to vector<3x5x8xf32>
    %265 = vector.extract_strided_slice %262 {offsets = [0, 0, 0], sizes = [3, 5, 8], strides = [1, 1, 1]} : vector<3x5x32xf32> to vector<3x5x8xf32>
    %266 = vector.extract_strided_slice %263 {offsets = [0, 0, 0], sizes = [3, 5, 8], strides = [1, 1, 1]} : vector<3x5x32xf32> to vector<3x5x8xf32>
    "tpu.trace_start"() <{level = 10 : i32, message = "bqd,bkd->bqk"}> : () -> ()
    %cst_136 = arith.constant dense<0.000000e+00> : vector<3x5x5xf32>
    %267 = tpu.matmul %264, %265, %cst_136 {dimension_numbers = #tpu.dot_dimension_numbers<[2], [2], [1], [1], [0, 0, 0, 1, 1, 1], [0], [0]>} : vector<3x5x8xf32>, vector<3x5x8xf32>, vector<3x5x5xf32> -> vector<3x5x5xf32>
    "tpu.trace_stop"() : () -> ()
    %cst_137 = arith.constant dense<0xFF800000> : vector<3x5xf32>
    %268 = vector.multi_reduction <maximumf>, %267, %cst_137 [2] : vector<3x5x5xf32> to vector<3x5xf32>
    %269 = vector.shape_cast %268 : vector<3x5xf32> to vector<3x5x1xf32>
    %270 = vector.broadcast %269 : vector<3x5x1xf32> to vector<3x5x5xf32>
    %271 = arith.subf %267, %270 : vector<3x5x5xf32>
    %272 = math.exp %271 : vector<3x5x5xf32>
    %cst_138 = arith.constant dense<0.000000e+00> : vector<3x5xf32>
    %273 = vector.multi_reduction <add>, %272, %cst_138 [2] : vector<3x5x5xf32> to vector<3x5xf32>
    %274 = vector.shape_cast %273 : vector<3x5xf32> to vector<3x5x1xf32>
    %275 = tpu.reciprocal %274 {approx = true} : vector<3x5x1xf32> -> vector<3x5x1xf32>
    %276 = vector.broadcast %275 : vector<3x5x1xf32> to vector<3x5x5xf32>
    %277 = arith.mulf %272, %276 : vector<3x5x5xf32>
    "tpu.trace_start"() <{level = 10 : i32, message = "bqk,bkd->bqd"}> : () -> ()
    %cst_139 = arith.constant dense<0.000000e+00> : vector<3x5x8xf32>
    %278 = tpu.matmul %277, %266, %cst_139 {dimension_numbers = #tpu.dot_dimension_numbers<[2], [1], [1], [2], [0, 0, 0, 1, 1, 2], [0], [0]>} : vector<3x5x5xf32>, vector<3x5x8xf32>, vector<3x5x8xf32> -> vector<3x5x8xf32>
    "tpu.trace_stop"() : () -> ()
    %279 = vector.extract_strided_slice %261 {offsets = [0, 0, 8], sizes = [3, 5, 8], strides = [1, 1, 1]} : vector<3x5x32xf32> to vector<3x5x8xf32>
    %280 = vector.extract_strided_slice %262 {offsets = [0, 0, 8], sizes = [3, 5, 8], strides = [1, 1, 1]} : vector<3x5x32xf32> to vector<3x5x8xf32>
    %281 = vector.extract_strided_slice %263 {offsets = [0, 0, 8], sizes = [3, 5, 8], strides = [1, 1, 1]} : vector<3x5x32xf32> to vector<3x5x8xf32>
    "tpu.trace_start"() <{level = 10 : i32, message = "bqd,bkd->bqk"}> : () -> ()
    %cst_140 = arith.constant dense<0.000000e+00> : vector<3x5x5xf32>
    %282 = tpu.matmul %279, %280, %cst_140 {dimension_numbers = #tpu.dot_dimension_numbers<[2], [2], [1], [1], [0, 0, 0, 1, 1, 1], [0], [0]>} : vector<3x5x8xf32>, vector<3x5x8xf32>, vector<3x5x5xf32> -> vector<3x5x5xf32>
    "tpu.trace_stop"() : () -> ()
    %cst_141 = arith.constant dense<0xFF800000> : vector<3x5xf32>
    %283 = vector.multi_reduction <maximumf>, %282, %cst_141 [2] : vector<3x5x5xf32> to vector<3x5xf32>
    %284 = vector.shape_cast %283 : vector<3x5xf32> to vector<3x5x1xf32>
    %285 = vector.broadcast %284 : vector<3x5x1xf32> to vector<3x5x5xf32>
    %286 = arith.subf %282, %285 : vector<3x5x5xf32>
    %287 = math.exp %286 : vector<3x5x5xf32>
    %cst_142 = arith.constant dense<0.000000e+00> : vector<3x5xf32>
    %288 = vector.multi_reduction <add>, %287, %cst_142 [2] : vector<3x5x5xf32> to vector<3x5xf32>
    %289 = vector.shape_cast %288 : vector<3x5xf32> to vector<3x5x1xf32>
    %290 = tpu.reciprocal %289 {approx = true} : vector<3x5x1xf32> -> vector<3x5x1xf32>
    %291 = vector.broadcast %290 : vector<3x5x1xf32> to vector<3x5x5xf32>
    %292 = arith.mulf %287, %291 : vector<3x5x5xf32>
    "tpu.trace_start"() <{level = 10 : i32, message = "bqk,bkd->bqd"}> : () -> ()
    %cst_143 = arith.constant dense<0.000000e+00> : vector<3x5x8xf32>
    %293 = tpu.matmul %292, %281, %cst_143 {dimension_numbers = #tpu.dot_dimension_numbers<[2], [1], [1], [2], [0, 0, 0, 1, 1, 2], [0], [0]>} : vector<3x5x5xf32>, vector<3x5x8xf32>, vector<3x5x8xf32> -> vector<3x5x8xf32>
    "tpu.trace_stop"() : () -> ()
    %294 = vector.extract_strided_slice %261 {offsets = [0, 0, 16], sizes = [3, 5, 8], strides = [1, 1, 1]} : vector<3x5x32xf32> to vector<3x5x8xf32>
    %295 = vector.extract_strided_slice %262 {offsets = [0, 0, 16], sizes = [3, 5, 8], strides = [1, 1, 1]} : vector<3x5x32xf32> to vector<3x5x8xf32>
    %296 = vector.extract_strided_slice %263 {offsets = [0, 0, 16], sizes = [3, 5, 8], strides = [1, 1, 1]} : vector<3x5x32xf32> to vector<3x5x8xf32>
    "tpu.trace_start"() <{level = 10 : i32, message = "bqd,bkd->bqk"}> : () -> ()
    %cst_144 = arith.constant dense<0.000000e+00> : vector<3x5x5xf32>
    %297 = tpu.matmul %294, %295, %cst_144 {dimension_numbers = #tpu.dot_dimension_numbers<[2], [2], [1], [1], [0, 0, 0, 1, 1, 1], [0], [0]>} : vector<3x5x8xf32>, vector<3x5x8xf32>, vector<3x5x5xf32> -> vector<3x5x5xf32>
    "tpu.trace_stop"() : () -> ()
    %cst_145 = arith.constant dense<0xFF800000> : vector<3x5xf32>
    %298 = vector.multi_reduction <maximumf>, %297, %cst_145 [2] : vector<3x5x5xf32> to vector<3x5xf32>
    %299 = vector.shape_cast %298 : vector<3x5xf32> to vector<3x5x1xf32>
    %300 = vector.broadcast %299 : vector<3x5x1xf32> to vector<3x5x5xf32>
    %301 = arith.subf %297, %300 : vector<3x5x5xf32>
    %302 = math.exp %301 : vector<3x5x5xf32>
    %cst_146 = arith.constant dense<0.000000e+00> : vector<3x5xf32>
    %303 = vector.multi_reduction <add>, %302, %cst_146 [2] : vector<3x5x5xf32> to vector<3x5xf32>
    %304 = vector.shape_cast %303 : vector<3x5xf32> to vector<3x5x1xf32>
    %305 = tpu.reciprocal %304 {approx = true} : vector<3x5x1xf32> -> vector<3x5x1xf32>
    %306 = vector.broadcast %305 : vector<3x5x1xf32> to vector<3x5x5xf32>
    %307 = arith.mulf %302, %306 : vector<3x5x5xf32>
    "tpu.trace_start"() <{level = 10 : i32, message = "bqk,bkd->bqd"}> : () -> ()
    %cst_147 = arith.constant dense<0.000000e+00> : vector<3x5x8xf32>
    %308 = tpu.matmul %307, %296, %cst_147 {dimension_numbers = #tpu.dot_dimension_numbers<[2], [1], [1], [2], [0, 0, 0, 1, 1, 2], [0], [0]>} : vector<3x5x5xf32>, vector<3x5x8xf32>, vector<3x5x8xf32> -> vector<3x5x8xf32>
    "tpu.trace_stop"() : () -> ()
    %309 = vector.extract_strided_slice %261 {offsets = [0, 0, 24], sizes = [3, 5, 8], strides = [1, 1, 1]} : vector<3x5x32xf32> to vector<3x5x8xf32>
    %310 = vector.extract_strided_slice %262 {offsets = [0, 0, 24], sizes = [3, 5, 8], strides = [1, 1, 1]} : vector<3x5x32xf32> to vector<3x5x8xf32>
    %311 = vector.extract_strided_slice %263 {offsets = [0, 0, 24], sizes = [3, 5, 8], strides = [1, 1, 1]} : vector<3x5x32xf32> to vector<3x5x8xf32>
    "tpu.trace_start"() <{level = 10 : i32, message = "bqd,bkd->bqk"}> : () -> ()
    %cst_148 = arith.constant dense<0.000000e+00> : vector<3x5x5xf32>
    %312 = tpu.matmul %309, %310, %cst_148 {dimension_numbers = #tpu.dot_dimension_numbers<[2], [2], [1], [1], [0, 0, 0, 1, 1, 1], [0], [0]>} : vector<3x5x8xf32>, vector<3x5x8xf32>, vector<3x5x5xf32> -> vector<3x5x5xf32>
    "tpu.trace_stop"() : () -> ()
    %cst_149 = arith.constant dense<0xFF800000> : vector<3x5xf32>
    %313 = vector.multi_reduction <maximumf>, %312, %cst_149 [2] : vector<3x5x5xf32> to vector<3x5xf32>
    %314 = vector.shape_cast %313 : vector<3x5xf32> to vector<3x5x1xf32>
    %315 = vector.broadcast %314 : vector<3x5x1xf32> to vector<3x5x5xf32>
    %316 = arith.subf %312, %315 : vector<3x5x5xf32>
    %317 = math.exp %316 : vector<3x5x5xf32>
    %cst_150 = arith.constant dense<0.000000e+00> : vector<3x5xf32>
    %318 = vector.multi_reduction <add>, %317, %cst_150 [2] : vector<3x5x5xf32> to vector<3x5xf32>
    %319 = vector.shape_cast %318 : vector<3x5xf32> to vector<3x5x1xf32>
    %320 = tpu.reciprocal %319 {approx = true} : vector<3x5x1xf32> -> vector<3x5x1xf32>
    %321 = vector.broadcast %320 : vector<3x5x1xf32> to vector<3x5x5xf32>
    %322 = arith.mulf %317, %321 : vector<3x5x5xf32>
    "tpu.trace_start"() <{level = 10 : i32, message = "bqk,bkd->bqd"}> : () -> ()
    %cst_151 = arith.constant dense<0.000000e+00> : vector<3x5x8xf32>
    %323 = tpu.matmul %322, %311, %cst_151 {dimension_numbers = #tpu.dot_dimension_numbers<[2], [1], [1], [2], [0, 0, 0, 1, 1, 2], [0], [0]>} : vector<3x5x5xf32>, vector<3x5x8xf32>, vector<3x5x8xf32> -> vector<3x5x8xf32>
    "tpu.trace_stop"() : () -> ()
    %324 = tpu.concatenate %278, %293, %308, %323 in 2 : vector<3x5x8xf32>, vector<3x5x8xf32>, vector<3x5x8xf32>, vector<3x5x8xf32> -> vector<3x5x32xf32>
    %325 = vector.shape_cast %324 : vector<3x5x32xf32> to vector<15x32xf32>
    %c1_152 = arith.constant 1 : index
    %c0_153 = arith.constant 0 : index
    %c0_154 = arith.constant 0 : index
    %326 = vector.load %arg13[%c1_152, %c0_153, %c0_154] : memref<2x32x32xf32, #tpu.memory_space<vmem>>, vector<1x32x32xf32>
    %327 = vector.shape_cast %326 : vector<1x32x32xf32> to vector<32x32xf32>
    %cst_155 = arith.constant dense<0.000000e+00> : vector<15x32xf32>
    %328 = tpu.matmul %325, %327, %cst_155 {dimension_numbers = #tpu.dot_dimension_numbers<[1], [0], [0], [1], [0, 0, 1, 1], [], []>} : vector<15x32xf32>, vector<32x32xf32>, vector<15x32xf32> -> vector<15x32xf32>
    %c1_156 = arith.constant 1 : index
    %c0_157 = arith.constant 0 : index
    %c0_158 = arith.constant 0 : index
    %329 = vector.load %arg14[%c1_156, %c0_157, %c0_158] : memref<2x1x32xf32, #tpu.memory_space<vmem>>, vector<1x1x32xf32>
    %330 = vector.shape_cast %329 : vector<1x1x32xf32> to vector<1x32xf32>
    %331 = vector.broadcast %330 : vector<1x32xf32> to vector<15x32xf32>
    %332 = arith.addf %328, %331 : vector<15x32xf32>
    %333 = arith.addf %213, %332 : vector<15x32xf32>
    %c1_159 = arith.constant 1 : index
    %c0_160 = arith.constant 0 : index
    %c0_161 = arith.constant 0 : index
    %334 = vector.load %arg15[%c1_159, %c0_160, %c0_161] : memref<2x1x32xf32, #tpu.memory_space<vmem>>, vector<1x1x32xf32>
    %335 = vector.shape_cast %334 : vector<1x1x32xf32> to vector<1x32xf32>
    %c1_162 = arith.constant 1 : index
    %c0_163 = arith.constant 0 : index
    %c0_164 = arith.constant 0 : index
    %336 = vector.load %arg16[%c1_162, %c0_163, %c0_164] : memref<2x1x32xf32, #tpu.memory_space<vmem>>, vector<1x1x32xf32>
    %337 = vector.shape_cast %336 : vector<1x1x32xf32> to vector<1x32xf32>
    %cst_165 = arith.constant dense<0.000000e+00> : vector<15xf32>
    %338 = vector.multi_reduction <add>, %333, %cst_165 [1] : vector<15x32xf32> to vector<15xf32>
    %339 = vector.shape_cast %338 : vector<15xf32> to vector<15x1xf32>
    %cst_166 = arith.constant 3.200000e+01 : f32
    %340 = vector.broadcast %cst_166 : f32 to vector<15x1xf32>
    %341 = arith.divf %339, %340 : vector<15x1xf32>
    %342 = vector.broadcast %341 : vector<15x1xf32> to vector<15x32xf32>
    %343 = arith.subf %333, %342 : vector<15x32xf32>
    %344 = arith.mulf %343, %343 : vector<15x32xf32>
    %cst_167 = arith.constant dense<0.000000e+00> : vector<15xf32>
    %345 = vector.multi_reduction <add>, %344, %cst_167 [1] : vector<15x32xf32> to vector<15xf32>
    %346 = vector.shape_cast %345 : vector<15xf32> to vector<15x1xf32>
    %cst_168 = arith.constant 3.200000e+01 : f32
    %347 = vector.broadcast %cst_168 : f32 to vector<15x1xf32>
    %348 = arith.divf %346, %347 : vector<15x1xf32>
    %cst_169 = arith.constant 9.99999997E-7 : f32
    %349 = vector.broadcast %cst_169 : f32 to vector<15x1xf32>
    %350 = arith.addf %348, %349 : vector<15x1xf32>
    %351 = math.rsqrt %350 : vector<15x1xf32>
    %352 = vector.broadcast %351 : vector<15x1xf32> to vector<15x32xf32>
    %353 = arith.mulf %343, %352 : vector<15x32xf32>
    %354 = vector.broadcast %335 : vector<1x32xf32> to vector<15x32xf32>
    %355 = arith.mulf %353, %354 : vector<15x32xf32>
    %356 = vector.broadcast %337 : vector<1x32xf32> to vector<15x32xf32>
    %357 = arith.addf %355, %356 : vector<15x32xf32>
    %c1_170 = arith.constant 1 : index
    %c0_171 = arith.constant 0 : index
    %c0_172 = arith.constant 0 : index
    %358 = vector.load %arg17[%c1_170, %c0_171, %c0_172] : memref<2x32x128xf32, #tpu.memory_space<vmem>>, vector<1x32x128xf32>
    %359 = vector.shape_cast %358 : vector<1x32x128xf32> to vector<32x128xf32>
    %cst_173 = arith.constant dense<0.000000e+00> : vector<15x128xf32>
    %360 = tpu.matmul %357, %359, %cst_173 {dimension_numbers = #tpu.dot_dimension_numbers<[1], [0], [0], [1], [0, 0, 1, 1], [], []>} : vector<15x32xf32>, vector<32x128xf32>, vector<15x128xf32> -> vector<15x128xf32>
    %c1_174 = arith.constant 1 : index
    %c0_175 = arith.constant 0 : index
    %c0_176 = arith.constant 0 : index
    %361 = vector.load %arg18[%c1_174, %c0_175, %c0_176] : memref<2x1x128xf32, #tpu.memory_space<vmem>>, vector<1x1x128xf32>
    %362 = vector.shape_cast %361 : vector<1x1x128xf32> to vector<1x128xf32>
    %363 = vector.broadcast %362 : vector<1x128xf32> to vector<15x128xf32>
    %364 = arith.addf %360, %363 : vector<15x128xf32>
    %cst_177 = arith.constant 5.000000e-01 : f32
    %365 = vector.broadcast %cst_177 : f32 to vector<15x128xf32>
    %366 = arith.mulf %365, %364 : vector<15x128xf32>
    %cst_178 = arith.constant 0.707106769 : f32
    %367 = vector.broadcast %cst_178 : f32 to vector<15x128xf32>
    %368 = arith.mulf %364, %367 : vector<15x128xf32>
    %369 = math.absf %368 : vector<15x128xf32>
    %cst_179 = arith.constant 0.327591091 : f32
    %370 = vector.broadcast %cst_179 : f32 to vector<15x128xf32>
    %371 = arith.mulf %370, %369 : vector<15x128xf32>
    %cst_180 = arith.constant 1.000000e+00 : f32
    %372 = vector.broadcast %cst_180 : f32 to vector<15x128xf32>
    %373 = arith.addf %372, %371 : vector<15x128xf32>
    %cst_181 = arith.constant 1.000000e+00 : f32
    %374 = vector.broadcast %cst_181 : f32 to vector<15x128xf32>
    %375 = arith.divf %374, %373 : vector<15x128xf32>
    %cst_182 = arith.constant 1.06140542 : f32
    %376 = vector.broadcast %cst_182 : f32 to vector<15x128xf32>
    %377 = arith.mulf %376, %375 : vector<15x128xf32>
    %cst_183 = arith.constant -1.45315206 : f32
    %378 = vector.broadcast %cst_183 : f32 to vector<15x128xf32>
    %379 = arith.addf %377, %378 : vector<15x128xf32>
    %380 = arith.mulf %379, %375 : vector<15x128xf32>
    %cst_184 = arith.constant 1.42141378 : f32
    %381 = vector.broadcast %cst_184 : f32 to vector<15x128xf32>
    %382 = arith.addf %380, %381 : vector<15x128xf32>
    %383 = arith.mulf %382, %375 : vector<15x128xf32>
    %cst_185 = arith.constant -0.284496725 : f32
    %384 = vector.broadcast %cst_185 : f32 to vector<15x128xf32>
    %385 = arith.addf %383, %384 : vector<15x128xf32>
    %386 = arith.mulf %385, %375 : vector<15x128xf32>
    %cst_186 = arith.constant 0.254829586 : f32
    %387 = vector.broadcast %cst_186 : f32 to vector<15x128xf32>
    %388 = arith.addf %386, %387 : vector<15x128xf32>
    %389 = arith.mulf %388, %375 : vector<15x128xf32>
    %cst_187 = arith.constant 0.000000e+00 : f32
    %390 = vector.broadcast %cst_187 : f32 to vector<15x128xf32>
    %391 = arith.subf %390, %369 : vector<15x128xf32>
    %392 = arith.mulf %391, %369 : vector<15x128xf32>
    %393 = math.exp %392 : vector<15x128xf32>
    %394 = arith.mulf %389, %393 : vector<15x128xf32>
    %cst_188 = arith.constant 1.000000e+00 : f32
    %395 = vector.broadcast %cst_188 : f32 to vector<15x128xf32>
    %396 = arith.subf %395, %394 : vector<15x128xf32>
    %cst_189 = arith.constant 0.000000e+00 : f32
    %397 = vector.broadcast %cst_189 : f32 to vector<15x128xf32>
    %398 = arith.cmpf oge, %368, %397 : vector<15x128xf32>
    %cst_190 = arith.constant 0.000000e+00 : f32
    %399 = vector.broadcast %cst_190 : f32 to vector<15x128xf32>
    %400 = arith.subf %399, %396 : vector<15x128xf32>
    %401 = arith.select %398, %396, %400 : vector<15x128xi1>, vector<15x128xf32>
    %cst_191 = arith.constant 1.000000e+00 : f32
    %402 = vector.broadcast %cst_191 : f32 to vector<15x128xf32>
    %403 = arith.addf %402, %401 : vector<15x128xf32>
    %404 = arith.mulf %366, %403 : vector<15x128xf32>
    %c1_192 = arith.constant 1 : index
    %c0_193 = arith.constant 0 : index
    %c0_194 = arith.constant 0 : index
    %405 = vector.load %arg19[%c1_192, %c0_193, %c0_194] : memref<2x128x32xf32, #tpu.memory_space<vmem>>, vector<1x128x32xf32>
    %406 = vector.shape_cast %405 : vector<1x128x32xf32> to vector<128x32xf32>
    %cst_195 = arith.constant dense<0.000000e+00> : vector<15x32xf32>
    %407 = tpu.matmul %404, %406, %cst_195 {dimension_numbers = #tpu.dot_dimension_numbers<[1], [0], [0], [1], [0, 0, 1, 1], [], []>} : vector<15x128xf32>, vector<128x32xf32>, vector<15x32xf32> -> vector<15x32xf32>
    %c1_196 = arith.constant 1 : index
    %c0_197 = arith.constant 0 : index
    %c0_198 = arith.constant 0 : index
    %408 = vector.load %arg20[%c1_196, %c0_197, %c0_198] : memref<2x1x32xf32, #tpu.memory_space<vmem>>, vector<1x1x32xf32>
    %409 = vector.shape_cast %408 : vector<1x1x32xf32> to vector<1x32xf32>
    %410 = vector.broadcast %409 : vector<1x32xf32> to vector<15x32xf32>
    %411 = arith.addf %407, %410 : vector<15x32xf32>
    %412 = arith.addf %333, %411 : vector<15x32xf32>
    %413 = vector.shape_cast %412 : vector<15x32xf32> to vector<3x5x32xf32>
    %414 = vector.extract_strided_slice %413 {offsets = [0, 0, 0], sizes = [3, 1, 32], strides = [1, 1, 1]} : vector<3x5x32xf32> to vector<3x1x32xf32>
    %415 = vector.shape_cast %414 : vector<3x1x32xf32> to vector<3x32xf32>
    %c0_199 = arith.constant 0 : index
    %c0_200 = arith.constant 0 : index
    %416 = vector.load %arg21[%c0_199, %c0_200] : memref<1x32xf32, #tpu.memory_space<vmem>>, vector<1x32xf32>
    %c0_201 = arith.constant 0 : index
    %c0_202 = arith.constant 0 : index
    %417 = vector.load %arg22[%c0_201, %c0_202] : memref<1x32xf32, #tpu.memory_space<vmem>>, vector<1x32xf32>
    %cst_203 = arith.constant dense<0.000000e+00> : vector<3xf32>
    %418 = vector.multi_reduction <add>, %415, %cst_203 [1] : vector<3x32xf32> to vector<3xf32>
    %419 = vector.shape_cast %418 : vector<3xf32> to vector<3x1xf32>
    %cst_204 = arith.constant 3.200000e+01 : f32
    %420 = vector.broadcast %cst_204 : f32 to vector<3x1xf32>
    %421 = arith.divf %419, %420 : vector<3x1xf32>
    %422 = vector.broadcast %421 : vector<3x1xf32> to vector<3x32xf32>
    %423 = arith.subf %415, %422 : vector<3x32xf32>
    %424 = arith.mulf %423, %423 : vector<3x32xf32>
    %cst_205 = arith.constant dense<0.000000e+00> : vector<3xf32>
    %425 = vector.multi_reduction <add>, %424, %cst_205 [1] : vector<3x32xf32> to vector<3xf32>
    %426 = vector.shape_cast %425 : vector<3xf32> to vector<3x1xf32>
    %cst_206 = arith.constant 3.200000e+01 : f32
    %427 = vector.broadcast %cst_206 : f32 to vector<3x1xf32>
    %428 = arith.divf %426, %427 : vector<3x1xf32>
    %cst_207 = arith.constant 9.99999997E-7 : f32
    %429 = vector.broadcast %cst_207 : f32 to vector<3x1xf32>
    %430 = arith.addf %428, %429 : vector<3x1xf32>
    %431 = math.rsqrt %430 : vector<3x1xf32>
    %432 = vector.broadcast %431 : vector<3x1xf32> to vector<3x32xf32>
    %433 = arith.mulf %423, %432 : vector<3x32xf32>
    %434 = vector.broadcast %416 : vector<1x32xf32> to vector<3x32xf32>
    %435 = arith.mulf %433, %434 : vector<3x32xf32>
    %436 = vector.broadcast %417 : vector<1x32xf32> to vector<3x32xf32>
    %437 = arith.addf %435, %436 : vector<3x32xf32>
    %c0_208 = arith.constant 0 : index
    %c0_209 = arith.constant 0 : index
    %438 = vector.load %arg23[%c0_208, %c0_209] : memref<32x8xf32, #tpu.memory_space<vmem>>, vector<32x8xf32>
    %cst_210 = arith.constant dense<0.000000e+00> : vector<3x8xf32>
    %439 = tpu.matmul %437, %438, %cst_210 {dimension_numbers = #tpu.dot_dimension_numbers<[1], [0], [0], [1], [0, 0, 1, 1], [], []>} : vector<3x32xf32>, vector<32x8xf32>, vector<3x8xf32> -> vector<3x8xf32>
    %c0_211 = arith.constant 0 : index
    %c0_212 = arith.constant 0 : index
    %440 = vector.load %arg24[%c0_211, %c0_212] : memref<1x8xf32, #tpu.memory_space<vmem>>, vector<1x8xf32>
    %441 = vector.broadcast %440 : vector<1x8xf32> to vector<3x8xf32>
    %442 = arith.addf %439, %441 : vector<3x8xf32>
    %c0_213 = arith.constant 0 : index
    %c0_214 = arith.constant 0 : index
    %c0_215 = arith.constant 0 : index
    %443 = vector.load %arg25[%c0_213, %c0_214, %c0_215] : memref<1x3x8xf32, #tpu.memory_space<vmem>>, vector<1x3x8xf32>
    %444 = vector.shape_cast %443 : vector<1x3x8xf32> to vector<3x8xf32>
    %445 = vector.shape_cast %442 : vector<3x8xf32> to vector<1x3x8xf32>
    tpu.vector_store %arg25[%c0_213, %c0_214, %c0_215], %445 {strides = array<i32>} : memref<1x3x8xf32, #tpu.memory_space<vmem>>, vector<1x3x8xf32>,
    return
  }
  func.func @transform_0(%arg0: i32) -> (i32, i32, i32) {
    %c0_i32 = arith.constant 0 : i32
    %c0_i32_0 = arith.constant 0 : i32
    %c0_i32_1 = arith.constant 0 : i32
    return %arg0, %c0_i32, %c0_i32_0 : i32, i32, i32
  }
  func.func @transform_1(%arg0: i32) -> (i32, i32) {
    %c0_i32 = arith.constant 0 : i32
    %c0_i32_0 = arith.constant 0 : i32
    %c0_i32_1 = arith.constant 0 : i32
    return %c0_i32, %c0_i32_0 : i32, i32
  }
  func.func @transform_2(%arg0: i32) -> (i32, i32) {
    %c0_i32 = arith.constant 0 : i32
    %c0_i32_0 = arith.constant 0 : i32
    %c0_i32_1 = arith.constant 0 : i32
    return %c0_i32, %c0_i32_0 : i32, i32
  }
  func.func @transform_3(%arg0: i32) -> (i32, i32) {
    %c0_i32 = arith.constant 0 : i32
    %c0_i32_0 = arith.constant 0 : i32
    %c0_i32_1 = arith.constant 0 : i32
    return %c0_i32, %c0_i32_0 : i32, i32
  }
  func.func @transform_4(%arg0: i32) -> (i32, i32, i32) {
    %c0_i32 = arith.constant 0 : i32
    %c0_i32_0 = arith.constant 0 : i32
    %c0_i32_1 = arith.constant 0 : i32
    %c0_i32_2 = arith.constant 0 : i32
    return %c0_i32, %c0_i32_0, %c0_i32_1 : i32, i32, i32
  }
  func.func @transform_5(%arg0: i32) -> (i32, i32, i32) {
    %c0_i32 = arith.constant 0 : i32
    %c0_i32_0 = arith.constant 0 : i32
    %c0_i32_1 = arith.constant 0 : i32
    %c0_i32_2 = arith.constant 0 : i32
    return %c0_i32, %c0_i32_0, %c0_i32_1 : i32, i32, i32
  }
  func.func @transform_6(%arg0: i32) -> (i32, i32, i32) {
    %c0_i32 = arith.constant 0 : i32
    %c0_i32_0 = arith.constant 0 : i32
    %c0_i32_1 = arith.constant 0 : i32
    %c0_i32_2 = arith.constant 0 : i32
    return %c0_i32, %c0_i32_0, %c0_i32_1 : i32, i32, i32
  }
  func.func @transform_7(%arg0: i32) -> (i32, i32, i32) {
    %c0_i32 = arith.constant 0 : i32
    %c0_i32_0 = arith.constant 0 : i32
    %c0_i32_1 = arith.constant 0 : i32
    %c0_i32_2 = arith.constant 0 : i32
    return %c0_i32, %c0_i32_0, %c0_i32_1 : i32, i32, i32
  }
  func.func @transform_8(%arg0: i32) -> (i32, i32, i32) {
    %c0_i32 = arith.constant 0 : i32
    %c0_i32_0 = arith.constant 0 : i32
    %c0_i32_1 = arith.constant 0 : i32
    %c0_i32_2 = arith.constant 0 : i32
    return %c0_i32, %c0_i32_0, %c0_i32_1 : i32, i32, i32
  }
  func.func @transform_9(%arg0: i32) -> (i32, i32, i32) {
    %c0_i32 = arith.constant 0 : i32
    %c0_i32_0 = arith.constant 0 : i32
    %c0_i32_1 = arith.constant 0 : i32
    %c0_i32_2 = arith.constant 0 : i32
    return %c0_i32, %c0_i32_0, %c0_i32_1 : i32, i32, i32
  }
  func.func @transform_10(%arg0: i32) -> (i32, i32, i32) {
    %c0_i32 = arith.constant 0 : i32
    %c0_i32_0 = arith.constant 0 : i32
    %c0_i32_1 = arith.constant 0 : i32
    %c0_i32_2 = arith.constant 0 : i32
    return %c0_i32, %c0_i32_0, %c0_i32_1 : i32, i32, i32
  }
  func.func @transform_11(%arg0: i32) -> (i32, i32, i32) {
    %c0_i32 = arith.constant 0 : i32
    %c0_i32_0 = arith.constant 0 : i32
    %c0_i32_1 = arith.constant 0 : i32
    %c0_i32_2 = arith.constant 0 : i32
    return %c0_i32, %c0_i32_0, %c0_i32_1 : i32, i32, i32
  }
  func.func @transform_12(%arg0: i32) -> (i32, i32, i32) {
    %c0_i32 = arith.constant 0 : i32
    %c0_i32_0 = arith.constant 0 : i32
    %c0_i32_1 = arith.constant 0 : i32
    %c0_i32_2 = arith.constant 0 : i32
    return %c0_i32, %c0_i32_0, %c0_i32_1 : i32, i32, i32
  }
  func.func @transform_13(%arg0: i32) -> (i32, i32, i32) {
    %c0_i32 = arith.constant 0 : i32
    %c0_i32_0 = arith.constant 0 : i32
    %c0_i32_1 = arith.constant 0 : i32
    %c0_i32_2 = arith.constant 0 : i32
    return %c0_i32, %c0_i32_0, %c0_i32_1 : i32, i32, i32
  }
  func.func @transform_14(%arg0: i32) -> (i32, i32, i32) {
    %c0_i32 = arith.constant 0 : i32
    %c0_i32_0 = arith.constant 0 : i32
    %c0_i32_1 = arith.constant 0 : i32
    %c0_i32_2 = arith.constant 0 : i32
    return %c0_i32, %c0_i32_0, %c0_i32_1 : i32, i32, i32
  }
  func.func @transform_15(%arg0: i32) -> (i32, i32, i32) {
    %c0_i32 = arith.constant 0 : i32
    %c0_i32_0 = arith.constant 0 : i32
    %c0_i32_1 = arith.constant 0 : i32
    %c0_i32_2 = arith.constant 0 : i32
    return %c0_i32, %c0_i32_0, %c0_i32_1 : i32, i32, i32
  }
  func.func @transform_16(%arg0: i32) -> (i32, i32, i32) {
    %c0_i32 = arith.constant 0 : i32
    %c0_i32_0 = arith.constant 0 : i32
    %c0_i32_1 = arith.constant 0 : i32
    %c0_i32_2 = arith.constant 0 : i32
    return %c0_i32, %c0_i32_0, %c0_i32_1 : i32, i32, i32
  }
  func.func @transform_17(%arg0: i32) -> (i32, i32, i32) {
    %c0_i32 = arith.constant 0 : i32
    %c0_i32_0 = arith.constant 0 : i32
    %c0_i32_1 = arith.constant 0 : i32
    %c0_i32_2 = arith.constant 0 : i32
    return %c0_i32, %c0_i32_0, %c0_i32_1 : i32, i32, i32
  }
  func.func @transform_18(%arg0: i32) -> (i32, i32, i32) {
    %c0_i32 = arith.constant 0 : i32
    %c0_i32_0 = arith.constant 0 : i32
    %c0_i32_1 = arith.constant 0 : i32
    %c0_i32_2 = arith.constant 0 : i32
    return %c0_i32, %c0_i32_0, %c0_i32_1 : i32, i32, i32
  }
  func.func @transform_19(%arg0: i32) -> (i32, i32, i32) {
    %c0_i32 = arith.constant 0 : i32
    %c0_i32_0 = arith.constant 0 : i32
    %c0_i32_1 = arith.constant 0 : i32
    %c0_i32_2 = arith.constant 0 : i32
    return %c0_i32, %c0_i32_0, %c0_i32_1 : i32, i32, i32
  }
  func.func @transform_20(%arg0: i32) -> (i32, i32) {
    %c0_i32 = arith.constant 0 : i32
    %c0_i32_0 = arith.constant 0 : i32
    %c0_i32_1 = arith.constant 0 : i32
    return %c0_i32, %c0_i32_0 : i32, i32
  }
  func.func @transform_21(%arg0: i32) -> (i32, i32) {
    %c0_i32 = arith.constant 0 : i32
    %c0_i32_0 = arith.constant 0 : i32
    %c0_i32_1 = arith.constant 0 : i32
    return %c0_i32, %c0_i32_0 : i32, i32
  }
  func.func @transform_22(%arg0: i32) -> (i32, i32) {
    %c0_i32 = arith.constant 0 : i32
    %c0_i32_0 = arith.constant 0 : i32
    %c0_i32_1 = arith.constant 0 : i32
    return %c0_i32, %c0_i32_0 : i32, i32
  }
  func.func @transform_23(%arg0: i32) -> (i32, i32) {
    %c0_i32 = arith.constant 0 : i32
    %c0_i32_0 = arith.constant 0 : i32
    %c0_i32_1 = arith.constant 0 : i32
    return %c0_i32, %c0_i32_0 : i32, i32
  }
  func.func @transform_24(%arg0: i32) -> (i32, i32, i32) {
    %c0_i32 = arith.constant 0 : i32
    %c0_i32_0 = arith.constant 0 : i32
    %c0_i32_1 = arith.constant 0 : i32
    return %arg0, %c0_i32, %c0_i32_0 : i32, i32, i32
  }
}

</mosaic_0001>

<llo_original>
// kernel: _features.1
$region0: #{_features.1}
  #allocation0 [shape = 'u32[]', space=smem, size = 0x4, offset = 0x4, fixed_abs, tag = 'smem constant byte address 0x4 - core index']
  #allocation1 [shape = 'u32[144,128]{1,0:T(1,128)}', space=vmem, size = 0x12000, scoped, tag = 'internal scratch']
  %s0 = inlined_call_operand.vmem [shape: f32[2,12,768], index: 0, kind: input, shape index: {}]
  %s1 = inlined_call_operand.vmem [shape: f32[768,32], index: 1, kind: input, shape index: {}]
  %s2 = inlined_call_operand.vmem [shape: f32[1,32], index: 2, kind: input, shape index: {}]
  %s3 = inlined_call_operand.vmem [shape: f32[4,32], index: 3, kind: input, shape index: {}]
  %s4 = inlined_call_operand.vmem [shape: f32[2,1,32], index: 4, kind: input, shape index: {}]
  %s5 = inlined_call_operand.vmem [shape: f32[2,1,32], index: 5, kind: input, shape index: {}]
  %s6 = inlined_call_operand.vmem [shape: f32[2,32,32], index: 6, kind: input, shape index: {}]
  %s7 = inlined_call_operand.vmem [shape: f32[2,1,32], index: 7, kind: input, shape index: {}]
  %s8 = inlined_call_operand.vmem [shape: f32[2,32,32], index: 8, kind: input, shape index: {}]
  %s9 = inlined_call_operand.vmem [shape: f32[2,1,32], index: 9, kind: input, shape index: {}]
  %s10 = inlined_call_operand.vmem [shape: f32[2,32,32], index: 10, kind: input, shape index: {}]
  %s11 = inlined_call_operand.vmem [shape: f32[2,1,32], index: 11, kind: input, shape index: {}]
  %s12 = inlined_call_operand.vmem [shape: f32[2,32,32], index: 12, kind: input, shape index: {}]
  %s13 = inlined_call_operand.vmem [shape: f32[2,1,32], index: 13, kind: input, shape index: {}]
  %s14 = inlined_call_operand.vmem [shape: f32[2,1,32], index: 14, kind: input, shape index: {}]
  %s15 = inlined_call_operand.vmem [shape: f32[2,1,32], index: 15, kind: input, shape index: {}]
  %s16 = inlined_call_operand.vmem [shape: f32[2,32,128], index: 16, kind: input, shape index: {}]
  %s17 = inlined_call_operand.vmem [shape: f32[2,1,128], index: 17, kind: input, shape index: {}]
  %s18 = inlined_call_operand.vmem [shape: f32[2,128,32], index: 18, kind: input, shape index: {}]
  %s19 = inlined_call_operand.vmem [shape: f32[2,1,32], index: 19, kind: input, shape index: {}]
  %s20 = inlined_call_operand.vmem [shape: f32[1,32], index: 20, kind: input, shape index: {}]
  %s21 = inlined_call_operand.vmem [shape: f32[1,32], index: 21, kind: input, shape index: {}]
  %s22 = inlined_call_operand.vmem [shape: f32[32,8], index: 22, kind: input, shape index: {}]
  %s23 = inlined_call_operand.vmem [shape: f32[1,8], index: 23, kind: input, shape index: {}]
  %s24 = inlined_call_operand.vmem [shape: f32[2,3,8], index: 24, kind: output, shape index: {}]
  %s25 = sld [smem:[#allocation0]]
  $region129: #{_features.1} parent=0
    _
  %s27 = ssub.s32 1, %s25
  %s28 = scalar_select 0, %s27, %s25
  loop: start=0, step=1, limit=4
  $region2: #{_features.1} parent=0 // loop_pre_header
    _
  $region3: #{_features.1} parent=0 // loop_header
    %s30 = sphi 0, %s34
    %p31 = scmp.ge.s32.totalorder %s30, 4
    %s40 = sphi 0, %s42
    %s43 = sphi 0, %s40
    %s44 = sphi 0, %s43
    %s60 = sphi 0, %s44
    %s64 = sphi 0, %s64
    %s66 = sphi 0, %s64
    %s67 = sphi 0, %s66
    %s81 = sphi 0, %s67
    %s85 = sphi 0, %s85
    %s87 = sphi 0, %s85
    %s88 = sphi 0, %s87
    %s102 = sphi 0, %s88
    %s106 = sphi 0, %s106
    %s108 = sphi 0, %s106
    %s109 = sphi 0, %s108
    %s123 = sphi 0, %s109
    %s127 = sphi 0, %s127
    %s129 = sphi 0, %s127
    %s130 = sphi 0, %s129
    %s144 = sphi 0, %s130
    %s148 = sphi 0, %s148
    %s150 = sphi 0, %s148
    %s151 = sphi 0, %s150
    %s165 = sphi 0, %s151
    %s169 = sphi 0, %s169
    %s171 = sphi 0, %s169
    %s172 = sphi 0, %s171
    %s186 = sphi 0, %s172
    %s190 = sphi 0, %s190
    %s192 = sphi 0, %s190
    %s193 = sphi 0, %s192
    %s207 = sphi 0, %s193
    %s211 = sphi 0, %s211
    %s213 = sphi 0, %s211
    %s214 = sphi 0, %s213
    %s228 = sphi 0, %s214
    %s232 = sphi 0, %s232
    %s234 = sphi 0, %s232
    %s235 = sphi 0, %s234
    %s249 = sphi 0, %s235
    %s253 = sphi 0, %s253
    %s255 = sphi 0, %s253
    %s256 = sphi 0, %s255
    %s270 = sphi 0, %s256
    %s274 = sphi 0, %s274
    %s276 = sphi 0, %s274
    %s277 = sphi 0, %s276
    %s291 = sphi 0, %s277
    %s295 = sphi 0, %s295
    %s297 = sphi 0, %s295
    %s298 = sphi 0, %s297
    %s312 = sphi 0, %s298
    %s316 = sphi 0, %s316
    %s318 = sphi 0, %s316
    %s319 = sphi 0, %s318
    %s333 = sphi 0, %s319
    %s337 = sphi 0, %s337
    %s339 = sphi 0, %s337
    %s340 = sphi 0, %s339
    %s354 = sphi 0, %s340
    %s358 = sphi 0, %s358
    %s360 = sphi 0, %s358
    %s361 = sphi 0, %s360
    %s375 = sphi 0, %s361
    %s379 = sphi 0, %s379
    %s381 = sphi 0, %s379
    %s382 = sphi 0, %s381
    %s396 = sphi 0, %s382
    %s400 = sphi 0, %s400
    %s402 = sphi 0, %s400
    %s403 = sphi 0, %s402
    %s417 = sphi 0, %s403
    %s421 = sphi 0, %s421
    %s423 = sphi 0, %s421
    %s424 = sphi 0, %s423
    %s438 = sphi 0, %s424
    %s442 = sphi 0, %s442
    %s444 = sphi 0, %s442
    %s445 = sphi 0, %s444
    %s459 = sphi 0, %s445
    %s463 = sphi 0, %s463
    %s465 = sphi 0, %s463
    %s466 = sphi 0, %s465
    %s480 = sphi 0, %s466
    %s484 = sphi 0, %s484
    %s486 = sphi 0, %s484
    %s487 = sphi 0, %s486
    %s501 = sphi 0, %s487
    %s505 = sphi 0, %s505
    %s507 = sphi 0, %s505
    %s508 = sphi 0, %s507
    %s522 = sphi 0, %s508
    %s526 = sphi 0, %s526
    %s528 = sphi 0, %s526
    %s529 = sphi 0, %s528
    %s543 = sphi 0, %s529
    %s549 = sphi 0, %s551
    %s552 = sphi 0, %s549
    %s553 = sphi 0, %s552
    %s569 = sphi 0, %s553
  $region4: #{_features.1} parent=0 // loop_header_branch
    %33 = sbr.rel (%p31) target = $region8
  $region5: #{_features.1} parent=0 // loop_body
    %s35 = ssub.s32 %s30, 1
    %s36 = ssub.s32 %s30, 2
    %s37 = sadd.s32 %s30, 1
    %s38 = ssub.s32 %s30, %s37
    %p39 = scmp.eq.s32.totalorder %s38, 0
    %s41 = sadd.s32 %s40, 1
    %s42 = scalar_select %p39, %s40, %s41
    %p45 = pneg %p39
    %p46 = scmp.eq.s32.totalorder %s30, 1
    %p47 = por %p45, %p46
    %p48 = scmp.ne.s32.totalorder %s40, %s43
    %p49 = scmp.eq.s32.totalorder %s30, 0
    %p50 = por %p48, %p49
    %p51 = scmp.ne.s32.totalorder %s40, %s43
    %p52 = scmp.eq.s32.totalorder %s35, 1
    %p53 = por %p51, %p52
    %p54 = scmp.ne.s32.totalorder %s43, %s44
    %p55 = scmp.eq.s32.totalorder %s35, 0
    %p56 = por %p54, %p55
    %p57 = scmp.ne.s32.totalorder %s43, %s44
    %p58 = scmp.eq.s32.totalorder %s36, 1
    %p59 = por %p57, %p58
    %p61 = scmp.ne.s32.totalorder %s44, %s60
    %p62 = scmp.eq.s32.totalorder %s36, 0
    %p63 = por %p61, %p62
    %s65 = sadd.s32 %s64, 1
    %p68 = scmp.eq.s32.totalorder %s30, 1
    %p69 = scmp.ne.s32.totalorder %s64, %s66
    %p70 = scmp.eq.s32.totalorder %s30, 0
    %p71 = por %p69, %p70
    %p72 = scmp.ne.s32.totalorder %s64, %s66
    %p73 = scmp.eq.s32.totalorder %s35, 1
    %p74 = por %p72, %p73
    %p75 = scmp.ne.s32.totalorder %s66, %s67
    %p76 = scmp.eq.s32.totalorder %s35, 0
    %p77 = por %p75, %p76
    %p78 = scmp.ne.s32.totalorder %s66, %s67
    %p79 = scmp.eq.s32.totalorder %s36, 1
    %p80 = por %p78, %p79
    %p82 = scmp.ne.s32.totalorder %s67, %s81
    %p83 = scmp.eq.s32.totalorder %s36, 0
    %p84 = por %p82, %p83
    %s86 = sadd.s32 %s85, 1
    %p89 = scmp.eq.s32.totalorder %s30, 1
    %p90 = scmp.ne.s32.totalorder %s85, %s87
    %p91 = scmp.eq.s32.totalorder %s30, 0
    %p92 = por %p90, %p91
    %p93 = scmp.ne.s32.totalorder %s85, %s87
    %p94 = scmp.eq.s32.totalorder %s35, 1
    %p95 = por %p93, %p94
    %p96 = scmp.ne.s32.totalorder %s87, %s88
    %p97 = scmp.eq.s32.totalorder %s35, 0
    %p98 = por %p96, %p97
    %p99 = scmp.ne.s32.totalorder %s87, %s88
    %p100 = scmp.eq.s32.totalorder %s36, 1
    %p101 = por %p99, %p100
    %p103 = scmp.ne.s32.totalorder %s88, %s102
    %p104 = scmp.eq.s32.totalorder %s36, 0
    %p105 = por %p103, %p104
    %s107 = sadd.s32 %s106, 1
    %p110 = scmp.eq.s32.totalorder %s30, 1
    %p111 = scmp.ne.s32.totalorder %s106, %s108
    %p112 = scmp.eq.s32.totalorder %s30, 0
    %p113 = por %p111, %p112
    %p114 = scmp.ne.s32.totalorder %s106, %s108
    %p115 = scmp.eq.s32.totalorder %s35, 1
    %p116 = por %p114, %p115
    %p117 = scmp.ne.s32.totalorder %s108, %s109
    %p118 = scmp.eq.s32.totalorder %s35, 0
    %p119 = por %p117, %p118
    %p120 = scmp.ne.s32.totalorder %s108, %s109
    %p121 = scmp.eq.s32.totalorder %s36, 1
    %p122 = por %p120, %p121
    %p124 = scmp.ne.s32.totalorder %s109, %s123
    %p125 = scmp.eq.s32.totalorder %s36, 0
    %p126 = por %p124, %p125
    %s128 = sadd.s32 %s127, 1
    %p131 = scmp.eq.s32.totalorder %s30, 1
    %p132 = scmp.ne.s32.totalorder %s127, %s129
    %p133 = scmp.eq.s32.totalorder %s30, 0
    %p134 = por %p132, %p133
    %p135 = scmp.ne.s32.totalorder %s127, %s129
    %p136 = scmp.eq.s32.totalorder %s35, 1
    %p137 = por %p135, %p136
    %p138 = scmp.ne.s32.totalorder %s129, %s130
    %p139 = scmp.eq.s32.totalorder %s35, 0
    %p140 = por %p138, %p139
    %p141 = scmp.ne.s32.totalorder %s129, %s130
    %p142 = scmp.eq.s32.totalorder %s36, 1
    %p143 = por %p141, %p142
    %p145 = scmp.ne.s32.totalorder %s130, %s144
    %p146 = scmp.eq.s32.totalorder %s36, 0
    %p147 = por %p145, %p146
    %s149 = sadd.s32 %s148, 1
    %p152 = scmp.eq.s32.totalorder %s30, 1
    %p153 = scmp.ne.s32.totalorder %s148, %s150
    %p154 = scmp.eq.s32.totalorder %s30, 0
    %p155 = por %p153, %p154
    %p156 = scmp.ne.s32.totalorder %s148, %s150
    %p157 = scmp.eq.s32.totalorder %s35, 1
    %p158 = por %p156, %p157
    %p159 = scmp.ne.s32.totalorder %s150, %s151
    %p160 = scmp.eq.s32.totalorder %s35, 0
    %p161 = por %p159, %p160
    %p162 = scmp.ne.s32.totalorder %s150, %s151
    %p163 = scmp.eq.s32.totalorder %s36, 1
    %p164 = por %p162, %p163
    %p166 = scmp.ne.s32.totalorder %s151, %s165
    %p167 = scmp.eq.s32.totalorder %s36, 0
    %p168 = por %p166, %p167
    %s170 = sadd.s32 %s169, 1
    %p173 = scmp.eq.s32.totalorder %s30, 1
    %p174 = scmp.ne.s32.totalorder %s169, %s171
    %p175 = scmp.eq.s32.totalorder %s30, 0
    %p176 = por %p174, %p175
    %p177 = scmp.ne.s32.totalorder %s169, %s171
    %p178 = scmp.eq.s32.totalorder %s35, 1
    %p179 = por %p177, %p178
    %p180 = scmp.ne.s32.totalorder %s171, %s172
    %p181 = scmp.eq.s32.totalorder %s35, 0
    %p182 = por %p180, %p181
    %p183 = scmp.ne.s32.totalorder %s171, %s172
    %p184 = scmp.eq.s32.totalorder %s36, 1
    %p185 = por %p183, %p184
    %p187 = scmp.ne.s32.totalorder %s172, %s186
    %p188 = scmp.eq.s32.totalorder %s36, 0
    %p189 = por %p187, %p188
    %s191 = sadd.s32 %s190, 1
    %p194 = scmp.eq.s32.totalorder %s30, 1
    %p195 = scmp.ne.s32.totalorder %s190, %s192
    %p196 = scmp.eq.s32.totalorder %s30, 0
    %p197 = por %p195, %p196
    %p198 = scmp.ne.s32.totalorder %s190, %s192
    %p199 = scmp.eq.s32.totalorder %s35, 1
    %p200 = por %p198, %p199
    %p201 = scmp.ne.s32.totalorder %s192, %s193
    %p202 = scmp.eq.s32.totalorder %s35, 0
    %p203 = por %p201, %p202
    %p204 = scmp.ne.s32.totalorder %s192, %s193
    %p205 = scmp.eq.s32.totalorder %s36, 1
    %p206 = por %p204, %p205
    %p208 = scmp.ne.s32.totalorder %s193, %s207
    %p209 = scmp.eq.s32.totalorder %s36, 0
    %p210 = por %p208, %p209
    %s212 = sadd.s32 %s211, 1
    %p215 = scmp.eq.s32.totalorder %s30, 1
    %p216 = scmp.ne.s32.totalorder %s211, %s213
    %p217 = scmp.eq.s32.totalorder %s30, 0
    %p218 = por %p216, %p217
    %p219 = scmp.ne.s32.totalorder %s211, %s213
    %p220 = scmp.eq.s32.totalorder %s35, 1
    %p221 = por %p219, %p220
    %p222 = scmp.ne.s32.totalorder %s213, %s214
    %p223 = scmp.eq.s32.totalorder %s35, 0
    %p224 = por %p222, %p223
    %p225 = scmp.ne.s32.totalorder %s213, %s214
    %p226 = scmp.eq.s32.totalorder %s36, 1
    %p227 = por %p225, %p226
    %p229 = scmp.ne.s32.totalorder %s214, %s228
    %p230 = scmp.eq.s32.totalorder %s36, 0
    %p231 = por %p229, %p230
    %s233 = sadd.s32 %s232, 1
    %p236 = scmp.eq.s32.totalorder %s30, 1
    %p237 = scmp.ne.s32.totalorder %s232, %s234
    %p238 = scmp.eq.s32.totalorder %s30, 0
    %p239 = por %p237, %p238
    %p240 = scmp.ne.s32.totalorder %s232, %s234
    %p241 = scmp.eq.s32.totalorder %s35, 1
    %p242 = por %p240, %p241
    %p243 = scmp.ne.s32.totalorder %s234, %s235
    %p244 = scmp.eq.s32.totalorder %s35, 0
    %p245 = por %p243, %p244
    %p246 = scmp.ne.s32.totalorder %s234, %s235
    %p247 = scmp.eq.s32.totalorder %s36, 1
    %p248 = por %p246, %p247
    %p250 = scmp.ne.s32.totalorder %s235, %s249
    %p251 = scmp.eq.s32.totalorder %s36, 0
    %p252 = por %p250, %p251
    %s254 = sadd.s32 %s253, 1
    %p257 = scmp.eq.s32.totalorder %s30, 1
    %p258 = scmp.ne.s32.totalorder %s253, %s255
    %p259 = scmp.eq.s32.totalorder %s30, 0
    %p260 = por %p258, %p259
    %p261 = scmp.ne.s32.totalorder %s253, %s255
    %p262 = scmp.eq.s32.totalorder %s35, 1
    %p263 = por %p261, %p262
    %p264 = scmp.ne.s32.totalorder %s255, %s256
    %p265 = scmp.eq.s32.totalorder %s35, 0
    %p266 = por %p264, %p265
    %p267 = scmp.ne.s32.totalorder %s255, %s256
    %p268 = scmp.eq.s32.totalorder %s36, 1
    %p269 = por %p267, %p268
    %p271 = scmp.ne.s32.totalorder %s256, %s270
    %p272 = scmp.eq.s32.totalorder %s36, 0
    %p273 = por %p271, %p272
    %s275 = sadd.s32 %s274, 1
    %p278 = scmp.eq.s32.totalorder %s30, 1
    %p279 = scmp.ne.s32.totalorder %s274, %s276
    %p280 = scmp.eq.s32.totalorder %s30, 0
    %p281 = por %p279, %p280
    %p282 = scmp.ne.s32.totalorder %s274, %s276
    %p283 = scmp.eq.s32.totalorder %s35, 1
    %p284 = por %p282, %p283
    %p285 = scmp.ne.s32.totalorder %s276, %s277
    %p286 = scmp.eq.s32.totalorder %s35, 0
    %p287 = por %p285, %p286
    %p288 = scmp.ne.s32.totalorder %s276, %s277
    %p289 = scmp.eq.s32.totalorder %s36, 1
    %p290 = por %p288, %p289
    %p292 = scmp.ne.s32.totalorder %s277, %s291
    %p293 = scmp.eq.s32.totalorder %s36, 0
    %p294 = por %p292, %p293
    %s296 = sadd.s32 %s295, 1
    %p299 = scmp.eq.s32.totalorder %s30, 1
    %p300 = scmp.ne.s32.totalorder %s295, %s297
    %p301 = scmp.eq.s32.totalorder %s30, 0
    %p302 = por %p300, %p301
    %p303 = scmp.ne.s32.totalorder %s295, %s297
    %p304 = scmp.eq.s32.totalorder %s35, 1
    %p305 = por %p303, %p304
    %p306 = scmp.ne.s32.totalorder %s297, %s298
    %p307 = scmp.eq.s32.totalorder %s35, 0
    %p308 = por %p306, %p307
    %p309 = scmp.ne.s32.totalorder %s297, %s298
    %p310 = scmp.eq.s32.totalorder %s36, 1
    %p311 = por %p309, %p310
    %p313 = scmp.ne.s32.totalorder %s298, %s312
    %p314 = scmp.eq.s32.totalorder %s36, 0
    %p315 = por %p313, %p314
    %s317 = sadd.s32 %s316, 1
    %p320 = scmp.eq.s32.totalorder %s30, 1
    %p321 = scmp.ne.s32.totalorder %s316, %s318
    %p322 = scmp.eq.s32.totalorder %s30, 0
    %p323 = por %p321, %p322
    %p324 = scmp.ne.s32.totalorder %s316, %s318
    %p325 = scmp.eq.s32.totalorder %s35, 1
    %p326 = por %p324, %p325
    %p327 = scmp.ne.s32.totalorder %s318, %s319
    %p328 = scmp.eq.s32.totalorder %s35, 0
    %p329 = por %p327, %p328
    %p330 = scmp.ne.s32.totalorder %s318, %s319
    %p331 = scmp.eq.s32.totalorder %s36, 1
    %p332 = por %p330, %p331
    %p334 = scmp.ne.s32.totalorder %s319, %s333
    %p335 = scmp.eq.s32.totalorder %s36, 0
    %p336 = por %p334, %p335
    %s338 = sadd.s32 %s337, 1
    %p341 = scmp.eq.s32.totalorder %s30, 1
    %p342 = scmp.ne.s32.totalorder %s337, %s339
    %p343 = scmp.eq.s32.totalorder %s30, 0
    %p344 = por %p342, %p343
    %p345 = scmp.ne.s32.totalorder %s337, %s339
    %p346 = scmp.eq.s32.totalorder %s35, 1
    %p347 = por %p345, %p346
    %p348 = scmp.ne.s32.totalorder %s339, %s340
    %p349 = scmp.eq.s32.totalorder %s35, 0
    %p350 = por %p348, %p349
    %p351 = scmp.ne.s32.totalorder %s339, %s340
    %p352 = scmp.eq.s32.totalorder %s36, 1
    %p353 = por %p351, %p352
    %p355 = scmp.ne.s32.totalorder %s340, %s354
    %p356 = scmp.eq.s32.totalorder %s36, 0
    %p357 = por %p355, %p356
    %s359 = sadd.s32 %s358, 1
    %p362 = scmp.eq.s32.totalorder %s30, 1
    %p363 = scmp.ne.s32.totalorder %s358, %s360
    %p364 = scmp.eq.s32.totalorder %s30, 0
    %p365 = por %p363, %p364
    %p366 = scmp.ne.s32.totalorder %s358, %s360
    %p367 = scmp.eq.s32.totalorder %s35, 1
    %p368 = por %p366, %p367
    %p369 = scmp.ne.s32.totalorder %s360, %s361
    %p370 = scmp.eq.s32.totalorder %s35, 0
    %p371 = por %p369, %p370
    %p372 = scmp.ne.s32.totalorder %s360, %s361
    %p373 = scmp.eq.s32.totalorder %s36, 1
    %p374 = por %p372, %p373
    %p376 = scmp.ne.s32.totalorder %s361, %s375
    %p377 = scmp.eq.s32.totalorder %s36, 0
    %p378 = por %p376, %p377
    %s380 = sadd.s32 %s379, 1
    %p383 = scmp.eq.s32.totalorder %s30, 1
    %p384 = scmp.ne.s32.totalorder %s379, %s381
    %p385 = scmp.eq.s32.totalorder %s30, 0
    %p386 = por %p384, %p385
    %p387 = scmp.ne.s32.totalorder %s379, %s381
    %p388 = scmp.eq.s32.totalorder %s35, 1
    %p389 = por %p387, %p388
    %p390 = scmp.ne.s32.totalorder %s381, %s382
    %p391 = scmp.eq.s32.totalorder %s35, 0
    %p392 = por %p390, %p391
    %p393 = scmp.ne.s32.totalorder %s381, %s382
    %p394 = scmp.eq.s32.totalorder %s36, 1
    %p395 = por %p393, %p394
    %p397 = scmp.ne.s32.totalorder %s382, %s396
    %p398 = scmp.eq.s32.totalorder %s36, 0
    %p399 = por %p397, %p398
    %s401 = sadd.s32 %s400, 1
    %p404 = scmp.eq.s32.totalorder %s30, 1
    %p405 = scmp.ne.s32.totalorder %s400, %s402
    %p406 = scmp.eq.s32.totalorder %s30, 0
    %p407 = por %p405, %p406
    %p408 = scmp.ne.s32.totalorder %s400, %s402
    %p409 = scmp.eq.s32.totalorder %s35, 1
    %p410 = por %p408, %p409
    %p411 = scmp.ne.s32.totalorder %s402, %s403
    %p412 = scmp.eq.s32.totalorder %s35, 0
    %p413 = por %p411, %p412
    %p414 = scmp.ne.s32.totalorder %s402, %s403
    %p415 = scmp.eq.s32.totalorder %s36, 1
    %p416 = por %p414, %p415
    %p418 = scmp.ne.s32.totalorder %s403, %s417
    %p419 = scmp.eq.s32.totalorder %s36, 0
    %p420 = por %p418, %p419
    %s422 = sadd.s32 %s421, 1
    %p425 = scmp.eq.s32.totalorder %s30, 1
    %p426 = scmp.ne.s32.totalorder %s421, %s423
    %p427 = scmp.eq.s32.totalorder %s30, 0
    %p428 = por %p426, %p427
    %p429 = scmp.ne.s32.totalorder %s421, %s423
    %p430 = scmp.eq.s32.totalorder %s35, 1
    %p431 = por %p429, %p430
    %p432 = scmp.ne.s32.totalorder %s423, %s424
    %p433 = scmp.eq.s32.totalorder %s35, 0
    %p434 = por %p432, %p433
    %p435 = scmp.ne.s32.totalorder %s423, %s424
    %p436 = scmp.eq.s32.totalorder %s36, 1
    %p437 = por %p435, %p436
    %p439 = scmp.ne.s32.totalorder %s424, %s438
    %p440 = scmp.eq.s32.totalorder %s36, 0
    %p441 = por %p439, %p440
    %s443 = sadd.s32 %s442, 1
    %p446 = scmp.eq.s32.totalorder %s30, 1
    %p447 = scmp.ne.s32.totalorder %s442, %s444
    %p448 = scmp.eq.s32.totalorder %s30, 0
    %p449 = por %p447, %p448
    %p450 = scmp.ne.s32.totalorder %s442, %s444
    %p451 = scmp.eq.s32.totalorder %s35, 1
    %p452 = por %p450, %p451
    %p453 = scmp.ne.s32.totalorder %s444, %s445
    %p454 = scmp.eq.s32.totalorder %s35, 0
    %p455 = por %p453, %p454
    %p456 = scmp.ne.s32.totalorder %s444, %s445
    %p457 = scmp.eq.s32.totalorder %s36, 1
    %p458 = por %p456, %p457
    %p460 = scmp.ne.s32.totalorder %s445, %s459
    %p461 = scmp.eq.s32.totalorder %s36, 0
    %p462 = por %p460, %p461
    %s464 = sadd.s32 %s463, 1
    %p467 = scmp.eq.s32.totalorder %s30, 1
    %p468 = scmp.ne.s32.totalorder %s463, %s465
    %p469 = scmp.eq.s32.totalorder %s30, 0
    %p470 = por %p468, %p469
    %p471 = scmp.ne.s32.totalorder %s463, %s465
    %p472 = scmp.eq.s32.totalorder %s35, 1
    %p473 = por %p471, %p472
    %p474 = scmp.ne.s32.totalorder %s465, %s466
    %p475 = scmp.eq.s32.totalorder %s35, 0
    %p476 = por %p474, %p475
    %p477 = scmp.ne.s32.totalorder %s465, %s466
    %p478 = scmp.eq.s32.totalorder %s36, 1
    %p479 = por %p477, %p478
    %p481 = scmp.ne.s32.totalorder %s466, %s480
    %p482 = scmp.eq.s32.totalorder %s36, 0
    %p483 = por %p481, %p482
    %s485 = sadd.s32 %s484, 1
    %p488 = scmp.eq.s32.totalorder %s30, 1
    %p489 = scmp.ne.s32.totalorder %s484, %s486
    %p490 = scmp.eq.s32.totalorder %s30, 0
    %p491 = por %p489, %p490
    %p492 = scmp.ne.s32.totalorder %s484, %s486
    %p493 = scmp.eq.s32.totalorder %s35, 1
    %p494 = por %p492, %p493
    %p495 = scmp.ne.s32.totalorder %s486, %s487
    %p496 = scmp.eq.s32.totalorder %s35, 0
    %p497 = por %p495, %p496
    %p498 = scmp.ne.s32.totalorder %s486, %s487
    %p499 = scmp.eq.s32.totalorder %s36, 1
    %p500 = por %p498, %p499
    %p502 = scmp.ne.s32.totalorder %s487, %s501
    %p503 = scmp.eq.s32.totalorder %s36, 0
    %p504 = por %p502, %p503
    %s506 = sadd.s32 %s505, 1
    %p509 = scmp.eq.s32.totalorder %s30, 1
    %p510 = scmp.ne.s32.totalorder %s505, %s507
    %p511 = scmp.eq.s32.totalorder %s30, 0
    %p512 = por %p510, %p511
    %p513 = scmp.ne.s32.totalorder %s505, %s507
    %p514 = scmp.eq.s32.totalorder %s35, 1
    %p515 = por %p513, %p514
    %p516 = scmp.ne.s32.totalorder %s507, %s508
    %p517 = scmp.eq.s32.totalorder %s35, 0
    %p518 = por %p516, %p517
    %p519 = scmp.ne.s32.totalorder %s507, %s508
    %p520 = scmp.eq.s32.totalorder %s36, 1
    %p521 = por %p519, %p520
    %p523 = scmp.ne.s32.totalorder %s508, %s522
    %p524 = scmp.eq.s32.totalorder %s36, 0
    %p525 = por %p523, %p524
    %s527 = sadd.s32 %s526, 1
    %p530 = scmp.eq.s32.totalorder %s30, 1
    %p531 = scmp.ne.s32.totalorder %s526, %s528
    %p532 = scmp.eq.s32.totalorder %s30, 0
    %p533 = por %p531, %p532
    %p534 = scmp.ne.s32.totalorder %s526, %s528
    %p535 = scmp.eq.s32.totalorder %s35, 1
    %p536 = por %p534, %p535
    %p537 = scmp.ne.s32.totalorder %s528, %s529
    %p538 = scmp.eq.s32.totalorder %s35, 0
    %p539 = por %p537, %p538
    %p540 = scmp.ne.s32.totalorder %s528, %s529
    %p541 = scmp.eq.s32.totalorder %s36, 1
    %p542 = por %p540, %p541
    %p544 = scmp.ne.s32.totalorder %s529, %s543
    %p545 = scmp.eq.s32.totalorder %s36, 0
    %p546 = por %p544, %p545
    %s547 = ssub.s32 %s30, %s37
    %p548 = scmp.eq.s32.totalorder %s547, 0
    %s550 = sadd.s32 %s549, 1
    %s551 = scalar_select %p548, %s549, %s550
    %p554 = pneg %p548
    %p555 = scmp.eq.s32.totalorder %s30, 1
    %p556 = por %p554, %p555
    %p557 = scmp.ne.s32.totalorder %s549, %s552
    %p558 = scmp.eq.s32.totalorder %s30, 0
    %p559 = por %p557, %p558
    %p560 = scmp.ne.s32.totalorder %s549, %s552
    %p561 = scmp.eq.s32.totalorder %s35, 1
    %p562 = por %p560, %p561
    %p563 = scmp.ne.s32.totalorder %s552, %s553
    %p564 = scmp.eq.s32.totalorder %s35, 0
    %p565 = por %p563, %p564
    %p566 = scmp.ne.s32.totalorder %s552, %s553
    %p567 = scmp.eq.s32.totalorder %s36, 1
    %p568 = por %p566, %p567
    %p570 = scmp.ne.s32.totalorder %s553, %s569
    %p571 = scmp.eq.s32.totalorder %s36, 0
    %p572 = por %p570, %p571
    %p573 = scmp.le.s32.totalorder 1, %s30
    %p574 = scmp.lt.s32.totalorder %s30, 3
    %p575 = pnand %p573, %p574
    %p576 = pneg %p575
    // Predicated region
    $region9: #{_features.1} parent=5 // pred_check
      _
    $region10: #{_features.1} parent=5 // pred_check_branch
      %578 = sbr.rel (%p575) target = $region12
    $region11: #{_features.1} parent=5 // pred_region
      %s579 = ssub.s32 %s30, 1
      // Predicated region
      $region13: #{_features.1} parent=11 // pred_check
        %p580 = pneg %p77
      $region14: #{_features.1} parent=11 // pred_check_branch
        %582 = sbr.rel (%p580) target = $region16
      $region15: #{_features.1} parent=11 // pred_region
        _
      $region16: #{_features.1} parent=11 // pred_fallthru
        _
      // Predicated region
      $region17: #{_features.1} parent=11 // pred_check
        %p583 = pneg %p98
      $region18: #{_features.1} parent=11 // pred_check_branch
        %585 = sbr.rel (%p583) target = $region20
      $region19: #{_features.1} parent=11 // pred_region
        _
      $region20: #{_features.1} parent=11 // pred_fallthru
        _
      // Predicated region
      $region21: #{_features.1} parent=11 // pred_check
        %p586 = pneg %p119
      $region22: #{_features.1} parent=11 // pred_check_branch
        %588 = sbr.rel (%p586) target = $region24
      $region23: #{_features.1} parent=11 // pred_region
        _
      $region24: #{_features.1} parent=11 // pred_fallthru
        _
      // Predicated region
      $region25: #{_features.1} parent=11 // pred_check
        %p589 = pneg %p140
      $region26: #{_features.1} parent=11 // pred_check_branch
        %591 = sbr.rel (%p589) target = $region28
      $region27: #{_features.1} parent=11 // pred_region
        _
      $region28: #{_features.1} parent=11 // pred_fallthru
        _
      // Predicated region
      $region29: #{_features.1} parent=11 // pred_check
        %p592 = pneg %p161
      $region30: #{_features.1} parent=11 // pred_check_branch
        %594 = sbr.rel (%p592) target = $region32
      $region31: #{_features.1} parent=11 // pred_region
        _
      $region32: #{_features.1} parent=11 // pred_fallthru
        _
      // Predicated region
      $region33: #{_features.1} parent=11 // pred_check
        %p595 = pneg %p182
      $region34: #{_features.1} parent=11 // pred_check_branch
        %597 = sbr.rel (%p595) target = $region36
      $region35: #{_features.1} parent=11 // pred_region
        _
      $region36: #{_features.1} parent=11 // pred_fallthru
        _
      // Predicated region
      $region37: #{_features.1} parent=11 // pred_check
        %p598 = pneg %p203
      $region38: #{_features.1} parent=11 // pred_check_branch
        %600 = sbr.rel (%p598) target = $region40
      $region39: #{_features.1} parent=11 // pred_region
        _
      $region40: #{_features.1} parent=11 // pred_fallthru
        _
      // Predicated region
      $region41: #{_features.1} parent=11 // pred_check
        %p601 = pneg %p224
      $region42: #{_features.1} parent=11 // pred_check_branch
        %603 = sbr.rel (%p601) target = $region44
      $region43: #{_features.1} parent=11 // pred_region
        _
      $region44: #{_features.1} parent=11 // pred_fallthru
        _
      // Predicated region
      $region45: #{_features.1} parent=11 // pred_check
        %p604 = pneg %p245
      $region46: #{_features.1} parent=11 // pred_check_branch
        %606 = sbr.rel (%p604) target = $region48
      $region47: #{_features.1} parent=11 // pred_region
        _
      $region48: #{_features.1} parent=11 // pred_fallthru
        _
      // Predicated region
      $region49: #{_features.1} parent=11 // pred_check
        %p607 = pneg %p266
      $region50: #{_features.1} parent=11 // pred_check_branch
        %609 = sbr.rel (%p607) target = $region52
      $region51: #{_features.1} parent=11 // pred_region
        _
      $region52: #{_features.1} parent=11 // pred_fallthru
        _
      // Predicated region
      $region53: #{_features.1} parent=11 // pred_check
        %p610 = pneg %p287
      $region54: #{_features.1} parent=11 // pred_check_branch
        %612 = sbr.rel (%p610) target = $region56
      $region55: #{_features.1} parent=11 // pred_region
        _
      $region56: #{_features.1} parent=11 // pred_fallthru
        _
      // Predicated region
      $region57: #{_features.1} parent=11 // pred_check
        %p613 = pneg %p308
      $region58: #{_features.1} parent=11 // pred_check_branch
        %615 = sbr.rel (%p613) target = $region60
      $region59: #{_features.1} parent=11 // pred_region
        _
      $region60: #{_features.1} parent=11 // pred_fallthru
        _
      // Predicated region
      $region61: #{_features.1} parent=11 // pred_check
        %p616 = pneg %p329
      $region62: #{_features.1} parent=11 // pred_check_branch
        %618 = sbr.rel (%p616) target = $region64
      $region63: #{_features.1} parent=11 // pred_region
        _
      $region64: #{_features.1} parent=11 // pred_fallthru
        _
      // Predicated region
      $region65: #{_features.1} parent=11 // pred_check
        %p619 = pneg %p350
      $region66: #{_features.1} parent=11 // pred_check_branch
        %621 = sbr.rel (%p619) target = $region68
      $region67: #{_features.1} parent=11 // pred_region
        _
      $region68: #{_features.1} parent=11 // pred_fallthru
        _
      // Predicated region
      $region69: #{_features.1} parent=11 // pred_check
        %p622 = pneg %p371
      $region70: #{_features.1} parent=11 // pred_check_branch
        %624 = sbr.rel (%p622) target = $region72
      $region71: #{_features.1} parent=11 // pred_region
        _
      $region72: #{_features.1} parent=11 // pred_fallthru
        _
      // Predicated region
      $region73: #{_features.1} parent=11 // pred_check
        %p625 = pneg %p392
      $region74: #{_features.1} parent=11 // pred_check_branch
        %627 = sbr.rel (%p625) target = $region76
      $region75: #{_features.1} parent=11 // pred_region
        _
      $region76: #{_features.1} parent=11 // pred_fallthru
        _
      // Predicated region
      $region77: #{_features.1} parent=11 // pred_check
        %p628 = pneg %p413
      $region78: #{_features.1} parent=11 // pred_check_branch
        %630 = sbr.rel (%p628) target = $region80
      $region79: #{_features.1} parent=11 // pred_region
        _
      $region80: #{_features.1} parent=11 // pred_fallthru
        _
      // Predicated region
      $region81: #{_features.1} parent=11 // pred_check
        %p631 = pneg %p434
      $region82: #{_features.1} parent=11 // pred_check_branch
        %633 = sbr.rel (%p631) target = $region84
      $region83: #{_features.1} parent=11 // pred_region
        _
      $region84: #{_features.1} parent=11 // pred_fallthru
        _
      // Predicated region
      $region85: #{_features.1} parent=11 // pred_check
        %p634 = pneg %p455
      $region86: #{_features.1} parent=11 // pred_check_branch
        %636 = sbr.rel (%p634) target = $region88
      $region87: #{_features.1} parent=11 // pred_region
        _
      $region88: #{_features.1} parent=11 // pred_fallthru
        _
      // Predicated region
      $region89: #{_features.1} parent=11 // pred_check
        %p637 = pneg %p476
      $region90: #{_features.1} parent=11 // pred_check_branch
        %639 = sbr.rel (%p637) target = $region92
      $region91: #{_features.1} parent=11 // pred_region
        _
      $region92: #{_features.1} parent=11 // pred_fallthru
        _
      // Predicated region
      $region93: #{_features.1} parent=11 // pred_check
        %p640 = pneg %p497
      $region94: #{_features.1} parent=11 // pred_check_branch
        %642 = sbr.rel (%p640) target = $region96
      $region95: #{_features.1} parent=11 // pred_region
        _
      $region96: #{_features.1} parent=11 // pred_fallthru
        _
      // Predicated region
      $region97: #{_features.1} parent=11 // pred_check
        %p643 = pneg %p518
      $region98: #{_features.1} parent=11 // pred_check_branch
        %645 = sbr.rel (%p643) target = $region100
      $region99: #{_features.1} parent=11 // pred_region
        _
      $region100: #{_features.1} parent=11 // pred_fallthru
        _
      // Predicated region
      $region101: #{_features.1} parent=11 // pred_check
        %p646 = pneg %p539
      $region102: #{_features.1} parent=11 // pred_check_branch
        %648 = sbr.rel (%p646) target = $region104
      $region103: #{_features.1} parent=11 // pred_region
        _
      $region104: #{_features.1} parent=11 // pred_fallthru
        _
    $region12: #{_features.1} parent=5 // pred_fallthru
      _
    %p649 = scmp.lt.s32.totalorder %s30, 2
    // Predicated region
    $region105: #{_features.1} parent=5 // pred_check
      %p650 = pneg %p649
    $region106: #{_features.1} parent=5 // pred_check_branch
      %652 = sbr.rel (%p650) target = $region108
    $region107: #{_features.1} parent=5 // pred_region
      // Predicated region
      $region109: #{_features.1} parent=107 // pred_check
        %p653 = pneg %p50
      $region110: #{_features.1} parent=107 // pred_check_branch
        %655 = sbr.rel (%p653) target = $region112
      $region111: #{_features.1} parent=107 // pred_region
        %p656 = scmp.lt.s32.totalorder %s30, 1
        %s657 = scalar_select %p656, %s30, 1
        %s658 = smul.addr %s657, 12
        %s659 = smul.addr %s658, 8
        %s660 = scalar_lea.vmem %s0, %s659
      $region112: #{_features.1} parent=107 // pred_fallthru
        _
    $region108: #{_features.1} parent=5 // pred_fallthru
      _
    %p661 = scmp.le.s32.totalorder 1, %s30
    %p662 = scmp.lt.s32.totalorder %s30, 3
    %p663 = pnand %p661, %p662
    %p664 = pneg %p663
    // Predicated region
    $region113: #{_features.1} parent=5 // pred_check
      _
    $region114: #{_features.1} parent=5 // pred_check_branch
      %666 = sbr.rel (%p663) target = $region116
    $region115: #{_features.1} parent=5 // pred_region
      %s667 = ssub.s32 %s30, 1
      %p668 = scmp.lt.s32.totalorder %s35, 1
      %s669 = scalar_select %p668, %s35, 1
      %s670 = smul.addr %s669, 12
      %s671 = smul.addr %s670, 8
      %s672 = scalar_lea.vmem %s0, %s671
      %p673 = pneg %p56
      %p674 = pneg %p53
      %p675 = pneg %p77
      %p676 = pneg %p74
      %p677 = pneg %p98
      %p678 = pneg %p95
      %p679 = pneg %p119
      %p680 = pneg %p116
      %p681 = pneg %p140
      %p682 = pneg %p137
      %p683 = pneg %p161
      %p684 = pneg %p158
      %p685 = pneg %p182
      %p686 = pneg %p179
      %p687 = pneg %p203
      %p688 = pneg %p200
      %p689 = pneg %p224
      %p690 = pneg %p221
      %p691 = pneg %p245
      %p692 = pneg %p242
      %p693 = pneg %p266
      %p694 = pneg %p263
      %p695 = pneg %p287
      %p696 = pneg %p284
      %p697 = pneg %p308
      %p698 = pneg %p305
      %p699 = pneg %p329
      %p700 = pneg %p326
      %p701 = pneg %p350
      %p702 = pneg %p347
      %p703 = pneg %p371
      %p704 = pneg %p368
      %p705 = pneg %p392
      %p706 = pneg %p389
      %p707 = pneg %p413
      %p708 = pneg %p410
      %p709 = pneg %p434
      %p710 = pneg %p431
      %p711 = pneg %p455
      %p712 = pneg %p452
      %p713 = pneg %p476
      %p714 = pneg %p473
      %p715 = pneg %p497
      %p716 = pneg %p494
      %p717 = pneg %p518
      %p718 = pneg %p515
      %p719 = pneg %p539
      %p720 = pneg %p536
      %p721 = pneg %p565
      %p722 = pneg %p562
      %p723 = scmp.lt.s32.totalorder %s35, 1
      %s724 = scalar_select %p723, %s35, 1
      %s725 = smul.addr %s724, 4
      %s726 = scalar_lea.vmem %s24, %s725
      %p727 = scmp.lt.s32.totalorder %s35, 1
      %s728 = scalar_select %p727, %s35, 1
      %s729 = smul.addr %s728, 12
      %s730 = smul.addr %s729, 8
      %s731 = scalar_lea.vmem %s0, %s730
      %p732 = scmp.lt.s32.totalorder %s35, 1
      %s733 = scalar_select %p732, %s35, 1
      %s734 = smul.addr %s733, 4
      %s735 = scalar_lea.vmem %s24, %s734
      %v736 = vld [vmem:[%s731] sm:$0xff]
      %v737 = vld [vmem:[%s731 + $0x8] sm:$0xff]
      %v738 = vld [vmem:[%s731 + $0x10] sm:$0xff]
      %v739 = vld [vmem:[%s731 + $0x18] sm:$0xff]
      %v740 = vld [vmem:[%s731 + $0x20] sm:$0xff]
      %v741 = vld [vmem:[%s731 + $0x28] sm:$0xff]
      %v742 = vld [vmem:[%s731 + $0x30] sm:$0xf]
      %v743 = vld [vmem:[%s731 + $0x38] sm:$0xf]
      %v744 = vld [vmem:[%s731 + $0x40] sm:$0xf]
      %v745 = vld [vmem:[%s731 + $0x48] sm:$0xf]
      %v746 = vld [vmem:[%s731 + $0x50] sm:$0xf]
      %v747 = vld [vmem:[%s731 + $0x58] sm:$0xf]
      %v748 = vld [vmem:[%s1] sm:$0xff]
      %v749 = vld [vmem:[%s1 + $0x8] sm:$0xff]
      %v750 = vld [vmem:[%s1 + $0x10] sm:$0xff]
      %v751 = vld [vmem:[%s1 + $0x18] sm:$0xff]
      %v752 = vld [vmem:[%s1 + $0x20] sm:$0xff]
      %v753 = vld [vmem:[%s1 + $0x28] sm:$0xff]
      %v754 = vld [vmem:[%s1 + $0x30] sm:$0xff]
      %v755 = vld [vmem:[%s1 + $0x38] sm:$0xff]
      %v756 = vld [vmem:[%s1 + $0x40] sm:$0xff]
      %v757 = vld [vmem:[%s1 + $0x48] sm:$0xff]
      %v758 = vld [vmem:[%s1 + $0x50] sm:$0xff]
      %v759 = vld [vmem:[%s1 + $0x58] sm:$0xff]
      %v760 = vld [vmem:[%s1 + $0x60] sm:$0xff]
      %v761 = vld [vmem:[%s1 + $0x68] sm:$0xff]
      %v762 = vld [vmem:[%s1 + $0x70] sm:$0xff]
      %v763 = vld [vmem:[%s1 + $0x78] sm:$0xff]
      %v764 = vld [vmem:[%s1 + $0x80] sm:$0xff]
      %v765 = vld [vmem:[%s1 + $0x88] sm:$0xff]
      %v766 = vld [vmem:[%s1 + $0x90] sm:$0xff]
      %v767 = vld [vmem:[%s1 + $0x98] sm:$0xff]
      %v768 = vld [vmem:[%s1 + $0xa0] sm:$0xff]
      %v769 = vld [vmem:[%s1 + $0xa8] sm:$0xff]
      %v770 = vld [vmem:[%s1 + $0xb0] sm:$0xff]
      %v771 = vld [vmem:[%s1 + $0xb8] sm:$0xff]
      %v772 = vld [vmem:[%s1 + $0xc0] sm:$0xff]
      %v773 = vld [vmem:[%s1 + $0xc8] sm:$0xff]
      %v774 = vld [vmem:[%s1 + $0xd0] sm:$0xff]
      %v775 = vld [vmem:[%s1 + $0xd8] sm:$0xff]
      %v776 = vld [vmem:[%s1 + $0xe0] sm:$0xff]
      %v777 = vld [vmem:[%s1 + $0xe8] sm:$0xff]
      %v778 = vld [vmem:[%s1 + $0xf0] sm:$0xff]
      %v779 = vld [vmem:[%s1 + $0xf8] sm:$0xff]
      %v780 = vld [vmem:[%s1 + $0x100] sm:$0xff]
      %v781 = vld [vmem:[%s1 + $0x108] sm:$0xff]
      %v782 = vld [vmem:[%s1 + $0x110] sm:$0xff]
      %v783 = vld [vmem:[%s1 + $0x118] sm:$0xff]
      %v784 = vld [vmem:[%s1 + $0x120] sm:$0xff]
      %v785 = vld [vmem:[%s1 + $0x128] sm:$0xff]
      %v786 = vld [vmem:[%s1 + $0x130] sm:$0xff]
      %v787 = vld [vmem:[%s1 + $0x138] sm:$0xff]
      %v788 = vld [vmem:[%s1 + $0x140] sm:$0xff]
      %v789 = vld [vmem:[%s1 + $0x148] sm:$0xff]
      %v790 = vld [vmem:[%s1 + $0x150] sm:$0xff]
      %v791 = vld [vmem:[%s1 + $0x158] sm:$0xff]
      %v792 = vld [vmem:[%s1 + $0x160] sm:$0xff]
      %v793 = vld [vmem:[%s1 + $0x168] sm:$0xff]
      %v794 = vld [vmem:[%s1 + $0x170] sm:$0xff]
      %v795 = vld [vmem:[%s1 + $0x178] sm:$0xff]
      %v796 = vld [vmem:[%s1 + $0x180] sm:$0xff]
      %v797 = vld [vmem:[%s1 + $0x188] sm:$0xff]
      %v798 = vld [vmem:[%s1 + $0x190] sm:$0xff]
      %v799 = vld [vmem:[%s1 + $0x198] sm:$0xff]
      %v800 = vld [vmem:[%s1 + $0x1a0] sm:$0xff]
      %v801 = vld [vmem:[%s1 + $0x1a8] sm:$0xff]
      %v802 = vld [vmem:[%s1 + $0x1b0] sm:$0xff]
      %v803 = vld [vmem:[%s1 + $0x1b8] sm:$0xff]
      %v804 = vld [vmem:[%s1 + $0x1c0] sm:$0xff]
      %v805 = vld [vmem:[%s1 + $0x1c8] sm:$0xff]
      %v806 = vld [vmem:[%s1 + $0x1d0] sm:$0xff]
      %v807 = vld [vmem:[%s1 + $0x1d8] sm:$0xff]
      %v808 = vld [vmem:[%s1 + $0x1e0] sm:$0xff]
      %v809 = vld [vmem:[%s1 + $0x1e8] sm:$0xff]
      %v810 = vld [vmem:[%s1 + $0x1f0] sm:$0xff]
      %v811 = vld [vmem:[%s1 + $0x1f8] sm:$0xff]
      %v812 = vld [vmem:[%s1 + $0x200] sm:$0xff]
      %v813 = vld [vmem:[%s1 + $0x208] sm:$0xff]
      %v814 = vld [vmem:[%s1 + $0x210] sm:$0xff]
      %v815 = vld [vmem:[%s1 + $0x218] sm:$0xff]
      %v816 = vld [vmem:[%s1 + $0x220] sm:$0xff]
      %v817 = vld [vmem:[%s1 + $0x228] sm:$0xff]
      %v818 = vld [vmem:[%s1 + $0x230] sm:$0xff]
      %v819 = vld [vmem:[%s1 + $0x238] sm:$0xff]
      %v820 = vld [vmem:[%s1 + $0x240] sm:$0xff]
      %v821 = vld [vmem:[%s1 + $0x248] sm:$0xff]
      %v822 = vld [vmem:[%s1 + $0x250] sm:$0xff]
      %v823 = vld [vmem:[%s1 + $0x258] sm:$0xff]
      %v824 = vld [vmem:[%s1 + $0x260] sm:$0xff]
      %v825 = vld [vmem:[%s1 + $0x268] sm:$0xff]
      %v826 = vld [vmem:[%s1 + $0x270] sm:$0xff]
      %v827 = vld [vmem:[%s1 + $0x278] sm:$0xff]
      %v828 = vld [vmem:[%s1 + $0x280] sm:$0xff]
      %v829 = vld [vmem:[%s1 + $0x288] sm:$0xff]
      %v830 = vld [vmem:[%s1 + $0x290] sm:$0xff]
      %v831 = vld [vmem:[%s1 + $0x298] sm:$0xff]
      %v832 = vld [vmem:[%s1 + $0x2a0] sm:$0xff]
      %v833 = vld [vmem:[%s1 + $0x2a8] sm:$0xff]
      %v834 = vld [vmem:[%s1 + $0x2b0] sm:$0xff]
      %v835 = vld [vmem:[%s1 + $0x2b8] sm:$0xff]
      %v836 = vld [vmem:[%s1 + $0x2c0] sm:$0xff]
      %v837 = vld [vmem:[%s1 + $0x2c8] sm:$0xff]
      %v838 = vld [vmem:[%s1 + $0x2d0] sm:$0xff]
      %v839 = vld [vmem:[%s1 + $0x2d8] sm:$0xff]
      %v840 = vld [vmem:[%s1 + $0x2e0] sm:$0xff]
      %v841 = vld [vmem:[%s1 + $0x2e8] sm:$0xff]
      %v842 = vld [vmem:[%s1 + $0x2f0] sm:$0xff]
      %v843 = vld [vmem:[%s1 + $0x2f8] sm:$0xff]
      %844 = vmatprep.subr.mxu0 0.0
      %845 = vmatpush1.msra.mxu0 %v748
      %846 = vmatprep.subr.mxu0 0.0
      %847 = vmatpush1.msra.mxu0 %v749
      %848 = vmatprep.subr.mxu0 0.0
      %849 = vmatpush1.msra.mxu0 %v750
      %850 = vmatprep.subr.mxu0 0.0
      %851 = vmatpush1.msra.mxu0 %v751
      %852 = vmatprep.subr.mxu0 0.0
      %853 = vmatpush1.msra.mxu0 %v752
      %854 = vmatprep.subr.mxu0 0.0
      %855 = vmatpush1.msra.mxu0 %v753
      %856 = vmatprep.subr.mxu0 0.0
      %857 = vmatpush1.msra.mxu0 %v754
      %858 = vmatprep.subr.mxu0 0.0
      %859 = vmatpush1.msra.mxu0 %v755
      %860 = vmatprep.subr.mxu0 0.0
      %861 = vmatpush1.msra.mxu0 %v756
      %862 = vmatprep.subr.mxu0 0.0
      %863 = vmatpush1.msra.mxu0 %v757
      %864 = vmatprep.subr.mxu0 0.0
      %865 = vmatpush1.msra.mxu0 %v758
      %866 = vmatprep.subr.mxu0 0.0
      %867 = vmatpush1.msra.mxu0 %v759
      %868 = vmatprep.subr.mxu0 0.0
      %869 = vmatpush1.msra.mxu0 %v760
      %870 = vmatprep.subr.mxu0 0.0
      %871 = vmatpush1.msra.mxu0 %v761
      %872 = vmatprep.subr.mxu0 0.0
      %873 = vmatpush1.msra.mxu0 %v762
      %874 = vmatprep.subr.mxu0 0.0
      %875 = vmatpush1.msra.mxu0 %v763
      %876 = vmatprep.subr.mxu0 0.0
      %877 = vmatpush1.msra.mxu0 %v764
      %878 = vmatprep.subr.mxu0 0.0
      %879 = vmatpush1.msra.mxu0 %v765
      %880 = vmatprep.subr.mxu0 0.0
      %881 = vmatpush1.msra.mxu0 %v766
      %882 = vmatprep.subr.mxu0 0.0
      %883 = vmatpush1.msra.mxu0 %v767
      %884 = vmatprep.subr.mxu0 0.0
      %885 = vmatpush1.msra.mxu0 %v768
      %886 = vmatprep.subr.mxu0 0.0
      %887 = vmatpush1.msra.mxu0 %v769
      %888 = vmatprep.subr.mxu0 0.0
      %889 = vmatpush1.msra.mxu0 %v770
      %890 = vmatprep.subr.mxu0 0.0
      %891 = vmatpush1.msra.mxu0 %v771
      %892 = vmatprep.subr.mxu0 0.0
      %893 = vmatpush1.msra.mxu0 %v772
      %894 = vmatprep.subr.mxu0 0.0
      %895 = vmatpush1.msra.mxu0 %v773
      %896 = vmatprep.subr.mxu0 0.0
      %897 = vmatpush1.msra.mxu0 %v774
      %898 = vmatprep.subr.mxu0 0.0
      %899 = vmatpush1.msra.mxu0 %v775
      %900 = vmatprep.subr.mxu0 0.0
      %901 = vmatpush1.msra.mxu0 %v776
      %902 = vmatprep.subr.mxu0 0.0
      %903 = vmatpush1.msra.mxu0 %v777
      %904 = vmatprep.subr.mxu0 0.0
      %905 = vmatpush1.msra.mxu0 %v778
      %906 = vmatprep.subr.mxu0 0.0
      %907 = vmatpush1.msra.mxu0 %v779
      %908 = vmatprep.mubr.f32.mxu0 %v737
      %909 = vmatmul.mubr.f32.gmra.mrb[0].mxu0 %v736
      %v910 = vpop.f32.mrb[0].mxu0
      %v911 = vadd.f32 0.0, %v910
      %v912 = vpop.f32.mrb[0].mxu0
      %913 = vmatprep.mubr.f32.mxu0 %v743
      %914 = vmatmul.mubr.f32.gmra.mrb[0].mxu0 %v742
      %v915 = vpop.f32.mrb[0].mxu0
      %v916 = vadd.f32 0.0, %v915
      %v917 = vpop.f32.mrb[0].mxu0
      %918 = vdwg.mxu0
      %919 = vmatprep.subr.mxu0 0.0
      %920 = vmatpush1.msra.mxu0 %v780
      %921 = vmatprep.subr.mxu0 0.0
      %922 = vmatpush1.msra.mxu0 %v781
      %923 = vmatprep.subr.mxu0 0.0
      %924 = vmatpush1.msra.mxu0 %v782
      %925 = vmatprep.subr.mxu0 0.0
      %926 = vmatpush1.msra.mxu0 %v783
      %927 = vmatprep.subr.mxu0 0.0
      %928 = vmatpush1.msra.mxu0 %v784
      %929 = vmatprep.subr.mxu0 0.0
      %930 = vmatpush1.msra.mxu0 %v785
      %931 = vmatprep.subr.mxu0 0.0
      %932 = vmatpush1.msra.mxu0 %v786
      %933 = vmatprep.subr.mxu0 0.0
      %934 = vmatpush1.msra.mxu0 %v787
      %935 = vmatprep.subr.mxu0 0.0
      %936 = vmatpush1.msra.mxu0 %v788
      %937 = vmatprep.subr.mxu0 0.0
      %938 = vmatpush1.msra.mxu0 %v789
      %939 = vmatprep.subr.mxu0 0.0
      %940 = vmatpush1.msra.mxu0 %v790
      %941 = vmatprep.subr.mxu0 0.0
      %942 = vmatpush1.msra.mxu0 %v791
      %943 = vmatprep.subr.mxu0 0.0
      %944 = vmatpush1.msra.mxu0 %v792
      %945 = vmatprep.subr.mxu0 0.0
      %946 = vmatpush1.msra.mxu0 %v793
      %947 = vmatprep.subr.mxu0 0.0
      %948 = vmatpush1.msra.mxu0 %v794
      %949 = vmatprep.subr.mxu0 0.0
      %950 = vmatpush1.msra.mxu0 %v795
      %951 = vmatprep.subr.mxu0 0.0
      %952 = vmatpush1.msra.mxu0 %v796
      %953 = vmatprep.subr.mxu0 0.0
      %954 = vmatpush1.msra.mxu0 %v797
      %955 = vmatprep.subr.mxu0 0.0
      %956 = vmatpush1.msra.mxu0 %v798
      %957 = vmatprep.subr.mxu0 0.0
      %958 = vmatpush1.msra.mxu0 %v799
      %959 = vmatprep.subr.mxu0 0.0
      %960 = vmatpush1.msra.mxu0 %v800
      %961 = vmatprep.subr.mxu0 0.0
      %962 = vmatpush1.msra.mxu0 %v801
      %963 = vmatprep.subr.mxu0 0.0
      %964 = vmatpush1.msra.mxu0 %v802
      %965 = vmatprep.subr.mxu0 0.0
      %966 = vmatpush1.msra.mxu0 %v803
      %967 = vmatprep.subr.mxu0 0.0
      %968 = vmatpush1.msra.mxu0 %v804
      %969 = vmatprep.subr.mxu0 0.0
      %970 = vmatpush1.msra.mxu0 %v805
      %971 = vmatprep.subr.mxu0 0.0
      %972 = vmatpush1.msra.mxu0 %v806
      %973 = vmatprep.subr.mxu0 0.0
      %974 = vmatpush1.msra.mxu0 %v807
      %975 = vmatprep.subr.mxu0 0.0
      %976 = vmatpush1.msra.mxu0 %v808
      %977 = vmatprep.subr.mxu0 0.0
      %978 = vmatpush1.msra.mxu0 %v809
      %979 = vmatprep.subr.mxu0 0.0
      %980 = vmatpush1.msra.mxu0 %v810
      %981 = vmatprep.subr.mxu0 0.0
      %982 = vmatpush1.msra.mxu0 %v811
      %983 = vmatprep.mubr.f32.mxu0 %v739
      %984 = vmatmul.mubr.f32.gmra.mrb[0].mxu0 %v738
      %v985 = vpop.f32.mrb[0].mxu0
      %v986 = vadd.f32 %v911, %v985
      %v987 = vpop.f32.mrb[0].mxu0
      %988 = vmatprep.mubr.f32.mxu0 %v745
      %989 = vmatmul.mubr.f32.gmra.mrb[0].mxu0 %v744
      %v990 = vpop.f32.mrb[0].mxu0
      %v991 = vadd.f32 %v916, %v990
      %v992 = vpop.f32.mrb[0].mxu0
      %993 = vdwg.mxu0
      %994 = vmatprep.subr.mxu0 0.0
      %995 = vmatpush1.msra.mxu0 %v812
      %996 = vmatprep.subr.mxu0 0.0
      %997 = vmatpush1.msra.mxu0 %v813
      %998 = vmatprep.subr.mxu0 0.0
      %999 = vmatpush1.msra.mxu0 %v814
      %1000 = vmatprep.subr.mxu0 0.0
      %1001 = vmatpush1.msra.mxu0 %v815
      %1002 = vmatprep.subr.mxu0 0.0
      %1003 = vmatpush1.msra.mxu0 %v816
      %1004 = vmatprep.subr.mxu0 0.0
      %1005 = vmatpush1.msra.mxu0 %v817
      %1006 = vmatprep.subr.mxu0 0.0
      %1007 = vmatpush1.msra.mxu0 %v818
      %1008 = vmatprep.subr.mxu0 0.0
      %1009 = vmatpush1.msra.mxu0 %v819
      %1010 = vmatprep.subr.mxu0 0.0
      %1011 = vmatpush1.msra.mxu0 %v820
      %1012 = vmatprep.subr.mxu0 0.0
      %1013 = vmatpush1.msra.mxu0 %v821
      %1014 = vmatprep.subr.mxu0 0.0
      %1015 = vmatpush1.msra.mxu0 %v822
      %1016 = vmatprep.subr.mxu0 0.0
      %1017 = vmatpush1.msra.mxu0 %v823
      %1018 = vmatprep.subr.mxu0 0.0
      %1019 = vmatpush1.msra.mxu0 %v824
      %1020 = vmatprep.subr.mxu0 0.0
      %1021 = vmatpush1.msra.mxu0 %v825
      %1022 = vmatprep.subr.mxu0 0.0
      %1023 = vmatpush1.msra.mxu0 %v826
      %1024 = vmatprep.subr.mxu0 0.0
      %1025 = vmatpush1.msra.mxu0 %v827
      %1026 = vmatprep.subr.mxu0 0.0
      %1027 = vmatpush1.msra.mxu0 %v828
      %1028 = vmatprep.subr.mxu0 0.0
      %1029 = vmatpush1.msra.mxu0 %v829
      %1030 = vmatprep.subr.mxu0 0.0
      %1031 = vmatpush1.msra.mxu0 %v830
      %1032 = vmatprep.subr.mxu0 0.0
      %1033 = vmatpush1.msra.mxu0 %v831
      %1034 = vmatprep.subr.mxu0 0.0
      %1035 = vmatpush1.msra.mxu0 %v832
      %1036 = vmatprep.subr.mxu0 0.0
      %1037 = vmatpush1.msra.mxu0 %v833
      %1038 = vmatprep.subr.mxu0 0.0
      %1039 = vmatpush1.msra.mxu0 %v834
      %1040 = vmatprep.subr.mxu0 0.0
      %1041 = vmatpush1.msra.mxu0 %v835
      %1042 = vmatprep.subr.mxu0 0.0
      %1043 = vmatpush1.msra.mxu0 %v836
      %1044 = vmatprep.subr.mxu0 0.0
      %1045 = vmatpush1.msra.mxu0 %v837
      %1046 = vmatprep.subr.mxu0 0.0
      %1047 = vmatpush1.msra.mxu0 %v838
      %1048 = vmatprep.subr.mxu0 0.0
      %1049 = vmatpush1.msra.mxu0 %v839
      %1050 = vmatprep.subr.mxu0 0.0
      %1051 = vmatpush1.msra.mxu0 %v840
      %1052 = vmatprep.subr.mxu0 0.0
      %1053 = vmatpush1.msra.mxu0 %v841
      %1054 = vmatprep.subr.mxu0 0.0
      %1055 = vmatpush1.msra.mxu0 %v842
      %1056 = vmatprep.subr.mxu0 0.0
      %1057 = vmatpush1.msra.mxu0 %v843
      %1058 = vmatprep.mubr.f32.mxu0 %v741
      %1059 = vmatmul.mubr.f32.gmra.mrb[0].mxu0 %v740
      %v1060 = vpop.f32.mrb[0].mxu0
      %v1061 = vadd.f32 %v986, %v1060
      %v1062 = vpop.f32.mrb[0].mxu0
      %1063 = vmatprep.mubr.f32.mxu0 %v747
      %1064 = vmatmul.mubr.f32.gmra.mrb[0].mxu0 %v746
      %v1065 = vpop.f32.mrb[0].mxu0
      %v1066 = vadd.f32 %v991, %v1065
      %v1067 = vpop.f32.mrb[0].mxu0
      %1068 = vdwg.mxu0
      %v1070 = vcombine.high %v1061, %v1061
      %v1072 = vld [vmem:[%s3] sm:$0xf]
      %v1073 = vadd.f32 %v1061, %v1072
      %v1074 = vadd.f32 %v1070, %v1072
      %v1075 = vadd.f32 %v1066, %v1072
      %v1076 = vld [vmem:[%s2] sm:$0x1]
      %v1080 = vrot.slane %v1073, 7
      %v1081 = vrot.slane %v1074, 7
      %v1082 = vrot.slane %v1075, 7
      %vm1086 = vcmask 1040384
      %v1087 = vsel %vm1086, %v1076, %v1080
      %v1088 = vsel %vm1086, %v1076, %v1081
      %v1089 = vsel %vm1086, %v1076, %v1082
      %v1093 = vcombine.high %v1087, %v1087
      %v1095 = vunpack.c.l.s4 1966171168
      %v1096 = vunpack.c.0.s8 %v1095
      %v1097 = vlaneseq
      %v1098 = vshrl.u32 %v1097, 7
      %v1099 = vsub.s32 %v1096, %v1098
      %v1100 = vrot.slane %v1087, %v1099
      %v1102 = vunpack.c.l.s4 1966171168
      %v1103 = vunpack.c.0.s8 %v1102
      %v1104 = vlaneseq
      %v1105 = vshrl.u32 %v1104, 7
      %v1106 = vsub.s32 %v1103, %v1105
      %v1107 = vrot.slane %v1093, %v1106
      %v1108 = vcombine.high %v1100, %v1100
      %v1110 = vunpack.c.l.s4 1966171168
      %v1111 = vunpack.c.0.s8 %v1110
      %v1112 = vlaneseq
      %v1113 = vshrl.u32 %v1112, 7
      %v1114 = vsub.s32 %v1111, %v1113
      %v1115 = vrot.slane %v1100, %v1114
      %v1117 = vunpack.c.l.s4 1966171168
      %v1118 = vunpack.c.0.s8 %v1117
      %v1119 = vlaneseq
      %v1120 = vshrl.u32 %v1119, 7
      %v1121 = vsub.s32 %v1118, %v1120
      %v1122 = vrot.slane %v1107, %v1121
      %v1124 = vunpack.c.l.s4 1966171168
      %v1125 = vunpack.c.0.s8 %v1124
      %v1126 = vlaneseq
      %v1127 = vshrl.u32 %v1126, 7
      %v1128 = vsub.s32 %v1125, %v1127
      %v1129 = vrot.slane %v1108, %v1128
      %v1130 = vcombine.high %v1115, %v1115
      %v1131 = vcombine.high %v1129, %v1129
      %v1132 = vcombine.high %v1088, %v1088
      %v1134 = vunpack.c.l.s4 1966171168
      %v1135 = vunpack.c.0.s8 %v1134
      %v1136 = vlaneseq
      %v1137 = vshrl.u32 %v1136, 7
      %v1138 = vsub.s32 %v1135, %v1137
      %v1139 = vrot.slane %v1088, %v1138
      %v1141 = vunpack.c.l.s4 1966171168
      %v1142 = vunpack.c.0.s8 %v1141
      %v1143 = vlaneseq
      %v1144 = vshrl.u32 %v1143, 7
      %v1145 = vsub.s32 %v1142, %v1144
      %v1146 = vrot.slane %v1132, %v1145
      %v1147 = vcombine.high %v1139, %v1139
      %v1149 = vunpack.c.l.s4 1966171168
      %v1150 = vunpack.c.0.s8 %v1149
      %v1151 = vlaneseq
      %v1152 = vshrl.u32 %v1151, 7
      %v1153 = vsub.s32 %v1150, %v1152
      %v1154 = vrot.slane %v1139, %v1153
      %v1156 = vunpack.c.l.s4 1966171168
      %v1157 = vunpack.c.0.s8 %v1156
      %v1158 = vlaneseq
      %v1159 = vshrl.u32 %v1158, 7
      %v1160 = vsub.s32 %v1157, %v1159
      %v1161 = vrot.slane %v1146, %v1160
      %v1163 = vunpack.c.l.s4 1966171168
      %v1164 = vunpack.c.0.s8 %v1163
      %v1165 = vlaneseq
      %v1166 = vshrl.u32 %v1165, 7
      %v1167 = vsub.s32 %v1164, %v1166
      %v1168 = vrot.slane %v1147, %v1167
      %v1169 = vcombine.high %v1154, %v1154
      %v1170 = vcombine.high %v1168, %v1168
      %v1171 = vcombine.high %v1089, %v1089
      %v1173 = vunpack.c.l.s4 1966171168
      %v1174 = vunpack.c.0.s8 %v1173
      %v1175 = vlaneseq
      %v1176 = vshrl.u32 %v1175, 7
      %v1177 = vsub.s32 %v1174, %v1176
      %v1178 = vrot.slane %v1089, %v1177
      %v1180 = vunpack.c.l.s4 1966171168
      %v1181 = vunpack.c.0.s8 %v1180
      %v1182 = vlaneseq
      %v1183 = vshrl.u32 %v1182, 7
      %v1184 = vsub.s32 %v1181, %v1183
      %v1185 = vrot.slane %v1171, %v1184
      %v1186 = vcombine.high %v1178, %v1178
      %v1188 = vunpack.c.l.s4 1966171168
      %v1189 = vunpack.c.0.s8 %v1188
      %v1190 = vlaneseq
      %v1191 = vshrl.u32 %v1190, 7
      %v1192 = vsub.s32 %v1189, %v1191
      %v1193 = vrot.slane %v1178, %v1192
      %v1195 = vunpack.c.l.s4 1966171168
      %v1196 = vunpack.c.0.s8 %v1195
      %v1197 = vlaneseq
      %v1198 = vshrl.u32 %v1197, 7
      %v1199 = vsub.s32 %v1196, %v1198
      %v1200 = vrot.slane %v1185, %v1199
      %v1202 = vunpack.c.l.s4 1966171168
      %v1203 = vunpack.c.0.s8 %v1202
      %v1204 = vlaneseq
      %v1205 = vshrl.u32 %v1204, 7
      %v1206 = vsub.s32 %v1203, %v1205
      %v1207 = vrot.slane %v1186, %v1206
      %v1208 = vcombine.high %v1193, %v1193
      %v1209 = vcombine.high %v1207, %v1207
      %v1225 = vld [vmem:[%s4] sm:$0x1]
      %v1226 = vld [vmem:[%s5] sm:$0x1]
      %v1227 = vcombine.low %v1115, %v1129
      %v1228 = vcombine.low %v1130, %v1131
      %v1229 = vcombine.low %v1122, %v1154
      %v1230 = vcombine.low %v1168, %v1169
      %v1232 = vunpack.c.l.s4 1966171168
      %v1233 = vunpack.c.0.s8 %v1232
      %v1234 = vlaneseq
      %v1235 = vshrl.u32 %v1234, 7
      %v1236 = vsub.s32 %v1233, %v1235
      %v1237 = vrot.slane %v1227, %v1236
      %v1239 = vunpack.c.l.s4 1966171168
      %v1240 = vunpack.c.0.s8 %v1239
      %v1241 = vlaneseq
      %v1242 = vshrl.u32 %v1241, 7
      %v1243 = vsub.s32 %v1240, %v1242
      %v1244 = vrot.slane %v1228, %v1243
      %v1246 = vunpack.c.l.s4 1966171168
      %v1247 = vunpack.c.0.s8 %v1246
      %v1248 = vlaneseq
      %v1249 = vshrl.u32 %v1248, 7
      %v1250 = vsub.s32 %v1247, %v1249
      %v1251 = vrot.slane %v1229, %v1250
      %v1253 = vunpack.c.l.s4 1966171168
      %v1254 = vunpack.c.0.s8 %v1253
      %v1255 = vlaneseq
      %v1256 = vshrl.u32 %v1255, 7
      %v1257 = vsub.s32 %v1254, %v1256
      %v1258 = vrot.slane %v1230, %v1257
      %v1259 = vcombine.low %v1237, %v1244
      %v1260 = vcombine.low %v1251, %v1258
      %v1262 = vunpack.c.l.s4 1966171168
      %v1263 = vunpack.c.0.s8 %v1262
      %v1264 = vlaneseq
      %v1265 = vshrl.u32 %v1264, 7
      %v1266 = vsub.s32 %v1263, %v1265
      %v1267 = vrot.slane %v1259, %v1266
      %v1269 = vunpack.c.l.s4 1966171168
      %v1270 = vunpack.c.0.s8 %v1269
      %v1271 = vlaneseq
      %v1272 = vshrl.u32 %v1271, 7
      %v1273 = vsub.s32 %v1270, %v1272
      %v1274 = vrot.slane %v1260, %v1273
      %v1275 = vcombine.low %v1267, %v1274
      %v1276 = vcombine.low %v1170, %v1161
      %v1277 = vcombine.low %v1193, %v1207
      %v1278 = vcombine.low %v1208, %v1209
      %v1280 = vunpack.c.l.s4 1966171168
      %v1281 = vunpack.c.0.s8 %v1280
      %v1282 = vlaneseq
      %v1283 = vshrl.u32 %v1282, 7
      %v1284 = vsub.s32 %v1281, %v1283
      %v1285 = vrot.slane %v1276, %v1284
      %v1287 = vunpack.c.l.s4 1966171168
      %v1288 = vunpack.c.0.s8 %v1287
      %v1289 = vlaneseq
      %v1290 = vshrl.u32 %v1289, 7
      %v1291 = vsub.s32 %v1288, %v1290
      %v1292 = vrot.slane %v1277, %v1291
      %v1294 = vunpack.c.l.s4 1966171168
      %v1295 = vunpack.c.0.s8 %v1294
      %v1296 = vlaneseq
      %v1297 = vshrl.u32 %v1296, 7
      %v1298 = vsub.s32 %v1295, %v1297
      %v1299 = vrot.slane %v1278, %v1298
      %v1301 = vunpack.c.l.s4 1966171168
      %v1302 = vunpack.c.0.s8 %v1301
      %v1303 = vlaneseq
      %v1304 = vshrl.u32 %v1303, 7
      %v1305 = vsub.s32 %v1302, %v1304
      %v1306 = vrot.slane %v1200, %v1305
      %v1307 = vcombine.low %v1285, %v1292
      %v1308 = vcombine.low %v1299, %v1306
      %v1310 = vunpack.c.l.s4 1966171168
      %v1311 = vunpack.c.0.s8 %v1310
      %v1312 = vlaneseq
      %v1313 = vshrl.u32 %v1312, 7
      %v1314 = vsub.s32 %v1311, %v1313
      %v1315 = vrot.slane %v1307, %v1314
      %v1317 = vunpack.c.l.s4 1966171168
      %v1318 = vunpack.c.0.s8 %v1317
      %v1319 = vlaneseq
      %v1320 = vshrl.u32 %v1319, 7
      %v1321 = vsub.s32 %v1318, %v1320
      %v1322 = vrot.slane %v1308, %v1321
      %v1323 = vcombine.low %v1315, %v1322
      %vm1326 = vcmask 261120
      %v1327 = vsel %vm1326, %v1275, 0.0
      %1328 = vadd.xlane.f32.xlu0 %v1327
      %v1329 = vpop.xlane.xlu0 %1328
      %vm1330 = vcmask 260096
      %v1331 = vsel %vm1330, %v1323, 0.0
      %1332 = vadd.xlane.f32.xlu0 %v1331
      %v1333 = vpop.xlane.xlu0 %1332
      %v1334 = vrcp.pop 32.0
      %v1335 = vmul.f32 %v1329, %v1334
      %v1336 = vmul.f32 %v1333, %v1334
      %v1339 = vlaneseq
      %v1340 = vshrl.u32 %v1339, 7
      %v1341 = vsub.s32 0, %v1340
      %v1342 = vrot.slane %v1335, %v1341
      %v1343 = vlaneseq
      %v1344 = vshrl.u32 %v1343, 7
      %v1345 = vsub.s32 1, %v1344
      %v1346 = vrot.slane %v1335, %v1345
      %v1347 = vlaneseq
      %v1348 = vshrl.u32 %v1347, 7
      %v1349 = vsub.s32 2, %v1348
      %v1350 = vrot.slane %v1335, %v1349
      %v1351 = vlaneseq
      %v1352 = vshrl.u32 %v1351, 7
      %v1353 = vsub.s32 3, %v1352
      %v1354 = vrot.slane %v1335, %v1353
      %v1355 = vlaneseq
      %v1356 = vshrl.u32 %v1355, 7
      %v1357 = vsub.s32 4, %v1356
      %v1358 = vrot.slane %v1335, %v1357
      %v1359 = vlaneseq
      %v1360 = vshrl.u32 %v1359, 7
      %v1361 = vsub.s32 5, %v1360
      %v1362 = vrot.slane %v1335, %v1361
      %v1363 = vlaneseq
      %v1364 = vshrl.u32 %v1363, 7
      %v1365 = vsub.s32 6, %v1364
      %v1366 = vrot.slane %v1335, %v1365
      %v1367 = vlaneseq
      %v1368 = vshrl.u32 %v1367, 7
      %v1369 = vsub.s32 7, %v1368
      %v1370 = vrot.slane %v1335, %v1369
      %v1371 = vlaneseq
      %v1372 = vshrl.u32 %v1371, 7
      %v1373 = vsub.s32 0, %v1372
      %v1374 = vrot.slane %v1336, %v1373
      %v1375 = vlaneseq
      %v1376 = vshrl.u32 %v1375, 7
      %v1377 = vsub.s32 1, %v1376
      %v1378 = vrot.slane %v1336, %v1377
      %v1379 = vlaneseq
      %v1380 = vshrl.u32 %v1379, 7
      %v1381 = vsub.s32 2, %v1380
      %v1382 = vrot.slane %v1336, %v1381
      %v1383 = vlaneseq
      %v1384 = vshrl.u32 %v1383, 7
      %v1385 = vsub.s32 3, %v1384
      %v1386 = vrot.slane %v1336, %v1385
      %v1387 = vlaneseq
      %v1388 = vshrl.u32 %v1387, 7
      %v1389 = vsub.s32 4, %v1388
      %v1390 = vrot.slane %v1336, %v1389
      %v1391 = vlaneseq
      %v1392 = vshrl.u32 %v1391, 7
      %v1393 = vsub.s32 5, %v1392
      %v1394 = vrot.slane %v1336, %v1393
      %v1395 = vlaneseq
      %v1396 = vshrl.u32 %v1395, 7
      %v1397 = vsub.s32 6, %v1396
      %v1398 = vrot.slane %v1336, %v1397
      %v1414 = vsub.f32 %v1115, %v1342
      %v1415 = vsub.f32 %v1129, %v1346
      %v1416 = vsub.f32 %v1130, %v1350
      %v1417 = vsub.f32 %v1131, %v1354
      %v1418 = vsub.f32 %v1122, %v1358
      %v1419 = vsub.f32 %v1154, %v1362
      %v1420 = vsub.f32 %v1168, %v1366
      %v1421 = vsub.f32 %v1169, %v1370
      %v1422 = vsub.f32 %v1170, %v1374
      %v1423 = vsub.f32 %v1161, %v1378
      %v1424 = vsub.f32 %v1193, %v1382
      %v1425 = vsub.f32 %v1207, %v1386
      %v1426 = vsub.f32 %v1208, %v1390
      %v1427 = vsub.f32 %v1209, %v1394
      %v1428 = vsub.f32 %v1200, %v1398
      %v1429 = vmul.f32 %v1414, %v1414
      %v1430 = vmul.f32 %v1415, %v1415
      %v1431 = vmul.f32 %v1416, %v1416
      %v1432 = vmul.f32 %v1417, %v1417
      %v1433 = vmul.f32 %v1418, %v1418
      %v1434 = vmul.f32 %v1419, %v1419
      %v1435 = vmul.f32 %v1420, %v1420
      %v1436 = vmul.f32 %v1421, %v1421
      %v1437 = vmul.f32 %v1422, %v1422
      %v1438 = vmul.f32 %v1423, %v1423
      %v1439 = vmul.f32 %v1424, %v1424
      %v1440 = vmul.f32 %v1425, %v1425
      %v1441 = vmul.f32 %v1426, %v1426
      %v1442 = vmul.f32 %v1427, %v1427
      %v1443 = vmul.f32 %v1428, %v1428
      %v1459 = vcombine.low %v1429, %v1430
      %v1460 = vcombine.low %v1431, %v1432
      %v1461 = vcombine.low %v1433, %v1434
      %v1462 = vcombine.low %v1435, %v1436
      %v1464 = vunpack.c.l.s4 1966171168
      %v1465 = vunpack.c.0.s8 %v1464
      %v1466 = vlaneseq
      %v1467 = vshrl.u32 %v1466, 7
      %v1468 = vsub.s32 %v1465, %v1467
      %v1469 = vrot.slane %v1459, %v1468
      %v1471 = vunpack.c.l.s4 1966171168
      %v1472 = vunpack.c.0.s8 %v1471
      %v1473 = vlaneseq
      %v1474 = vshrl.u32 %v1473, 7
      %v1475 = vsub.s32 %v1472, %v1474
      %v1476 = vrot.slane %v1460, %v1475
      %v1478 = vunpack.c.l.s4 1966171168
      %v1479 = vunpack.c.0.s8 %v1478
      %v1480 = vlaneseq
      %v1481 = vshrl.u32 %v1480, 7
      %v1482 = vsub.s32 %v1479, %v1481
      %v1483 = vrot.slane %v1461, %v1482
      %v1485 = vunpack.c.l.s4 1966171168
      %v1486 = vunpack.c.0.s8 %v1485
      %v1487 = vlaneseq
      %v1488 = vshrl.u32 %v1487, 7
      %v1489 = vsub.s32 %v1486, %v1488
      %v1490 = vrot.slane %v1462, %v1489
      %v1491 = vcombine.low %v1469, %v1476
      %v1492 = vcombine.low %v1483, %v1490
      %v1494 = vunpack.c.l.s4 1966171168
      %v1495 = vunpack.c.0.s8 %v1494
      %v1496 = vlaneseq
      %v1497 = vshrl.u32 %v1496, 7
      %v1498 = vsub.s32 %v1495, %v1497
      %v1499 = vrot.slane %v1491, %v1498
      %v1501 = vunpack.c.l.s4 1966171168
      %v1502 = vunpack.c.0.s8 %v1501
      %v1503 = vlaneseq
      %v1504 = vshrl.u32 %v1503, 7
      %v1505 = vsub.s32 %v1502, %v1504
      %v1506 = vrot.slane %v1492, %v1505
      %v1507 = vcombine.low %v1499, %v1506
      %v1508 = vcombine.low %v1437, %v1438
      %v1509 = vcombine.low %v1439, %v1440
      %v1510 = vcombine.low %v1441, %v1442
      %v1512 = vunpack.c.l.s4 1966171168
      %v1513 = vunpack.c.0.s8 %v1512
      %v1514 = vlaneseq
      %v1515 = vshrl.u32 %v1514, 7
      %v1516 = vsub.s32 %v1513, %v1515
      %v1517 = vrot.slane %v1508, %v1516
      %v1519 = vunpack.c.l.s4 1966171168
      %v1520 = vunpack.c.0.s8 %v1519
      %v1521 = vlaneseq
      %v1522 = vshrl.u32 %v1521, 7
      %v1523 = vsub.s32 %v1520, %v1522
      %v1524 = vrot.slane %v1509, %v1523
      %v1526 = vunpack.c.l.s4 1966171168
      %v1527 = vunpack.c.0.s8 %v1526
      %v1528 = vlaneseq
      %v1529 = vshrl.u32 %v1528, 7
      %v1530 = vsub.s32 %v1527, %v1529
      %v1531 = vrot.slane %v1510, %v1530
      %v1533 = vunpack.c.l.s4 1966171168
      %v1534 = vunpack.c.0.s8 %v1533
      %v1535 = vlaneseq
      %v1536 = vshrl.u32 %v1535, 7
      %v1537 = vsub.s32 %v1534, %v1536
      %v1538 = vrot.slane %v1443, %v1537
      %v1539 = vcombine.low %v1517, %v1524
      %v1540 = vcombine.low %v1531, %v1538
      %v1542 = vunpack.c.l.s4 1966171168
      %v1543 = vunpack.c.0.s8 %v1542
      %v1544 = vlaneseq
      %v1545 = vshrl.u32 %v1544, 7
      %v1546 = vsub.s32 %v1543, %v1545
      %v1547 = vrot.slane %v1539, %v1546
      %v1549 = vunpack.c.l.s4 1966171168
      %v1550 = vunpack.c.0.s8 %v1549
      %v1551 = vlaneseq
      %v1552 = vshrl.u32 %v1551, 7
      %v1553 = vsub.s32 %v1550, %v1552
      %v1554 = vrot.slane %v1540, %v1553
      %v1555 = vcombine.low %v1547, %v1554
      %v1558 = vsel %vm1326, %v1507, 0.0
      %1559 = vadd.xlane.f32.xlu0 %v1558
      %v1560 = vpop.xlane.xlu0 %1559
      %v1561 = vsel %vm1330, %v1555, 0.0
      %1562 = vadd.xlane.f32.xlu0 %v1561
      %v1563 = vpop.xlane.xlu0 %1562
      %v1564 = vmul.f32 %v1560, %v1334
      %v1565 = vmul.f32 %v1563, %v1334
      %v1566 = vadd.f32 %v1564, 1e-06
      %v1567 = vadd.f32 %v1565, 1e-06
      %v1568 = vrsqrt.pop %v1566
      %v1569 = vrsqrt.pop %v1567
      %v1572 = vlaneseq
      %v1573 = vshrl.u32 %v1572, 7
      %v1574 = vsub.s32 0, %v1573
      %v1575 = vrot.slane %v1568, %v1574
      %v1576 = vlaneseq
      %v1577 = vshrl.u32 %v1576, 7
      %v1578 = vsub.s32 1, %v1577
      %v1579 = vrot.slane %v1568, %v1578
      %v1580 = vlaneseq
      %v1581 = vshrl.u32 %v1580, 7
      %v1582 = vsub.s32 2, %v1581
      %v1583 = vrot.slane %v1568, %v1582
      %v1584 = vlaneseq
      %v1585 = vshrl.u32 %v1584, 7
      %v1586 = vsub.s32 3, %v1585
      %v1587 = vrot.slane %v1568, %v1586
      %v1588 = vlaneseq
      %v1589 = vshrl.u32 %v1588, 7
      %v1590 = vsub.s32 4, %v1589
      %v1591 = vrot.slane %v1568, %v1590
      %v1592 = vlaneseq
      %v1593 = vshrl.u32 %v1592, 7
      %v1594 = vsub.s32 5, %v1593
      %v1595 = vrot.slane %v1568, %v1594
      %v1596 = vlaneseq
      %v1597 = vshrl.u32 %v1596, 7
      %v1598 = vsub.s32 6, %v1597
      %v1599 = vrot.slane %v1568, %v1598
      %v1600 = vlaneseq
      %v1601 = vshrl.u32 %v1600, 7
      %v1602 = vsub.s32 7, %v1601
      %v1603 = vrot.slane %v1568, %v1602
      %v1604 = vlaneseq
      %v1605 = vshrl.u32 %v1604, 7
      %v1606 = vsub.s32 0, %v1605
      %v1607 = vrot.slane %v1569, %v1606
      %v1608 = vlaneseq
      %v1609 = vshrl.u32 %v1608, 7
      %v1610 = vsub.s32 1, %v1609
      %v1611 = vrot.slane %v1569, %v1610
      %v1612 = vlaneseq
      %v1613 = vshrl.u32 %v1612, 7
      %v1614 = vsub.s32 2, %v1613
      %v1615 = vrot.slane %v1569, %v1614
      %v1616 = vlaneseq
      %v1617 = vshrl.u32 %v1616, 7
      %v1618 = vsub.s32 3, %v1617
      %v1619 = vrot.slane %v1569, %v1618
      %v1620 = vlaneseq
      %v1621 = vshrl.u32 %v1620, 7
      %v1622 = vsub.s32 4, %v1621
      %v1623 = vrot.slane %v1569, %v1622
      %v1624 = vlaneseq
      %v1625 = vshrl.u32 %v1624, 7
      %v1626 = vsub.s32 5, %v1625
      %v1627 = vrot.slane %v1569, %v1626
      %v1628 = vlaneseq
      %v1629 = vshrl.u32 %v1628, 7
      %v1630 = vsub.s32 6, %v1629
      %v1631 = vrot.slane %v1569, %v1630
      %v1647 = vmul.f32 %v1414, %v1575
      %v1648 = vmul.f32 %v1415, %v1579
      %v1649 = vmul.f32 %v1416, %v1583
      %v1650 = vmul.f32 %v1417, %v1587
      %v1651 = vmul.f32 %v1418, %v1591
      %v1652 = vmul.f32 %v1419, %v1595
      %v1653 = vmul.f32 %v1420, %v1599
      %v1654 = vmul.f32 %v1421, %v1603
      %v1655 = vmul.f32 %v1422, %v1607
      %v1656 = vmul.f32 %v1423, %v1611
      %v1657 = vmul.f32 %v1424, %v1615
      %v1658 = vmul.f32 %v1425, %v1619
      %v1659 = vmul.f32 %v1426, %v1623
      %v1660 = vmul.f32 %v1427, %v1627
      %v1661 = vmul.f32 %v1428, %v1631
      %v1663 = vlaneseq
      %v1664 = vshrl.u32 %v1663, 7
      %v1665 = vsub.s32 0, %v1664
      %v1666 = vrot.slane %v1225, %v1665
      %v1667 = vcombine.high %v1666, %v1666
      %v1669 = vunpack.c.l.s4 1966171168
      %v1670 = vunpack.c.0.s8 %v1669
      %v1671 = vlaneseq
      %v1672 = vshrl.u32 %v1671, 7
      %v1673 = vsub.s32 %v1670, %v1672
      %v1674 = vrot.slane %v1666, %v1673
      %v1676 = vunpack.c.l.s4 1966171168
      %v1677 = vunpack.c.0.s8 %v1676
      %v1678 = vlaneseq
      %v1679 = vshrl.u32 %v1678, 7
      %v1680 = vsub.s32 %v1677, %v1679
      %v1681 = vrot.slane %v1667, %v1680
      %v1682 = vcombine.high %v1674, %v1674
      %v1683 = vcombine.high %v1681, %v1681
      %v1685 = vunpack.c.l.s4 1966171168
      %v1686 = vunpack.c.0.s8 %v1685
      %v1687 = vlaneseq
      %v1688 = vshrl.u32 %v1687, 7
      %v1689 = vsub.s32 %v1686, %v1688
      %v1690 = vrot.slane %v1674, %v1689
      %v1692 = vunpack.c.l.s4 1966171168
      %v1693 = vunpack.c.0.s8 %v1692
      %v1694 = vlaneseq
      %v1695 = vshrl.u32 %v1694, 7
      %v1696 = vsub.s32 %v1693, %v1695
      %v1697 = vrot.slane %v1681, %v1696
      %v1699 = vunpack.c.l.s4 1966171168
      %v1700 = vunpack.c.0.s8 %v1699
      %v1701 = vlaneseq
      %v1702 = vshrl.u32 %v1701, 7
      %v1703 = vsub.s32 %v1700, %v1702
      %v1704 = vrot.slane %v1682, %v1703
      %v1706 = vunpack.c.l.s4 1966171168
      %v1707 = vunpack.c.0.s8 %v1706
      %v1708 = vlaneseq
      %v1709 = vshrl.u32 %v1708, 7
      %v1710 = vsub.s32 %v1707, %v1709
      %v1711 = vrot.slane %v1683, %v1710
      %v1712 = vcombine.high %v1690, %v1690
      %v1713 = vcombine.high %v1697, %v1697
      %v1714 = vcombine.high %v1704, %v1704
      %v1715 = vcombine.high %v1711, %v1711
      %v1724 = vmul.f32 %v1647, %v1690
      %v1725 = vmul.f32 %v1648, %v1704
      %v1726 = vmul.f32 %v1649, %v1712
      %v1727 = vmul.f32 %v1650, %v1714
      %v1728 = vmul.f32 %v1651, %v1697
      %v1729 = vmul.f32 %v1652, %v1711
      %v1730 = vmul.f32 %v1653, %v1713
      %v1731 = vmul.f32 %v1654, %v1715
      %v1732 = vmul.f32 %v1655, %v1690
      %v1733 = vmul.f32 %v1656, %v1704
      %v1734 = vmul.f32 %v1657, %v1712
      %v1735 = vmul.f32 %v1658, %v1714
      %v1736 = vmul.f32 %v1659, %v1697
      %v1737 = vmul.f32 %v1660, %v1711
      %v1738 = vmul.f32 %v1661, %v1713
      %v1740 = vlaneseq
      %v1741 = vshrl.u32 %v1740, 7
      %v1742 = vsub.s32 0, %v1741
      %v1743 = vrot.slane %v1226, %v1742
      %v1744 = vcombine.high %v1743, %v1743
      %v1746 = vunpack.c.l.s4 1966171168
      %v1747 = vunpack.c.0.s8 %v1746
      %v1748 = vlaneseq
      %v1749 = vshrl.u32 %v1748, 7
      %v1750 = vsub.s32 %v1747, %v1749
      %v1751 = vrot.slane %v1743, %v1750
      %v1753 = vunpack.c.l.s4 1966171168
      %v1754 = vunpack.c.0.s8 %v1753
      %v1755 = vlaneseq
      %v1756 = vshrl.u32 %v1755, 7
      %v1757 = vsub.s32 %v1754, %v1756
      %v1758 = vrot.slane %v1744, %v1757
      %v1759 = vcombine.high %v1751, %v1751
      %v1760 = vcombine.high %v1758, %v1758
      %v1762 = vunpack.c.l.s4 1966171168
      %v1763 = vunpack.c.0.s8 %v1762
      %v1764 = vlaneseq
      %v1765 = vshrl.u32 %v1764, 7
      %v1766 = vsub.s32 %v1763, %v1765
      %v1767 = vrot.slane %v1751, %v1766
      %v1769 = vunpack.c.l.s4 1966171168
      %v1770 = vunpack.c.0.s8 %v1769
      %v1771 = vlaneseq
      %v1772 = vshrl.u32 %v1771, 7
      %v1773 = vsub.s32 %v1770, %v1772
      %v1774 = vrot.slane %v1758, %v1773
      %v1776 = vunpack.c.l.s4 1966171168
      %v1777 = vunpack.c.0.s8 %v1776
      %v1778 = vlaneseq
      %v1779 = vshrl.u32 %v1778, 7
      %v1780 = vsub.s32 %v1777, %v1779
      %v1781 = vrot.slane %v1759, %v1780
      %v1783 = vunpack.c.l.s4 1966171168
      %v1784 = vunpack.c.0.s8 %v1783
      %v1785 = vlaneseq
      %v1786 = vshrl.u32 %v1785, 7
      %v1787 = vsub.s32 %v1784, %v1786
      %v1788 = vrot.slane %v1760, %v1787
      %v1789 = vcombine.high %v1767, %v1767
      %v1790 = vcombine.high %v1774, %v1774
      %v1791 = vcombine.high %v1781, %v1781
      %v1792 = vcombine.high %v1788, %v1788
      %v1801 = vadd.f32 %v1724, %v1767
      %v1802 = vadd.f32 %v1725, %v1781
      %v1803 = vadd.f32 %v1726, %v1789
      %v1804 = vadd.f32 %v1727, %v1791
      %v1805 = vadd.f32 %v1728, %v1774
      %v1806 = vadd.f32 %v1729, %v1788
      %v1807 = vadd.f32 %v1730, %v1790
      %v1808 = vadd.f32 %v1731, %v1792
      %v1809 = vadd.f32 %v1732, %v1767
      %v1810 = vadd.f32 %v1733, %v1781
      %v1811 = vadd.f32 %v1734, %v1789
      %v1812 = vadd.f32 %v1735, %v1791
      %v1813 = vadd.f32 %v1736, %v1774
      %v1814 = vadd.f32 %v1737, %v1788
      %v1815 = vadd.f32 %v1738, %v1790
      %v1816 = vld [vmem:[%s6] sm:$0xff]
      %v1817 = vld [vmem:[%s6 + $0x8] sm:$0xff]
      %v1818 = vld [vmem:[%s6 + $0x10] sm:$0xff]
      %v1819 = vld [vmem:[%s6 + $0x18] sm:$0xff]
      %v1820 = vld [vmem:[%s7] sm:$0x1]
      %v1822 = vlaneseq
      %v1823 = vshrl.u32 %v1822, 7
      %v1824 = vsub.s32 0, %v1823
      %v1825 = vrot.slane %v1820, %v1824
      %v1842 = vcombine.low %v1801, %v1802
      %v1843 = vcombine.low %v1803, %v1804
      %v1844 = vcombine.low %v1805, %v1806
      %v1845 = vcombine.low %v1807, %v1808
      %v1847 = vunpack.c.l.s4 1966171168
      %v1848 = vunpack.c.0.s8 %v1847
      %v1849 = vlaneseq
      %v1850 = vshrl.u32 %v1849, 7
      %v1851 = vsub.s32 %v1848, %v1850
      %v1852 = vrot.slane %v1842, %v1851
      %v1854 = vunpack.c.l.s4 1966171168
      %v1855 = vunpack.c.0.s8 %v1854
      %v1856 = vlaneseq
      %v1857 = vshrl.u32 %v1856, 7
      %v1858 = vsub.s32 %v1855, %v1857
      %v1859 = vrot.slane %v1843, %v1858
      %v1861 = vunpack.c.l.s4 1966171168
      %v1862 = vunpack.c.0.s8 %v1861
      %v1863 = vlaneseq
      %v1864 = vshrl.u32 %v1863, 7
      %v1865 = vsub.s32 %v1862, %v1864
      %v1866 = vrot.slane %v1844, %v1865
      %v1868 = vunpack.c.l.s4 1966171168
      %v1869 = vunpack.c.0.s8 %v1868
      %v1870 = vlaneseq
      %v1871 = vshrl.u32 %v1870, 7
      %v1872 = vsub.s32 %v1869, %v1871
      %v1873 = vrot.slane %v1845, %v1872
      %v1874 = vcombine.low %v1852, %v1859
      %v1875 = vcombine.low %v1866, %v1873
      %v1877 = vunpack.c.l.s4 1966171168
      %v1878 = vunpack.c.0.s8 %v1877
      %v1879 = vlaneseq
      %v1880 = vshrl.u32 %v1879, 7
      %v1881 = vsub.s32 %v1878, %v1880
      %v1882 = vrot.slane %v1874, %v1881
      %v1884 = vunpack.c.l.s4 1966171168
      %v1885 = vunpack.c.0.s8 %v1884
      %v1886 = vlaneseq
      %v1887 = vshrl.u32 %v1886, 7
      %v1888 = vsub.s32 %v1885, %v1887
      %v1889 = vrot.slane %v1875, %v1888
      %v1890 = vcombine.low %v1882, %v1889
      %v1891 = vcombine.low %v1809, %v1810
      %v1892 = vcombine.low %v1811, %v1812
      %v1893 = vcombine.low %v1813, %v1814
      %v1895 = vunpack.c.l.s4 1966171168
      %v1896 = vunpack.c.0.s8 %v1895
      %v1897 = vlaneseq
      %v1898 = vshrl.u32 %v1897, 7
      %v1899 = vsub.s32 %v1896, %v1898
      %v1900 = vrot.slane %v1891, %v1899
      %v1902 = vunpack.c.l.s4 1966171168
      %v1903 = vunpack.c.0.s8 %v1902
      %v1904 = vlaneseq
      %v1905 = vshrl.u32 %v1904, 7
      %v1906 = vsub.s32 %v1903, %v1905
      %v1907 = vrot.slane %v1892, %v1906
      %v1909 = vunpack.c.l.s4 1966171168
      %v1910 = vunpack.c.0.s8 %v1909
      %v1911 = vlaneseq
      %v1912 = vshrl.u32 %v1911, 7
      %v1913 = vsub.s32 %v1910, %v1912
      %v1914 = vrot.slane %v1893, %v1913
      %v1916 = vunpack.c.l.s4 1966171168
      %v1917 = vunpack.c.0.s8 %v1916
      %v1918 = vlaneseq
      %v1919 = vshrl.u32 %v1918, 7
      %v1920 = vsub.s32 %v1917, %v1919
      %v1921 = vrot.slane %v1815, %v1920
      %v1922 = vcombine.low %v1900, %v1907
      %v1923 = vcombine.low %v1914, %v1921
      %v1925 = vunpack.c.l.s4 1966171168
      %v1926 = vunpack.c.0.s8 %v1925
      %v1927 = vlaneseq
      %v1928 = vshrl.u32 %v1927, 7
      %v1929 = vsub.s32 %v1926, %v1928
      %v1930 = vrot.slane %v1922, %v1929
      %v1932 = vunpack.c.l.s4 1966171168
      %v1933 = vunpack.c.0.s8 %v1932
      %v1934 = vlaneseq
      %v1935 = vshrl.u32 %v1934, 7
      %v1936 = vsub.s32 %v1933, %v1935
      %v1937 = vrot.slane %v1923, %v1936
      %v1938 = vcombine.low %v1930, %v1937
      %v1939 = vsel %vm1326, %v1890, 0
      %v1941 = vsel %vm1326, %v1938, 0
      %1943 = vmatprep.subr.mxu0 0.0
      %1944 = vmatpush1.msra.mxu0 %v1816
      %1945 = vmatprep.subr.mxu0 0.0
      %1946 = vmatpush1.msra.mxu0 %v1817
      %1947 = vmatprep.subr.mxu0 0.0
      %1948 = vmatpush1.msra.mxu0 %v1818
      %1949 = vmatprep.subr.mxu0 0.0
      %1950 = vmatpush1.msra.mxu0 %v1819
      %1951 = vmatprep.subr.mxu0 0.0
      %1952 = vmatpush1.msra.mxu0 0.0
      %1953 = vmatprep.subr.mxu0 0.0
      %1954 = vmatpush1.msra.mxu0 0.0
      %1955 = vmatprep.subr.mxu0 0.0
      %1956 = vmatpush1.msra.mxu0 0.0
      %1957 = vmatprep.subr.mxu0 0.0
      %1958 = vmatpush1.msra.mxu0 0.0
      %1959 = vmatprep.subr.mxu0 0.0
      %1960 = vmatpush1.msra.mxu0 0.0
      %1961 = vmatprep.subr.mxu0 0.0
      %1962 = vmatpush1.msra.mxu0 0.0
      %1963 = vmatprep.subr.mxu0 0.0
      %1964 = vmatpush1.msra.mxu0 0.0
      %1965 = vmatprep.subr.mxu0 0.0
      %1966 = vmatpush1.msra.mxu0 0.0
      %1967 = vmatprep.subr.mxu0 0.0
      %1968 = vmatpush1.msra.mxu0 0.0
      %1969 = vmatprep.subr.mxu0 0.0
      %1970 = vmatpush1.msra.mxu0 0.0
      %1971 = vmatprep.subr.mxu0 0.0
      %1972 = vmatpush1.msra.mxu0 0.0
      %1973 = vmatprep.subr.mxu0 0.0
      %1974 = vmatpush1.msra.mxu0 0.0
      %1975 = vmatprep.subr.mxu0 0.0
      %1976 = vmatpush1.msra.mxu0 0.0
      %1977 = vmatprep.subr.mxu0 0.0
      %1978 = vmatpush1.msra.mxu0 0.0
      %1979 = vmatprep.subr.mxu0 0.0
      %1980 = vmatpush1.msra.mxu0 0.0
      %1981 = vmatprep.subr.mxu0 0.0
      %1982 = vmatpush1.msra.mxu0 0.0
      %1983 = vmatprep.subr.mxu0 0.0
      %1984 = vmatpush1.msra.mxu0 0.0
      %1985 = vmatprep.subr.mxu0 0.0
      %1986 = vmatpush1.msra.mxu0 0.0
      %1987 = vmatprep.subr.mxu0 0.0
      %1988 = vmatpush1.msra.mxu0 0.0
      %1989 = vmatprep.subr.mxu0 0.0
      %1990 = vmatpush1.msra.mxu0 0.0
      %1991 = vmatprep.subr.mxu0 0.0
      %1992 = vmatpush1.msra.mxu0 0.0
      %1993 = vmatprep.subr.mxu0 0.0
      %1994 = vmatpush1.msra.mxu0 0.0
      %1995 = vmatprep.subr.mxu0 0.0
      %1996 = vmatpush1.msra.mxu0 0.0
      %1997 = vmatprep.subr.mxu0 0.0
      %1998 = vmatpush1.msra.mxu0 0.0
      %1999 = vmatprep.subr.mxu0 0.0
      %2000 = vmatpush1.msra.mxu0 0.0
      %2001 = vmatprep.subr.mxu0 0.0
      %2002 = vmatpush1.msra.mxu0 0.0
      %2003 = vmatprep.subr.mxu0 0.0
      %2004 = vmatpush1.msra.mxu0 0.0
      %2005 = vmatprep.subr.mxu0 0.0
      %2006 = vmatpush1.msra.mxu0 0.0
      %2007 = vmatprep.mubr.f32.mxu0 0.0
      %2008 = vmatmul.mubr.f32.gmra.mrb[0].mxu0 %v1939
      %v2009 = vpop.f32.mrb[0].mxu0
      %v2010 = vadd.f32 %v1825, %v2009
      %v2011 = vpop.f32.mrb[0].mxu0
      %2012 = vmatprep.mubr.f32.mxu0 0.0
      %2013 = vmatmul.mubr.f32.gmra.mrb[0].mxu0 %v1941
      %v2014 = vpop.f32.mrb[0].mxu0
      %v2015 = vadd.f32 %v1825, %v2014
      %v2016 = vpop.f32.mrb[0].mxu0
      %2017 = vdwg.mxu0
      %v2018 = vmul.f32 %v2010, 0.35355338
      %v2019 = vmul.f32 %v2015, 0.35355338
      %v2020 = vld [vmem:[%s8] sm:$0xff]
      %v2021 = vld [vmem:[%s8 + $0x8] sm:$0xff]
      %v2022 = vld [vmem:[%s8 + $0x10] sm:$0xff]
      %v2023 = vld [vmem:[%s8 + $0x18] sm:$0xff]
      %v2024 = vld [vmem:[%s9] sm:$0x1]
      %v2026 = vlaneseq
      %v2027 = vshrl.u32 %v2026, 7
      %v2028 = vsub.s32 0, %v2027
      %v2029 = vrot.slane %v2024, %v2028
      %2031 = vmatprep.subr.mxu0 0.0
      %2032 = vmatpush1.msra.mxu0 %v2020
      %2033 = vmatprep.subr.mxu0 0.0
      %2034 = vmatpush1.msra.mxu0 %v2021
      %2035 = vmatprep.subr.mxu0 0.0
      %2036 = vmatpush1.msra.mxu0 %v2022
      %2037 = vmatprep.subr.mxu0 0.0
      %2038 = vmatpush1.msra.mxu0 %v2023
      %2039 = vmatprep.subr.mxu0 0.0
      %2040 = vmatpush1.msra.mxu0 0.0
      %2041 = vmatprep.subr.mxu0 0.0
      %2042 = vmatpush1.msra.mxu0 0.0
      %2043 = vmatprep.subr.mxu0 0.0
      %2044 = vmatpush1.msra.mxu0 0.0
      %2045 = vmatprep.subr.mxu0 0.0
      %2046 = vmatpush1.msra.mxu0 0.0
      %2047 = vmatprep.subr.mxu0 0.0
      %2048 = vmatpush1.msra.mxu0 0.0
      %2049 = vmatprep.subr.mxu0 0.0
      %2050 = vmatpush1.msra.mxu0 0.0
      %2051 = vmatprep.subr.mxu0 0.0
      %2052 = vmatpush1.msra.mxu0 0.0
      %2053 = vmatprep.subr.mxu0 0.0
      %2054 = vmatpush1.msra.mxu0 0.0
      %2055 = vmatprep.subr.mxu0 0.0
      %2056 = vmatpush1.msra.mxu0 0.0
      %2057 = vmatprep.subr.mxu0 0.0
      %2058 = vmatpush1.msra.mxu0 0.0
      %2059 = vmatprep.subr.mxu0 0.0
      %2060 = vmatpush1.msra.mxu0 0.0
      %2061 = vmatprep.subr.mxu0 0.0
      %2062 = vmatpush1.msra.mxu0 0.0
      %2063 = vmatprep.subr.mxu0 0.0
      %2064 = vmatpush1.msra.mxu0 0.0
      %2065 = vmatprep.subr.mxu0 0.0
      %2066 = vmatpush1.msra.mxu0 0.0
      %2067 = vmatprep.subr.mxu0 0.0
      %2068 = vmatpush1.msra.mxu0 0.0
      %2069 = vmatprep.subr.mxu0 0.0
      %2070 = vmatpush1.msra.mxu0 0.0
      %2071 = vmatprep.subr.mxu0 0.0
      %2072 = vmatpush1.msra.mxu0 0.0
      %2073 = vmatprep.subr.mxu0 0.0
      %2074 = vmatpush1.msra.mxu0 0.0
      %2075 = vmatprep.subr.mxu0 0.0
      %2076 = vmatpush1.msra.mxu0 0.0
      %2077 = vmatprep.subr.mxu0 0.0
      %2078 = vmatpush1.msra.mxu0 0.0
      %2079 = vmatprep.subr.mxu0 0.0
      %2080 = vmatpush1.msra.mxu0 0.0
      %2081 = vmatprep.subr.mxu0 0.0
      %2082 = vmatpush1.msra.mxu0 0.0
      %2083 = vmatprep.subr.mxu0 0.0
      %2084 = vmatpush1.msra.mxu0 0.0
      %2085 = vmatprep.subr.mxu0 0.0
      %2086 = vmatpush1.msra.mxu0 0.0
      %2087 = vmatprep.subr.mxu0 0.0
      %2088 = vmatpush1.msra.mxu0 0.0
      %2089 = vmatprep.subr.mxu0 0.0
      %2090 = vmatpush1.msra.mxu0 0.0
      %2091 = vmatprep.subr.mxu0 0.0
      %2092 = vmatpush1.msra.mxu0 0.0
      %2093 = vmatprep.subr.mxu0 0.0
      %2094 = vmatpush1.msra.mxu0 0.0
      %2095 = vmatprep.mubr.f32.mxu0 0.0
      %2096 = vmatmul.mubr.f32.gmra.mrb[0].mxu0 %v1939
      %v2097 = vpop.f32.mrb[0].mxu0
      %v2098 = vadd.f32 %v2029, %v2097
      %v2099 = vpop.f32.mrb[0].mxu0
      %2100 = vmatprep.mubr.f32.mxu0 0.0
      %2101 = vmatmul.mubr.f32.gmra.mrb[0].mxu0 %v1941
      %v2102 = vpop.f32.mrb[0].mxu0
      %v2103 = vadd.f32 %v2029, %v2102
      %v2104 = vpop.f32.mrb[0].mxu0
      %2105 = vdwg.mxu0
      %v2106 = vld [vmem:[%s10] sm:$0xff]
      %v2107 = vld [vmem:[%s10 + $0x8] sm:$0xff]
      %v2108 = vld [vmem:[%s10 + $0x10] sm:$0xff]
      %v2109 = vld [vmem:[%s10 + $0x18] sm:$0xff]
      %v2110 = vld [vmem:[%s11] sm:$0x1]
      %v2112 = vlaneseq
      %v2113 = vshrl.u32 %v2112, 7
      %v2114 = vsub.s32 0, %v2113
      %v2115 = vrot.slane %v2110, %v2114
      %2117 = vmatprep.subr.mxu0 0.0
      %2118 = vmatpush1.msra.mxu0 %v2106
      %2119 = vmatprep.subr.mxu0 0.0
      %2120 = vmatpush1.msra.mxu0 %v2107
      %2121 = vmatprep.subr.mxu0 0.0
      %2122 = vmatpush1.msra.mxu0 %v2108
      %2123 = vmatprep.subr.mxu0 0.0
      %2124 = vmatpush1.msra.mxu0 %v2109
      %2125 = vmatprep.subr.mxu0 0.0
      %2126 = vmatpush1.msra.mxu0 0.0
      %2127 = vmatprep.subr.mxu0 0.0
      %2128 = vmatpush1.msra.mxu0 0.0
      %2129 = vmatprep.subr.mxu0 0.0
      %2130 = vmatpush1.msra.mxu0 0.0
      %2131 = vmatprep.subr.mxu0 0.0
      %2132 = vmatpush1.msra.mxu0 0.0
      %2133 = vmatprep.subr.mxu0 0.0
      %2134 = vmatpush1.msra.mxu0 0.0
      %2135 = vmatprep.subr.mxu0 0.0
      %2136 = vmatpush1.msra.mxu0 0.0
      %2137 = vmatprep.subr.mxu0 0.0
      %2138 = vmatpush1.msra.mxu0 0.0
      %2139 = vmatprep.subr.mxu0 0.0
      %2140 = vmatpush1.msra.mxu0 0.0
      %2141 = vmatprep.subr.mxu0 0.0
      %2142 = vmatpush1.msra.mxu0 0.0
      %2143 = vmatprep.subr.mxu0 0.0
      %2144 = vmatpush1.msra.mxu0 0.0
      %2145 = vmatprep.subr.mxu0 0.0
      %2146 = vmatpush1.msra.mxu0 0.0
      %2147 = vmatprep.subr.mxu0 0.0
      %2148 = vmatpush1.msra.mxu0 0.0
      %2149 = vmatprep.subr.mxu0 0.0
      %2150 = vmatpush1.msra.mxu0 0.0
      %2151 = vmatprep.subr.mxu0 0.0
      %2152 = vmatpush1.msra.mxu0 0.0
      %2153 = vmatprep.subr.mxu0 0.0
      %2154 = vmatpush1.msra.mxu0 0.0
      %2155 = vmatprep.subr.mxu0 0.0
      %2156 = vmatpush1.msra.mxu0 0.0
      %2157 = vmatprep.subr.mxu0 0.0
      %2158 = vmatpush1.msra.mxu0 0.0
      %2159 = vmatprep.subr.mxu0 0.0
      %2160 = vmatpush1.msra.mxu0 0.0
      %2161 = vmatprep.subr.mxu0 0.0
      %2162 = vmatpush1.msra.mxu0 0.0
      %2163 = vmatprep.subr.mxu0 0.0
      %2164 = vmatpush1.msra.mxu0 0.0
      %2165 = vmatprep.subr.mxu0 0.0
      %2166 = vmatpush1.msra.mxu0 0.0
      %2167 = vmatprep.subr.mxu0 0.0
      %2168 = vmatpush1.msra.mxu0 0.0
      %2169 = vmatprep.subr.mxu0 0.0
      %2170 = vmatpush1.msra.mxu0 0.0
      %2171 = vmatprep.subr.mxu0 0.0
      %2172 = vmatpush1.msra.mxu0 0.0
      %2173 = vmatprep.subr.mxu0 0.0
      %2174 = vmatpush1.msra.mxu0 0.0
      %2175 = vmatprep.subr.mxu0 0.0
      %2176 = vmatpush1.msra.mxu0 0.0
      %2177 = vmatprep.subr.mxu0 0.0
      %2178 = vmatpush1.msra.mxu0 0.0
      %2179 = vmatprep.subr.mxu0 0.0
      %2180 = vmatpush1.msra.mxu0 0.0
      %2181 = vmatprep.mubr.f32.mxu0 0.0
      %2182 = vmatmul.mubr.f32.gmra.mrb[0].mxu0 %v1939
      %v2183 = vpop.f32.mrb[0].mxu0
      %v2184 = vadd.f32 %v2115, %v2183
      %v2185 = vpop.f32.mrb[0].mxu0
      %2186 = vmatprep.mubr.f32.mxu0 0.0
      %2187 = vmatmul.mubr.f32.gmra.mrb[0].mxu0 %v1941
      %v2188 = vpop.f32.mrb[0].mxu0
      %v2189 = vadd.f32 %v2115, %v2188
      %v2190 = vpop.f32.mrb[0].mxu0
      %2191 = vdwg.mxu0
      %v2194 = vcombine.high %v2018, %v2018
      %v2196 = vunpack.c.l.s4 1966171168
      %v2197 = vunpack.c.0.s8 %v2196
      %v2198 = vlaneseq
      %v2199 = vshrl.u32 %v2198, 7
      %v2200 = vsub.s32 %v2197, %v2199
      %v2201 = vrot.slane %v2018, %v2200
      %v2203 = vunpack.c.l.s4 1966171168
      %v2204 = vunpack.c.0.s8 %v2203
      %v2205 = vlaneseq
      %v2206 = vshrl.u32 %v2205, 7
      %v2207 = vsub.s32 %v2204, %v2206
      %v2208 = vrot.slane %v2194, %v2207
      %v2209 = vcombine.high %v2201, %v2201
      %v2210 = vcombine.high %v2208, %v2208
      %v2212 = vunpack.c.l.s4 1966171168
      %v2213 = vunpack.c.0.s8 %v2212
      %v2214 = vlaneseq
      %v2215 = vshrl.u32 %v2214, 7
      %v2216 = vsub.s32 %v2213, %v2215
      %v2217 = vrot.slane %v2201, %v2216
      %v2219 = vunpack.c.l.s4 1966171168
      %v2220 = vunpack.c.0.s8 %v2219
      %v2221 = vlaneseq
      %v2222 = vshrl.u32 %v2221, 7
      %v2223 = vsub.s32 %v2220, %v2222
      %v2224 = vrot.slane %v2208, %v2223
      %v2226 = vunpack.c.l.s4 1966171168
      %v2227 = vunpack.c.0.s8 %v2226
      %v2228 = vlaneseq
      %v2229 = vshrl.u32 %v2228, 7
      %v2230 = vsub.s32 %v2227, %v2229
      %v2231 = vrot.slane %v2209, %v2230
      %v2233 = vunpack.c.l.s4 1966171168
      %v2234 = vunpack.c.0.s8 %v2233
      %v2235 = vlaneseq
      %v2236 = vshrl.u32 %v2235, 7
      %v2237 = vsub.s32 %v2234, %v2236
      %v2238 = vrot.slane %v2210, %v2237
      %v2239 = vcombine.high %v2217, %v2217
      %v2240 = vcombine.high %v2224, %v2224
      %v2241 = vcombine.high %v2231, %v2231
      %v2242 = vcombine.high %v2238, %v2238
      %v2243 = vcombine.high %v2019, %v2019
      %v2245 = vunpack.c.l.s4 1966171168
      %v2246 = vunpack.c.0.s8 %v2245
      %v2247 = vlaneseq
      %v2248 = vshrl.u32 %v2247, 7
      %v2249 = vsub.s32 %v2246, %v2248
      %v2250 = vrot.slane %v2019, %v2249
      %v2252 = vunpack.c.l.s4 1966171168
      %v2253 = vunpack.c.0.s8 %v2252
      %v2254 = vlaneseq
      %v2255 = vshrl.u32 %v2254, 7
      %v2256 = vsub.s32 %v2253, %v2255
      %v2257 = vrot.slane %v2243, %v2256
      %v2258 = vcombine.high %v2250, %v2250
      %v2259 = vcombine.high %v2257, %v2257
      %v2261 = vunpack.c.l.s4 1966171168
      %v2262 = vunpack.c.0.s8 %v2261
      %v2263 = vlaneseq
      %v2264 = vshrl.u32 %v2263, 7
      %v2265 = vsub.s32 %v2262, %v2264
      %v2266 = vrot.slane %v2250, %v2265
      %v2268 = vunpack.c.l.s4 1966171168
      %v2269 = vunpack.c.0.s8 %v2268
      %v2270 = vlaneseq
      %v2271 = vshrl.u32 %v2270, 7
      %v2272 = vsub.s32 %v2269, %v2271
      %v2273 = vrot.slane %v2257, %v2272
      %v2275 = vunpack.c.l.s4 1966171168
      %v2276 = vunpack.c.0.s8 %v2275
      %v2277 = vlaneseq
      %v2278 = vshrl.u32 %v2277, 7
      %v2279 = vsub.s32 %v2276, %v2278
      %v2280 = vrot.slane %v2258, %v2279
      %v2282 = vunpack.c.l.s4 1966171168
      %v2283 = vunpack.c.0.s8 %v2282
      %v2284 = vlaneseq
      %v2285 = vshrl.u32 %v2284, 7
      %v2286 = vsub.s32 %v2283, %v2285
      %v2287 = vrot.slane %v2259, %v2286
      %v2288 = vcombine.high %v2266, %v2266
      %v2289 = vcombine.high %v2273, %v2273
      %v2290 = vcombine.high %v2280, %v2280
      %v2293 = vcombine.high %v2098, %v2098
      %v2295 = vunpack.c.l.s4 1966171168
      %v2296 = vunpack.c.0.s8 %v2295
      %v2297 = vlaneseq
      %v2298 = vshrl.u32 %v2297, 7
      %v2299 = vsub.s32 %v2296, %v2298
      %v2300 = vrot.slane %v2098, %v2299
      %v2302 = vunpack.c.l.s4 1966171168
      %v2303 = vunpack.c.0.s8 %v2302
      %v2304 = vlaneseq
      %v2305 = vshrl.u32 %v2304, 7
      %v2306 = vsub.s32 %v2303, %v2305
      %v2307 = vrot.slane %v2293, %v2306
      %v2308 = vcombine.high %v2300, %v2300
      %v2309 = vcombine.high %v2307, %v2307
      %v2311 = vunpack.c.l.s4 1966171168
      %v2312 = vunpack.c.0.s8 %v2311
      %v2313 = vlaneseq
      %v2314 = vshrl.u32 %v2313, 7
      %v2315 = vsub.s32 %v2312, %v2314
      %v2316 = vrot.slane %v2300, %v2315
      %v2318 = vunpack.c.l.s4 1966171168
      %v2319 = vunpack.c.0.s8 %v2318
      %v2320 = vlaneseq
      %v2321 = vshrl.u32 %v2320, 7
      %v2322 = vsub.s32 %v2319, %v2321
      %v2323 = vrot.slane %v2307, %v2322
      %v2325 = vunpack.c.l.s4 1966171168
      %v2326 = vunpack.c.0.s8 %v2325
      %v2327 = vlaneseq
      %v2328 = vshrl.u32 %v2327, 7
      %v2329 = vsub.s32 %v2326, %v2328
      %v2330 = vrot.slane %v2308, %v2329
      %v2332 = vunpack.c.l.s4 1966171168
      %v2333 = vunpack.c.0.s8 %v2332
      %v2334 = vlaneseq
      %v2335 = vshrl.u32 %v2334, 7
      %v2336 = vsub.s32 %v2333, %v2335
      %v2337 = vrot.slane %v2309, %v2336
      %v2338 = vcombine.high %v2316, %v2316
      %v2339 = vcombine.high %v2323, %v2323
      %v2340 = vcombine.high %v2330, %v2330
      %v2341 = vcombine.high %v2337, %v2337
      %v2342 = vcombine.high %v2103, %v2103
      %v2344 = vunpack.c.l.s4 1966171168
      %v2345 = vunpack.c.0.s8 %v2344
      %v2346 = vlaneseq
      %v2347 = vshrl.u32 %v2346, 7
      %v2348 = vsub.s32 %v2345, %v2347
      %v2349 = vrot.slane %v2103, %v2348
      %v2351 = vunpack.c.l.s4 1966171168
      %v2352 = vunpack.c.0.s8 %v2351
      %v2353 = vlaneseq
      %v2354 = vshrl.u32 %v2353, 7
      %v2355 = vsub.s32 %v2352, %v2354
      %v2356 = vrot.slane %v2342, %v2355
      %v2357 = vcombine.high %v2349, %v2349
      %v2358 = vcombine.high %v2356, %v2356
      %v2360 = vunpack.c.l.s4 1966171168
      %v2361 = vunpack.c.0.s8 %v2360
      %v2362 = vlaneseq
      %v2363 = vshrl.u32 %v2362, 7
      %v2364 = vsub.s32 %v2361, %v2363
      %v2365 = vrot.slane %v2349, %v2364
      %v2367 = vunpack.c.l.s4 1966171168
      %v2368 = vunpack.c.0.s8 %v2367
      %v2369 = vlaneseq
      %v2370 = vshrl.u32 %v2369, 7
      %v2371 = vsub.s32 %v2368, %v2370
      %v2372 = vrot.slane %v2356, %v2371
      %v2374 = vunpack.c.l.s4 1966171168
      %v2375 = vunpack.c.0.s8 %v2374
      %v2376 = vlaneseq
      %v2377 = vshrl.u32 %v2376, 7
      %v2378 = vsub.s32 %v2375, %v2377
      %v2379 = vrot.slane %v2357, %v2378
      %v2381 = vunpack.c.l.s4 1966171168
      %v2382 = vunpack.c.0.s8 %v2381
      %v2383 = vlaneseq
      %v2384 = vshrl.u32 %v2383, 7
      %v2385 = vsub.s32 %v2382, %v2384
      %v2386 = vrot.slane %v2358, %v2385
      %v2387 = vcombine.high %v2365, %v2365
      %v2388 = vcombine.high %v2372, %v2372
      %v2389 = vcombine.high %v2379, %v2379
      %v2392 = vcombine.high %v2184, %v2184
      %v2394 = vunpack.c.l.s4 1966171168
      %v2395 = vunpack.c.0.s8 %v2394
      %v2396 = vlaneseq
      %v2397 = vshrl.u32 %v2396, 7
      %v2398 = vsub.s32 %v2395, %v2397
      %v2399 = vrot.slane %v2184, %v2398
      %v2401 = vunpack.c.l.s4 1966171168
      %v2402 = vunpack.c.0.s8 %v2401
      %v2403 = vlaneseq
      %v2404 = vshrl.u32 %v2403, 7
      %v2405 = vsub.s32 %v2402, %v2404
      %v2406 = vrot.slane %v2392, %v2405
      %v2407 = vcombine.high %v2399, %v2399
      %v2408 = vcombine.high %v2406, %v2406
      %v2410 = vunpack.c.l.s4 1966171168
      %v2411 = vunpack.c.0.s8 %v2410
      %v2412 = vlaneseq
      %v2413 = vshrl.u32 %v2412, 7
      %v2414 = vsub.s32 %v2411, %v2413
      %v2415 = vrot.slane %v2399, %v2414
      %v2417 = vunpack.c.l.s4 1966171168
      %v2418 = vunpack.c.0.s8 %v2417
      %v2419 = vlaneseq
      %v2420 = vshrl.u32 %v2419, 7
      %v2421 = vsub.s32 %v2418, %v2420
      %v2422 = vrot.slane %v2406, %v2421
      %v2424 = vunpack.c.l.s4 1966171168
      %v2425 = vunpack.c.0.s8 %v2424
      %v2426 = vlaneseq
      %v2427 = vshrl.u32 %v2426, 7
      %v2428 = vsub.s32 %v2425, %v2427
      %v2429 = vrot.slane %v2407, %v2428
      %v2431 = vunpack.c.l.s4 1966171168
      %v2432 = vunpack.c.0.s8 %v2431
      %v2433 = vlaneseq
      %v2434 = vshrl.u32 %v2433, 7
      %v2435 = vsub.s32 %v2432, %v2434
      %v2436 = vrot.slane %v2408, %v2435
      %v2437 = vcombine.high %v2415, %v2415
      %v2438 = vcombine.high %v2422, %v2422
      %v2439 = vcombine.high %v2429, %v2429
      %v2440 = vcombine.high %v2436, %v2436
      %v2441 = vcombine.high %v2189, %v2189
      %v2443 = vunpack.c.l.s4 1966171168
      %v2444 = vunpack.c.0.s8 %v2443
      %v2445 = vlaneseq
      %v2446 = vshrl.u32 %v2445, 7
      %v2447 = vsub.s32 %v2444, %v2446
      %v2448 = vrot.slane %v2189, %v2447
      %v2450 = vunpack.c.l.s4 1966171168
      %v2451 = vunpack.c.0.s8 %v2450
      %v2452 = vlaneseq
      %v2453 = vshrl.u32 %v2452, 7
      %v2454 = vsub.s32 %v2451, %v2453
      %v2455 = vrot.slane %v2441, %v2454
      %v2456 = vcombine.high %v2448, %v2448
      %v2457 = vcombine.high %v2455, %v2455
      %v2459 = vunpack.c.l.s4 1966171168
      %v2460 = vunpack.c.0.s8 %v2459
      %v2461 = vlaneseq
      %v2462 = vshrl.u32 %v2461, 7
      %v2463 = vsub.s32 %v2460, %v2462
      %v2464 = vrot.slane %v2448, %v2463
      %v2466 = vunpack.c.l.s4 1966171168
      %v2467 = vunpack.c.0.s8 %v2466
      %v2468 = vlaneseq
      %v2469 = vshrl.u32 %v2468, 7
      %v2470 = vsub.s32 %v2467, %v2469
      %v2471 = vrot.slane %v2455, %v2470
      %v2473 = vunpack.c.l.s4 1966171168
      %v2474 = vunpack.c.0.s8 %v2473
      %v2475 = vlaneseq
      %v2476 = vshrl.u32 %v2475, 7
      %v2477 = vsub.s32 %v2474, %v2476
      %v2478 = vrot.slane %v2456, %v2477
      %v2480 = vunpack.c.l.s4 1966171168
      %v2481 = vunpack.c.0.s8 %v2480
      %v2482 = vlaneseq
      %v2483 = vshrl.u32 %v2482, 7
      %v2484 = vsub.s32 %v2481, %v2483
      %v2485 = vrot.slane %v2457, %v2484
      %v2486 = vcombine.high %v2464, %v2464
      %v2487 = vcombine.high %v2471, %v2471
      %v2488 = vcombine.high %v2478, %v2478
      %v2489 = vcombine.low %v2217, %v2231
      %v2490 = vcombine.low %v2239, %v2241
      %v2492 = vunpack.c.l.s4 1966171168
      %v2493 = vunpack.c.0.s8 %v2492
      %v2494 = vlaneseq
      %v2495 = vshrl.u32 %v2494, 7
      %v2496 = vsub.s32 %v2493, %v2495
      %v2497 = vrot.slane %v2489, %v2496
      %v2499 = vunpack.c.l.s4 1966171168
      %v2500 = vunpack.c.0.s8 %v2499
      %v2501 = vlaneseq
      %v2502 = vshrl.u32 %v2501, 7
      %v2503 = vsub.s32 %v2500, %v2502
      %v2504 = vrot.slane %v2490, %v2503
      %v2506 = vunpack.c.l.s4 1966171168
      %v2507 = vunpack.c.0.s8 %v2506
      %v2508 = vlaneseq
      %v2509 = vshrl.u32 %v2508, 7
      %v2510 = vsub.s32 %v2507, %v2509
      %v2511 = vrot.slane %v2224, %v2510
      %v2512 = vcombine.low %v2497, %v2504
      %v2514 = vunpack.c.l.s4 1966171168
      %v2515 = vunpack.c.0.s8 %v2514
      %v2516 = vlaneseq
      %v2517 = vshrl.u32 %v2516, 7
      %v2518 = vsub.s32 %v2515, %v2517
      %v2519 = vrot.slane %v2512, %v2518
      %v2521 = vunpack.c.l.s4 1966171168
      %v2522 = vunpack.c.0.s8 %v2521
      %v2523 = vlaneseq
      %v2524 = vshrl.u32 %v2523, 7
      %v2525 = vsub.s32 %v2522, %v2524
      %v2526 = vrot.slane %v2511, %v2525
      %v2527 = vcombine.low %v2519, %v2526
      %v2528 = vcombine.low %v2316, %v2330
      %v2529 = vcombine.low %v2338, %v2340
      %v2531 = vunpack.c.l.s4 1966171168
      %v2532 = vunpack.c.0.s8 %v2531
      %v2533 = vlaneseq
      %v2534 = vshrl.u32 %v2533, 7
      %v2535 = vsub.s32 %v2532, %v2534
      %v2536 = vrot.slane %v2528, %v2535
      %v2538 = vunpack.c.l.s4 1966171168
      %v2539 = vunpack.c.0.s8 %v2538
      %v2540 = vlaneseq
      %v2541 = vshrl.u32 %v2540, 7
      %v2542 = vsub.s32 %v2539, %v2541
      %v2543 = vrot.slane %v2529, %v2542
      %v2545 = vunpack.c.l.s4 1966171168
      %v2546 = vunpack.c.0.s8 %v2545
      %v2547 = vlaneseq
      %v2548 = vshrl.u32 %v2547, 7
      %v2549 = vsub.s32 %v2546, %v2548
      %v2550 = vrot.slane %v2323, %v2549
      %v2551 = vcombine.low %v2536, %v2543
      %v2553 = vunpack.c.l.s4 1966171168
      %v2554 = vunpack.c.0.s8 %v2553
      %v2555 = vlaneseq
      %v2556 = vshrl.u32 %v2555, 7
      %v2557 = vsub.s32 %v2554, %v2556
      %v2558 = vrot.slane %v2551, %v2557
      %v2560 = vunpack.c.l.s4 1966171168
      %v2561 = vunpack.c.0.s8 %v2560
      %v2562 = vlaneseq
      %v2563 = vshrl.u32 %v2562, 7
      %v2564 = vsub.s32 %v2561, %v2563
      %v2565 = vrot.slane %v2550, %v2564
      %v2566 = vcombine.low %v2558, %v2565
      %vm2567 = vcmask 64512
      %v2568 = vsel %vm2567, %v2527, 0
      %v2570 = vsel %vm2567, %v2566, 0
      %2572 = vmatprep.subr.mxu0 0.0
      %2573 = vmatpush1.xpose.msra.mxu0 %v2570
      %2574 = vmatprep.subr.mxu0 0.0
      %2575 = vmatpush1.xpose.msra.mxu0 0.0
      %2576 = vmatprep.subr.mxu0 0.0
      %2577 = vmatpush1.xpose.msra.mxu0 0.0
      %2578 = vmatprep.subr.mxu0 0.0
      %2579 = vmatpush1.xpose.msra.mxu0 0.0
      %2580 = vmatprep.subr.mxu0 0.0
      %2581 = vmatpush1.xpose.msra.mxu0 0.0
      %2582 = vmatprep.subr.mxu0 0.0
      %2583 = vmatpush1.xpose.msra.mxu0 0.0
      %2584 = vmatprep.subr.mxu0 0.0
      %2585 = vmatpush1.xpose.msra.mxu0 0.0
      %2586 = vmatprep.subr.mxu0 0.0
      %2587 = vmatpush1.xpose.msra.mxu0 0.0
      %2588 = vmatprep.subr.mxu0 0.0
      %2589 = vmatpush1.xpose.msra.mxu0 0.0
      %2590 = vmatprep.subr.mxu0 0.0
      %2591 = vmatpush1.xpose.msra.mxu0 0.0
      %2592 = vmatprep.subr.mxu0 0.0
      %2593 = vmatpush1.xpose.msra.mxu0 0.0
      %2594 = vmatprep.subr.mxu0 0.0
      %2595 = vmatpush1.xpose.msra.mxu0 0.0
      %2596 = vmatprep.subr.mxu0 0.0
      %2597 = vmatpush1.xpose.msra.mxu0 0.0
      %2598 = vmatprep.subr.mxu0 0.0
      %2599 = vmatpush1.xpose.msra.mxu0 0.0
      %2600 = vmatprep.subr.mxu0 0.0
      %2601 = vmatpush1.xpose.msra.mxu0 0.0
      %2602 = vmatprep.subr.mxu0 0.0
      %2603 = vmatpush1.xpose.msra.mxu0 0.0
      %2604 = vmatprep.subr.mxu0 0.0
      %2605 = vmatpush1.xpose.msra.mxu0 0.0
      %2606 = vmatprep.subr.mxu0 0.0
      %2607 = vmatpush1.xpose.msra.mxu0 0.0
      %2608 = vmatprep.subr.mxu0 0.0
      %2609 = vmatpush1.xpose.msra.mxu0 0.0
      %2610 = vmatprep.subr.mxu0 0.0
      %2611 = vmatpush1.xpose.msra.mxu0 0.0
      %2612 = vmatprep.subr.mxu0 0.0
      %2613 = vmatpush1.xpose.msra.mxu0 0.0
      %2614 = vmatprep.subr.mxu0 0.0
      %2615 = vmatpush1.xpose.msra.mxu0 0.0
      %2616 = vmatprep.subr.mxu0 0.0
      %2617 = vmatpush1.xpose.msra.mxu0 0.0
      %2618 = vmatprep.subr.mxu0 0.0
      %2619 = vmatpush1.xpose.msra.mxu0 0.0
      %2620 = vmatprep.subr.mxu0 0.0
      %2621 = vmatpush1.xpose.msra.mxu0 0.0
      %2622 = vmatprep.subr.mxu0 0.0
      %2623 = vmatpush1.xpose.msra.mxu0 0.0
      %2624 = vmatprep.subr.mxu0 0.0
      %2625 = vmatpush1.xpose.msra.mxu0 0.0
      %2626 = vmatprep.subr.mxu0 0.0
      %2627 = vmatpush1.xpose.msra.mxu0 0.0
      %2628 = vmatprep.subr.mxu0 0.0
      %2629 = vmatpush1.xpose.msra.mxu0 0.0
      %2630 = vmatprep.subr.mxu0 0.0
      %2631 = vmatpush1.xpose.msra.mxu0 0.0
      %2632 = vmatprep.subr.mxu0 0.0
      %2633 = vmatpush1.xpose.msra.mxu0 0.0
      %2634 = vmatprep.subr.mxu0 0.0
      %2635 = vmatpush1.xpose.msra.mxu0 0.0
      %2636 = vmatprep.mubr.f32.mxu0 0.0
      %2637 = vmatmul.mubr.f32.gmra.mrb[0].mxu0 %v2568
      %v2638 = vpop.f32.mrb[0].mxu0
      %v2639 = vadd.f32 0.0, %v2638
      %v2640 = vpop.f32.mrb[0].mxu0
      %2641 = vdwg.mxu0
      %v2642 = vcombine.low %v2238, %v2240
      %v2643 = vcombine.low %v2242, %v2266
      %v2645 = vunpack.c.l.s4 1966171168
      %v2646 = vunpack.c.0.s8 %v2645
      %v2647 = vlaneseq
      %v2648 = vshrl.u32 %v2647, 7
      %v2649 = vsub.s32 %v2646, %v2648
      %v2650 = vrot.slane %v2642, %v2649
      %v2652 = vunpack.c.l.s4 1966171168
      %v2653 = vunpack.c.0.s8 %v2652
      %v2654 = vlaneseq
      %v2655 = vshrl.u32 %v2654, 7
      %v2656 = vsub.s32 %v2653, %v2655
      %v2657 = vrot.slane %v2643, %v2656
      %v2659 = vunpack.c.l.s4 1966171168
      %v2660 = vunpack.c.0.s8 %v2659
      %v2661 = vlaneseq
      %v2662 = vshrl.u32 %v2661, 7
      %v2663 = vsub.s32 %v2660, %v2662
      %v2664 = vrot.slane %v2280, %v2663
      %v2665 = vcombine.low %v2650, %v2657
      %v2667 = vunpack.c.l.s4 1966171168
      %v2668 = vunpack.c.0.s8 %v2667
      %v2669 = vlaneseq
      %v2670 = vshrl.u32 %v2669, 7
      %v2671 = vsub.s32 %v2668, %v2670
      %v2672 = vrot.slane %v2665, %v2671
      %v2674 = vunpack.c.l.s4 1966171168
      %v2675 = vunpack.c.0.s8 %v2674
      %v2676 = vlaneseq
      %v2677 = vshrl.u32 %v2676, 7
      %v2678 = vsub.s32 %v2675, %v2677
      %v2679 = vrot.slane %v2664, %v2678
      %v2680 = vcombine.low %v2672, %v2679
      %v2681 = vcombine.low %v2337, %v2339
      %v2682 = vcombine.low %v2341, %v2365
      %v2684 = vunpack.c.l.s4 1966171168
      %v2685 = vunpack.c.0.s8 %v2684
      %v2686 = vlaneseq
      %v2687 = vshrl.u32 %v2686, 7
      %v2688 = vsub.s32 %v2685, %v2687
      %v2689 = vrot.slane %v2681, %v2688
      %v2691 = vunpack.c.l.s4 1966171168
      %v2692 = vunpack.c.0.s8 %v2691
      %v2693 = vlaneseq
      %v2694 = vshrl.u32 %v2693, 7
      %v2695 = vsub.s32 %v2692, %v2694
      %v2696 = vrot.slane %v2682, %v2695
      %v2698 = vunpack.c.l.s4 1966171168
      %v2699 = vunpack.c.0.s8 %v2698
      %v2700 = vlaneseq
      %v2701 = vshrl.u32 %v2700, 7
      %v2702 = vsub.s32 %v2699, %v2701
      %v2703 = vrot.slane %v2379, %v2702
      %v2704 = vcombine.low %v2689, %v2696
      %v2706 = vunpack.c.l.s4 1966171168
      %v2707 = vunpack.c.0.s8 %v2706
      %v2708 = vlaneseq
      %v2709 = vshrl.u32 %v2708, 7
      %v2710 = vsub.s32 %v2707, %v2709
      %v2711 = vrot.slane %v2704, %v2710
      %v2713 = vunpack.c.l.s4 1966171168
      %v2714 = vunpack.c.0.s8 %v2713
      %v2715 = vlaneseq
      %v2716 = vshrl.u32 %v2715, 7
      %v2717 = vsub.s32 %v2714, %v2716
      %v2718 = vrot.slane %v2703, %v2717
      %v2719 = vcombine.low %v2711, %v2718
      %v2720 = vsel %vm2567, %v2680, 0
      %v2722 = vsel %vm2567, %v2719, 0
      %2724 = vmatprep.subr.mxu0 0.0
      %2725 = vmatpush1.xpose.msra.mxu0 %v2722
      %2726 = vmatprep.subr.mxu0 0.0
      %2727 = vmatpush1.xpose.msra.mxu0 0.0
      %2728 = vmatprep.subr.mxu0 0.0
      %2729 = vmatpush1.xpose.msra.mxu0 0.0
      %2730 = vmatprep.subr.mxu0 0.0
      %2731 = vmatpush1.xpose.msra.mxu0 0.0
      %2732 = vmatprep.subr.mxu0 0.0
      %2733 = vmatpush1.xpose.msra.mxu0 0.0
      %2734 = vmatprep.subr.mxu0 0.0
      %2735 = vmatpush1.xpose.msra.mxu0 0.0
      %2736 = vmatprep.subr.mxu0 0.0
      %2737 = vmatpush1.xpose.msra.mxu0 0.0
      %2738 = vmatprep.subr.mxu0 0.0
      %2739 = vmatpush1.xpose.msra.mxu0 0.0
      %2740 = vmatprep.subr.mxu0 0.0
      %2741 = vmatpush1.xpose.msra.mxu0 0.0
      %2742 = vmatprep.subr.mxu0 0.0
      %2743 = vmatpush1.xpose.msra.mxu0 0.0
      %2744 = vmatprep.subr.mxu0 0.0
      %2745 = vmatpush1.xpose.msra.mxu0 0.0
      %2746 = vmatprep.subr.mxu0 0.0
      %2747 = vmatpush1.xpose.msra.mxu0 0.0
      %2748 = vmatprep.subr.mxu0 0.0
      %2749 = vmatpush1.xpose.msra.mxu0 0.0
      %2750 = vmatprep.subr.mxu0 0.0
      %2751 = vmatpush1.xpose.msra.mxu0 0.0
      %2752 = vmatprep.subr.mxu0 0.0
      %2753 = vmatpush1.xpose.msra.mxu0 0.0
      %2754 = vmatprep.subr.mxu0 0.0
      %2755 = vmatpush1.xpose.msra.mxu0 0.0
      %2756 = vmatprep.subr.mxu0 0.0
      %2757 = vmatpush1.xpose.msra.mxu0 0.0
      %2758 = vmatprep.subr.mxu0 0.0
      %2759 = vmatpush1.xpose.msra.mxu0 0.0
      %2760 = vmatprep.subr.mxu0 0.0
      %2761 = vmatpush1.xpose.msra.mxu0 0.0
      %2762 = vmatprep.subr.mxu0 0.0
      %2763 = vmatpush1.xpose.msra.mxu0 0.0
      %2764 = vmatprep.subr.mxu0 0.0
      %2765 = vmatpush1.xpose.msra.mxu0 0.0
      %2766 = vmatprep.subr.mxu0 0.0
      %2767 = vmatpush1.xpose.msra.mxu0 0.0
      %2768 = vmatprep.subr.mxu0 0.0
      %2769 = vmatpush1.xpose.msra.mxu0 0.0
      %2770 = vmatprep.subr.mxu0 0.0
      %2771 = vmatpush1.xpose.msra.mxu0 0.0
      %2772 = vmatprep.subr.mxu0 0.0
      %2773 = vmatpush1.xpose.msra.mxu0 0.0
      %2774 = vmatprep.subr.mxu0 0.0
      %2775 = vmatpush1.xpose.msra.mxu0 0.0
      %2776 = vmatprep.subr.mxu0 0.0
      %2777 = vmatpush1.xpose.msra.mxu0 0.0
      %2778 = vmatprep.subr.mxu0 0.0
      %2779 = vmatpush1.xpose.msra.mxu0 0.0
      %2780 = vmatprep.subr.mxu0 0.0
      %2781 = vmatpush1.xpose.msra.mxu0 0.0
      %2782 = vmatprep.subr.mxu0 0.0
      %2783 = vmatpush1.xpose.msra.mxu0 0.0
      %2784 = vmatprep.subr.mxu0 0.0
      %2785 = vmatpush1.xpose.msra.mxu0 0.0
      %2786 = vmatprep.subr.mxu0 0.0
      %2787 = vmatpush1.xpose.msra.mxu0 0.0
      %2788 = vmatprep.mubr.f32.mxu0 0.0
      %2789 = vmatmul.mubr.f32.gmra.mrb[0].mxu0 %v2720
      %v2790 = vpop.f32.mrb[0].mxu0
      %v2791 = vadd.f32 0.0, %v2790
      %v2792 = vpop.f32.mrb[0].mxu0
      %2793 = vdwg.mxu0
      %v2794 = vcombine.low %v2288, %v2290
      %v2795 = vcombine.low %v2273, %v2287
      %v2797 = vunpack.c.l.s4 1966171168
      %v2798 = vunpack.c.0.s8 %v2797
      %v2799 = vlaneseq
      %v2800 = vshrl.u32 %v2799, 7
      %v2801 = vsub.s32 %v2798, %v2800
      %v2802 = vrot.slane %v2794, %v2801
      %v2804 = vunpack.c.l.s4 1966171168
      %v2805 = vunpack.c.0.s8 %v2804
      %v2806 = vlaneseq
      %v2807 = vshrl.u32 %v2806, 7
      %v2808 = vsub.s32 %v2805, %v2807
      %v2809 = vrot.slane %v2795, %v2808
      %v2811 = vunpack.c.l.s4 1966171168
      %v2812 = vunpack.c.0.s8 %v2811
      %v2813 = vlaneseq
      %v2814 = vshrl.u32 %v2813, 7
      %v2815 = vsub.s32 %v2812, %v2814
      %v2816 = vrot.slane %v2289, %v2815
      %v2817 = vcombine.low %v2802, %v2809
      %v2819 = vunpack.c.l.s4 1966171168
      %v2820 = vunpack.c.0.s8 %v2819
      %v2821 = vlaneseq
      %v2822 = vshrl.u32 %v2821, 7
      %v2823 = vsub.s32 %v2820, %v2822
      %v2824 = vrot.slane %v2817, %v2823
      %v2826 = vunpack.c.l.s4 1966171168
      %v2827 = vunpack.c.0.s8 %v2826
      %v2828 = vlaneseq
      %v2829 = vshrl.u32 %v2828, 7
      %v2830 = vsub.s32 %v2827, %v2829
      %v2831 = vrot.slane %v2816, %v2830
      %v2832 = vcombine.low %v2824, %v2831
      %v2833 = vcombine.low %v2387, %v2389
      %v2834 = vcombine.low %v2372, %v2386
      %v2836 = vunpack.c.l.s4 1966171168
      %v2837 = vunpack.c.0.s8 %v2836
      %v2838 = vlaneseq
      %v2839 = vshrl.u32 %v2838, 7
      %v2840 = vsub.s32 %v2837, %v2839
      %v2841 = vrot.slane %v2833, %v2840
      %v2843 = vunpack.c.l.s4 1966171168
      %v2844 = vunpack.c.0.s8 %v2843
      %v2845 = vlaneseq
      %v2846 = vshrl.u32 %v2845, 7
      %v2847 = vsub.s32 %v2844, %v2846
      %v2848 = vrot.slane %v2834, %v2847
      %v2850 = vunpack.c.l.s4 1966171168
      %v2851 = vunpack.c.0.s8 %v2850
      %v2852 = vlaneseq
      %v2853 = vshrl.u32 %v2852, 7
      %v2854 = vsub.s32 %v2851, %v2853
      %v2855 = vrot.slane %v2388, %v2854
      %v2856 = vcombine.low %v2841, %v2848
      %v2858 = vunpack.c.l.s4 1966171168
      %v2859 = vunpack.c.0.s8 %v2858
      %v2860 = vlaneseq
      %v2861 = vshrl.u32 %v2860, 7
      %v2862 = vsub.s32 %v2859, %v2861
      %v2863 = vrot.slane %v2856, %v2862
      %v2865 = vunpack.c.l.s4 1966171168
      %v2866 = vunpack.c.0.s8 %v2865
      %v2867 = vlaneseq
      %v2868 = vshrl.u32 %v2867, 7
      %v2869 = vsub.s32 %v2866, %v2868
      %v2870 = vrot.slane %v2855, %v2869
      %v2871 = vcombine.low %v2863, %v2870
      %v2872 = vsel %vm2567, %v2832, 0
      %v2874 = vsel %vm2567, %v2871, 0
      %2876 = vmatprep.subr.mxu0 0.0
      %2877 = vmatpush1.xpose.msra.mxu0 %v2874
      %2878 = vmatprep.subr.mxu0 0.0
      %2879 = vmatpush1.xpose.msra.mxu0 0.0
      %2880 = vmatprep.subr.mxu0 0.0
      %2881 = vmatpush1.xpose.msra.mxu0 0.0
      %2882 = vmatprep.subr.mxu0 0.0
      %2883 = vmatpush1.xpose.msra.mxu0 0.0
      %2884 = vmatprep.subr.mxu0 0.0
      %2885 = vmatpush1.xpose.msra.mxu0 0.0
      %2886 = vmatprep.subr.mxu0 0.0
      %2887 = vmatpush1.xpose.msra.mxu0 0.0
      %2888 = vmatprep.subr.mxu0 0.0
      %2889 = vmatpush1.xpose.msra.mxu0 0.0
      %2890 = vmatprep.subr.mxu0 0.0
      %2891 = vmatpush1.xpose.msra.mxu0 0.0
      %2892 = vmatprep.subr.mxu0 0.0
      %2893 = vmatpush1.xpose.msra.mxu0 0.0
      %2894 = vmatprep.subr.mxu0 0.0
      %2895 = vmatpush1.xpose.msra.mxu0 0.0
      %2896 = vmatprep.subr.mxu0 0.0
      %2897 = vmatpush1.xpose.msra.mxu0 0.0
      %2898 = vmatprep.subr.mxu0 0.0
      %2899 = vmatpush1.xpose.msra.mxu0 0.0
      %2900 = vmatprep.subr.mxu0 0.0
      %2901 = vmatpush1.xpose.msra.mxu0 0.0
      %2902 = vmatprep.subr.mxu0 0.0
      %2903 = vmatpush1.xpose.msra.mxu0 0.0
      %2904 = vmatprep.subr.mxu0 0.0
      %2905 = vmatpush1.xpose.msra.mxu0 0.0
      %2906 = vmatprep.subr.mxu0 0.0
      %2907 = vmatpush1.xpose.msra.mxu0 0.0
      %2908 = vmatprep.subr.mxu0 0.0
      %2909 = vmatpush1.xpose.msra.mxu0 0.0
      %2910 = vmatprep.subr.mxu0 0.0
      %2911 = vmatpush1.xpose.msra.mxu0 0.0
      %2912 = vmatprep.subr.mxu0 0.0
      %2913 = vmatpush1.xpose.msra.mxu0 0.0
      %2914 = vmatprep.subr.mxu0 0.0
      %2915 = vmatpush1.xpose.msra.mxu0 0.0
      %2916 = vmatprep.subr.mxu0 0.0
      %2917 = vmatpush1.xpose.msra.mxu0 0.0
      %2918 = vmatprep.subr.mxu0 0.0
      %2919 = vmatpush1.xpose.msra.mxu0 0.0
      %2920 = vmatprep.subr.mxu0 0.0
      %2921 = vmatpush1.xpose.msra.mxu0 0.0
      %2922 = vmatprep.subr.mxu0 0.0
      %2923 = vmatpush1.xpose.msra.mxu0 0.0
      %2924 = vmatprep.subr.mxu0 0.0
      %2925 = vmatpush1.xpose.msra.mxu0 0.0
      %2926 = vmatprep.subr.mxu0 0.0
      %2927 = vmatpush1.xpose.msra.mxu0 0.0
      %2928 = vmatprep.subr.mxu0 0.0
      %2929 = vmatpush1.xpose.msra.mxu0 0.0
      %2930 = vmatprep.subr.mxu0 0.0
      %2931 = vmatpush1.xpose.msra.mxu0 0.0
      %2932 = vmatprep.subr.mxu0 0.0
      %2933 = vmatpush1.xpose.msra.mxu0 0.0
      %2934 = vmatprep.subr.mxu0 0.0
      %2935 = vmatpush1.xpose.msra.mxu0 0.0
      %2936 = vmatprep.subr.mxu0 0.0
      %2937 = vmatpush1.xpose.msra.mxu0 0.0
      %2938 = vmatprep.subr.mxu0 0.0
      %2939 = vmatpush1.xpose.msra.mxu0 0.0
      %2940 = vmatprep.mubr.f32.mxu0 0.0
      %2941 = vmatmul.mubr.f32.gmra.mrb[0].mxu0 %v2872
      %v2942 = vpop.f32.mrb[0].mxu0
      %v2943 = vadd.f32 0.0, %v2942
      %v2944 = vpop.f32.mrb[0].mxu0
      %2945 = vdwg.mxu0
      %vm2946 = vcmask 36864
      %v2947 = vsel %vm2946, %v2639, -inf
      %2948 = vmax.xlane.f32.xlu0 %v2947
      %v2949 = vpop.xlane.xlu0 %2948
      %v2950 = vsel %vm2946, %v2791, -inf
      %2951 = vmax.xlane.f32.xlu0 %v2950
      %v2952 = vpop.xlane.xlu0 %2951
      %v2953 = vsel %vm2946, %v2943, -inf
      %2954 = vmax.xlane.f32.xlu0 %v2953
      %v2955 = vpop.xlane.xlu0 %2954
      %v2956 = vsub.f32 %v2639, %v2949
      %v2957 = vsub.f32 %v2791, %v2952
      %v2958 = vsub.f32 %v2943, %v2955
      %v2959 = vmul.f32 %v2956, 1.442695
      %v2960 = vpow.pop %v2959
      %v2961 = vmul.f32 %v2957, 1.442695
      %v2962 = vpow.pop %v2961
      %v2963 = vmul.f32 %v2958, 1.442695
      %v2964 = vpow.pop %v2963
      %v2965 = vsel %vm2946, %v2960, 0.0
      %2966 = vadd.xlane.f32.xlu0 %v2965
      %v2967 = vpop.xlane.xlu0 %2966
      %v2968 = vsel %vm2946, %v2962, 0.0
      %2969 = vadd.xlane.f32.xlu0 %v2968
      %v2970 = vpop.xlane.xlu0 %2969
      %v2971 = vsel %vm2946, %v2964, 0.0
      %2972 = vadd.xlane.f32.xlu0 %v2971
      %v2973 = vpop.xlane.xlu0 %2972
      %v2974 = vrcp.pop %v2967
      %v2975 = vrcp.pop %v2970
      %v2976 = vrcp.pop %v2973
      %v2977 = vmul.f32 %v2960, %v2974
      %v2978 = vmul.f32 %v2962, %v2975
      %v2979 = vmul.f32 %v2964, %v2976
      %v2980 = vcombine.low %v2415, %v2429
      %v2981 = vcombine.low %v2437, %v2439
      %v2983 = vunpack.c.l.s4 1966171168
      %v2984 = vunpack.c.0.s8 %v2983
      %v2985 = vlaneseq
      %v2986 = vshrl.u32 %v2985, 7
      %v2987 = vsub.s32 %v2984, %v2986
      %v2988 = vrot.slane %v2980, %v2987
      %v2990 = vunpack.c.l.s4 1966171168
      %v2991 = vunpack.c.0.s8 %v2990
      %v2992 = vlaneseq
      %v2993 = vshrl.u32 %v2992, 7
      %v2994 = vsub.s32 %v2991, %v2993
      %v2995 = vrot.slane %v2981, %v2994
      %v2997 = vunpack.c.l.s4 1966171168
      %v2998 = vunpack.c.0.s8 %v2997
      %v2999 = vlaneseq
      %v3000 = vshrl.u32 %v2999, 7
      %v3001 = vsub.s32 %v2998, %v3000
      %v3002 = vrot.slane %v2422, %v3001
      %v3003 = vcombine.low %v2988, %v2995
      %v3005 = vunpack.c.l.s4 1966171168
      %v3006 = vunpack.c.0.s8 %v3005
      %v3007 = vlaneseq
      %v3008 = vshrl.u32 %v3007, 7
      %v3009 = vsub.s32 %v3006, %v3008
      %v3010 = vrot.slane %v3003, %v3009
      %v3012 = vunpack.c.l.s4 1966171168
      %v3013 = vunpack.c.0.s8 %v3012
      %v3014 = vlaneseq
      %v3015 = vshrl.u32 %v3014, 7
      %v3016 = vsub.s32 %v3013, %v3015
      %v3017 = vrot.slane %v3002, %v3016
      %v3018 = vcombine.low %v3010, %v3017
      %vm3019 = vcmask 39936
      %v3021 = vsel %vm3019, %v2977, 0
      %vm3023 = vcmask 1044480
      %v3024 = vsel %vm3023, %v3018, 0
      %3026 = vmatprep.subr.mxu0 0.0
      %3027 = vmatpush1.msra.mxu0 %v3024
      %3028 = vmatprep.subr.mxu0 0.0
      %3029 = vmatpush1.msra.mxu0 0.0
      %3030 = vmatprep.subr.mxu0 0.0
      %3031 = vmatpush1.msra.mxu0 0.0
      %3032 = vmatprep.subr.mxu0 0.0
      %3033 = vmatpush1.msra.mxu0 0.0
      %3034 = vmatprep.subr.mxu0 0.0
      %3035 = vmatpush1.msra.mxu0 0.0
      %3036 = vmatprep.subr.mxu0 0.0
      %3037 = vmatpush1.msra.mxu0 0.0
      %3038 = vmatprep.subr.mxu0 0.0
      %3039 = vmatpush1.msra.mxu0 0.0
      %3040 = vmatprep.subr.mxu0 0.0
      %3041 = vmatpush1.msra.mxu0 0.0
      %3042 = vmatprep.subr.mxu0 0.0
      %3043 = vmatpush1.msra.mxu0 0.0
      %3044 = vmatprep.subr.mxu0 0.0
      %3045 = vmatpush1.msra.mxu0 0.0
      %3046 = vmatprep.subr.mxu0 0.0
      %3047 = vmatpush1.msra.mxu0 0.0
      %3048 = vmatprep.subr.mxu0 0.0
      %3049 = vmatpush1.msra.mxu0 0.0
      %3050 = vmatprep.subr.mxu0 0.0
      %3051 = vmatpush1.msra.mxu0 0.0
      %3052 = vmatprep.subr.mxu0 0.0
      %3053 = vmatpush1.msra.mxu0 0.0
      %3054 = vmatprep.subr.mxu0 0.0
      %3055 = vmatpush1.msra.mxu0 0.0
      %3056 = vmatprep.subr.mxu0 0.0
      %3057 = vmatpush1.msra.mxu0 0.0
      %3058 = vmatprep.subr.mxu0 0.0
      %3059 = vmatpush1.msra.mxu0 0.0
      %3060 = vmatprep.subr.mxu0 0.0
      %3061 = vmatpush1.msra.mxu0 0.0
      %3062 = vmatprep.subr.mxu0 0.0
      %3063 = vmatpush1.msra.mxu0 0.0
      %3064 = vmatprep.subr.mxu0 0.0
      %3065 = vmatpush1.msra.mxu0 0.0
      %3066 = vmatprep.subr.mxu0 0.0
      %3067 = vmatpush1.msra.mxu0 0.0
      %3068 = vmatprep.subr.mxu0 0.0
      %3069 = vmatpush1.msra.mxu0 0.0
      %3070 = vmatprep.subr.mxu0 0.0
      %3071 = vmatpush1.msra.mxu0 0.0
      %3072 = vmatprep.subr.mxu0 0.0
      %3073 = vmatpush1.msra.mxu0 0.0
      %3074 = vmatprep.subr.mxu0 0.0
      %3075 = vmatpush1.msra.mxu0 0.0
      %3076 = vmatprep.subr.mxu0 0.0
      %3077 = vmatpush1.msra.mxu0 0.0
      %3078 = vmatprep.subr.mxu0 0.0
      %3079 = vmatpush1.msra.mxu0 0.0
      %3080 = vmatprep.subr.mxu0 0.0
      %3081 = vmatpush1.msra.mxu0 0.0
      %3082 = vmatprep.subr.mxu0 0.0
      %3083 = vmatpush1.msra.mxu0 0.0
      %3084 = vmatprep.subr.mxu0 0.0
      %3085 = vmatpush1.msra.mxu0 0.0
      %3086 = vmatprep.subr.mxu0 0.0
      %3087 = vmatpush1.msra.mxu0 0.0
      %3088 = vmatprep.subr.mxu0 0.0
      %3089 = vmatpush1.msra.mxu0 0.0
      %3090 = vmatprep.mubr.f32.mxu0 0.0
      %3091 = vmatmul.mubr.f32.gmra.mrb[0].mxu0 %v3021
      %v3092 = vpop.f32.mrb[0].mxu0
      %v3093 = vadd.f32 0.0, %v3092
      %v3094 = vpop.f32.mrb[0].mxu0
      %3095 = vdwg.mxu0
      %v3096 = vcombine.low %v2436, %v2438
      %v3097 = vcombine.low %v2440, %v2464
      %v3099 = vunpack.c.l.s4 1966171168
      %v3100 = vunpack.c.0.s8 %v3099
      %v3101 = vlaneseq
      %v3102 = vshrl.u32 %v3101, 7
      %v3103 = vsub.s32 %v3100, %v3102
      %v3104 = vrot.slane %v3096, %v3103
      %v3106 = vunpack.c.l.s4 1966171168
      %v3107 = vunpack.c.0.s8 %v3106
      %v3108 = vlaneseq
      %v3109 = vshrl.u32 %v3108, 7
      %v3110 = vsub.s32 %v3107, %v3109
      %v3111 = vrot.slane %v3097, %v3110
      %v3113 = vunpack.c.l.s4 1966171168
      %v3114 = vunpack.c.0.s8 %v3113
      %v3115 = vlaneseq
      %v3116 = vshrl.u32 %v3115, 7
      %v3117 = vsub.s32 %v3114, %v3116
      %v3118 = vrot.slane %v2478, %v3117
      %v3119 = vcombine.low %v3104, %v3111
      %v3121 = vunpack.c.l.s4 1966171168
      %v3122 = vunpack.c.0.s8 %v3121
      %v3123 = vlaneseq
      %v3124 = vshrl.u32 %v3123, 7
      %v3125 = vsub.s32 %v3122, %v3124
      %v3126 = vrot.slane %v3119, %v3125
      %v3128 = vunpack.c.l.s4 1966171168
      %v3129 = vunpack.c.0.s8 %v3128
      %v3130 = vlaneseq
      %v3131 = vshrl.u32 %v3130, 7
      %v3132 = vsub.s32 %v3129, %v3131
      %v3133 = vrot.slane %v3118, %v3132
      %v3134 = vcombine.low %v3126, %v3133
      %v3136 = vsel %vm3019, %v2978, 0
      %v3138 = vsel %vm3023, %v3134, 0
      %3140 = vmatprep.subr.mxu0 0.0
      %3141 = vmatpush1.msra.mxu0 %v3138
      %3142 = vmatprep.subr.mxu0 0.0
      %3143 = vmatpush1.msra.mxu0 0.0
      %3144 = vmatprep.subr.mxu0 0.0
      %3145 = vmatpush1.msra.mxu0 0.0
      %3146 = vmatprep.subr.mxu0 0.0
      %3147 = vmatpush1.msra.mxu0 0.0
      %3148 = vmatprep.subr.mxu0 0.0
      %3149 = vmatpush1.msra.mxu0 0.0
      %3150 = vmatprep.subr.mxu0 0.0
      %3151 = vmatpush1.msra.mxu0 0.0
      %3152 = vmatprep.subr.mxu0 0.0
      %3153 = vmatpush1.msra.mxu0 0.0
      %3154 = vmatprep.subr.mxu0 0.0
      %3155 = vmatpush1.msra.mxu0 0.0
      %3156 = vmatprep.subr.mxu0 0.0
      %3157 = vmatpush1.msra.mxu0 0.0
      %3158 = vmatprep.subr.mxu0 0.0
      %3159 = vmatpush1.msra.mxu0 0.0
      %3160 = vmatprep.subr.mxu0 0.0
      %3161 = vmatpush1.msra.mxu0 0.0
      %3162 = vmatprep.subr.mxu0 0.0
      %3163 = vmatpush1.msra.mxu0 0.0
      %3164 = vmatprep.subr.mxu0 0.0
      %3165 = vmatpush1.msra.mxu0 0.0
      %3166 = vmatprep.subr.mxu0 0.0
      %3167 = vmatpush1.msra.mxu0 0.0
      %3168 = vmatprep.subr.mxu0 0.0
      %3169 = vmatpush1.msra.mxu0 0.0
      %3170 = vmatprep.subr.mxu0 0.0
      %3171 = vmatpush1.msra.mxu0 0.0
      %3172 = vmatprep.subr.mxu0 0.0
      %3173 = vmatpush1.msra.mxu0 0.0
      %3174 = vmatprep.subr.mxu0 0.0
      %3175 = vmatpush1.msra.mxu0 0.0
      %3176 = vmatprep.subr.mxu0 0.0
      %3177 = vmatpush1.msra.mxu0 0.0
      %3178 = vmatprep.subr.mxu0 0.0
      %3179 = vmatpush1.msra.mxu0 0.0
      %3180 = vmatprep.subr.mxu0 0.0
      %3181 = vmatpush1.msra.mxu0 0.0
      %3182 = vmatprep.subr.mxu0 0.0
      %3183 = vmatpush1.msra.mxu0 0.0
      %3184 = vmatprep.subr.mxu0 0.0
      %3185 = vmatpush1.msra.mxu0 0.0
      %3186 = vmatprep.subr.mxu0 0.0
      %3187 = vmatpush1.msra.mxu0 0.0
      %3188 = vmatprep.subr.mxu0 0.0
      %3189 = vmatpush1.msra.mxu0 0.0
      %3190 = vmatprep.subr.mxu0 0.0
      %3191 = vmatpush1.msra.mxu0 0.0
      %3192 = vmatprep.subr.mxu0 0.0
      %3193 = vmatpush1.msra.mxu0 0.0
      %3194 = vmatprep.subr.mxu0 0.0
      %3195 = vmatpush1.msra.mxu0 0.0
      %3196 = vmatprep.subr.mxu0 0.0
      %3197 = vmatpush1.msra.mxu0 0.0
      %3198 = vmatprep.subr.mxu0 0.0
      %3199 = vmatpush1.msra.mxu0 0.0
      %3200 = vmatprep.subr.mxu0 0.0
      %3201 = vmatpush1.msra.mxu0 0.0
      %3202 = vmatprep.subr.mxu0 0.0
      %3203 = vmatpush1.msra.mxu0 0.0
      %3204 = vmatprep.mubr.f32.mxu0 0.0
      %3205 = vmatmul.mubr.f32.gmra.mrb[0].mxu0 %v3136
      %v3206 = vpop.f32.mrb[0].mxu0
      %v3207 = vadd.f32 0.0, %v3206
      %v3208 = vpop.f32.mrb[0].mxu0
      %3209 = vdwg.mxu0
      %v3210 = vcombine.low %v2486, %v2488
      %v3211 = vcombine.low %v2471, %v2485
      %v3213 = vunpack.c.l.s4 1966171168
      %v3214 = vunpack.c.0.s8 %v3213
      %v3215 = vlaneseq
      %v3216 = vshrl.u32 %v3215, 7
      %v3217 = vsub.s32 %v3214, %v3216
      %v3218 = vrot.slane %v3210, %v3217
      %v3220 = vunpack.c.l.s4 1966171168
      %v3221 = vunpack.c.0.s8 %v3220
      %v3222 = vlaneseq
      %v3223 = vshrl.u32 %v3222, 7
      %v3224 = vsub.s32 %v3221, %v3223
      %v3225 = vrot.slane %v3211, %v3224
      %v3227 = vunpack.c.l.s4 1966171168
      %v3228 = vunpack.c.0.s8 %v3227
      %v3229 = vlaneseq
      %v3230 = vshrl.u32 %v3229, 7
      %v3231 = vsub.s32 %v3228, %v3230
      %v3232 = vrot.slane %v2487, %v3231
      %v3233 = vcombine.low %v3218, %v3225
      %v3235 = vunpack.c.l.s4 1966171168
      %v3236 = vunpack.c.0.s8 %v3235
      %v3237 = vlaneseq
      %v3238 = vshrl.u32 %v3237, 7
      %v3239 = vsub.s32 %v3236, %v3238
      %v3240 = vrot.slane %v3233, %v3239
      %v3242 = vunpack.c.l.s4 1966171168
      %v3243 = vunpack.c.0.s8 %v3242
      %v3244 = vlaneseq
      %v3245 = vshrl.u32 %v3244, 7
      %v3246 = vsub.s32 %v3243, %v3245
      %v3247 = vrot.slane %v3232, %v3246
      %v3248 = vcombine.low %v3240, %v3247
      %v3250 = vsel %vm3019, %v2979, 0
      %v3252 = vsel %vm3023, %v3248, 0
      %3254 = vmatprep.subr.mxu0 0.0
      %3255 = vmatpush1.msra.mxu0 %v3252
      %3256 = vmatprep.subr.mxu0 0.0
      %3257 = vmatpush1.msra.mxu0 0.0
      %3258 = vmatprep.subr.mxu0 0.0
      %3259 = vmatpush1.msra.mxu0 0.0
      %3260 = vmatprep.subr.mxu0 0.0
      %3261 = vmatpush1.msra.mxu0 0.0
      %3262 = vmatprep.subr.mxu0 0.0
      %3263 = vmatpush1.msra.mxu0 0.0
      %3264 = vmatprep.subr.mxu0 0.0
      %3265 = vmatpush1.msra.mxu0 0.0
      %3266 = vmatprep.subr.mxu0 0.0
      %3267 = vmatpush1.msra.mxu0 0.0
      %3268 = vmatprep.subr.mxu0 0.0
      %3269 = vmatpush1.msra.mxu0 0.0
      %3270 = vmatprep.subr.mxu0 0.0
      %3271 = vmatpush1.msra.mxu0 0.0
      %3272 = vmatprep.subr.mxu0 0.0
      %3273 = vmatpush1.msra.mxu0 0.0
      %3274 = vmatprep.subr.mxu0 0.0
      %3275 = vmatpush1.msra.mxu0 0.0
      %3276 = vmatprep.subr.mxu0 0.0
      %3277 = vmatpush1.msra.mxu0 0.0
      %3278 = vmatprep.subr.mxu0 0.0
      %3279 = vmatpush1.msra.mxu0 0.0
      %3280 = vmatprep.subr.mxu0 0.0
      %3281 = vmatpush1.msra.mxu0 0.0
      %3282 = vmatprep.subr.mxu0 0.0
      %3283 = vmatpush1.msra.mxu0 0.0
      %3284 = vmatprep.subr.mxu0 0.0
      %3285 = vmatpush1.msra.mxu0 0.0
      %3286 = vmatprep.subr.mxu0 0.0
      %3287 = vmatpush1.msra.mxu0 0.0
      %3288 = vmatprep.subr.mxu0 0.0
      %3289 = vmatpush1.msra.mxu0 0.0
      %3290 = vmatprep.subr.mxu0 0.0
      %3291 = vmatpush1.msra.mxu0 0.0
      %3292 = vmatprep.subr.mxu0 0.0
      %3293 = vmatpush1.msra.mxu0 0.0
      %3294 = vmatprep.subr.mxu0 0.0
      %3295 = vmatpush1.msra.mxu0 0.0
      %3296 = vmatprep.subr.mxu0 0.0
      %3297 = vmatpush1.msra.mxu0 0.0
      %3298 = vmatprep.subr.mxu0 0.0
      %3299 = vmatpush1.msra.mxu0 0.0
      %3300 = vmatprep.subr.mxu0 0.0
      %3301 = vmatpush1.msra.mxu0 0.0
      %3302 = vmatprep.subr.mxu0 0.0
      %3303 = vmatpush1.msra.mxu0 0.0
      %3304 = vmatprep.subr.mxu0 0.0
      %3305 = vmatpush1.msra.mxu0 0.0
      %3306 = vmatprep.subr.mxu0 0.0
      %3307 = vmatpush1.msra.mxu0 0.0
      %3308 = vmatprep.subr.mxu0 0.0
      %3309 = vmatpush1.msra.mxu0 0.0
      %3310 = vmatprep.subr.mxu0 0.0
      %3311 = vmatpush1.msra.mxu0 0.0
      %3312 = vmatprep.subr.mxu0 0.0
      %3313 = vmatpush1.msra.mxu0 0.0
      %3314 = vmatprep.subr.mxu0 0.0
      %3315 = vmatpush1.msra.mxu0 0.0
      %3316 = vmatprep.subr.mxu0 0.0
      %3317 = vmatpush1.msra.mxu0 0.0
      %3318 = vmatprep.mubr.f32.mxu0 0.0
      %3319 = vmatmul.mubr.f32.gmra.mrb[0].mxu0 %v3250
      %v3320 = vpop.f32.mrb[0].mxu0
      %v3321 = vadd.f32 0.0, %v3320
      %v3322 = vpop.f32.mrb[0].mxu0
      %3323 = vdwg.mxu0
      %3324 = vrot.lane.b32.xlu0 %v2527, 120
      %v3325 = vpop.permute.xlu0 %3324
      %3326 = vrot.lane.b32.xlu0 %v2566, 120
      %v3327 = vpop.permute.xlu0 %3326
      %v3328 = vsel %vm2567, %v3325, 0
      %v3330 = vsel %vm2567, %v3327, 0
      %3332 = vmatprep.subr.mxu0 0.0
      %3333 = vmatpush1.xpose.msra.mxu0 %v3330
      %3334 = vmatprep.subr.mxu0 0.0
      %3335 = vmatpush1.xpose.msra.mxu0 0.0
      %3336 = vmatprep.subr.mxu0 0.0
      %3337 = vmatpush1.xpose.msra.mxu0 0.0
      %3338 = vmatprep.subr.mxu0 0.0
      %3339 = vmatpush1.xpose.msra.mxu0 0.0
      %3340 = vmatprep.subr.mxu0 0.0
      %3341 = vmatpush1.xpose.msra.mxu0 0.0
      %3342 = vmatprep.subr.mxu0 0.0
      %3343 = vmatpush1.xpose.msra.mxu0 0.0
      %3344 = vmatprep.subr.mxu0 0.0
      %3345 = vmatpush1.xpose.msra.mxu0 0.0
      %3346 = vmatprep.subr.mxu0 0.0
      %3347 = vmatpush1.xpose.msra.mxu0 0.0
      %3348 = vmatprep.subr.mxu0 0.0
      %3349 = vmatpush1.xpose.msra.mxu0 0.0
      %3350 = vmatprep.subr.mxu0 0.0
      %3351 = vmatpush1.xpose.msra.mxu0 0.0
      %3352 = vmatprep.subr.mxu0 0.0
      %3353 = vmatpush1.xpose.msra.mxu0 0.0
      %3354 = vmatprep.subr.mxu0 0.0
      %3355 = vmatpush1.xpose.msra.mxu0 0.0
      %3356 = vmatprep.subr.mxu0 0.0
      %3357 = vmatpush1.xpose.msra.mxu0 0.0
      %3358 = vmatprep.subr.mxu0 0.0
      %3359 = vmatpush1.xpose.msra.mxu0 0.0
      %3360 = vmatprep.subr.mxu0 0.0
      %3361 = vmatpush1.xpose.msra.mxu0 0.0
      %3362 = vmatprep.subr.mxu0 0.0
      %3363 = vmatpush1.xpose.msra.mxu0 0.0
      %3364 = vmatprep.subr.mxu0 0.0
      %3365 = vmatpush1.xpose.msra.mxu0 0.0
      %3366 = vmatprep.subr.mxu0 0.0
      %3367 = vmatpush1.xpose.msra.mxu0 0.0
      %3368 = vmatprep.subr.mxu0 0.0
      %3369 = vmatpush1.xpose.msra.mxu0 0.0
      %3370 = vmatprep.subr.mxu0 0.0
      %3371 = vmatpush1.xpose.msra.mxu0 0.0
      %3372 = vmatprep.subr.mxu0 0.0
      %3373 = vmatpush1.xpose.msra.mxu0 0.0
      %3374 = vmatprep.subr.mxu0 0.0
      %3375 = vmatpush1.xpose.msra.mxu0 0.0
      %3376 = vmatprep.subr.mxu0 0.0
      %3377 = vmatpush1.xpose.msra.mxu0 0.0
      %3378 = vmatprep.subr.mxu0 0.0
      %3379 = vmatpush1.xpose.msra.mxu0 0.0
      %3380 = vmatprep.subr.mxu0 0.0
      %3381 = vmatpush1.xpose.msra.mxu0 0.0
      %3382 = vmatprep.subr.mxu0 0.0
      %3383 = vmatpush1.xpose.msra.mxu0 0.0
      %3384 = vmatprep.subr.mxu0 0.0
      %3385 = vmatpush1.xpose.msra.mxu0 0.0
      %3386 = vmatprep.subr.mxu0 0.0
      %3387 = vmatpush1.xpose.msra.mxu0 0.0
      %3388 = vmatprep.subr.mxu0 0.0
      %3389 = vmatpush1.xpose.msra.mxu0 0.0
      %3390 = vmatprep.subr.mxu0 0.0
      %3391 = vmatpush1.xpose.msra.mxu0 0.0
      %3392 = vmatprep.subr.mxu0 0.0
      %3393 = vmatpush1.xpose.msra.mxu0 0.0
      %3394 = vmatprep.subr.mxu0 0.0
      %3395 = vmatpush1.xpose.msra.mxu0 0.0
      %3396 = vmatprep.mubr.f32.mxu0 0.0
      %3397 = vmatmul.mubr.f32.gmra.mrb[0].mxu0 %v3328
      %v3398 = vpop.f32.mrb[0].mxu0
      %v3399 = vadd.f32 0.0, %v3398
      %v3400 = vpop.f32.mrb[0].mxu0
      %3401 = vdwg.mxu0
      %3402 = vrot.lane.b32.xlu0 %v2680, 120
      %v3403 = vpop.permute.xlu0 %3402
      %3404 = vrot.lane.b32.xlu0 %v2719, 120
      %v3405 = vpop.permute.xlu0 %3404
      %v3406 = vsel %vm2567, %v3403, 0
      %v3408 = vsel %vm2567, %v3405, 0
      %3410 = vmatprep.subr.mxu0 0.0
      %3411 = vmatpush1.xpose.msra.mxu0 %v3408
      %3412 = vmatprep.subr.mxu0 0.0
      %3413 = vmatpush1.xpose.msra.mxu0 0.0
      %3414 = vmatprep.subr.mxu0 0.0
      %3415 = vmatpush1.xpose.msra.mxu0 0.0
      %3416 = vmatprep.subr.mxu0 0.0
      %3417 = vmatpush1.xpose.msra.mxu0 0.0
      %3418 = vmatprep.subr.mxu0 0.0
      %3419 = vmatpush1.xpose.msra.mxu0 0.0
      %3420 = vmatprep.subr.mxu0 0.0
      %3421 = vmatpush1.xpose.msra.mxu0 0.0
      %3422 = vmatprep.subr.mxu0 0.0
      %3423 = vmatpush1.xpose.msra.mxu0 0.0
      %3424 = vmatprep.subr.mxu0 0.0
      %3425 = vmatpush1.xpose.msra.mxu0 0.0
      %3426 = vmatprep.subr.mxu0 0.0
      %3427 = vmatpush1.xpose.msra.mxu0 0.0
      %3428 = vmatprep.subr.mxu0 0.0
      %3429 = vmatpush1.xpose.msra.mxu0 0.0
      %3430 = vmatprep.subr.mxu0 0.0
      %3431 = vmatpush1.xpose.msra.mxu0 0.0
      %3432 = vmatprep.subr.mxu0 0.0
      %3433 = vmatpush1.xpose.msra.mxu0 0.0
      %3434 = vmatprep.subr.mxu0 0.0
      %3435 = vmatpush1.xpose.msra.mxu0 0.0
      %3436 = vmatprep.subr.mxu0 0.0
      %3437 = vmatpush1.xpose.msra.mxu0 0.0
      %3438 = vmatprep.subr.mxu0 0.0
      %3439 = vmatpush1.xpose.msra.mxu0 0.0
      %3440 = vmatprep.subr.mxu0 0.0
      %3441 = vmatpush1.xpose.msra.mxu0 0.0
      %3442 = vmatprep.subr.mxu0 0.0
      %3443 = vmatpush1.xpose.msra.mxu0 0.0
      %3444 = vmatprep.subr.mxu0 0.0
      %3445 = vmatpush1.xpose.msra.mxu0 0.0
      %3446 = vmatprep.subr.mxu0 0.0
      %3447 = vmatpush1.xpose.msra.mxu0 0.0
      %3448 = vmatprep.subr.mxu0 0.0
      %3449 = vmatpush1.xpose.msra.mxu0 0.0
      %3450 = vmatprep.subr.mxu0 0.0
      %3451 = vmatpush1.xpose.msra.mxu0 0.0
      %3452 = vmatprep.subr.mxu0 0.0
      %3453 = vmatpush1.xpose.msra.mxu0 0.0
      %3454 = vmatprep.subr.mxu0 0.0
      %3455 = vmatpush1.xpose.msra.mxu0 0.0
      %3456 = vmatprep.subr.mxu0 0.0
      %3457 = vmatpush1.xpose.msra.mxu0 0.0
      %3458 = vmatprep.subr.mxu0 0.0
      %3459 = vmatpush1.xpose.msra.mxu0 0.0
      %3460 = vmatprep.subr.mxu0 0.0
      %3461 = vmatpush1.xpose.msra.mxu0 0.0
      %3462 = vmatprep.subr.mxu0 0.0
      %3463 = vmatpush1.xpose.msra.mxu0 0.0
      %3464 = vmatprep.subr.mxu0 0.0
      %3465 = vmatpush1.xpose.msra.mxu0 0.0
      %3466 = vmatprep.subr.mxu0 0.0
      %3467 = vmatpush1.xpose.msra.mxu0 0.0
      %3468 = vmatprep.subr.mxu0 0.0
      %3469 = vmatpush1.xpose.msra.mxu0 0.0
      %3470 = vmatprep.subr.mxu0 0.0
      %3471 = vmatpush1.xpose.msra.mxu0 0.0
      %3472 = vmatprep.subr.mxu0 0.0
      %3473 = vmatpush1.xpose.msra.mxu0 0.0
      %3474 = vmatprep.mubr.f32.mxu0 0.0
      %3475 = vmatmul.mubr.f32.gmra.mrb[0].mxu0 %v3406
      %v3476 = vpop.f32.mrb[0].mxu0
      %v3477 = vadd.f32 0.0, %v3476
      %v3478 = vpop.f32.mrb[0].mxu0
      %3479 = vdwg.mxu0
      %3480 = vrot.lane.b32.xlu0 %v2832, 120
      %v3481 = vpop.permute.xlu0 %3480
      %3482 = vrot.lane.b32.xlu0 %v2871, 120
      %v3483 = vpop.permute.xlu0 %3482
      %v3484 = vsel %vm2567, %v3481, 0
      %v3486 = vsel %vm2567, %v3483, 0
      %3488 = vmatprep.subr.mxu0 0.0
      %3489 = vmatpush1.xpose.msra.mxu0 %v3486
      %3490 = vmatprep.subr.mxu0 0.0
      %3491 = vmatpush1.xpose.msra.mxu0 0.0
      %3492 = vmatprep.subr.mxu0 0.0
      %3493 = vmatpush1.xpose.msra.mxu0 0.0
      %3494 = vmatprep.subr.mxu0 0.0
      %3495 = vmatpush1.xpose.msra.mxu0 0.0
      %3496 = vmatprep.subr.mxu0 0.0
      %3497 = vmatpush1.xpose.msra.mxu0 0.0
      %3498 = vmatprep.subr.mxu0 0.0
      %3499 = vmatpush1.xpose.msra.mxu0 0.0
      %3500 = vmatprep.subr.mxu0 0.0
      %3501 = vmatpush1.xpose.msra.mxu0 0.0
      %3502 = vmatprep.subr.mxu0 0.0
      %3503 = vmatpush1.xpose.msra.mxu0 0.0
      %3504 = vmatprep.subr.mxu0 0.0
      %3505 = vmatpush1.xpose.msra.mxu0 0.0
      %3506 = vmatprep.subr.mxu0 0.0
      %3507 = vmatpush1.xpose.msra.mxu0 0.0
      %3508 = vmatprep.subr.mxu0 0.0
      %3509 = vmatpush1.xpose.msra.mxu0 0.0
      %3510 = vmatprep.subr.mxu0 0.0
      %3511 = vmatpush1.xpose.msra.mxu0 0.0
      %3512 = vmatprep.subr.mxu0 0.0
      %3513 = vmatpush1.xpose.msra.mxu0 0.0
      %3514 = vmatprep.subr.mxu0 0.0
      %3515 = vmatpush1.xpose.msra.mxu0 0.0
      %3516 = vmatprep.subr.mxu0 0.0
      %3517 = vmatpush1.xpose.msra.mxu0 0.0
      %3518 = vmatprep.subr.mxu0 0.0
      %3519 = vmatpush1.xpose.msra.mxu0 0.0
      %3520 = vmatprep.subr.mxu0 0.0
      %3521 = vmatpush1.xpose.msra.mxu0 0.0
      %3522 = vmatprep.subr.mxu0 0.0
      %3523 = vmatpush1.xpose.msra.mxu0 0.0
      %3524 = vmatprep.subr.mxu0 0.0
      %3525 = vmatpush1.xpose.msra.mxu0 0.0
      %3526 = vmatprep.subr.mxu0 0.0
      %3527 = vmatpush1.xpose.msra.mxu0 0.0
      %3528 = vmatprep.subr.mxu0 0.0
      %3529 = vmatpush1.xpose.msra.mxu0 0.0
      %3530 = vmatprep.subr.mxu0 0.0
      %3531 = vmatpush1.xpose.msra.mxu0 0.0
      %3532 = vmatprep.subr.mxu0 0.0
      %3533 = vmatpush1.xpose.msra.mxu0 0.0
      %3534 = vmatprep.subr.mxu0 0.0
      %3535 = vmatpush1.xpose.msra.mxu0 0.0
      %3536 = vmatprep.subr.mxu0 0.0
      %3537 = vmatpush1.xpose.msra.mxu0 0.0
      %3538 = vmatprep.subr.mxu0 0.0
      %3539 = vmatpush1.xpose.msra.mxu0 0.0
      %3540 = vmatprep.subr.mxu0 0.0
      %3541 = vmatpush1.xpose.msra.mxu0 0.0
      %3542 = vmatprep.subr.mxu0 0.0
      %3543 = vmatpush1.xpose.msra.mxu0 0.0
      %3544 = vmatprep.subr.mxu0 0.0
      %3545 = vmatpush1.xpose.msra.mxu0 0.0
      %3546 = vmatprep.subr.mxu0 0.0
      %3547 = vmatpush1.xpose.msra.mxu0 0.0
      %3548 = vmatprep.subr.mxu0 0.0
      %3549 = vmatpush1.xpose.msra.mxu0 0.0
      %3550 = vmatprep.subr.mxu0 0.0
      %3551 = vmatpush1.xpose.msra.mxu0 0.0
      %3552 = vmatprep.mubr.f32.mxu0 0.0
      %3553 = vmatmul.mubr.f32.gmra.mrb[0].mxu0 %v3484
      %v3554 = vpop.f32.mrb[0].mxu0
      %v3555 = vadd.f32 0.0, %v3554
      %v3556 = vpop.f32.mrb[0].mxu0
      %3557 = vdwg.mxu0
      %v3558 = vsel %vm2946, %v3399, -inf
      %3559 = vmax.xlane.f32.xlu0 %v3558
      %v3560 = vpop.xlane.xlu0 %3559
      %v3561 = vsel %vm2946, %v3477, -inf
      %3562 = vmax.xlane.f32.xlu0 %v3561
      %v3563 = vpop.xlane.xlu0 %3562
      %v3564 = vsel %vm2946, %v3555, -inf
      %3565 = vmax.xlane.f32.xlu0 %v3564
      %v3566 = vpop.xlane.xlu0 %3565
      %v3567 = vsub.f32 %v3399, %v3560
      %v3568 = vsub.f32 %v3477, %v3563
      %v3569 = vsub.f32 %v3555, %v3566
      %v3570 = vmul.f32 %v3567, 1.442695
      %v3571 = vpow.pop %v3570
      %v3572 = vmul.f32 %v3568, 1.442695
      %v3573 = vpow.pop %v3572
      %v3574 = vmul.f32 %v3569, 1.442695
      %v3575 = vpow.pop %v3574
      %v3576 = vsel %vm2946, %v3571, 0.0
      %3577 = vadd.xlane.f32.xlu0 %v3576
      %v3578 = vpop.xlane.xlu0 %3577
      %v3579 = vsel %vm2946, %v3573, 0.0
      %3580 = vadd.xlane.f32.xlu0 %v3579
      %v3581 = vpop.xlane.xlu0 %3580
      %v3582 = vsel %vm2946, %v3575, 0.0
      %3583 = vadd.xlane.f32.xlu0 %v3582
      %v3584 = vpop.xlane.xlu0 %3583
      %v3585 = vrcp.pop %v3578
      %v3586 = vrcp.pop %v3581
      %v3587 = vrcp.pop %v3584
      %v3588 = vmul.f32 %v3571, %v3585
      %v3589 = vmul.f32 %v3573, %v3586
      %v3590 = vmul.f32 %v3575, %v3587
      %3591 = vrot.lane.b32.xlu0 %v3018, 120
      %v3592 = vpop.permute.xlu0 %3591
      %v3594 = vsel %vm3019, %v3588, 0
      %v3596 = vsel %vm3023, %v3592, 0
      %3598 = vmatprep.subr.mxu0 0.0
      %3599 = vmatpush1.msra.mxu0 %v3596
      %3600 = vmatprep.subr.mxu0 0.0
      %3601 = vmatpush1.msra.mxu0 0.0
      %3602 = vmatprep.subr.mxu0 0.0
      %3603 = vmatpush1.msra.mxu0 0.0
      %3604 = vmatprep.subr.mxu0 0.0
      %3605 = vmatpush1.msra.mxu0 0.0
      %3606 = vmatprep.subr.mxu0 0.0
      %3607 = vmatpush1.msra.mxu0 0.0
      %3608 = vmatprep.subr.mxu0 0.0
      %3609 = vmatpush1.msra.mxu0 0.0
      %3610 = vmatprep.subr.mxu0 0.0
      %3611 = vmatpush1.msra.mxu0 0.0
      %3612 = vmatprep.subr.mxu0 0.0
      %3613 = vmatpush1.msra.mxu0 0.0
      %3614 = vmatprep.subr.mxu0 0.0
      %3615 = vmatpush1.msra.mxu0 0.0
      %3616 = vmatprep.subr.mxu0 0.0
      %3617 = vmatpush1.msra.mxu0 0.0
      %3618 = vmatprep.subr.mxu0 0.0
      %3619 = vmatpush1.msra.mxu0 0.0
      %3620 = vmatprep.subr.mxu0 0.0
      %3621 = vmatpush1.msra.mxu0 0.0
      %3622 = vmatprep.subr.mxu0 0.0
      %3623 = vmatpush1.msra.mxu0 0.0
      %3624 = vmatprep.subr.mxu0 0.0
      %3625 = vmatpush1.msra.mxu0 0.0
      %3626 = vmatprep.subr.mxu0 0.0
      %3627 = vmatpush1.msra.mxu0 0.0
      %3628 = vmatprep.subr.mxu0 0.0
      %3629 = vmatpush1.msra.mxu0 0.0
      %3630 = vmatprep.subr.mxu0 0.0
      %3631 = vmatpush1.msra.mxu0 0.0
      %3632 = vmatprep.subr.mxu0 0.0
      %3633 = vmatpush1.msra.mxu0 0.0
      %3634 = vmatprep.subr.mxu0 0.0
      %3635 = vmatpush1.msra.mxu0 0.0
      %3636 = vmatprep.subr.mxu0 0.0
      %3637 = vmatpush1.msra.mxu0 0.0
      %3638 = vmatprep.subr.mxu0 0.0
      %3639 = vmatpush1.msra.mxu0 0.0
      %3640 = vmatprep.subr.mxu0 0.0
      %3641 = vmatpush1.msra.mxu0 0.0
      %3642 = vmatprep.subr.mxu0 0.0
      %3643 = vmatpush1.msra.mxu0 0.0
      %3644 = vmatprep.subr.mxu0 0.0
      %3645 = vmatpush1.msra.mxu0 0.0
      %3646 = vmatprep.subr.mxu0 0.0
      %3647 = vmatpush1.msra.mxu0 0.0
      %3648 = vmatprep.subr.mxu0 0.0
      %3649 = vmatpush1.msra.mxu0 0.0
      %3650 = vmatprep.subr.mxu0 0.0
      %3651 = vmatpush1.msra.mxu0 0.0
      %3652 = vmatprep.subr.mxu0 0.0
      %3653 = vmatpush1.msra.mxu0 0.0
      %3654 = vmatprep.subr.mxu0 0.0
      %3655 = vmatpush1.msra.mxu0 0.0
      %3656 = vmatprep.subr.mxu0 0.0
      %3657 = vmatpush1.msra.mxu0 0.0
      %3658 = vmatprep.subr.mxu0 0.0
      %3659 = vmatpush1.msra.mxu0 0.0
      %3660 = vmatprep.subr.mxu0 0.0
      %3661 = vmatpush1.msra.mxu0 0.0
      %3662 = vmatprep.mubr.f32.mxu0 0.0
      %3663 = vmatmul.mubr.f32.gmra.mrb[0].mxu0 %v3594
      %v3664 = vpop.f32.mrb[0].mxu0
      %v3665 = vadd.f32 0.0, %v3664
      %v3666 = vpop.f32.mrb[0].mxu0
      %3667 = vdwg.mxu0
      %3668 = vrot.lane.b32.xlu0 %v3134, 120
      %v3669 = vpop.permute.xlu0 %3668
      %v3671 = vsel %vm3019, %v3589, 0
      %v3673 = vsel %vm3023, %v3669, 0
      %3675 = vmatprep.subr.mxu0 0.0
      %3676 = vmatpush1.msra.mxu0 %v3673
      %3677 = vmatprep.subr.mxu0 0.0
      %3678 = vmatpush1.msra.mxu0 0.0
      %3679 = vmatprep.subr.mxu0 0.0
      %3680 = vmatpush1.msra.mxu0 0.0
      %3681 = vmatprep.subr.mxu0 0.0
      %3682 = vmatpush1.msra.mxu0 0.0
      %3683 = vmatprep.subr.mxu0 0.0
      %3684 = vmatpush1.msra.mxu0 0.0
      %3685 = vmatprep.subr.mxu0 0.0
      %3686 = vmatpush1.msra.mxu0 0.0
      %3687 = vmatprep.subr.mxu0 0.0
      %3688 = vmatpush1.msra.mxu0 0.0
      %3689 = vmatprep.subr.mxu0 0.0
      %3690 = vmatpush1.msra.mxu0 0.0
      %3691 = vmatprep.subr.mxu0 0.0
      %3692 = vmatpush1.msra.mxu0 0.0
      %3693 = vmatprep.subr.mxu0 0.0
      %3694 = vmatpush1.msra.mxu0 0.0
      %3695 = vmatprep.subr.mxu0 0.0
      %3696 = vmatpush1.msra.mxu0 0.0
      %3697 = vmatprep.subr.mxu0 0.0
      %3698 = vmatpush1.msra.mxu0 0.0
      %3699 = vmatprep.subr.mxu0 0.0
      %3700 = vmatpush1.msra.mxu0 0.0
      %3701 = vmatprep.subr.mxu0 0.0
      %3702 = vmatpush1.msra.mxu0 0.0
      %3703 = vmatprep.subr.mxu0 0.0
      %3704 = vmatpush1.msra.mxu0 0.0
      %3705 = vmatprep.subr.mxu0 0.0
      %3706 = vmatpush1.msra.mxu0 0.0
      %3707 = vmatprep.subr.mxu0 0.0
      %3708 = vmatpush1.msra.mxu0 0.0
      %3709 = vmatprep.subr.mxu0 0.0
      %3710 = vmatpush1.msra.mxu0 0.0
      %3711 = vmatprep.subr.mxu0 0.0
      %3712 = vmatpush1.msra.mxu0 0.0
      %3713 = vmatprep.subr.mxu0 0.0
      %3714 = vmatpush1.msra.mxu0 0.0
      %3715 = vmatprep.subr.mxu0 0.0
      %3716 = vmatpush1.msra.mxu0 0.0
      %3717 = vmatprep.subr.mxu0 0.0
      %3718 = vmatpush1.msra.mxu0 0.0
      %3719 = vmatprep.subr.mxu0 0.0
      %3720 = vmatpush1.msra.mxu0 0.0
      %3721 = vmatprep.subr.mxu0 0.0
      %3722 = vmatpush1.msra.mxu0 0.0
      %3723 = vmatprep.subr.mxu0 0.0
      %3724 = vmatpush1.msra.mxu0 0.0
      %3725 = vmatprep.subr.mxu0 0.0
      %3726 = vmatpush1.msra.mxu0 0.0
      %3727 = vmatprep.subr.mxu0 0.0
      %3728 = vmatpush1.msra.mxu0 0.0
      %3729 = vmatprep.subr.mxu0 0.0
      %3730 = vmatpush1.msra.mxu0 0.0
      %3731 = vmatprep.subr.mxu0 0.0
      %3732 = vmatpush1.msra.mxu0 0.0
      %3733 = vmatprep.subr.mxu0 0.0
      %3734 = vmatpush1.msra.mxu0 0.0
      %3735 = vmatprep.subr.mxu0 0.0
      %3736 = vmatpush1.msra.mxu0 0.0
      %3737 = vmatprep.subr.mxu0 0.0
      %3738 = vmatpush1.msra.mxu0 0.0
      %3739 = vmatprep.mubr.f32.mxu0 0.0
      %3740 = vmatmul.mubr.f32.gmra.mrb[0].mxu0 %v3671
      %v3741 = vpop.f32.mrb[0].mxu0
      %v3742 = vadd.f32 0.0, %v3741
      %v3743 = vpop.f32.mrb[0].mxu0
      %3744 = vdwg.mxu0
      %3745 = vrot.lane.b32.xlu0 %v3248, 120
      %v3746 = vpop.permute.xlu0 %3745
      %v3748 = vsel %vm3019, %v3590, 0
      %v3750 = vsel %vm3023, %v3746, 0
      %3752 = vmatprep.subr.mxu0 0.0
      %3753 = vmatpush1.msra.mxu0 %v3750
      %3754 = vmatprep.subr.mxu0 0.0
      %3755 = vmatpush1.msra.mxu0 0.0
      %3756 = vmatprep.subr.mxu0 0.0
      %3757 = vmatpush1.msra.mxu0 0.0
      %3758 = vmatprep.subr.mxu0 0.0
      %3759 = vmatpush1.msra.mxu0 0.0
      %3760 = vmatprep.subr.mxu0 0.0
      %3761 = vmatpush1.msra.mxu0 0.0
      %3762 = vmatprep.subr.mxu0 0.0
      %3763 = vmatpush1.msra.mxu0 0.0
      %3764 = vmatprep.subr.mxu0 0.0
      %3765 = vmatpush1.msra.mxu0 0.0
      %3766 = vmatprep.subr.mxu0 0.0
      %3767 = vmatpush1.msra.mxu0 0.0
      %3768 = vmatprep.subr.mxu0 0.0
      %3769 = vmatpush1.msra.mxu0 0.0
      %3770 = vmatprep.subr.mxu0 0.0
      %3771 = vmatpush1.msra.mxu0 0.0
      %3772 = vmatprep.subr.mxu0 0.0
      %3773 = vmatpush1.msra.mxu0 0.0
      %3774 = vmatprep.subr.mxu0 0.0
      %3775 = vmatpush1.msra.mxu0 0.0
      %3776 = vmatprep.subr.mxu0 0.0
      %3777 = vmatpush1.msra.mxu0 0.0
      %3778 = vmatprep.subr.mxu0 0.0
      %3779 = vmatpush1.msra.mxu0 0.0
      %3780 = vmatprep.subr.mxu0 0.0
      %3781 = vmatpush1.msra.mxu0 0.0
      %3782 = vmatprep.subr.mxu0 0.0
      %3783 = vmatpush1.msra.mxu0 0.0
      %3784 = vmatprep.subr.mxu0 0.0
      %3785 = vmatpush1.msra.mxu0 0.0
      %3786 = vmatprep.subr.mxu0 0.0
      %3787 = vmatpush1.msra.mxu0 0.0
      %3788 = vmatprep.subr.mxu0 0.0
      %3789 = vmatpush1.msra.mxu0 0.0
      %3790 = vmatprep.subr.mxu0 0.0
      %3791 = vmatpush1.msra.mxu0 0.0
      %3792 = vmatprep.subr.mxu0 0.0
      %3793 = vmatpush1.msra.mxu0 0.0
      %3794 = vmatprep.subr.mxu0 0.0
      %3795 = vmatpush1.msra.mxu0 0.0
      %3796 = vmatprep.subr.mxu0 0.0
      %3797 = vmatpush1.msra.mxu0 0.0
      %3798 = vmatprep.subr.mxu0 0.0
      %3799 = vmatpush1.msra.mxu0 0.0
      %3800 = vmatprep.subr.mxu0 0.0
      %3801 = vmatpush1.msra.mxu0 0.0
      %3802 = vmatprep.subr.mxu0 0.0
      %3803 = vmatpush1.msra.mxu0 0.0
      %3804 = vmatprep.subr.mxu0 0.0
      %3805 = vmatpush1.msra.mxu0 0.0
      %3806 = vmatprep.subr.mxu0 0.0
      %3807 = vmatpush1.msra.mxu0 0.0
      %3808 = vmatprep.subr.mxu0 0.0
      %3809 = vmatpush1.msra.mxu0 0.0
      %3810 = vmatprep.subr.mxu0 0.0
      %3811 = vmatpush1.msra.mxu0 0.0
      %3812 = vmatprep.subr.mxu0 0.0
      %3813 = vmatpush1.msra.mxu0 0.0
      %3814 = vmatprep.subr.mxu0 0.0
      %3815 = vmatpush1.msra.mxu0 0.0
      %3816 = vmatprep.mubr.f32.mxu0 0.0
      %3817 = vmatmul.mubr.f32.gmra.mrb[0].mxu0 %v3748
      %v3818 = vpop.f32.mrb[0].mxu0
      %v3819 = vadd.f32 0.0, %v3818
      %v3820 = vpop.f32.mrb[0].mxu0
      %3821 = vdwg.mxu0
      %3822 = vrot.lane.b32.xlu0 %v2527, 112
      %v3823 = vpop.permute.xlu0 %3822
      %3824 = vrot.lane.b32.xlu0 %v2566, 112
      %v3825 = vpop.permute.xlu0 %3824
      %v3826 = vsel %vm2567, %v3823, 0
      %v3828 = vsel %vm2567, %v3825, 0
      %3830 = vmatprep.subr.mxu0 0.0
      %3831 = vmatpush1.xpose.msra.mxu0 %v3828
      %3832 = vmatprep.subr.mxu0 0.0
      %3833 = vmatpush1.xpose.msra.mxu0 0.0
      %3834 = vmatprep.subr.mxu0 0.0
      %3835 = vmatpush1.xpose.msra.mxu0 0.0
      %3836 = vmatprep.subr.mxu0 0.0
      %3837 = vmatpush1.xpose.msra.mxu0 0.0
      %3838 = vmatprep.subr.mxu0 0.0
      %3839 = vmatpush1.xpose.msra.mxu0 0.0
      %3840 = vmatprep.subr.mxu0 0.0
      %3841 = vmatpush1.xpose.msra.mxu0 0.0
      %3842 = vmatprep.subr.mxu0 0.0
      %3843 = vmatpush1.xpose.msra.mxu0 0.0
      %3844 = vmatprep.subr.mxu0 0.0
      %3845 = vmatpush1.xpose.msra.mxu0 0.0
      %3846 = vmatprep.subr.mxu0 0.0
      %3847 = vmatpush1.xpose.msra.mxu0 0.0
      %3848 = vmatprep.subr.mxu0 0.0
      %3849 = vmatpush1.xpose.msra.mxu0 0.0
      %3850 = vmatprep.subr.mxu0 0.0
      %3851 = vmatpush1.xpose.msra.mxu0 0.0
      %3852 = vmatprep.subr.mxu0 0.0
      %3853 = vmatpush1.xpose.msra.mxu0 0.0
      %3854 = vmatprep.subr.mxu0 0.0
      %3855 = vmatpush1.xpose.msra.mxu0 0.0
      %3856 = vmatprep.subr.mxu0 0.0
      %3857 = vmatpush1.xpose.msra.mxu0 0.0
      %3858 = vmatprep.subr.mxu0 0.0
      %3859 = vmatpush1.xpose.msra.mxu0 0.0
      %3860 = vmatprep.subr.mxu0 0.0
      %3861 = vmatpush1.xpose.msra.mxu0 0.0
      %3862 = vmatprep.subr.mxu0 0.0
      %3863 = vmatpush1.xpose.msra.mxu0 0.0
      %3864 = vmatprep.subr.mxu0 0.0
      %3865 = vmatpush1.xpose.msra.mxu0 0.0
      %3866 = vmatprep.subr.mxu0 0.0
      %3867 = vmatpush1.xpose.msra.mxu0 0.0
      %3868 = vmatprep.subr.mxu0 0.0
      %3869 = vmatpush1.xpose.msra.mxu0 0.0
      %3870 = vmatprep.subr.mxu0 0.0
      %3871 = vmatpush1.xpose.msra.mxu0 0.0
      %3872 = vmatprep.subr.mxu0 0.0
      %3873 = vmatpush1.xpose.msra.mxu0 0.0
      %3874 = vmatprep.subr.mxu0 0.0
      %3875 = vmatpush1.xpose.msra.mxu0 0.0
      %3876 = vmatprep.subr.mxu0 0.0
      %3877 = vmatpush1.xpose.msra.mxu0 0.0
      %3878 = vmatprep.subr.mxu0 0.0
      %3879 = vmatpush1.xpose.msra.mxu0 0.0
      %3880 = vmatprep.subr.mxu0 0.0
      %3881 = vmatpush1.xpose.msra.mxu0 0.0
      %3882 = vmatprep.subr.mxu0 0.0
      %3883 = vmatpush1.xpose.msra.mxu0 0.0
      %3884 = vmatprep.subr.mxu0 0.0
      %3885 = vmatpush1.xpose.msra.mxu0 0.0
      %3886 = vmatprep.subr.mxu0 0.0
      %3887 = vmatpush1.xpose.msra.mxu0 0.0
      %3888 = vmatprep.subr.mxu0 0.0
      %3889 = vmatpush1.xpose.msra.mxu0 0.0
      %3890 = vmatprep.subr.mxu0 0.0
      %3891 = vmatpush1.xpose.msra.mxu0 0.0
      %3892 = vmatprep.subr.mxu0 0.0
      %3893 = vmatpush1.xpose.msra.mxu0 0.0
      %3894 = vmatprep.mubr.f32.mxu0 0.0
      %3895 = vmatmul.mubr.f32.gmra.mrb[0].mxu0 %v3826
      %v3896 = vpop.f32.mrb[0].mxu0
      %v3897 = vadd.f32 0.0, %v3896
      %v3898 = vpop.f32.mrb[0].mxu0
      %3899 = vdwg.mxu0
      %3900 = vrot.lane.b32.xlu0 %v2680, 112
      %v3901 = vpop.permute.xlu0 %3900
      %3902 = vrot.lane.b32.xlu0 %v2719, 112
      %v3903 = vpop.permute.xlu0 %3902
      %v3904 = vsel %vm2567, %v3901, 0
      %v3906 = vsel %vm2567, %v3903, 0
      %3908 = vmatprep.subr.mxu0 0.0
      %3909 = vmatpush1.xpose.msra.mxu0 %v3906
      %3910 = vmatprep.subr.mxu0 0.0
      %3911 = vmatpush1.xpose.msra.mxu0 0.0
      %3912 = vmatprep.subr.mxu0 0.0
      %3913 = vmatpush1.xpose.msra.mxu0 0.0
      %3914 = vmatprep.subr.mxu0 0.0
      %3915 = vmatpush1.xpose.msra.mxu0 0.0
      %3916 = vmatprep.subr.mxu0 0.0
      %3917 = vmatpush1.xpose.msra.mxu0 0.0
      %3918 = vmatprep.subr.mxu0 0.0
      %3919 = vmatpush1.xpose.msra.mxu0 0.0
      %3920 = vmatprep.subr.mxu0 0.0
      %3921 = vmatpush1.xpose.msra.mxu0 0.0
      %3922 = vmatprep.subr.mxu0 0.0
      %3923 = vmatpush1.xpose.msra.mxu0 0.0
      %3924 = vmatprep.subr.mxu0 0.0
      %3925 = vmatpush1.xpose.msra.mxu0 0.0
      %3926 = vmatprep.subr.mxu0 0.0
      %3927 = vmatpush1.xpose.msra.mxu0 0.0
      %3928 = vmatprep.subr.mxu0 0.0
      %3929 = vmatpush1.xpose.msra.mxu0 0.0
      %3930 = vmatprep.subr.mxu0 0.0
      %3931 = vmatpush1.xpose.msra.mxu0 0.0
      %3932 = vmatprep.subr.mxu0 0.0
      %3933 = vmatpush1.xpose.msra.mxu0 0.0
      %3934 = vmatprep.subr.mxu0 0.0
      %3935 = vmatpush1.xpose.msra.mxu0 0.0
      %3936 = vmatprep.subr.mxu0 0.0
      %3937 = vmatpush1.xpose.msra.mxu0 0.0
      %3938 = vmatprep.subr.mxu0 0.0
      %3939 = vmatpush1.xpose.msra.mxu0 0.0
      %3940 = vmatprep.subr.mxu0 0.0
      %3941 = vmatpush1.xpose.msra.mxu0 0.0
      %3942 = vmatprep.subr.mxu0 0.0
      %3943 = vmatpush1.xpose.msra.mxu0 0.0
      %3944 = vmatprep.subr.mxu0 0.0
      %3945 = vmatpush1.xpose.msra.mxu0 0.0
      %3946 = vmatprep.subr.mxu0 0.0
      %3947 = vmatpush1.xpose.msra.mxu0 0.0
      %3948 = vmatprep.subr.mxu0 0.0
      %3949 = vmatpush1.xpose.msra.mxu0 0.0
      %3950 = vmatprep.subr.mxu0 0.0
      %3951 = vmatpush1.xpose.msra.mxu0 0.0
      %3952 = vmatprep.subr.mxu0 0.0
      %3953 = vmatpush1.xpose.msra.mxu0 0.0
      %3954 = vmatprep.subr.mxu0 0.0
      %3955 = vmatpush1.xpose.msra.mxu0 0.0
      %3956 = vmatprep.subr.mxu0 0.0
      %3957 = vmatpush1.xpose.msra.mxu0 0.0
      %3958 = vmatprep.subr.mxu0 0.0
      %3959 = vmatpush1.xpose.msra.mxu0 0.0
      %3960 = vmatprep.subr.mxu0 0.0
      %3961 = vmatpush1.xpose.msra.mxu0 0.0
      %3962 = vmatprep.subr.mxu0 0.0
      %3963 = vmatpush1.xpose.msra.mxu0 0.0
      %3964 = vmatprep.subr.mxu0 0.0
      %3965 = vmatpush1.xpose.msra.mxu0 0.0
      %3966 = vmatprep.subr.mxu0 0.0
      %3967 = vmatpush1.xpose.msra.mxu0 0.0
      %3968 = vmatprep.subr.mxu0 0.0
      %3969 = vmatpush1.xpose.msra.mxu0 0.0
      %3970 = vmatprep.subr.mxu0 0.0
      %3971 = vmatpush1.xpose.msra.mxu0 0.0
      %3972 = vmatprep.mubr.f32.mxu0 0.0
      %3973 = vmatmul.mubr.f32.gmra.mrb[0].mxu0 %v3904
      %v3974 = vpop.f32.mrb[0].mxu0
      %v3975 = vadd.f32 0.0, %v3974
      %v3976 = vpop.f32.mrb[0].mxu0
      %3977 = vdwg.mxu0
      %3978 = vrot.lane.b32.xlu0 %v2832, 112
      %v3979 = vpop.permute.xlu0 %3978
      %3980 = vrot.lane.b32.xlu0 %v2871, 112
      %v3981 = vpop.permute.xlu0 %3980
      %v3982 = vsel %vm2567, %v3979, 0
      %v3984 = vsel %vm2567, %v3981, 0
      %3986 = vmatprep.subr.mxu0 0.0
      %3987 = vmatpush1.xpose.msra.mxu0 %v3984
      %3988 = vmatprep.subr.mxu0 0.0
      %3989 = vmatpush1.xpose.msra.mxu0 0.0
      %3990 = vmatprep.subr.mxu0 0.0
      %3991 = vmatpush1.xpose.msra.mxu0 0.0
      %3992 = vmatprep.subr.mxu0 0.0
      %3993 = vmatpush1.xpose.msra.mxu0 0.0
      %3994 = vmatprep.subr.mxu0 0.0
      %3995 = vmatpush1.xpose.msra.mxu0 0.0
      %3996 = vmatprep.subr.mxu0 0.0
      %3997 = vmatpush1.xpose.msra.mxu0 0.0
      %3998 = vmatprep.subr.mxu0 0.0
      %3999 = vmatpush1.xpose.msra.mxu0 0.0
      %4000 = vmatprep.subr.mxu0 0.0
      %4001 = vmatpush1.xpose.msra.mxu0 0.0
      %4002 = vmatprep.subr.mxu0 0.0
      %4003 = vmatpush1.xpose.msra.mxu0 0.0
      %4004 = vmatprep.subr.mxu0 0.0
      %4005 = vmatpush1.xpose.msra.mxu0 0.0
      %4006 = vmatprep.subr.mxu0 0.0
      %4007 = vmatpush1.xpose.msra.mxu0 0.0
      %4008 = vmatprep.subr.mxu0 0.0
      %4009 = vmatpush1.xpose.msra.mxu0 0.0
      %4010 = vmatprep.subr.mxu0 0.0
      %4011 = vmatpush1.xpose.msra.mxu0 0.0
      %4012 = vmatprep.subr.mxu0 0.0
      %4013 = vmatpush1.xpose.msra.mxu0 0.0
      %4014 = vmatprep.subr.mxu0 0.0
      %4015 = vmatpush1.xpose.msra.mxu0 0.0
      %4016 = vmatprep.subr.mxu0 0.0
      %4017 = vmatpush1.xpose.msra.mxu0 0.0
      %4018 = vmatprep.subr.mxu0 0.0
      %4019 = vmatpush1.xpose.msra.mxu0 0.0
      %4020 = vmatprep.subr.mxu0 0.0
      %4021 = vmatpush1.xpose.msra.mxu0 0.0
      %4022 = vmatprep.subr.mxu0 0.0
      %4023 = vmatpush1.xpose.msra.mxu0 0.0
      %4024 = vmatprep.subr.mxu0 0.0
      %4025 = vmatpush1.xpose.msra.mxu0 0.0
      %4026 = vmatprep.subr.mxu0 0.0
      %4027 = vmatpush1.xpose.msra.mxu0 0.0
      %4028 = vmatprep.subr.mxu0 0.0
      %4029 = vmatpush1.xpose.msra.mxu0 0.0
      %4030 = vmatprep.subr.mxu0 0.0
      %4031 = vmatpush1.xpose.msra.mxu0 0.0
      %4032 = vmatprep.subr.mxu0 0.0
      %4033 = vmatpush1.xpose.msra.mxu0 0.0
      %4034 = vmatprep.subr.mxu0 0.0
      %4035 = vmatpush1.xpose.msra.mxu0 0.0
      %4036 = vmatprep.subr.mxu0 0.0
      %4037 = vmatpush1.xpose.msra.mxu0 0.0
      %4038 = vmatprep.subr.mxu0 0.0
      %4039 = vmatpush1.xpose.msra.mxu0 0.0
      %4040 = vmatprep.subr.mxu0 0.0
      %4041 = vmatpush1.xpose.msra.mxu0 0.0
      %4042 = vmatprep.subr.mxu0 0.0
      %4043 = vmatpush1.xpose.msra.mxu0 0.0
      %4044 = vmatprep.subr.mxu0 0.0
      %4045 = vmatpush1.xpose.msra.mxu0 0.0
      %4046 = vmatprep.subr.mxu0 0.0
      %4047 = vmatpush1.xpose.msra.mxu0 0.0
      %4048 = vmatprep.subr.mxu0 0.0
      %4049 = vmatpush1.xpose.msra.mxu0 0.0
      %4050 = vmatprep.mubr.f32.mxu0 0.0
      %4051 = vmatmul.mubr.f32.gmra.mrb[0].mxu0 %v3982
      %v4052 = vpop.f32.mrb[0].mxu0
      %v4053 = vadd.f32 0.0, %v4052
      %v4054 = vpop.f32.mrb[0].mxu0
      %4055 = vdwg.mxu0
      %v4056 = vsel %vm2946, %v3897, -inf
      %4057 = vmax.xlane.f32.xlu0 %v4056
      %v4058 = vpop.xlane.xlu0 %4057
      %v4059 = vsel %vm2946, %v3975, -inf
      %4060 = vmax.xlane.f32.xlu0 %v4059
      %v4061 = vpop.xlane.xlu0 %4060
      %v4062 = vsel %vm2946, %v4053, -inf
      %4063 = vmax.xlane.f32.xlu0 %v4062
      %v4064 = vpop.xlane.xlu0 %4063
      %v4065 = vsub.f32 %v3897, %v4058
      %v4066 = vsub.f32 %v3975, %v4061
      %v4067 = vsub.f32 %v4053, %v4064
      %v4068 = vmul.f32 %v4065, 1.442695
      %v4069 = vpow.pop %v4068
      %v4070 = vmul.f32 %v4066, 1.442695
      %v4071 = vpow.pop %v4070
      %v4072 = vmul.f32 %v4067, 1.442695
      %v4073 = vpow.pop %v4072
      %v4074 = vsel %vm2946, %v4069, 0.0
      %4075 = vadd.xlane.f32.xlu0 %v4074
      %v4076 = vpop.xlane.xlu0 %4075
      %v4077 = vsel %vm2946, %v4071, 0.0
      %4078 = vadd.xlane.f32.xlu0 %v4077
      %v4079 = vpop.xlane.xlu0 %4078
      %v4080 = vsel %vm2946, %v4073, 0.0
      %4081 = vadd.xlane.f32.xlu0 %v4080
      %v4082 = vpop.xlane.xlu0 %4081
      %v4083 = vrcp.pop %v4076
      %v4084 = vrcp.pop %v4079
      %v4085 = vrcp.pop %v4082
      %v4086 = vmul.f32 %v4069, %v4083
      %v4087 = vmul.f32 %v4071, %v4084
      %v4088 = vmul.f32 %v4073, %v4085
      %4089 = vrot.lane.b32.xlu0 %v3018, 112
      %v4090 = vpop.permute.xlu0 %4089
      %v4092 = vsel %vm3019, %v4086, 0
      %v4094 = vsel %vm3023, %v4090, 0
      %4096 = vmatprep.subr.mxu0 0.0
      %4097 = vmatpush1.msra.mxu0 %v4094
      %4098 = vmatprep.subr.mxu0 0.0
      %4099 = vmatpush1.msra.mxu0 0.0
      %4100 = vmatprep.subr.mxu0 0.0
      %4101 = vmatpush1.msra.mxu0 0.0
      %4102 = vmatprep.subr.mxu0 0.0
      %4103 = vmatpush1.msra.mxu0 0.0
      %4104 = vmatprep.subr.mxu0 0.0
      %4105 = vmatpush1.msra.mxu0 0.0
      %4106 = vmatprep.subr.mxu0 0.0
      %4107 = vmatpush1.msra.mxu0 0.0
      %4108 = vmatprep.subr.mxu0 0.0
      %4109 = vmatpush1.msra.mxu0 0.0
      %4110 = vmatprep.subr.mxu0 0.0
      %4111 = vmatpush1.msra.mxu0 0.0
      %4112 = vmatprep.subr.mxu0 0.0
      %4113 = vmatpush1.msra.mxu0 0.0
      %4114 = vmatprep.subr.mxu0 0.0
      %4115 = vmatpush1.msra.mxu0 0.0
      %4116 = vmatprep.subr.mxu0 0.0
      %4117 = vmatpush1.msra.mxu0 0.0
      %4118 = vmatprep.subr.mxu0 0.0
      %4119 = vmatpush1.msra.mxu0 0.0
      %4120 = vmatprep.subr.mxu0 0.0
      %4121 = vmatpush1.msra.mxu0 0.0
      %4122 = vmatprep.subr.mxu0 0.0
      %4123 = vmatpush1.msra.mxu0 0.0
      %4124 = vmatprep.subr.mxu0 0.0
      %4125 = vmatpush1.msra.mxu0 0.0
      %4126 = vmatprep.subr.mxu0 0.0
      %4127 = vmatpush1.msra.mxu0 0.0
      %4128 = vmatprep.subr.mxu0 0.0
      %4129 = vmatpush1.msra.mxu0 0.0
      %4130 = vmatprep.subr.mxu0 0.0
      %4131 = vmatpush1.msra.mxu0 0.0
      %4132 = vmatprep.subr.mxu0 0.0
      %4133 = vmatpush1.msra.mxu0 0.0
      %4134 = vmatprep.subr.mxu0 0.0
      %4135 = vmatpush1.msra.mxu0 0.0
      %4136 = vmatprep.subr.mxu0 0.0
      %4137 = vmatpush1.msra.mxu0 0.0
      %4138 = vmatprep.subr.mxu0 0.0
      %4139 = vmatpush1.msra.mxu0 0.0
      %4140 = vmatprep.subr.mxu0 0.0
      %4141 = vmatpush1.msra.mxu0 0.0
      %4142 = vmatprep.subr.mxu0 0.0
      %4143 = vmatpush1.msra.mxu0 0.0
      %4144 = vmatprep.subr.mxu0 0.0
      %4145 = vmatpush1.msra.mxu0 0.0
      %4146 = vmatprep.subr.mxu0 0.0
      %4147 = vmatpush1.msra.mxu0 0.0
      %4148 = vmatprep.subr.mxu0 0.0
      %4149 = vmatpush1.msra.mxu0 0.0
      %4150 = vmatprep.subr.mxu0 0.0
      %4151 = vmatpush1.msra.mxu0 0.0
      %4152 = vmatprep.subr.mxu0 0.0
      %4153 = vmatpush1.msra.mxu0 0.0
      %4154 = vmatprep.subr.mxu0 0.0
      %4155 = vmatpush1.msra.mxu0 0.0
      %4156 = vmatprep.subr.mxu0 0.0
      %4157 = vmatpush1.msra.mxu0 0.0
      %4158 = vmatprep.subr.mxu0 0.0
      %4159 = vmatpush1.msra.mxu0 0.0
      %4160 = vmatprep.mubr.f32.mxu0 0.0
      %4161 = vmatmul.mubr.f32.gmra.mrb[0].mxu0 %v4092
      %v4162 = vpop.f32.mrb[0].mxu0
      %v4163 = vadd.f32 0.0, %v4162
      %v4164 = vpop.f32.mrb[0].mxu0
      %4165 = vdwg.mxu0
      %4166 = vrot.lane.b32.xlu0 %v3134, 112
      %v4167 = vpop.permute.xlu0 %4166
      %v4169 = vsel %vm3019, %v4087, 0
      %v4171 = vsel %vm3023, %v4167, 0
      %4173 = vmatprep.subr.mxu0 0.0
      %4174 = vmatpush1.msra.mxu0 %v4171
      %4175 = vmatprep.subr.mxu0 0.0
      %4176 = vmatpush1.msra.mxu0 0.0
      %4177 = vmatprep.subr.mxu0 0.0
      %4178 = vmatpush1.msra.mxu0 0.0
      %4179 = vmatprep.subr.mxu0 0.0
      %4180 = vmatpush1.msra.mxu0 0.0
      %4181 = vmatprep.subr.mxu0 0.0
      %4182 = vmatpush1.msra.mxu0 0.0
      %4183 = vmatprep.subr.mxu0 0.0
      %4184 = vmatpush1.msra.mxu0 0.0
      %4185 = vmatprep.subr.mxu0 0.0
      %4186 = vmatpush1.msra.mxu0 0.0
      %4187 = vmatprep.subr.mxu0 0.0
      %4188 = vmatpush1.msra.mxu0 0.0
      %4189 = vmatprep.subr.mxu0 0.0
      %4190 = vmatpush1.msra.mxu0 0.0
      %4191 = vmatprep.subr.mxu0 0.0
      %4192 = vmatpush1.msra.mxu0 0.0
      %4193 = vmatprep.subr.mxu0 0.0
      %4194 = vmatpush1.msra.mxu0 0.0
      %4195 = vmatprep.subr.mxu0 0.0
      %4196 = vmatpush1.msra.mxu0 0.0
      %4197 = vmatprep.subr.mxu0 0.0
      %4198 = vmatpush1.msra.mxu0 0.0
      %4199 = vmatprep.subr.mxu0 0.0
      %4200 = vmatpush1.msra.mxu0 0.0
      %4201 = vmatprep.subr.mxu0 0.0
      %4202 = vmatpush1.msra.mxu0 0.0
      %4203 = vmatprep.subr.mxu0 0.0
      %4204 = vmatpush1.msra.mxu0 0.0
      %4205 = vmatprep.subr.mxu0 0.0
      %4206 = vmatpush1.msra.mxu0 0.0
      %4207 = vmatprep.subr.mxu0 0.0
      %4208 = vmatpush1.msra.mxu0 0.0
      %4209 = vmatprep.subr.mxu0 0.0
      %4210 = vmatpush1.msra.mxu0 0.0
      %4211 = vmatprep.subr.mxu0 0.0
      %4212 = vmatpush1.msra.mxu0 0.0
      %4213 = vmatprep.subr.mxu0 0.0
      %4214 = vmatpush1.msra.mxu0 0.0
      %4215 = vmatprep.subr.mxu0 0.0
      %4216 = vmatpush1.msra.mxu0 0.0
      %4217 = vmatprep.subr.mxu0 0.0
      %4218 = vmatpush1.msra.mxu0 0.0
      %4219 = vmatprep.subr.mxu0 0.0
      %4220 = vmatpush1.msra.mxu0 0.0
      %4221 = vmatprep.subr.mxu0 0.0
      %4222 = vmatpush1.msra.mxu0 0.0
      %4223 = vmatprep.subr.mxu0 0.0
      %4224 = vmatpush1.msra.mxu0 0.0
      %4225 = vmatprep.subr.mxu0 0.0
      %4226 = vmatpush1.msra.mxu0 0.0
      %4227 = vmatprep.subr.mxu0 0.0
      %4228 = vmatpush1.msra.mxu0 0.0
      %4229 = vmatprep.subr.mxu0 0.0
      %4230 = vmatpush1.msra.mxu0 0.0
      %4231 = vmatprep.subr.mxu0 0.0
      %4232 = vmatpush1.msra.mxu0 0.0
      %4233 = vmatprep.subr.mxu0 0.0
      %4234 = vmatpush1.msra.mxu0 0.0
      %4235 = vmatprep.subr.mxu0 0.0
      %4236 = vmatpush1.msra.mxu0 0.0
      %4237 = vmatprep.mubr.f32.mxu0 0.0
      %4238 = vmatmul.mubr.f32.gmra.mrb[0].mxu0 %v4169
      %v4239 = vpop.f32.mrb[0].mxu0
      %v4240 = vadd.f32 0.0, %v4239
      %v4241 = vpop.f32.mrb[0].mxu0
      %4242 = vdwg.mxu0
      %4243 = vrot.lane.b32.xlu0 %v3248, 112
      %v4244 = vpop.permute.xlu0 %4243
      %v4246 = vsel %vm3019, %v4088, 0
      %v4248 = vsel %vm3023, %v4244, 0
      %4250 = vmatprep.subr.mxu0 0.0
      %4251 = vmatpush1.msra.mxu0 %v4248
      %4252 = vmatprep.subr.mxu0 0.0
      %4253 = vmatpush1.msra.mxu0 0.0
      %4254 = vmatprep.subr.mxu0 0.0
      %4255 = vmatpush1.msra.mxu0 0.0
      %4256 = vmatprep.subr.mxu0 0.0
      %4257 = vmatpush1.msra.mxu0 0.0
      %4258 = vmatprep.subr.mxu0 0.0
      %4259 = vmatpush1.msra.mxu0 0.0
      %4260 = vmatprep.subr.mxu0 0.0
      %4261 = vmatpush1.msra.mxu0 0.0
      %4262 = vmatprep.subr.mxu0 0.0
      %4263 = vmatpush1.msra.mxu0 0.0
      %4264 = vmatprep.subr.mxu0 0.0
      %4265 = vmatpush1.msra.mxu0 0.0
      %4266 = vmatprep.subr.mxu0 0.0
      %4267 = vmatpush1.msra.mxu0 0.0
      %4268 = vmatprep.subr.mxu0 0.0
      %4269 = vmatpush1.msra.mxu0 0.0
      %4270 = vmatprep.subr.mxu0 0.0
      %4271 = vmatpush1.msra.mxu0 0.0
      %4272 = vmatprep.subr.mxu0 0.0
      %4273 = vmatpush1.msra.mxu0 0.0
      %4274 = vmatprep.subr.mxu0 0.0
      %4275 = vmatpush1.msra.mxu0 0.0
      %4276 = vmatprep.subr.mxu0 0.0
      %4277 = vmatpush1.msra.mxu0 0.0
      %4278 = vmatprep.subr.mxu0 0.0
      %4279 = vmatpush1.msra.mxu0 0.0
      %4280 = vmatprep.subr.mxu0 0.0
      %4281 = vmatpush1.msra.mxu0 0.0
      %4282 = vmatprep.subr.mxu0 0.0
      %4283 = vmatpush1.msra.mxu0 0.0
      %4284 = vmatprep.subr.mxu0 0.0
      %4285 = vmatpush1.msra.mxu0 0.0
      %4286 = vmatprep.subr.mxu0 0.0
      %4287 = vmatpush1.msra.mxu0 0.0
      %4288 = vmatprep.subr.mxu0 0.0
      %4289 = vmatpush1.msra.mxu0 0.0
      %4290 = vmatprep.subr.mxu0 0.0
      %4291 = vmatpush1.msra.mxu0 0.0
      %4292 = vmatprep.subr.mxu0 0.0
      %4293 = vmatpush1.msra.mxu0 0.0
      %4294 = vmatprep.subr.mxu0 0.0
      %4295 = vmatpush1.msra.mxu0 0.0
      %4296 = vmatprep.subr.mxu0 0.0
      %4297 = vmatpush1.msra.mxu0 0.0
      %4298 = vmatprep.subr.mxu0 0.0
      %4299 = vmatpush1.msra.mxu0 0.0
      %4300 = vmatprep.subr.mxu0 0.0
      %4301 = vmatpush1.msra.mxu0 0.0
      %4302 = vmatprep.subr.mxu0 0.0
      %4303 = vmatpush1.msra.mxu0 0.0
      %4304 = vmatprep.subr.mxu0 0.0
      %4305 = vmatpush1.msra.mxu0 0.0
      %4306 = vmatprep.subr.mxu0 0.0
      %4307 = vmatpush1.msra.mxu0 0.0
      %4308 = vmatprep.subr.mxu0 0.0
      %4309 = vmatpush1.msra.mxu0 0.0
      %4310 = vmatprep.subr.mxu0 0.0
      %4311 = vmatpush1.msra.mxu0 0.0
      %4312 = vmatprep.subr.mxu0 0.0
      %4313 = vmatpush1.msra.mxu0 0.0
      %4314 = vmatprep.mubr.f32.mxu0 0.0
      %4315 = vmatmul.mubr.f32.gmra.mrb[0].mxu0 %v4246
      %v4316 = vpop.f32.mrb[0].mxu0
      %v4317 = vadd.f32 0.0, %v4316
      %v4318 = vpop.f32.mrb[0].mxu0
      %4319 = vdwg.mxu0
      %4320 = vrot.lane.b32.xlu0 %v2527, 104
      %v4321 = vpop.permute.xlu0 %4320
      %4322 = vrot.lane.b32.xlu0 %v2566, 104
      %v4323 = vpop.permute.xlu0 %4322
      %v4324 = vsel %vm2567, %v4321, 0
      %v4326 = vsel %vm2567, %v4323, 0
      %4328 = vmatprep.subr.mxu0 0.0
      %4329 = vmatpush1.xpose.msra.mxu0 %v4326
      %4330 = vmatprep.subr.mxu0 0.0
      %4331 = vmatpush1.xpose.msra.mxu0 0.0
      %4332 = vmatprep.subr.mxu0 0.0
      %4333 = vmatpush1.xpose.msra.mxu0 0.0
      %4334 = vmatprep.subr.mxu0 0.0
      %4335 = vmatpush1.xpose.msra.mxu0 0.0
      %4336 = vmatprep.subr.mxu0 0.0
      %4337 = vmatpush1.xpose.msra.mxu0 0.0
      %4338 = vmatprep.subr.mxu0 0.0
      %4339 = vmatpush1.xpose.msra.mxu0 0.0
      %4340 = vmatprep.subr.mxu0 0.0
      %4341 = vmatpush1.xpose.msra.mxu0 0.0
      %4342 = vmatprep.subr.mxu0 0.0
      %4343 = vmatpush1.xpose.msra.mxu0 0.0
      %4344 = vmatprep.subr.mxu0 0.0
      %4345 = vmatpush1.xpose.msra.mxu0 0.0
      %4346 = vmatprep.subr.mxu0 0.0
      %4347 = vmatpush1.xpose.msra.mxu0 0.0
      %4348 = vmatprep.subr.mxu0 0.0
      %4349 = vmatpush1.xpose.msra.mxu0 0.0
      %4350 = vmatprep.subr.mxu0 0.0
      %4351 = vmatpush1.xpose.msra.mxu0 0.0
      %4352 = vmatprep.subr.mxu0 0.0
      %4353 = vmatpush1.xpose.msra.mxu0 0.0
      %4354 = vmatprep.subr.mxu0 0.0
      %4355 = vmatpush1.xpose.msra.mxu0 0.0
      %4356 = vmatprep.subr.mxu0 0.0
      %4357 = vmatpush1.xpose.msra.mxu0 0.0
      %4358 = vmatprep.subr.mxu0 0.0
      %4359 = vmatpush1.xpose.msra.mxu0 0.0
      %4360 = vmatprep.subr.mxu0 0.0
      %4361 = vmatpush1.xpose.msra.mxu0 0.0
      %4362 = vmatprep.subr.mxu0 0.0
      %4363 = vmatpush1.xpose.msra.mxu0 0.0
      %4364 = vmatprep.subr.mxu0 0.0
      %4365 = vmatpush1.xpose.msra.mxu0 0.0
      %4366 = vmatprep.subr.mxu0 0.0
      %4367 = vmatpush1.xpose.msra.mxu0 0.0
      %4368 = vmatprep.subr.mxu0 0.0
      %4369 = vmatpush1.xpose.msra.mxu0 0.0
      %4370 = vmatprep.subr.mxu0 0.0
      %4371 = vmatpush1.xpose.msra.mxu0 0.0
      %4372 = vmatprep.subr.mxu0 0.0
      %4373 = vmatpush1.xpose.msra.mxu0 0.0
      %4374 = vmatprep.subr.mxu0 0.0
      %4375 = vmatpush1.xpose.msra.mxu0 0.0
      %4376 = vmatprep.subr.mxu0 0.0
      %4377 = vmatpush1.xpose.msra.mxu0 0.0
      %4378 = vmatprep.subr.mxu0 0.0
      %4379 = vmatpush1.xpose.msra.mxu0 0.0
      %4380 = vmatprep.subr.mxu0 0.0
      %4381 = vmatpush1.xpose.msra.mxu0 0.0
      %4382 = vmatprep.subr.mxu0 0.0
      %4383 = vmatpush1.xpose.msra.mxu0 0.0
      %4384 = vmatprep.subr.mxu0 0.0
      %4385 = vmatpush1.xpose.msra.mxu0 0.0
      %4386 = vmatprep.subr.mxu0 0.0
      %4387 = vmatpush1.xpose.msra.mxu0 0.0
      %4388 = vmatprep.subr.mxu0 0.0
      %4389 = vmatpush1.xpose.msra.mxu0 0.0
      %4390 = vmatprep.subr.mxu0 0.0
      %4391 = vmatpush1.xpose.msra.mxu0 0.0
      %4392 = vmatprep.mubr.f32.mxu0 0.0
      %4393 = vmatmul.mubr.f32.gmra.mrb[0].mxu0 %v4324
      %v4394 = vpop.f32.mrb[0].mxu0
      %v4395 = vadd.f32 0.0, %v4394
      %v4396 = vpop.f32.mrb[0].mxu0
      %4397 = vdwg.mxu0
      %4398 = vrot.lane.b32.xlu0 %v2680, 104
      %v4399 = vpop.permute.xlu0 %4398
      %4400 = vrot.lane.b32.xlu0 %v2719, 104
      %v4401 = vpop.permute.xlu0 %4400
      %v4402 = vsel %vm2567, %v4399, 0
      %v4404 = vsel %vm2567, %v4401, 0
      %4406 = vmatprep.subr.mxu0 0.0
      %4407 = vmatpush1.xpose.msra.mxu0 %v4404
      %4408 = vmatprep.subr.mxu0 0.0
      %4409 = vmatpush1.xpose.msra.mxu0 0.0
      %4410 = vmatprep.subr.mxu0 0.0
      %4411 = vmatpush1.xpose.msra.mxu0 0.0
      %4412 = vmatprep.subr.mxu0 0.0
      %4413 = vmatpush1.xpose.msra.mxu0 0.0
      %4414 = vmatprep.subr.mxu0 0.0
      %4415 = vmatpush1.xpose.msra.mxu0 0.0
      %4416 = vmatprep.subr.mxu0 0.0
      %4417 = vmatpush1.xpose.msra.mxu0 0.0
      %4418 = vmatprep.subr.mxu0 0.0
      %4419 = vmatpush1.xpose.msra.mxu0 0.0
      %4420 = vmatprep.subr.mxu0 0.0
      %4421 = vmatpush1.xpose.msra.mxu0 0.0
      %4422 = vmatprep.subr.mxu0 0.0
      %4423 = vmatpush1.xpose.msra.mxu0 0.0
      %4424 = vmatprep.subr.mxu0 0.0
      %4425 = vmatpush1.xpose.msra.mxu0 0.0
      %4426 = vmatprep.subr.mxu0 0.0
      %4427 = vmatpush1.xpose.msra.mxu0 0.0
      %4428 = vmatprep.subr.mxu0 0.0
      %4429 = vmatpush1.xpose.msra.mxu0 0.0
      %4430 = vmatprep.subr.mxu0 0.0
      %4431 = vmatpush1.xpose.msra.mxu0 0.0
      %4432 = vmatprep.subr.mxu0 0.0
      %4433 = vmatpush1.xpose.msra.mxu0 0.0
      %4434 = vmatprep.subr.mxu0 0.0
      %4435 = vmatpush1.xpose.msra.mxu0 0.0
      %4436 = vmatprep.subr.mxu0 0.0
      %4437 = vmatpush1.xpose.msra.mxu0 0.0
      %4438 = vmatprep.subr.mxu0 0.0
      %4439 = vmatpush1.xpose.msra.mxu0 0.0
      %4440 = vmatprep.subr.mxu0 0.0
      %4441 = vmatpush1.xpose.msra.mxu0 0.0
      %4442 = vmatprep.subr.mxu0 0.0
      %4443 = vmatpush1.xpose.msra.mxu0 0.0
      %4444 = vmatprep.subr.mxu0 0.0
      %4445 = vmatpush1.xpose.msra.mxu0 0.0
      %4446 = vmatprep.subr.mxu0 0.0
      %4447 = vmatpush1.xpose.msra.mxu0 0.0
      %4448 = vmatprep.subr.mxu0 0.0
      %4449 = vmatpush1.xpose.msra.mxu0 0.0
      %4450 = vmatprep.subr.mxu0 0.0
      %4451 = vmatpush1.xpose.msra.mxu0 0.0
      %4452 = vmatprep.subr.mxu0 0.0
      %4453 = vmatpush1.xpose.msra.mxu0 0.0
      %4454 = vmatprep.subr.mxu0 0.0
      %4455 = vmatpush1.xpose.msra.mxu0 0.0
      %4456 = vmatprep.subr.mxu0 0.0
      %4457 = vmatpush1.xpose.msra.mxu0 0.0
      %4458 = vmatprep.subr.mxu0 0.0
      %4459 = vmatpush1.xpose.msra.mxu0 0.0
      %4460 = vmatprep.subr.mxu0 0.0
      %4461 = vmatpush1.xpose.msra.mxu0 0.0
      %4462 = vmatprep.subr.mxu0 0.0
      %4463 = vmatpush1.xpose.msra.mxu0 0.0
      %4464 = vmatprep.subr.mxu0 0.0
      %4465 = vmatpush1.xpose.msra.mxu0 0.0
      %4466 = vmatprep.subr.mxu0 0.0
      %4467 = vmatpush1.xpose.msra.mxu0 0.0
      %4468 = vmatprep.subr.mxu0 0.0
      %4469 = vmatpush1.xpose.msra.mxu0 0.0
      %4470 = vmatprep.mubr.f32.mxu0 0.0
      %4471 = vmatmul.mubr.f32.gmra.mrb[0].mxu0 %v4402
      %v4472 = vpop.f32.mrb[0].mxu0
      %v4473 = vadd.f32 0.0, %v4472
      %v4474 = vpop.f32.mrb[0].mxu0
      %4475 = vdwg.mxu0
      %4476 = vrot.lane.b32.xlu0 %v2832, 104
      %v4477 = vpop.permute.xlu0 %4476
      %4478 = vrot.lane.b32.xlu0 %v2871, 104
      %v4479 = vpop.permute.xlu0 %4478
      %v4480 = vsel %vm2567, %v4477, 0
      %v4482 = vsel %vm2567, %v4479, 0
      %4484 = vmatprep.subr.mxu0 0.0
      %4485 = vmatpush1.xpose.msra.mxu0 %v4482
      %4486 = vmatprep.subr.mxu0 0.0
      %4487 = vmatpush1.xpose.msra.mxu0 0.0
      %4488 = vmatprep.subr.mxu0 0.0
      %4489 = vmatpush1.xpose.msra.mxu0 0.0
      %4490 = vmatprep.subr.mxu0 0.0
      %4491 = vmatpush1.xpose.msra.mxu0 0.0
      %4492 = vmatprep.subr.mxu0 0.0
      %4493 = vmatpush1.xpose.msra.mxu0 0.0
      %4494 = vmatprep.subr.mxu0 0.0
      %4495 = vmatpush1.xpose.msra.mxu0 0.0
      %4496 = vmatprep.subr.mxu0 0.0
      %4497 = vmatpush1.xpose.msra.mxu0 0.0
      %4498 = vmatprep.subr.mxu0 0.0
      %4499 = vmatpush1.xpose.msra.mxu0 0.0
      %4500 = vmatprep.subr.mxu0 0.0
      %4501 = vmatpush1.xpose.msra.mxu0 0.0
      %4502 = vmatprep.subr.mxu0 0.0
      %4503 = vmatpush1.xpose.msra.mxu0 0.0
      %4504 = vmatprep.subr.mxu0 0.0
      %4505 = vmatpush1.xpose.msra.mxu0 0.0
      %4506 = vmatprep.subr.mxu0 0.0
      %4507 = vmatpush1.xpose.msra.mxu0 0.0
      %4508 = vmatprep.subr.mxu0 0.0
      %4509 = vmatpush1.xpose.msra.mxu0 0.0
      %4510 = vmatprep.subr.mxu0 0.0
      %4511 = vmatpush1.xpose.msra.mxu0 0.0
      %4512 = vmatprep.subr.mxu0 0.0
      %4513 = vmatpush1.xpose.msra.mxu0 0.0
      %4514 = vmatprep.subr.mxu0 0.0
      %4515 = vmatpush1.xpose.msra.mxu0 0.0
      %4516 = vmatprep.subr.mxu0 0.0
      %4517 = vmatpush1.xpose.msra.mxu0 0.0
      %4518 = vmatprep.subr.mxu0 0.0
      %4519 = vmatpush1.xpose.msra.mxu0 0.0
      %4520 = vmatprep.subr.mxu0 0.0
      %4521 = vmatpush1.xpose.msra.mxu0 0.0
      %4522 = vmatprep.subr.mxu0 0.0
      %4523 = vmatpush1.xpose.msra.mxu0 0.0
      %4524 = vmatprep.subr.mxu0 0.0
      %4525 = vmatpush1.xpose.msra.mxu0 0.0
      %4526 = vmatprep.subr.mxu0 0.0
      %4527 = vmatpush1.xpose.msra.mxu0 0.0
      %4528 = vmatprep.subr.mxu0 0.0
      %4529 = vmatpush1.xpose.msra.mxu0 0.0
      %4530 = vmatprep.subr.mxu0 0.0
      %4531 = vmatpush1.xpose.msra.mxu0 0.0
      %4532 = vmatprep.subr.mxu0 0.0
      %4533 = vmatpush1.xpose.msra.mxu0 0.0
      %4534 = vmatprep.subr.mxu0 0.0
      %4535 = vmatpush1.xpose.msra.mxu0 0.0
      %4536 = vmatprep.subr.mxu0 0.0
      %4537 = vmatpush1.xpose.msra.mxu0 0.0
      %4538 = vmatprep.subr.mxu0 0.0
      %4539 = vmatpush1.xpose.msra.mxu0 0.0
      %4540 = vmatprep.subr.mxu0 0.0
      %4541 = vmatpush1.xpose.msra.mxu0 0.0
      %4542 = vmatprep.subr.mxu0 0.0
      %4543 = vmatpush1.xpose.msra.mxu0 0.0
      %4544 = vmatprep.subr.mxu0 0.0
      %4545 = vmatpush1.xpose.msra.mxu0 0.0
      %4546 = vmatprep.subr.mxu0 0.0
      %4547 = vmatpush1.xpose.msra.mxu0 0.0
      %4548 = vmatprep.mubr.f32.mxu0 0.0
      %4549 = vmatmul.mubr.f32.gmra.mrb[0].mxu0 %v4480
      %v4550 = vpop.f32.mrb[0].mxu0
      %v4551 = vadd.f32 0.0, %v4550
      %v4552 = vpop.f32.mrb[0].mxu0
      %4553 = vdwg.mxu0
      %v4554 = vsel %vm2946, %v4395, -inf
      %4555 = vmax.xlane.f32.xlu0 %v4554
      %v4556 = vpop.xlane.xlu0 %4555
      %v4557 = vsel %vm2946, %v4473, -inf
      %4558 = vmax.xlane.f32.xlu0 %v4557
      %v4559 = vpop.xlane.xlu0 %4558
      %v4560 = vsel %vm2946, %v4551, -inf
      %4561 = vmax.xlane.f32.xlu0 %v4560
      %v4562 = vpop.xlane.xlu0 %4561
      %v4563 = vsub.f32 %v4395, %v4556
      %v4564 = vsub.f32 %v4473, %v4559
      %v4565 = vsub.f32 %v4551, %v4562
      %v4566 = vmul.f32 %v4563, 1.442695
      %v4567 = vpow.pop %v4566
      %v4568 = vmul.f32 %v4564, 1.442695
      %v4569 = vpow.pop %v4568
      %v4570 = vmul.f32 %v4565, 1.442695
      %v4571 = vpow.pop %v4570
      %v4572 = vsel %vm2946, %v4567, 0.0
      %4573 = vadd.xlane.f32.xlu0 %v4572
      %v4574 = vpop.xlane.xlu0 %4573
      %v4575 = vsel %vm2946, %v4569, 0.0
      %4576 = vadd.xlane.f32.xlu0 %v4575
      %v4577 = vpop.xlane.xlu0 %4576
      %v4578 = vsel %vm2946, %v4571, 0.0
      %4579 = vadd.xlane.f32.xlu0 %v4578
      %v4580 = vpop.xlane.xlu0 %4579
      %v4581 = vrcp.pop %v4574
      %v4582 = vrcp.pop %v4577
      %v4583 = vrcp.pop %v4580
      %v4584 = vmul.f32 %v4567, %v4581
      %v4585 = vmul.f32 %v4569, %v4582
      %v4586 = vmul.f32 %v4571, %v4583
      %4587 = vrot.lane.b32.xlu0 %v3018, 104
      %v4588 = vpop.permute.xlu0 %4587
      %v4590 = vsel %vm3019, %v4584, 0
      %v4592 = vsel %vm3023, %v4588, 0
      %4594 = vmatprep.subr.mxu0 0.0
      %4595 = vmatpush1.msra.mxu0 %v4592
      %4596 = vmatprep.subr.mxu0 0.0
      %4597 = vmatpush1.msra.mxu0 0.0
      %4598 = vmatprep.subr.mxu0 0.0
      %4599 = vmatpush1.msra.mxu0 0.0
      %4600 = vmatprep.subr.mxu0 0.0
      %4601 = vmatpush1.msra.mxu0 0.0
      %4602 = vmatprep.subr.mxu0 0.0
      %4603 = vmatpush1.msra.mxu0 0.0
      %4604 = vmatprep.subr.mxu0 0.0
      %4605 = vmatpush1.msra.mxu0 0.0
      %4606 = vmatprep.subr.mxu0 0.0
      %4607 = vmatpush1.msra.mxu0 0.0
      %4608 = vmatprep.subr.mxu0 0.0
      %4609 = vmatpush1.msra.mxu0 0.0
      %4610 = vmatprep.subr.mxu0 0.0
      %4611 = vmatpush1.msra.mxu0 0.0
      %4612 = vmatprep.subr.mxu0 0.0
      %4613 = vmatpush1.msra.mxu0 0.0
      %4614 = vmatprep.subr.mxu0 0.0
      %4615 = vmatpush1.msra.mxu0 0.0
      %4616 = vmatprep.subr.mxu0 0.0
      %4617 = vmatpush1.msra.mxu0 0.0
      %4618 = vmatprep.subr.mxu0 0.0
      %4619 = vmatpush1.msra.mxu0 0.0
      %4620 = vmatprep.subr.mxu0 0.0
      %4621 = vmatpush1.msra.mxu0 0.0
      %4622 = vmatprep.subr.mxu0 0.0
      %4623 = vmatpush1.msra.mxu0 0.0
      %4624 = vmatprep.subr.mxu0 0.0
      %4625 = vmatpush1.msra.mxu0 0.0
      %4626 = vmatprep.subr.mxu0 0.0
      %4627 = vmatpush1.msra.mxu0 0.0
      %4628 = vmatprep.subr.mxu0 0.0
      %4629 = vmatpush1.msra.mxu0 0.0
      %4630 = vmatprep.subr.mxu0 0.0
      %4631 = vmatpush1.msra.mxu0 0.0
      %4632 = vmatprep.subr.mxu0 0.0
      %4633 = vmatpush1.msra.mxu0 0.0
      %4634 = vmatprep.subr.mxu0 0.0
      %4635 = vmatpush1.msra.mxu0 0.0
      %4636 = vmatprep.subr.mxu0 0.0
      %4637 = vmatpush1.msra.mxu0 0.0
      %4638 = vmatprep.subr.mxu0 0.0
      %4639 = vmatpush1.msra.mxu0 0.0
      %4640 = vmatprep.subr.mxu0 0.0
      %4641 = vmatpush1.msra.mxu0 0.0
      %4642 = vmatprep.subr.mxu0 0.0
      %4643 = vmatpush1.msra.mxu0 0.0
      %4644 = vmatprep.subr.mxu0 0.0
      %4645 = vmatpush1.msra.mxu0 0.0
      %4646 = vmatprep.subr.mxu0 0.0
      %4647 = vmatpush1.msra.mxu0 0.0
      %4648 = vmatprep.subr.mxu0 0.0
      %4649 = vmatpush1.msra.mxu0 0.0
      %4650 = vmatprep.subr.mxu0 0.0
      %4651 = vmatpush1.msra.mxu0 0.0
      %4652 = vmatprep.subr.mxu0 0.0
      %4653 = vmatpush1.msra.mxu0 0.0
      %4654 = vmatprep.subr.mxu0 0.0
      %4655 = vmatpush1.msra.mxu0 0.0
      %4656 = vmatprep.subr.mxu0 0.0
      %4657 = vmatpush1.msra.mxu0 0.0
      %4658 = vmatprep.mubr.f32.mxu0 0.0
      %4659 = vmatmul.mubr.f32.gmra.mrb[0].mxu0 %v4590
      %v4660 = vpop.f32.mrb[0].mxu0
      %v4661 = vadd.f32 0.0, %v4660
      %v4662 = vpop.f32.mrb[0].mxu0
      %4663 = vdwg.mxu0
      %4664 = vrot.lane.b32.xlu0 %v3134, 104
      %v4665 = vpop.permute.xlu0 %4664
      %v4667 = vsel %vm3019, %v4585, 0
      %v4669 = vsel %vm3023, %v4665, 0
      %4671 = vmatprep.subr.mxu0 0.0
      %4672 = vmatpush1.msra.mxu0 %v4669
      %4673 = vmatprep.subr.mxu0 0.0
      %4674 = vmatpush1.msra.mxu0 0.0
      %4675 = vmatprep.subr.mxu0 0.0
      %4676 = vmatpush1.msra.mxu0 0.0
      %4677 = vmatprep.subr.mxu0 0.0
      %4678 = vmatpush1.msra.mxu0 0.0
      %4679 = vmatprep.subr.mxu0 0.0
      %4680 = vmatpush1.msra.mxu0 0.0
      %4681 = vmatprep.subr.mxu0 0.0
      %4682 = vmatpush1.msra.mxu0 0.0
      %4683 = vmatprep.subr.mxu0 0.0
      %4684 = vmatpush1.msra.mxu0 0.0
      %4685 = vmatprep.subr.mxu0 0.0
      %4686 = vmatpush1.msra.mxu0 0.0
      %4687 = vmatprep.subr.mxu0 0.0
      %4688 = vmatpush1.msra.mxu0 0.0
      %4689 = vmatprep.subr.mxu0 0.0
      %4690 = vmatpush1.msra.mxu0 0.0
      %4691 = vmatprep.subr.mxu0 0.0
      %4692 = vmatpush1.msra.mxu0 0.0
      %4693 = vmatprep.subr.mxu0 0.0
      %4694 = vmatpush1.msra.mxu0 0.0
      %4695 = vmatprep.subr.mxu0 0.0
      %4696 = vmatpush1.msra.mxu0 0.0
      %4697 = vmatprep.subr.mxu0 0.0
      %4698 = vmatpush1.msra.mxu0 0.0
      %4699 = vmatprep.subr.mxu0 0.0
      %4700 = vmatpush1.msra.mxu0 0.0
      %4701 = vmatprep.subr.mxu0 0.0
      %4702 = vmatpush1.msra.mxu0 0.0
      %4703 = vmatprep.subr.mxu0 0.0
      %4704 = vmatpush1.msra.mxu0 0.0
      %4705 = vmatprep.subr.mxu0 0.0
      %4706 = vmatpush1.msra.mxu0 0.0
      %4707 = vmatprep.subr.mxu0 0.0
      %4708 = vmatpush1.msra.mxu0 0.0
      %4709 = vmatprep.subr.mxu0 0.0
      %4710 = vmatpush1.msra.mxu0 0.0
      %4711 = vmatprep.subr.mxu0 0.0
      %4712 = vmatpush1.msra.mxu0 0.0
      %4713 = vmatprep.subr.mxu0 0.0
      %4714 = vmatpush1.msra.mxu0 0.0
      %4715 = vmatprep.subr.mxu0 0.0
      %4716 = vmatpush1.msra.mxu0 0.0
      %4717 = vmatprep.subr.mxu0 0.0
      %4718 = vmatpush1.msra.mxu0 0.0
      %4719 = vmatprep.subr.mxu0 0.0
      %4720 = vmatpush1.msra.mxu0 0.0
      %4721 = vmatprep.subr.mxu0 0.0
      %4722 = vmatpush1.msra.mxu0 0.0
      %4723 = vmatprep.subr.mxu0 0.0
      %4724 = vmatpush1.msra.mxu0 0.0
      %4725 = vmatprep.subr.mxu0 0.0
      %4726 = vmatpush1.msra.mxu0 0.0
      %4727 = vmatprep.subr.mxu0 0.0
      %4728 = vmatpush1.msra.mxu0 0.0
      %4729 = vmatprep.subr.mxu0 0.0
      %4730 = vmatpush1.msra.mxu0 0.0
      %4731 = vmatprep.subr.mxu0 0.0
      %4732 = vmatpush1.msra.mxu0 0.0
      %4733 = vmatprep.subr.mxu0 0.0
      %4734 = vmatpush1.msra.mxu0 0.0
      %4735 = vmatprep.mubr.f32.mxu0 0.0
      %4736 = vmatmul.mubr.f32.gmra.mrb[0].mxu0 %v4667
      %v4737 = vpop.f32.mrb[0].mxu0
      %v4738 = vadd.f32 0.0, %v4737
      %v4739 = vpop.f32.mrb[0].mxu0
      %4740 = vdwg.mxu0
      %4741 = vrot.lane.b32.xlu0 %v3248, 104
      %v4742 = vpop.permute.xlu0 %4741
      %v4744 = vsel %vm3019, %v4586, 0
      %v4746 = vsel %vm3023, %v4742, 0
      %4748 = vmatprep.subr.mxu0 0.0
      %4749 = vmatpush1.msra.mxu0 %v4746
      %4750 = vmatprep.subr.mxu0 0.0
      %4751 = vmatpush1.msra.mxu0 0.0
      %4752 = vmatprep.subr.mxu0 0.0
      %4753 = vmatpush1.msra.mxu0 0.0
      %4754 = vmatprep.subr.mxu0 0.0
      %4755 = vmatpush1.msra.mxu0 0.0
      %4756 = vmatprep.subr.mxu0 0.0
      %4757 = vmatpush1.msra.mxu0 0.0
      %4758 = vmatprep.subr.mxu0 0.0
      %4759 = vmatpush1.msra.mxu0 0.0
      %4760 = vmatprep.subr.mxu0 0.0
      %4761 = vmatpush1.msra.mxu0 0.0
      %4762 = vmatprep.subr.mxu0 0.0
      %4763 = vmatpush1.msra.mxu0 0.0
      %4764 = vmatprep.subr.mxu0 0.0
      %4765 = vmatpush1.msra.mxu0 0.0
      %4766 = vmatprep.subr.mxu0 0.0
      %4767 = vmatpush1.msra.mxu0 0.0
      %4768 = vmatprep.subr.mxu0 0.0
      %4769 = vmatpush1.msra.mxu0 0.0
      %4770 = vmatprep.subr.mxu0 0.0
      %4771 = vmatpush1.msra.mxu0 0.0
      %4772 = vmatprep.subr.mxu0 0.0
      %4773 = vmatpush1.msra.mxu0 0.0
      %4774 = vmatprep.subr.mxu0 0.0
      %4775 = vmatpush1.msra.mxu0 0.0
      %4776 = vmatprep.subr.mxu0 0.0
      %4777 = vmatpush1.msra.mxu0 0.0
      %4778 = vmatprep.subr.mxu0 0.0
      %4779 = vmatpush1.msra.mxu0 0.0
      %4780 = vmatprep.subr.mxu0 0.0
      %4781 = vmatpush1.msra.mxu0 0.0
      %4782 = vmatprep.subr.mxu0 0.0
      %4783 = vmatpush1.msra.mxu0 0.0
      %4784 = vmatprep.subr.mxu0 0.0
      %4785 = vmatpush1.msra.mxu0 0.0
      %4786 = vmatprep.subr.mxu0 0.0
      %4787 = vmatpush1.msra.mxu0 0.0
      %4788 = vmatprep.subr.mxu0 0.0
      %4789 = vmatpush1.msra.mxu0 0.0
      %4790 = vmatprep.subr.mxu0 0.0
      %4791 = vmatpush1.msra.mxu0 0.0
      %4792 = vmatprep.subr.mxu0 0.0
      %4793 = vmatpush1.msra.mxu0 0.0
      %4794 = vmatprep.subr.mxu0 0.0
      %4795 = vmatpush1.msra.mxu0 0.0
      %4796 = vmatprep.subr.mxu0 0.0
      %4797 = vmatpush1.msra.mxu0 0.0
      %4798 = vmatprep.subr.mxu0 0.0
      %4799 = vmatpush1.msra.mxu0 0.0
      %4800 = vmatprep.subr.mxu0 0.0
      %4801 = vmatpush1.msra.mxu0 0.0
      %4802 = vmatprep.subr.mxu0 0.0
      %4803 = vmatpush1.msra.mxu0 0.0
      %4804 = vmatprep.subr.mxu0 0.0
      %4805 = vmatpush1.msra.mxu0 0.0
      %4806 = vmatprep.subr.mxu0 0.0
      %4807 = vmatpush1.msra.mxu0 0.0
      %4808 = vmatprep.subr.mxu0 0.0
      %4809 = vmatpush1.msra.mxu0 0.0
      %4810 = vmatprep.subr.mxu0 0.0
      %4811 = vmatpush1.msra.mxu0 0.0
      %4812 = vmatprep.mubr.f32.mxu0 0.0
      %4813 = vmatmul.mubr.f32.gmra.mrb[0].mxu0 %v4744
      %v4814 = vpop.f32.mrb[0].mxu0
      %v4815 = vadd.f32 0.0, %v4814
      %v4816 = vpop.f32.mrb[0].mxu0
      %4817 = vdwg.mxu0
      %4821 = vrot.lane.b32.xlu0 %v3665, 8
      %v4822 = vpop.permute.xlu0 %4821
      %4823 = vrot.lane.b32.xlu0 %v3742, 8
      %v4824 = vpop.permute.xlu0 %4823
      %4825 = vrot.lane.b32.xlu0 %v3819, 8
      %v4826 = vpop.permute.xlu0 %4825
      %4833 = vrot.lane.b32.xlu0 %v4163, 16
      %v4834 = vpop.permute.xlu0 %4833
      %4835 = vrot.lane.b32.xlu0 %v4240, 16
      %v4836 = vpop.permute.xlu0 %4835
      %4837 = vrot.lane.b32.xlu0 %v4317, 16
      %v4838 = vpop.permute.xlu0 %4837
      %4845 = vrot.lane.b32.xlu0 %v4661, 24
      %v4846 = vpop.permute.xlu0 %4845
      %4847 = vrot.lane.b32.xlu0 %v4738, 24
      %v4848 = vpop.permute.xlu0 %4847
      %4849 = vrot.lane.b32.xlu0 %v4815, 24
      %v4850 = vpop.permute.xlu0 %4849
      %v4854 = vsel %vm2567, %v3093, %v4822
      %v4855 = vsel %vm2567, %v3207, %v4824
      %v4856 = vsel %vm2567, %v3321, %v4826
      %vm4857 = vcmask 130048
      %v4858 = vsel %vm4857, %v4854, %v4834
      %v4859 = vsel %vm4857, %v4855, %v4836
      %v4860 = vsel %vm4857, %v4856, %v4838
      %vm4861 = vcmask 195584
      %v4862 = vsel %vm4861, %v4858, %v4846
      %v4863 = vsel %vm4861, %v4859, %v4848
      %v4864 = vsel %vm4861, %v4860, %v4850
      %v4868 = vcombine.high %v4862, %v4862
      %v4870 = vunpack.c.l.s4 1966171168
      %v4871 = vunpack.c.0.s8 %v4870
      %v4872 = vlaneseq
      %v4873 = vshrl.u32 %v4872, 7
      %v4874 = vsub.s32 %v4871, %v4873
      %v4875 = vrot.slane %v4862, %v4874
      %v4877 = vunpack.c.l.s4 1966171168
      %v4878 = vunpack.c.0.s8 %v4877
      %v4879 = vlaneseq
      %v4880 = vshrl.u32 %v4879, 7
      %v4881 = vsub.s32 %v4878, %v4880
      %v4882 = vrot.slane %v4868, %v4881
      %v4883 = vcombine.high %v4875, %v4875
      %v4885 = vunpack.c.l.s4 1966171168
      %v4886 = vunpack.c.0.s8 %v4885
      %v4887 = vlaneseq
      %v4888 = vshrl.u32 %v4887, 7
      %v4889 = vsub.s32 %v4886, %v4888
      %v4890 = vrot.slane %v4875, %v4889
      %v4892 = vunpack.c.l.s4 1966171168
      %v4893 = vunpack.c.0.s8 %v4892
      %v4894 = vlaneseq
      %v4895 = vshrl.u32 %v4894, 7
      %v4896 = vsub.s32 %v4893, %v4895
      %v4897 = vrot.slane %v4882, %v4896
      %v4899 = vunpack.c.l.s4 1966171168
      %v4900 = vunpack.c.0.s8 %v4899
      %v4901 = vlaneseq
      %v4902 = vshrl.u32 %v4901, 7
      %v4903 = vsub.s32 %v4900, %v4902
      %v4904 = vrot.slane %v4883, %v4903
      %v4905 = vcombine.high %v4890, %v4890
      %v4906 = vcombine.high %v4904, %v4904
      %v4907 = vcombine.high %v4863, %v4863
      %v4909 = vunpack.c.l.s4 1966171168
      %v4910 = vunpack.c.0.s8 %v4909
      %v4911 = vlaneseq
      %v4912 = vshrl.u32 %v4911, 7
      %v4913 = vsub.s32 %v4910, %v4912
      %v4914 = vrot.slane %v4863, %v4913
      %v4916 = vunpack.c.l.s4 1966171168
      %v4917 = vunpack.c.0.s8 %v4916
      %v4918 = vlaneseq
      %v4919 = vshrl.u32 %v4918, 7
      %v4920 = vsub.s32 %v4917, %v4919
      %v4921 = vrot.slane %v4907, %v4920
      %v4922 = vcombine.high %v4914, %v4914
      %v4924 = vunpack.c.l.s4 1966171168
      %v4925 = vunpack.c.0.s8 %v4924
      %v4926 = vlaneseq
      %v4927 = vshrl.u32 %v4926, 7
      %v4928 = vsub.s32 %v4925, %v4927
      %v4929 = vrot.slane %v4914, %v4928
      %v4931 = vunpack.c.l.s4 1966171168
      %v4932 = vunpack.c.0.s8 %v4931
      %v4933 = vlaneseq
      %v4934 = vshrl.u32 %v4933, 7
      %v4935 = vsub.s32 %v4932, %v4934
      %v4936 = vrot.slane %v4921, %v4935
      %v4938 = vunpack.c.l.s4 1966171168
      %v4939 = vunpack.c.0.s8 %v4938
      %v4940 = vlaneseq
      %v4941 = vshrl.u32 %v4940, 7
      %v4942 = vsub.s32 %v4939, %v4941
      %v4943 = vrot.slane %v4922, %v4942
      %v4944 = vcombine.high %v4929, %v4929
      %v4945 = vcombine.high %v4943, %v4943
      %v4946 = vcombine.high %v4864, %v4864
      %v4948 = vunpack.c.l.s4 1966171168
      %v4949 = vunpack.c.0.s8 %v4948
      %v4950 = vlaneseq
      %v4951 = vshrl.u32 %v4950, 7
      %v4952 = vsub.s32 %v4949, %v4951
      %v4953 = vrot.slane %v4864, %v4952
      %v4955 = vunpack.c.l.s4 1966171168
      %v4956 = vunpack.c.0.s8 %v4955
      %v4957 = vlaneseq
      %v4958 = vshrl.u32 %v4957, 7
      %v4959 = vsub.s32 %v4956, %v4958
      %v4960 = vrot.slane %v4946, %v4959
      %v4961 = vcombine.high %v4953, %v4953
      %v4963 = vunpack.c.l.s4 1966171168
      %v4964 = vunpack.c.0.s8 %v4963
      %v4965 = vlaneseq
      %v4966 = vshrl.u32 %v4965, 7
      %v4967 = vsub.s32 %v4964, %v4966
      %v4968 = vrot.slane %v4953, %v4967
      %v4970 = vunpack.c.l.s4 1966171168
      %v4971 = vunpack.c.0.s8 %v4970
      %v4972 = vlaneseq
      %v4973 = vshrl.u32 %v4972, 7
      %v4974 = vsub.s32 %v4971, %v4973
      %v4975 = vrot.slane %v4960, %v4974
      %v4977 = vunpack.c.l.s4 1966171168
      %v4978 = vunpack.c.0.s8 %v4977
      %v4979 = vlaneseq
      %v4980 = vshrl.u32 %v4979, 7
      %v4981 = vsub.s32 %v4978, %v4980
      %v4982 = vrot.slane %v4961, %v4981
      %v4983 = vcombine.high %v4968, %v4968
      %v4984 = vcombine.high %v4982, %v4982
      %v4985 = vld [vmem:[%s12] sm:$0xff]
      %v4986 = vld [vmem:[%s12 + $0x8] sm:$0xff]
      %v4987 = vld [vmem:[%s12 + $0x10] sm:$0xff]
      %v4988 = vld [vmem:[%s12 + $0x18] sm:$0xff]
      %v4989 = vld [vmem:[%s13] sm:$0x1]
      %v4991 = vlaneseq
      %v4992 = vshrl.u32 %v4991, 7
      %v4993 = vsub.s32 0, %v4992
      %v4994 = vrot.slane %v4989, %v4993
      %v4996 = vcombine.low %v4890, %v4904
      %v4997 = vcombine.low %v4905, %v4906
      %v4998 = vcombine.low %v4897, %v4929
      %v4999 = vcombine.low %v4943, %v4944
      %v5001 = vunpack.c.l.s4 1966171168
      %v5002 = vunpack.c.0.s8 %v5001
      %v5003 = vlaneseq
      %v5004 = vshrl.u32 %v5003, 7
      %v5005 = vsub.s32 %v5002, %v5004
      %v5006 = vrot.slane %v4996, %v5005
      %v5008 = vunpack.c.l.s4 1966171168
      %v5009 = vunpack.c.0.s8 %v5008
      %v5010 = vlaneseq
      %v5011 = vshrl.u32 %v5010, 7
      %v5012 = vsub.s32 %v5009, %v5011
      %v5013 = vrot.slane %v4997, %v5012
      %v5015 = vunpack.c.l.s4 1966171168
      %v5016 = vunpack.c.0.s8 %v5015
      %v5017 = vlaneseq
      %v5018 = vshrl.u32 %v5017, 7
      %v5019 = vsub.s32 %v5016, %v5018
      %v5020 = vrot.slane %v4998, %v5019
      %v5022 = vunpack.c.l.s4 1966171168
      %v5023 = vunpack.c.0.s8 %v5022
      %v5024 = vlaneseq
      %v5025 = vshrl.u32 %v5024, 7
      %v5026 = vsub.s32 %v5023, %v5025
      %v5027 = vrot.slane %v4999, %v5026
      %v5028 = vcombine.low %v5006, %v5013
      %v5029 = vcombine.low %v5020, %v5027
      %v5031 = vunpack.c.l.s4 1966171168
      %v5032 = vunpack.c.0.s8 %v5031
      %v5033 = vlaneseq
      %v5034 = vshrl.u32 %v5033, 7
      %v5035 = vsub.s32 %v5032, %v5034
      %v5036 = vrot.slane %v5028, %v5035
      %v5038 = vunpack.c.l.s4 1966171168
      %v5039 = vunpack.c.0.s8 %v5038
      %v5040 = vlaneseq
      %v5041 = vshrl.u32 %v5040, 7
      %v5042 = vsub.s32 %v5039, %v5041
      %v5043 = vrot.slane %v5029, %v5042
      %v5044 = vcombine.low %v5036, %v5043
      %v5045 = vcombine.low %v4945, %v4936
      %v5046 = vcombine.low %v4968, %v4982
      %v5047 = vcombine.low %v4983, %v4984
      %v5049 = vunpack.c.l.s4 1966171168
      %v5050 = vunpack.c.0.s8 %v5049
      %v5051 = vlaneseq
      %v5052 = vshrl.u32 %v5051, 7
      %v5053 = vsub.s32 %v5050, %v5052
      %v5054 = vrot.slane %v5045, %v5053
      %v5056 = vunpack.c.l.s4 1966171168
      %v5057 = vunpack.c.0.s8 %v5056
      %v5058 = vlaneseq
      %v5059 = vshrl.u32 %v5058, 7
      %v5060 = vsub.s32 %v5057, %v5059
      %v5061 = vrot.slane %v5046, %v5060
      %v5063 = vunpack.c.l.s4 1966171168
      %v5064 = vunpack.c.0.s8 %v5063
      %v5065 = vlaneseq
      %v5066 = vshrl.u32 %v5065, 7
      %v5067 = vsub.s32 %v5064, %v5066
      %v5068 = vrot.slane %v5047, %v5067
      %v5070 = vunpack.c.l.s4 1966171168
      %v5071 = vunpack.c.0.s8 %v5070
      %v5072 = vlaneseq
      %v5073 = vshrl.u32 %v5072, 7
      %v5074 = vsub.s32 %v5071, %v5073
      %v5075 = vrot.slane %v4975, %v5074
      %v5076 = vcombine.low %v5054, %v5061
      %v5077 = vcombine.low %v5068, %v5075
      %v5079 = vunpack.c.l.s4 1966171168
      %v5080 = vunpack.c.0.s8 %v5079
      %v5081 = vlaneseq
      %v5082 = vshrl.u32 %v5081, 7
      %v5083 = vsub.s32 %v5080, %v5082
      %v5084 = vrot.slane %v5076, %v5083
      %v5086 = vunpack.c.l.s4 1966171168
      %v5087 = vunpack.c.0.s8 %v5086
      %v5088 = vlaneseq
      %v5089 = vshrl.u32 %v5088, 7
      %v5090 = vsub.s32 %v5087, %v5089
      %v5091 = vrot.slane %v5077, %v5090
      %v5092 = vcombine.low %v5084, %v5091
      %v5093 = vsel %vm1326, %v5044, 0
      %v5095 = vsel %vm1326, %v5092, 0
      %5097 = vmatprep.subr.mxu0 0.0
      %5098 = vmatpush1.msra.mxu0 %v4985
      %5099 = vmatprep.subr.mxu0 0.0
      %5100 = vmatpush1.msra.mxu0 %v4986
      %5101 = vmatprep.subr.mxu0 0.0
      %5102 = vmatpush1.msra.mxu0 %v4987
      %5103 = vmatprep.subr.mxu0 0.0
      %5104 = vmatpush1.msra.mxu0 %v4988
      %5105 = vmatprep.subr.mxu0 0.0
      %5106 = vmatpush1.msra.mxu0 0.0
      %5107 = vmatprep.subr.mxu0 0.0
      %5108 = vmatpush1.msra.mxu0 0.0
      %5109 = vmatprep.subr.mxu0 0.0
      %5110 = vmatpush1.msra.mxu0 0.0
      %5111 = vmatprep.subr.mxu0 0.0
      %5112 = vmatpush1.msra.mxu0 0.0
      %5113 = vmatprep.subr.mxu0 0.0
      %5114 = vmatpush1.msra.mxu0 0.0
      %5115 = vmatprep.subr.mxu0 0.0
      %5116 = vmatpush1.msra.mxu0 0.0
      %5117 = vmatprep.subr.mxu0 0.0
      %5118 = vmatpush1.msra.mxu0 0.0
      %5119 = vmatprep.subr.mxu0 0.0
      %5120 = vmatpush1.msra.mxu0 0.0
      %5121 = vmatprep.subr.mxu0 0.0
      %5122 = vmatpush1.msra.mxu0 0.0
      %5123 = vmatprep.subr.mxu0 0.0
      %5124 = vmatpush1.msra.mxu0 0.0
      %5125 = vmatprep.subr.mxu0 0.0
      %5126 = vmatpush1.msra.mxu0 0.0
      %5127 = vmatprep.subr.mxu0 0.0
      %5128 = vmatpush1.msra.mxu0 0.0
      %5129 = vmatprep.subr.mxu0 0.0
      %5130 = vmatpush1.msra.mxu0 0.0
      %5131 = vmatprep.subr.mxu0 0.0
      %5132 = vmatpush1.msra.mxu0 0.0
      %5133 = vmatprep.subr.mxu0 0.0
      %5134 = vmatpush1.msra.mxu0 0.0
      %5135 = vmatprep.subr.mxu0 0.0
      %5136 = vmatpush1.msra.mxu0 0.0
      %5137 = vmatprep.subr.mxu0 0.0
      %5138 = vmatpush1.msra.mxu0 0.0
      %5139 = vmatprep.subr.mxu0 0.0
      %5140 = vmatpush1.msra.mxu0 0.0
      %5141 = vmatprep.subr.mxu0 0.0
      %5142 = vmatpush1.msra.mxu0 0.0
      %5143 = vmatprep.subr.mxu0 0.0
      %5144 = vmatpush1.msra.mxu0 0.0
      %5145 = vmatprep.subr.mxu0 0.0
      %5146 = vmatpush1.msra.mxu0 0.0
      %5147 = vmatprep.subr.mxu0 0.0
      %5148 = vmatpush1.msra.mxu0 0.0
      %5149 = vmatprep.subr.mxu0 0.0
      %5150 = vmatpush1.msra.mxu0 0.0
      %5151 = vmatprep.subr.mxu0 0.0
      %5152 = vmatpush1.msra.mxu0 0.0
      %5153 = vmatprep.subr.mxu0 0.0
      %5154 = vmatpush1.msra.mxu0 0.0
      %5155 = vmatprep.subr.mxu0 0.0
      %5156 = vmatpush1.msra.mxu0 0.0
      %5157 = vmatprep.subr.mxu0 0.0
      %5158 = vmatpush1.msra.mxu0 0.0
      %5159 = vmatprep.subr.mxu0 0.0
      %5160 = vmatpush1.msra.mxu0 0.0
      %5161 = vmatprep.mubr.f32.mxu0 0.0
      %5162 = vmatmul.mubr.f32.gmra.mrb[0].mxu0 %v5093
      %v5163 = vpop.f32.mrb[0].mxu0
      %v5164 = vadd.f32 %v4994, %v5163
      %v5165 = vpop.f32.mrb[0].mxu0
      %5166 = vmatprep.mubr.f32.mxu0 0.0
      %5167 = vmatmul.mubr.f32.gmra.mrb[0].mxu0 %v5095
      %v5168 = vpop.f32.mrb[0].mxu0
      %v5169 = vadd.f32 %v4994, %v5168
      %v5170 = vpop.f32.mrb[0].mxu0
      %5171 = vdwg.mxu0
      %v5174 = vcombine.high %v5164, %v5164
      %v5176 = vunpack.c.l.s4 1966171168
      %v5177 = vunpack.c.0.s8 %v5176
      %v5178 = vlaneseq
      %v5179 = vshrl.u32 %v5178, 7
      %v5180 = vsub.s32 %v5177, %v5179
      %v5181 = vrot.slane %v5164, %v5180
      %v5183 = vunpack.c.l.s4 1966171168
      %v5184 = vunpack.c.0.s8 %v5183
      %v5185 = vlaneseq
      %v5186 = vshrl.u32 %v5185, 7
      %v5187 = vsub.s32 %v5184, %v5186
      %v5188 = vrot.slane %v5174, %v5187
      %v5189 = vcombine.high %v5181, %v5181
      %v5190 = vcombine.high %v5188, %v5188
      %v5192 = vunpack.c.l.s4 1966171168
      %v5193 = vunpack.c.0.s8 %v5192
      %v5194 = vlaneseq
      %v5195 = vshrl.u32 %v5194, 7
      %v5196 = vsub.s32 %v5193, %v5195
      %v5197 = vrot.slane %v5181, %v5196
      %v5199 = vunpack.c.l.s4 1966171168
      %v5200 = vunpack.c.0.s8 %v5199
      %v5201 = vlaneseq
      %v5202 = vshrl.u32 %v5201, 7
      %v5203 = vsub.s32 %v5200, %v5202
      %v5204 = vrot.slane %v5188, %v5203
      %v5206 = vunpack.c.l.s4 1966171168
      %v5207 = vunpack.c.0.s8 %v5206
      %v5208 = vlaneseq
      %v5209 = vshrl.u32 %v5208, 7
      %v5210 = vsub.s32 %v5207, %v5209
      %v5211 = vrot.slane %v5189, %v5210
      %v5213 = vunpack.c.l.s4 1966171168
      %v5214 = vunpack.c.0.s8 %v5213
      %v5215 = vlaneseq
      %v5216 = vshrl.u32 %v5215, 7
      %v5217 = vsub.s32 %v5214, %v5216
      %v5218 = vrot.slane %v5190, %v5217
      %v5219 = vcombine.high %v5197, %v5197
      %v5220 = vcombine.high %v5204, %v5204
      %v5221 = vcombine.high %v5211, %v5211
      %v5222 = vcombine.high %v5218, %v5218
      %v5223 = vcombine.high %v5169, %v5169
      %v5225 = vunpack.c.l.s4 1966171168
      %v5226 = vunpack.c.0.s8 %v5225
      %v5227 = vlaneseq
      %v5228 = vshrl.u32 %v5227, 7
      %v5229 = vsub.s32 %v5226, %v5228
      %v5230 = vrot.slane %v5169, %v5229
      %v5232 = vunpack.c.l.s4 1966171168
      %v5233 = vunpack.c.0.s8 %v5232
      %v5234 = vlaneseq
      %v5235 = vshrl.u32 %v5234, 7
      %v5236 = vsub.s32 %v5233, %v5235
      %v5237 = vrot.slane %v5223, %v5236
      %v5238 = vcombine.high %v5230, %v5230
      %v5239 = vcombine.high %v5237, %v5237
      %v5241 = vunpack.c.l.s4 1966171168
      %v5242 = vunpack.c.0.s8 %v5241
      %v5243 = vlaneseq
      %v5244 = vshrl.u32 %v5243, 7
      %v5245 = vsub.s32 %v5242, %v5244
      %v5246 = vrot.slane %v5230, %v5245
      %v5248 = vunpack.c.l.s4 1966171168
      %v5249 = vunpack.c.0.s8 %v5248
      %v5250 = vlaneseq
      %v5251 = vshrl.u32 %v5250, 7
      %v5252 = vsub.s32 %v5249, %v5251
      %v5253 = vrot.slane %v5237, %v5252
      %v5255 = vunpack.c.l.s4 1966171168
      %v5256 = vunpack.c.0.s8 %v5255
      %v5257 = vlaneseq
      %v5258 = vshrl.u32 %v5257, 7
      %v5259 = vsub.s32 %v5256, %v5258
      %v5260 = vrot.slane %v5238, %v5259
      %v5262 = vunpack.c.l.s4 1966171168
      %v5263 = vunpack.c.0.s8 %v5262
      %v5264 = vlaneseq
      %v5265 = vshrl.u32 %v5264, 7
      %v5266 = vsub.s32 %v5263, %v5265
      %v5267 = vrot.slane %v5239, %v5266
      %v5268 = vcombine.high %v5246, %v5246
      %v5269 = vcombine.high %v5253, %v5253
      %v5270 = vcombine.high %v5260, %v5260
      %v5286 = vadd.f32 %v1115, %v5197
      %v5287 = vadd.f32 %v1129, %v5211
      %v5288 = vadd.f32 %v1130, %v5219
      %v5289 = vadd.f32 %v1131, %v5221
      %v5290 = vadd.f32 %v1122, %v5204
      %v5291 = vadd.f32 %v1154, %v5218
      %v5292 = vadd.f32 %v1168, %v5220
      %v5293 = vadd.f32 %v1169, %v5222
      %v5294 = vadd.f32 %v1170, %v5246
      %v5295 = vadd.f32 %v1161, %v5260
      %v5296 = vadd.f32 %v1193, %v5268
      %v5297 = vadd.f32 %v1207, %v5270
      %v5298 = vadd.f32 %v1208, %v5253
      %v5299 = vadd.f32 %v1209, %v5267
      %v5300 = vadd.f32 %v1200, %v5269
      %v5301 = vld [vmem:[%s14] sm:$0x1]
      %v5302 = vld [vmem:[%s15] sm:$0x1]
      %v5318 = vcombine.low %v5286, %v5287
      %v5319 = vcombine.low %v5288, %v5289
      %v5320 = vcombine.low %v5290, %v5291
      %v5321 = vcombine.low %v5292, %v5293
      %v5323 = vunpack.c.l.s4 1966171168
      %v5324 = vunpack.c.0.s8 %v5323
      %v5325 = vlaneseq
      %v5326 = vshrl.u32 %v5325, 7
      %v5327 = vsub.s32 %v5324, %v5326
      %v5328 = vrot.slane %v5318, %v5327
      %v5330 = vunpack.c.l.s4 1966171168
      %v5331 = vunpack.c.0.s8 %v5330
      %v5332 = vlaneseq
      %v5333 = vshrl.u32 %v5332, 7
      %v5334 = vsub.s32 %v5331, %v5333
      %v5335 = vrot.slane %v5319, %v5334
      %v5337 = vunpack.c.l.s4 1966171168
      %v5338 = vunpack.c.0.s8 %v5337
      %v5339 = vlaneseq
      %v5340 = vshrl.u32 %v5339, 7
      %v5341 = vsub.s32 %v5338, %v5340
      %v5342 = vrot.slane %v5320, %v5341
      %v5344 = vunpack.c.l.s4 1966171168
      %v5345 = vunpack.c.0.s8 %v5344
      %v5346 = vlaneseq
      %v5347 = vshrl.u32 %v5346, 7
      %v5348 = vsub.s32 %v5345, %v5347
      %v5349 = vrot.slane %v5321, %v5348
      %v5350 = vcombine.low %v5328, %v5335
      %v5351 = vcombine.low %v5342, %v5349
      %v5353 = vunpack.c.l.s4 1966171168
      %v5354 = vunpack.c.0.s8 %v5353
      %v5355 = vlaneseq
      %v5356 = vshrl.u32 %v5355, 7
      %v5357 = vsub.s32 %v5354, %v5356
      %v5358 = vrot.slane %v5350, %v5357
      %v5360 = vunpack.c.l.s4 1966171168
      %v5361 = vunpack.c.0.s8 %v5360
      %v5362 = vlaneseq
      %v5363 = vshrl.u32 %v5362, 7
      %v5364 = vsub.s32 %v5361, %v5363
      %v5365 = vrot.slane %v5351, %v5364
      %v5366 = vcombine.low %v5358, %v5365
      %v5367 = vcombine.low %v5294, %v5295
      %v5368 = vcombine.low %v5296, %v5297
      %v5369 = vcombine.low %v5298, %v5299
      %v5371 = vunpack.c.l.s4 1966171168
      %v5372 = vunpack.c.0.s8 %v5371
      %v5373 = vlaneseq
      %v5374 = vshrl.u32 %v5373, 7
      %v5375 = vsub.s32 %v5372, %v5374
      %v5376 = vrot.slane %v5367, %v5375
      %v5378 = vunpack.c.l.s4 1966171168
      %v5379 = vunpack.c.0.s8 %v5378
      %v5380 = vlaneseq
      %v5381 = vshrl.u32 %v5380, 7
      %v5382 = vsub.s32 %v5379, %v5381
      %v5383 = vrot.slane %v5368, %v5382
      %v5385 = vunpack.c.l.s4 1966171168
      %v5386 = vunpack.c.0.s8 %v5385
      %v5387 = vlaneseq
      %v5388 = vshrl.u32 %v5387, 7
      %v5389 = vsub.s32 %v5386, %v5388
      %v5390 = vrot.slane %v5369, %v5389
      %v5392 = vunpack.c.l.s4 1966171168
      %v5393 = vunpack.c.0.s8 %v5392
      %v5394 = vlaneseq
      %v5395 = vshrl.u32 %v5394, 7
      %v5396 = vsub.s32 %v5393, %v5395
      %v5397 = vrot.slane %v5300, %v5396
      %v5398 = vcombine.low %v5376, %v5383
      %v5399 = vcombine.low %v5390, %v5397
      %v5401 = vunpack.c.l.s4 1966171168
      %v5402 = vunpack.c.0.s8 %v5401
      %v5403 = vlaneseq
      %v5404 = vshrl.u32 %v5403, 7
      %v5405 = vsub.s32 %v5402, %v5404
      %v5406 = vrot.slane %v5398, %v5405
      %v5408 = vunpack.c.l.s4 1966171168
      %v5409 = vunpack.c.0.s8 %v5408
      %v5410 = vlaneseq
      %v5411 = vshrl.u32 %v5410, 7
      %v5412 = vsub.s32 %v5409, %v5411
      %v5413 = vrot.slane %v5399, %v5412
      %v5414 = vcombine.low %v5406, %v5413
      %v5417 = vsel %vm1326, %v5366, 0.0
      %5418 = vadd.xlane.f32.xlu0 %v5417
      %v5419 = vpop.xlane.xlu0 %5418
      %v5420 = vsel %vm1330, %v5414, 0.0
      %5421 = vadd.xlane.f32.xlu0 %v5420
      %v5422 = vpop.xlane.xlu0 %5421
      %v5423 = vmul.f32 %v5419, %v1334
      %v5424 = vmul.f32 %v5422, %v1334
      %v5427 = vlaneseq
      %v5428 = vshrl.u32 %v5427, 7
      %v5429 = vsub.s32 0, %v5428
      %v5430 = vrot.slane %v5423, %v5429
      %v5431 = vlaneseq
      %v5432 = vshrl.u32 %v5431, 7
      %v5433 = vsub.s32 1, %v5432
      %v5434 = vrot.slane %v5423, %v5433
      %v5435 = vlaneseq
      %v5436 = vshrl.u32 %v5435, 7
      %v5437 = vsub.s32 2, %v5436
      %v5438 = vrot.slane %v5423, %v5437
      %v5439 = vlaneseq
      %v5440 = vshrl.u32 %v5439, 7
      %v5441 = vsub.s32 3, %v5440
      %v5442 = vrot.slane %v5423, %v5441
      %v5443 = vlaneseq
      %v5444 = vshrl.u32 %v5443, 7
      %v5445 = vsub.s32 4, %v5444
      %v5446 = vrot.slane %v5423, %v5445
      %v5447 = vlaneseq
      %v5448 = vshrl.u32 %v5447, 7
      %v5449 = vsub.s32 5, %v5448
      %v5450 = vrot.slane %v5423, %v5449
      %v5451 = vlaneseq
      %v5452 = vshrl.u32 %v5451, 7
      %v5453 = vsub.s32 6, %v5452
      %v5454 = vrot.slane %v5423, %v5453
      %v5455 = vlaneseq
      %v5456 = vshrl.u32 %v5455, 7
      %v5457 = vsub.s32 7, %v5456
      %v5458 = vrot.slane %v5423, %v5457
      %v5459 = vlaneseq
      %v5460 = vshrl.u32 %v5459, 7
      %v5461 = vsub.s32 0, %v5460
      %v5462 = vrot.slane %v5424, %v5461
      %v5463 = vlaneseq
      %v5464 = vshrl.u32 %v5463, 7
      %v5465 = vsub.s32 1, %v5464
      %v5466 = vrot.slane %v5424, %v5465
      %v5467 = vlaneseq
      %v5468 = vshrl.u32 %v5467, 7
      %v5469 = vsub.s32 2, %v5468
      %v5470 = vrot.slane %v5424, %v5469
      %v5471 = vlaneseq
      %v5472 = vshrl.u32 %v5471, 7
      %v5473 = vsub.s32 3, %v5472
      %v5474 = vrot.slane %v5424, %v5473
      %v5475 = vlaneseq
      %v5476 = vshrl.u32 %v5475, 7
      %v5477 = vsub.s32 4, %v5476
      %v5478 = vrot.slane %v5424, %v5477
      %v5479 = vlaneseq
      %v5480 = vshrl.u32 %v5479, 7
      %v5481 = vsub.s32 5, %v5480
      %v5482 = vrot.slane %v5424, %v5481
      %v5483 = vlaneseq
      %v5484 = vshrl.u32 %v5483, 7
      %v5485 = vsub.s32 6, %v5484
      %v5486 = vrot.slane %v5424, %v5485
      %v5502 = vsub.f32 %v5286, %v5430
      %v5503 = vsub.f32 %v5287, %v5434
      %v5504 = vsub.f32 %v5288, %v5438
      %v5505 = vsub.f32 %v5289, %v5442
      %v5506 = vsub.f32 %v5290, %v5446
      %v5507 = vsub.f32 %v5291, %v5450
      %v5508 = vsub.f32 %v5292, %v5454
      %v5509 = vsub.f32 %v5293, %v5458
      %v5510 = vsub.f32 %v5294, %v5462
      %v5511 = vsub.f32 %v5295, %v5466
      %v5512 = vsub.f32 %v5296, %v5470
      %v5513 = vsub.f32 %v5297, %v5474
      %v5514 = vsub.f32 %v5298, %v5478
      %v5515 = vsub.f32 %v5299, %v5482
      %v5516 = vsub.f32 %v5300, %v5486
      %v5517 = vmul.f32 %v5502, %v5502
      %v5518 = vmul.f32 %v5503, %v5503
      %v5519 = vmul.f32 %v5504, %v5504
      %v5520 = vmul.f32 %v5505, %v5505
      %v5521 = vmul.f32 %v5506, %v5506
      %v5522 = vmul.f32 %v5507, %v5507
      %v5523 = vmul.f32 %v5508, %v5508
      %v5524 = vmul.f32 %v5509, %v5509
      %v5525 = vmul.f32 %v5510, %v5510
      %v5526 = vmul.f32 %v5511, %v5511
      %v5527 = vmul.f32 %v5512, %v5512
      %v5528 = vmul.f32 %v5513, %v5513
      %v5529 = vmul.f32 %v5514, %v5514
      %v5530 = vmul.f32 %v5515, %v5515
      %v5531 = vmul.f32 %v5516, %v5516
      %v5547 = vcombine.low %v5517, %v5518
      %v5548 = vcombine.low %v5519, %v5520
      %v5549 = vcombine.low %v5521, %v5522
      %v5550 = vcombine.low %v5523, %v5524
      %v5552 = vunpack.c.l.s4 1966171168
      %v5553 = vunpack.c.0.s8 %v5552
      %v5554 = vlaneseq
      %v5555 = vshrl.u32 %v5554, 7
      %v5556 = vsub.s32 %v5553, %v5555
      %v5557 = vrot.slane %v5547, %v5556
      %v5559 = vunpack.c.l.s4 1966171168
      %v5560 = vunpack.c.0.s8 %v5559
      %v5561 = vlaneseq
      %v5562 = vshrl.u32 %v5561, 7
      %v5563 = vsub.s32 %v5560, %v5562
      %v5564 = vrot.slane %v5548, %v5563
      %v5566 = vunpack.c.l.s4 1966171168
      %v5567 = vunpack.c.0.s8 %v5566
      %v5568 = vlaneseq
      %v5569 = vshrl.u32 %v5568, 7
      %v5570 = vsub.s32 %v5567, %v5569
      %v5571 = vrot.slane %v5549, %v5570
      %v5573 = vunpack.c.l.s4 1966171168
      %v5574 = vunpack.c.0.s8 %v5573
      %v5575 = vlaneseq
      %v5576 = vshrl.u32 %v5575, 7
      %v5577 = vsub.s32 %v5574, %v5576
      %v5578 = vrot.slane %v5550, %v5577
      %v5579 = vcombine.low %v5557, %v5564
      %v5580 = vcombine.low %v5571, %v5578
      %v5582 = vunpack.c.l.s4 1966171168
      %v5583 = vunpack.c.0.s8 %v5582
      %v5584 = vlaneseq
      %v5585 = vshrl.u32 %v5584, 7
      %v5586 = vsub.s32 %v5583, %v5585
      %v5587 = vrot.slane %v5579, %v5586
      %v5589 = vunpack.c.l.s4 1966171168
      %v5590 = vunpack.c.0.s8 %v5589
      %v5591 = vlaneseq
      %v5592 = vshrl.u32 %v5591, 7
      %v5593 = vsub.s32 %v5590, %v5592
      %v5594 = vrot.slane %v5580, %v5593
      %v5595 = vcombine.low %v5587, %v5594
      %v5596 = vcombine.low %v5525, %v5526
      %v5597 = vcombine.low %v5527, %v5528
      %v5598 = vcombine.low %v5529, %v5530
      %v5600 = vunpack.c.l.s4 1966171168
      %v5601 = vunpack.c.0.s8 %v5600
      %v5602 = vlaneseq
      %v5603 = vshrl.u32 %v5602, 7
      %v5604 = vsub.s32 %v5601, %v5603
      %v5605 = vrot.slane %v5596, %v5604
      %v5607 = vunpack.c.l.s4 1966171168
      %v5608 = vunpack.c.0.s8 %v5607
      %v5609 = vlaneseq
      %v5610 = vshrl.u32 %v5609, 7
      %v5611 = vsub.s32 %v5608, %v5610
      %v5612 = vrot.slane %v5597, %v5611
      %v5614 = vunpack.c.l.s4 1966171168
      %v5615 = vunpack.c.0.s8 %v5614
      %v5616 = vlaneseq
      %v5617 = vshrl.u32 %v5616, 7
      %v5618 = vsub.s32 %v5615, %v5617
      %v5619 = vrot.slane %v5598, %v5618
      %v5621 = vunpack.c.l.s4 1966171168
      %v5622 = vunpack.c.0.s8 %v5621
      %v5623 = vlaneseq
      %v5624 = vshrl.u32 %v5623, 7
      %v5625 = vsub.s32 %v5622, %v5624
      %v5626 = vrot.slane %v5531, %v5625
      %v5627 = vcombine.low %v5605, %v5612
      %v5628 = vcombine.low %v5619, %v5626
      %v5630 = vunpack.c.l.s4 1966171168
      %v5631 = vunpack.c.0.s8 %v5630
      %v5632 = vlaneseq
      %v5633 = vshrl.u32 %v5632, 7
      %v5634 = vsub.s32 %v5631, %v5633
      %v5635 = vrot.slane %v5627, %v5634
      %v5637 = vunpack.c.l.s4 1966171168
      %v5638 = vunpack.c.0.s8 %v5637
      %v5639 = vlaneseq
      %v5640 = vshrl.u32 %v5639, 7
      %v5641 = vsub.s32 %v5638, %v5640
      %v5642 = vrot.slane %v5628, %v5641
      %v5643 = vcombine.low %v5635, %v5642
      %v5646 = vsel %vm1326, %v5595, 0.0
      %5647 = vadd.xlane.f32.xlu0 %v5646
      %v5648 = vpop.xlane.xlu0 %5647
      %v5649 = vsel %vm1330, %v5643, 0.0
      %5650 = vadd.xlane.f32.xlu0 %v5649
      %v5651 = vpop.xlane.xlu0 %5650
      %v5652 = vmul.f32 %v5648, %v1334
      %v5653 = vmul.f32 %v5651, %v1334
      %v5654 = vadd.f32 %v5652, 1e-06
      %v5655 = vadd.f32 %v5653, 1e-06
      %v5656 = vrsqrt.pop %v5654
      %v5657 = vrsqrt.pop %v5655
      %v5660 = vlaneseq
      %v5661 = vshrl.u32 %v5660, 7
      %v5662 = vsub.s32 0, %v5661
      %v5663 = vrot.slane %v5656, %v5662
      %v5664 = vlaneseq
      %v5665 = vshrl.u32 %v5664, 7
      %v5666 = vsub.s32 1, %v5665
      %v5667 = vrot.slane %v5656, %v5666
      %v5668 = vlaneseq
      %v5669 = vshrl.u32 %v5668, 7
      %v5670 = vsub.s32 2, %v5669
      %v5671 = vrot.slane %v5656, %v5670
      %v5672 = vlaneseq
      %v5673 = vshrl.u32 %v5672, 7
      %v5674 = vsub.s32 3, %v5673
      %v5675 = vrot.slane %v5656, %v5674
      %v5676 = vlaneseq
      %v5677 = vshrl.u32 %v5676, 7
      %v5678 = vsub.s32 4, %v5677
      %v5679 = vrot.slane %v5656, %v5678
      %v5680 = vlaneseq
      %v5681 = vshrl.u32 %v5680, 7
      %v5682 = vsub.s32 5, %v5681
      %v5683 = vrot.slane %v5656, %v5682
      %v5684 = vlaneseq
      %v5685 = vshrl.u32 %v5684, 7
      %v5686 = vsub.s32 6, %v5685
      %v5687 = vrot.slane %v5656, %v5686
      %v5688 = vlaneseq
      %v5689 = vshrl.u32 %v5688, 7
      %v5690 = vsub.s32 7, %v5689
      %v5691 = vrot.slane %v5656, %v5690
      %v5692 = vlaneseq
      %v5693 = vshrl.u32 %v5692, 7
      %v5694 = vsub.s32 0, %v5693
      %v5695 = vrot.slane %v5657, %v5694
      %v5696 = vlaneseq
      %v5697 = vshrl.u32 %v5696, 7
      %v5698 = vsub.s32 1, %v5697
      %v5699 = vrot.slane %v5657, %v5698
      %v5700 = vlaneseq
      %v5701 = vshrl.u32 %v5700, 7
      %v5702 = vsub.s32 2, %v5701
      %v5703 = vrot.slane %v5657, %v5702
      %v5704 = vlaneseq
      %v5705 = vshrl.u32 %v5704, 7
      %v5706 = vsub.s32 3, %v5705
      %v5707 = vrot.slane %v5657, %v5706
      %v5708 = vlaneseq
      %v5709 = vshrl.u32 %v5708, 7
      %v5710 = vsub.s32 4, %v5709
      %v5711 = vrot.slane %v5657, %v5710
      %v5712 = vlaneseq
      %v5713 = vshrl.u32 %v5712, 7
      %v5714 = vsub.s32 5, %v5713
      %v5715 = vrot.slane %v5657, %v5714
      %v5716 = vlaneseq
      %v5717 = vshrl.u32 %v5716, 7
      %v5718 = vsub.s32 6, %v5717
      %v5719 = vrot.slane %v5657, %v5718
      %v5735 = vmul.f32 %v5502, %v5663
      %v5736 = vmul.f32 %v5503, %v5667
      %v5737 = vmul.f32 %v5504, %v5671
      %v5738 = vmul.f32 %v5505, %v5675
      %v5739 = vmul.f32 %v5506, %v5679
      %v5740 = vmul.f32 %v5507, %v5683
      %v5741 = vmul.f32 %v5508, %v5687
      %v5742 = vmul.f32 %v5509, %v5691
      %v5743 = vmul.f32 %v5510, %v5695
      %v5744 = vmul.f32 %v5511, %v5699
      %v5745 = vmul.f32 %v5512, %v5703
      %v5746 = vmul.f32 %v5513, %v5707
      %v5747 = vmul.f32 %v5514, %v5711
      %v5748 = vmul.f32 %v5515, %v5715
      %v5749 = vmul.f32 %v5516, %v5719
      %v5751 = vlaneseq
      %v5752 = vshrl.u32 %v5751, 7
      %v5753 = vsub.s32 0, %v5752
      %v5754 = vrot.slane %v5301, %v5753
      %v5755 = vcombine.high %v5754, %v5754
      %v5757 = vunpack.c.l.s4 1966171168
      %v5758 = vunpack.c.0.s8 %v5757
      %v5759 = vlaneseq
      %v5760 = vshrl.u32 %v5759, 7
      %v5761 = vsub.s32 %v5758, %v5760
      %v5762 = vrot.slane %v5754, %v5761
      %v5764 = vunpack.c.l.s4 1966171168
      %v5765 = vunpack.c.0.s8 %v5764
      %v5766 = vlaneseq
      %v5767 = vshrl.u32 %v5766, 7
      %v5768 = vsub.s32 %v5765, %v5767
      %v5769 = vrot.slane %v5755, %v5768
      %v5770 = vcombine.high %v5762, %v5762
      %v5771 = vcombine.high %v5769, %v5769
      %v5773 = vunpack.c.l.s4 1966171168
      %v5774 = vunpack.c.0.s8 %v5773
      %v5775 = vlaneseq
      %v5776 = vshrl.u32 %v5775, 7
      %v5777 = vsub.s32 %v5774, %v5776
      %v5778 = vrot.slane %v5762, %v5777
      %v5780 = vunpack.c.l.s4 1966171168
      %v5781 = vunpack.c.0.s8 %v5780
      %v5782 = vlaneseq
      %v5783 = vshrl.u32 %v5782, 7
      %v5784 = vsub.s32 %v5781, %v5783
      %v5785 = vrot.slane %v5769, %v5784
      %v5787 = vunpack.c.l.s4 1966171168
      %v5788 = vunpack.c.0.s8 %v5787
      %v5789 = vlaneseq
      %v5790 = vshrl.u32 %v5789, 7
      %v5791 = vsub.s32 %v5788, %v5790
      %v5792 = vrot.slane %v5770, %v5791
      %v5794 = vunpack.c.l.s4 1966171168
      %v5795 = vunpack.c.0.s8 %v5794
      %v5796 = vlaneseq
      %v5797 = vshrl.u32 %v5796, 7
      %v5798 = vsub.s32 %v5795, %v5797
      %v5799 = vrot.slane %v5771, %v5798
      %v5800 = vcombine.high %v5778, %v5778
      %v5801 = vcombine.high %v5785, %v5785
      %v5802 = vcombine.high %v5792, %v5792
      %v5803 = vcombine.high %v5799, %v5799
      %v5812 = vmul.f32 %v5735, %v5778
      %v5813 = vmul.f32 %v5736, %v5792
      %v5814 = vmul.f32 %v5737, %v5800
      %v5815 = vmul.f32 %v5738, %v5802
      %v5816 = vmul.f32 %v5739, %v5785
      %v5817 = vmul.f32 %v5740, %v5799
      %v5818 = vmul.f32 %v5741, %v5801
      %v5819 = vmul.f32 %v5742, %v5803
      %v5820 = vmul.f32 %v5743, %v5778
      %v5821 = vmul.f32 %v5744, %v5792
      %v5822 = vmul.f32 %v5745, %v5800
      %v5823 = vmul.f32 %v5746, %v5802
      %v5824 = vmul.f32 %v5747, %v5785
      %v5825 = vmul.f32 %v5748, %v5799
      %v5826 = vmul.f32 %v5749, %v5801
      %v5828 = vlaneseq
      %v5829 = vshrl.u32 %v5828, 7
      %v5830 = vsub.s32 0, %v5829
      %v5831 = vrot.slane %v5302, %v5830
      %v5832 = vcombine.high %v5831, %v5831
      %v5834 = vunpack.c.l.s4 1966171168
      %v5835 = vunpack.c.0.s8 %v5834
      %v5836 = vlaneseq
      %v5837 = vshrl.u32 %v5836, 7
      %v5838 = vsub.s32 %v5835, %v5837
      %v5839 = vrot.slane %v5831, %v5838
      %v5841 = vunpack.c.l.s4 1966171168
      %v5842 = vunpack.c.0.s8 %v5841
      %v5843 = vlaneseq
      %v5844 = vshrl.u32 %v5843, 7
      %v5845 = vsub.s32 %v5842, %v5844
      %v5846 = vrot.slane %v5832, %v5845
      %v5847 = vcombine.high %v5839, %v5839
      %v5848 = vcombine.high %v5846, %v5846
      %v5850 = vunpack.c.l.s4 1966171168
      %v5851 = vunpack.c.0.s8 %v5850
      %v5852 = vlaneseq
      %v5853 = vshrl.u32 %v5852, 7
      %v5854 = vsub.s32 %v5851, %v5853
      %v5855 = vrot.slane %v5839, %v5854
      %v5857 = vunpack.c.l.s4 1966171168
      %v5858 = vunpack.c.0.s8 %v5857
      %v5859 = vlaneseq
      %v5860 = vshrl.u32 %v5859, 7
      %v5861 = vsub.s32 %v5858, %v5860
      %v5862 = vrot.slane %v5846, %v5861
      %v5864 = vunpack.c.l.s4 1966171168
      %v5865 = vunpack.c.0.s8 %v5864
      %v5866 = vlaneseq
      %v5867 = vshrl.u32 %v5866, 7
      %v5868 = vsub.s32 %v5865, %v5867
      %v5869 = vrot.slane %v5847, %v5868
      %v5871 = vunpack.c.l.s4 1966171168
      %v5872 = vunpack.c.0.s8 %v5871
      %v5873 = vlaneseq
      %v5874 = vshrl.u32 %v5873, 7
      %v5875 = vsub.s32 %v5872, %v5874
      %v5876 = vrot.slane %v5848, %v5875
      %v5877 = vcombine.high %v5855, %v5855
      %v5878 = vcombine.high %v5862, %v5862
      %v5879 = vcombine.high %v5869, %v5869
      %v5880 = vcombine.high %v5876, %v5876
      %v5889 = vadd.f32 %v5812, %v5855
      %v5890 = vadd.f32 %v5813, %v5869
      %v5891 = vadd.f32 %v5814, %v5877
      %v5892 = vadd.f32 %v5815, %v5879
      %v5893 = vadd.f32 %v5816, %v5862
      %v5894 = vadd.f32 %v5817, %v5876
      %v5895 = vadd.f32 %v5818, %v5878
      %v5896 = vadd.f32 %v5819, %v5880
      %v5897 = vadd.f32 %v5820, %v5855
      %v5898 = vadd.f32 %v5821, %v5869
      %v5899 = vadd.f32 %v5822, %v5877
      %v5900 = vadd.f32 %v5823, %v5879
      %v5901 = vadd.f32 %v5824, %v5862
      %v5902 = vadd.f32 %v5825, %v5876
      %v5903 = vadd.f32 %v5826, %v5878
      %v5904 = vld [vmem:[%s16] sm:$0xff]
      %v5905 = vld [vmem:[%s16 + $0x8] sm:$0xff]
      %v5906 = vld [vmem:[%s16 + $0x10] sm:$0xff]
      %v5907 = vld [vmem:[%s16 + $0x18] sm:$0xff]
      %v5908 = vld [vmem:[%s17] sm:$0x1]
      %v5910 = vlaneseq
      %v5911 = vshrl.u32 %v5910, 7
      %v5912 = vsub.s32 0, %v5911
      %v5913 = vrot.slane %v5908, %v5912
      %v5930 = vcombine.low %v5889, %v5890
      %v5931 = vcombine.low %v5891, %v5892
      %v5932 = vcombine.low %v5893, %v5894
      %v5933 = vcombine.low %v5895, %v5896
      %v5935 = vunpack.c.l.s4 1966171168
      %v5936 = vunpack.c.0.s8 %v5935
      %v5937 = vlaneseq
      %v5938 = vshrl.u32 %v5937, 7
      %v5939 = vsub.s32 %v5936, %v5938
      %v5940 = vrot.slane %v5930, %v5939
      %v5942 = vunpack.c.l.s4 1966171168
      %v5943 = vunpack.c.0.s8 %v5942
      %v5944 = vlaneseq
      %v5945 = vshrl.u32 %v5944, 7
      %v5946 = vsub.s32 %v5943, %v5945
      %v5947 = vrot.slane %v5931, %v5946
      %v5949 = vunpack.c.l.s4 1966171168
      %v5950 = vunpack.c.0.s8 %v5949
      %v5951 = vlaneseq
      %v5952 = vshrl.u32 %v5951, 7
      %v5953 = vsub.s32 %v5950, %v5952
      %v5954 = vrot.slane %v5932, %v5953
      %v5956 = vunpack.c.l.s4 1966171168
      %v5957 = vunpack.c.0.s8 %v5956
      %v5958 = vlaneseq
      %v5959 = vshrl.u32 %v5958, 7
      %v5960 = vsub.s32 %v5957, %v5959
      %v5961 = vrot.slane %v5933, %v5960
      %v5962 = vcombine.low %v5940, %v5947
      %v5963 = vcombine.low %v5954, %v5961
      %v5965 = vunpack.c.l.s4 1966171168
      %v5966 = vunpack.c.0.s8 %v5965
      %v5967 = vlaneseq
      %v5968 = vshrl.u32 %v5967, 7
      %v5969 = vsub.s32 %v5966, %v5968
      %v5970 = vrot.slane %v5962, %v5969
      %v5972 = vunpack.c.l.s4 1966171168
      %v5973 = vunpack.c.0.s8 %v5972
      %v5974 = vlaneseq
      %v5975 = vshrl.u32 %v5974, 7
      %v5976 = vsub.s32 %v5973, %v5975
      %v5977 = vrot.slane %v5963, %v5976
      %v5978 = vcombine.low %v5970, %v5977
      %v5979 = vcombine.low %v5897, %v5898
      %v5980 = vcombine.low %v5899, %v5900
      %v5981 = vcombine.low %v5901, %v5902
      %v5983 = vunpack.c.l.s4 1966171168
      %v5984 = vunpack.c.0.s8 %v5983
      %v5985 = vlaneseq
      %v5986 = vshrl.u32 %v5985, 7
      %v5987 = vsub.s32 %v5984, %v5986
      %v5988 = vrot.slane %v5979, %v5987
      %v5990 = vunpack.c.l.s4 1966171168
      %v5991 = vunpack.c.0.s8 %v5990
      %v5992 = vlaneseq
      %v5993 = vshrl.u32 %v5992, 7
      %v5994 = vsub.s32 %v5991, %v5993
      %v5995 = vrot.slane %v5980, %v5994
      %v5997 = vunpack.c.l.s4 1966171168
      %v5998 = vunpack.c.0.s8 %v5997
      %v5999 = vlaneseq
      %v6000 = vshrl.u32 %v5999, 7
      %v6001 = vsub.s32 %v5998, %v6000
      %v6002 = vrot.slane %v5981, %v6001
      %v6004 = vunpack.c.l.s4 1966171168
      %v6005 = vunpack.c.0.s8 %v6004
      %v6006 = vlaneseq
      %v6007 = vshrl.u32 %v6006, 7
      %v6008 = vsub.s32 %v6005, %v6007
      %v6009 = vrot.slane %v5903, %v6008
      %v6010 = vcombine.low %v5988, %v5995
      %v6011 = vcombine.low %v6002, %v6009
      %v6013 = vunpack.c.l.s4 1966171168
      %v6014 = vunpack.c.0.s8 %v6013
      %v6015 = vlaneseq
      %v6016 = vshrl.u32 %v6015, 7
      %v6017 = vsub.s32 %v6014, %v6016
      %v6018 = vrot.slane %v6010, %v6017
      %v6020 = vunpack.c.l.s4 1966171168
      %v6021 = vunpack.c.0.s8 %v6020
      %v6022 = vlaneseq
      %v6023 = vshrl.u32 %v6022, 7
      %v6024 = vsub.s32 %v6021, %v6023
      %v6025 = vrot.slane %v6011, %v6024
      %v6026 = vcombine.low %v6018, %v6025
      %v6027 = vsel %vm1326, %v5978, 0
      %v6029 = vsel %vm1326, %v6026, 0
      %6031 = vmatprep.subr.mxu0 0.0
      %6032 = vmatpush1.msra.mxu0 %v5904
      %6033 = vmatprep.subr.mxu0 0.0
      %6034 = vmatpush1.msra.mxu0 %v5905
      %6035 = vmatprep.subr.mxu0 0.0
      %6036 = vmatpush1.msra.mxu0 %v5906
      %6037 = vmatprep.subr.mxu0 0.0
      %6038 = vmatpush1.msra.mxu0 %v5907
      %6039 = vmatprep.subr.mxu0 0.0
      %6040 = vmatpush1.msra.mxu0 0.0
      %6041 = vmatprep.subr.mxu0 0.0
      %6042 = vmatpush1.msra.mxu0 0.0
      %6043 = vmatprep.subr.mxu0 0.0
      %6044 = vmatpush1.msra.mxu0 0.0
      %6045 = vmatprep.subr.mxu0 0.0
      %6046 = vmatpush1.msra.mxu0 0.0
      %6047 = vmatprep.subr.mxu0 0.0
      %6048 = vmatpush1.msra.mxu0 0.0
      %6049 = vmatprep.subr.mxu0 0.0
      %6050 = vmatpush1.msra.mxu0 0.0
      %6051 = vmatprep.subr.mxu0 0.0
      %6052 = vmatpush1.msra.mxu0 0.0
      %6053 = vmatprep.subr.mxu0 0.0
      %6054 = vmatpush1.msra.mxu0 0.0
      %6055 = vmatprep.subr.mxu0 0.0
      %6056 = vmatpush1.msra.mxu0 0.0
      %6057 = vmatprep.subr.mxu0 0.0
      %6058 = vmatpush1.msra.mxu0 0.0
      %6059 = vmatprep.subr.mxu0 0.0
      %6060 = vmatpush1.msra.mxu0 0.0
      %6061 = vmatprep.subr.mxu0 0.0
      %6062 = vmatpush1.msra.mxu0 0.0
      %6063 = vmatprep.subr.mxu0 0.0
      %6064 = vmatpush1.msra.mxu0 0.0
      %6065 = vmatprep.subr.mxu0 0.0
      %6066 = vmatpush1.msra.mxu0 0.0
      %6067 = vmatprep.subr.mxu0 0.0
      %6068 = vmatpush1.msra.mxu0 0.0
      %6069 = vmatprep.subr.mxu0 0.0
      %6070 = vmatpush1.msra.mxu0 0.0
      %6071 = vmatprep.subr.mxu0 0.0
      %6072 = vmatpush1.msra.mxu0 0.0
      %6073 = vmatprep.subr.mxu0 0.0
      %6074 = vmatpush1.msra.mxu0 0.0
      %6075 = vmatprep.subr.mxu0 0.0
      %6076 = vmatpush1.msra.mxu0 0.0
      %6077 = vmatprep.subr.mxu0 0.0
      %6078 = vmatpush1.msra.mxu0 0.0
      %6079 = vmatprep.subr.mxu0 0.0
      %6080 = vmatpush1.msra.mxu0 0.0
      %6081 = vmatprep.subr.mxu0 0.0
      %6082 = vmatpush1.msra.mxu0 0.0
      %6083 = vmatprep.subr.mxu0 0.0
      %6084 = vmatpush1.msra.mxu0 0.0
      %6085 = vmatprep.subr.mxu0 0.0
      %6086 = vmatpush1.msra.mxu0 0.0
      %6087 = vmatprep.subr.mxu0 0.0
      %6088 = vmatpush1.msra.mxu0 0.0
      %6089 = vmatprep.subr.mxu0 0.0
      %6090 = vmatpush1.msra.mxu0 0.0
      %6091 = vmatprep.subr.mxu0 0.0
      %6092 = vmatpush1.msra.mxu0 0.0
      %6093 = vmatprep.subr.mxu0 0.0
      %6094 = vmatpush1.msra.mxu0 0.0
      %6095 = vmatprep.mubr.f32.mxu0 0.0
      %6096 = vmatmul.mubr.f32.gmra.mrb[0].mxu0 %v6027
      %v6097 = vpop.f32.mrb[0].mxu0
      %v6098 = vadd.f32 %v5913, %v6097
      %v6099 = vpop.f32.mrb[0].mxu0
      %6100 = vmatprep.mubr.f32.mxu0 0.0
      %6101 = vmatmul.mubr.f32.gmra.mrb[0].mxu0 %v6029
      %v6102 = vpop.f32.mrb[0].mxu0
      %v6103 = vadd.f32 %v5913, %v6102
      %v6104 = vpop.f32.mrb[0].mxu0
      %6105 = vdwg.mxu0
      %v6106 = vmul.f32 %v6098, 0.5
      %v6107 = vmul.f32 %v6103, 0.5
      %v6108 = vmul.f32 %v6098, 0.70710677
      %v6109 = vmul.f32 %v6103, 0.70710677
      %v6110 = vand.u32 2147483647, %v6108
      %v6111 = vand.u32 2147483647, %v6109
      %v6112 = vmul.f32 %v6110, 0.3275911
      %v6113 = vmul.f32 %v6111, 0.3275911
      %v6114 = vadd.f32 %v6112, 1.0
      %v6115 = vadd.f32 %v6113, 1.0
      %v6116 = vrcp.pop %v6114
      %v6117 = vmul.f32 1.0, %v6116
      %v6118 = vrcp.pop %v6115
      %v6119 = vmul.f32 1.0, %v6118
      %v6120 = vmul.f32 %v6117, 1.0614054
      %v6121 = vmul.f32 %v6119, 1.0614054
      %v6122 = vadd.f32 %v6120, -1.4531521
      %v6123 = vadd.f32 %v6121, -1.4531521
      %v6124 = vmul.f32 %v6122, %v6117
      %v6125 = vmul.f32 %v6123, %v6119
      %v6126 = vadd.f32 %v6124, 1.4214138
      %v6127 = vadd.f32 %v6125, 1.4214138
      %v6128 = vmul.f32 %v6126, %v6117
      %v6129 = vmul.f32 %v6127, %v6119
      %v6130 = vadd.f32 %v6128, -0.28449672
      %v6131 = vadd.f32 %v6129, -0.28449672
      %v6132 = vmul.f32 %v6130, %v6117
      %v6133 = vmul.f32 %v6131, %v6119
      %v6134 = vadd.f32 %v6132, 0.2548296
      %v6135 = vadd.f32 %v6133, 0.2548296
      %v6136 = vmul.f32 %v6134, %v6117
      %v6137 = vmul.f32 %v6135, %v6119
      %v6138 = vsub.f32 0.0, %v6110
      %v6139 = vsub.f32 0.0, %v6111
      %v6140 = vmul.f32 %v6138, %v6110
      %v6141 = vmul.f32 %v6139, %v6111
      %v6142 = vmul.f32 %v6140, 1.442695
      %v6143 = vpow.pop %v6142
      %v6144 = vmul.f32 %v6141, 1.442695
      %v6145 = vpow.pop %v6144
      %v6146 = vmul.f32 %v6136, %v6143
      %v6147 = vmul.f32 %v6137, %v6145
      %v6148 = vsub.f32 1.0, %v6146
      %v6149 = vsub.f32 1.0, %v6147
      %vm6150 = vcmp.ge.f32.partialorder %v6108, 0.0
      %vm6151 = vcmp.ge.f32.partialorder %v6109, 0.0
      %v6152 = vsub.f32 0.0, %v6148
      %v6153 = vsub.f32 0.0, %v6149
      %v6154 = vsel %vm6150, %v6148, %v6152
      %v6155 = vsel %vm6151, %v6149, %v6153
      %v6156 = vadd.f32 %v6154, 1.0
      %v6157 = vadd.f32 %v6155, 1.0
      %v6158 = vmul.f32 %v6106, %v6156
      %v6159 = vmul.f32 %v6107, %v6157
      %v6160 = vld [vmem:[%s18] sm:$0xff]
      %v6161 = vld [vmem:[%s18 + $0x8] sm:$0xff]
      %v6162 = vld [vmem:[%s18 + $0x10] sm:$0xff]
      %v6163 = vld [vmem:[%s18 + $0x18] sm:$0xff]
      %v6164 = vld [vmem:[%s18 + $0x20] sm:$0xff]
      %v6165 = vld [vmem:[%s18 + $0x28] sm:$0xff]
      %v6166 = vld [vmem:[%s18 + $0x30] sm:$0xff]
      %v6167 = vld [vmem:[%s18 + $0x38] sm:$0xff]
      %v6168 = vld [vmem:[%s18 + $0x40] sm:$0xff]
      %v6169 = vld [vmem:[%s18 + $0x48] sm:$0xff]
      %v6170 = vld [vmem:[%s18 + $0x50] sm:$0xff]
      %v6171 = vld [vmem:[%s18 + $0x58] sm:$0xff]
      %v6172 = vld [vmem:[%s18 + $0x60] sm:$0xff]
      %v6173 = vld [vmem:[%s18 + $0x68] sm:$0xff]
      %v6174 = vld [vmem:[%s18 + $0x70] sm:$0xff]
      %v6175 = vld [vmem:[%s18 + $0x78] sm:$0xff]
      %v6176 = vld [vmem:[%s19] sm:$0x1]
      %v6178 = vlaneseq
      %v6179 = vshrl.u32 %v6178, 7
      %v6180 = vsub.s32 0, %v6179
      %v6181 = vrot.slane %v6176, %v6180
      %6183 = vmatprep.subr.mxu0 0.0
      %6184 = vmatpush1.msra.mxu0 %v6160
      %6185 = vmatprep.subr.mxu0 0.0
      %6186 = vmatpush1.msra.mxu0 %v6161
      %6187 = vmatprep.subr.mxu0 0.0
      %6188 = vmatpush1.msra.mxu0 %v6162
      %6189 = vmatprep.subr.mxu0 0.0
      %6190 = vmatpush1.msra.mxu0 %v6163
      %6191 = vmatprep.subr.mxu0 0.0
      %6192 = vmatpush1.msra.mxu0 %v6164
      %6193 = vmatprep.subr.mxu0 0.0
      %6194 = vmatpush1.msra.mxu0 %v6165
      %6195 = vmatprep.subr.mxu0 0.0
      %6196 = vmatpush1.msra.mxu0 %v6166
      %6197 = vmatprep.subr.mxu0 0.0
      %6198 = vmatpush1.msra.mxu0 %v6167
      %6199 = vmatprep.subr.mxu0 0.0
      %6200 = vmatpush1.msra.mxu0 %v6168
      %6201 = vmatprep.subr.mxu0 0.0
      %6202 = vmatpush1.msra.mxu0 %v6169
      %6203 = vmatprep.subr.mxu0 0.0
      %6204 = vmatpush1.msra.mxu0 %v6170
      %6205 = vmatprep.subr.mxu0 0.0
      %6206 = vmatpush1.msra.mxu0 %v6171
      %6207 = vmatprep.subr.mxu0 0.0
      %6208 = vmatpush1.msra.mxu0 %v6172
      %6209 = vmatprep.subr.mxu0 0.0
      %6210 = vmatpush1.msra.mxu0 %v6173
      %6211 = vmatprep.subr.mxu0 0.0
      %6212 = vmatpush1.msra.mxu0 %v6174
      %6213 = vmatprep.subr.mxu0 0.0
      %6214 = vmatpush1.msra.mxu0 %v6175
      %6215 = vmatprep.subr.mxu0 0.0
      %6216 = vmatpush1.msra.mxu0 0.0
      %6217 = vmatprep.subr.mxu0 0.0
      %6218 = vmatpush1.msra.mxu0 0.0
      %6219 = vmatprep.subr.mxu0 0.0
      %6220 = vmatpush1.msra.mxu0 0.0
      %6221 = vmatprep.subr.mxu0 0.0
      %6222 = vmatpush1.msra.mxu0 0.0
      %6223 = vmatprep.subr.mxu0 0.0
      %6224 = vmatpush1.msra.mxu0 0.0
      %6225 = vmatprep.subr.mxu0 0.0
      %6226 = vmatpush1.msra.mxu0 0.0
      %6227 = vmatprep.subr.mxu0 0.0
      %6228 = vmatpush1.msra.mxu0 0.0
      %6229 = vmatprep.subr.mxu0 0.0
      %6230 = vmatpush1.msra.mxu0 0.0
      %6231 = vmatprep.subr.mxu0 0.0
      %6232 = vmatpush1.msra.mxu0 0.0
      %6233 = vmatprep.subr.mxu0 0.0
      %6234 = vmatpush1.msra.mxu0 0.0
      %6235 = vmatprep.subr.mxu0 0.0
      %6236 = vmatpush1.msra.mxu0 0.0
      %6237 = vmatprep.subr.mxu0 0.0
      %6238 = vmatpush1.msra.mxu0 0.0
      %6239 = vmatprep.subr.mxu0 0.0
      %6240 = vmatpush1.msra.mxu0 0.0
      %6241 = vmatprep.subr.mxu0 0.0
      %6242 = vmatpush1.msra.mxu0 0.0
      %6243 = vmatprep.subr.mxu0 0.0
      %6244 = vmatpush1.msra.mxu0 0.0
      %6245 = vmatprep.subr.mxu0 0.0
      %6246 = vmatpush1.msra.mxu0 0.0
      %6247 = vmatprep.mubr.f32.mxu0 0.0
      %6248 = vmatmul.mubr.f32.gmra.mrb[0].mxu0 %v6158
      %v6249 = vpop.f32.mrb[0].mxu0
      %v6250 = vadd.f32 %v6181, %v6249
      %v6251 = vpop.f32.mrb[0].mxu0
      %6252 = vmatprep.mubr.f32.mxu0 0.0
      %6253 = vmatmul.mubr.f32.gmra.mrb[0].mxu0 %v6159
      %v6254 = vpop.f32.mrb[0].mxu0
      %v6255 = vadd.f32 %v6181, %v6254
      %v6256 = vpop.f32.mrb[0].mxu0
      %6257 = vdwg.mxu0
      %v6260 = vcombine.high %v6250, %v6250
      %v6262 = vunpack.c.l.s4 1966171168
      %v6263 = vunpack.c.0.s8 %v6262
      %v6264 = vlaneseq
      %v6265 = vshrl.u32 %v6264, 7
      %v6266 = vsub.s32 %v6263, %v6265
      %v6267 = vrot.slane %v6250, %v6266
      %v6269 = vunpack.c.l.s4 1966171168
      %v6270 = vunpack.c.0.s8 %v6269
      %v6271 = vlaneseq
      %v6272 = vshrl.u32 %v6271, 7
      %v6273 = vsub.s32 %v6270, %v6272
      %v6274 = vrot.slane %v6260, %v6273
      %v6275 = vcombine.high %v6267, %v6267
      %v6276 = vcombine.high %v6274, %v6274
      %v6278 = vunpack.c.l.s4 1966171168
      %v6279 = vunpack.c.0.s8 %v6278
      %v6280 = vlaneseq
      %v6281 = vshrl.u32 %v6280, 7
      %v6282 = vsub.s32 %v6279, %v6281
      %v6283 = vrot.slane %v6267, %v6282
      %v6285 = vunpack.c.l.s4 1966171168
      %v6286 = vunpack.c.0.s8 %v6285
      %v6287 = vlaneseq
      %v6288 = vshrl.u32 %v6287, 7
      %v6289 = vsub.s32 %v6286, %v6288
      %v6290 = vrot.slane %v6274, %v6289
      %v6292 = vunpack.c.l.s4 1966171168
      %v6293 = vunpack.c.0.s8 %v6292
      %v6294 = vlaneseq
      %v6295 = vshrl.u32 %v6294, 7
      %v6296 = vsub.s32 %v6293, %v6295
      %v6297 = vrot.slane %v6275, %v6296
      %v6299 = vunpack.c.l.s4 1966171168
      %v6300 = vunpack.c.0.s8 %v6299
      %v6301 = vlaneseq
      %v6302 = vshrl.u32 %v6301, 7
      %v6303 = vsub.s32 %v6300, %v6302
      %v6304 = vrot.slane %v6276, %v6303
      %v6305 = vcombine.high %v6283, %v6283
      %v6306 = vcombine.high %v6290, %v6290
      %v6307 = vcombine.high %v6297, %v6297
      %v6308 = vcombine.high %v6304, %v6304
      %v6309 = vcombine.high %v6255, %v6255
      %v6311 = vunpack.c.l.s4 1966171168
      %v6312 = vunpack.c.0.s8 %v6311
      %v6313 = vlaneseq
      %v6314 = vshrl.u32 %v6313, 7
      %v6315 = vsub.s32 %v6312, %v6314
      %v6316 = vrot.slane %v6255, %v6315
      %v6318 = vunpack.c.l.s4 1966171168
      %v6319 = vunpack.c.0.s8 %v6318
      %v6320 = vlaneseq
      %v6321 = vshrl.u32 %v6320, 7
      %v6322 = vsub.s32 %v6319, %v6321
      %v6323 = vrot.slane %v6309, %v6322
      %v6324 = vcombine.high %v6316, %v6316
      %v6325 = vcombine.high %v6323, %v6323
      %v6327 = vunpack.c.l.s4 1966171168
      %v6328 = vunpack.c.0.s8 %v6327
      %v6329 = vlaneseq
      %v6330 = vshrl.u32 %v6329, 7
      %v6331 = vsub.s32 %v6328, %v6330
      %v6332 = vrot.slane %v6316, %v6331
      %v6334 = vunpack.c.l.s4 1966171168
      %v6335 = vunpack.c.0.s8 %v6334
      %v6336 = vlaneseq
      %v6337 = vshrl.u32 %v6336, 7
      %v6338 = vsub.s32 %v6335, %v6337
      %v6339 = vrot.slane %v6323, %v6338
      %v6341 = vunpack.c.l.s4 1966171168
      %v6342 = vunpack.c.0.s8 %v6341
      %v6343 = vlaneseq
      %v6344 = vshrl.u32 %v6343, 7
      %v6345 = vsub.s32 %v6342, %v6344
      %v6346 = vrot.slane %v6324, %v6345
      %v6348 = vunpack.c.l.s4 1966171168
      %v6349 = vunpack.c.0.s8 %v6348
      %v6350 = vlaneseq
      %v6351 = vshrl.u32 %v6350, 7
      %v6352 = vsub.s32 %v6349, %v6351
      %v6353 = vrot.slane %v6325, %v6352
      %v6354 = vcombine.high %v6332, %v6332
      %v6355 = vcombine.high %v6339, %v6339
      %v6356 = vcombine.high %v6346, %v6346
      %v6372 = vadd.f32 %v5286, %v6283
      %v6373 = vadd.f32 %v5287, %v6297
      %v6374 = vadd.f32 %v5288, %v6305
      %v6375 = vadd.f32 %v5289, %v6307
      %v6376 = vadd.f32 %v5290, %v6290
      %v6377 = vadd.f32 %v5291, %v6304
      %v6378 = vadd.f32 %v5292, %v6306
      %v6379 = vadd.f32 %v5293, %v6308
      %v6380 = vadd.f32 %v5294, %v6332
      %v6381 = vadd.f32 %v5295, %v6346
      %v6382 = vadd.f32 %v5296, %v6354
      %v6383 = vadd.f32 %v5297, %v6356
      %v6384 = vadd.f32 %v5298, %v6339
      %v6385 = vadd.f32 %v5299, %v6353
      %v6386 = vadd.f32 %v5300, %v6355
      %s6387 = scalar_lea.vmem %s4, 1
      %v6388 = vld [vmem:[%s6387] sm:$0x1]
      %s6389 = scalar_lea.vmem %s5, 1
      %v6390 = vld [vmem:[%s6389] sm:$0x1]
      %v6406 = vcombine.low %v6372, %v6373
      %v6407 = vcombine.low %v6374, %v6375
      %v6408 = vcombine.low %v6376, %v6377
      %v6409 = vcombine.low %v6378, %v6379
      %v6411 = vunpack.c.l.s4 1966171168
      %v6412 = vunpack.c.0.s8 %v6411
      %v6413 = vlaneseq
      %v6414 = vshrl.u32 %v6413, 7
      %v6415 = vsub.s32 %v6412, %v6414
      %v6416 = vrot.slane %v6406, %v6415
      %v6418 = vunpack.c.l.s4 1966171168
      %v6419 = vunpack.c.0.s8 %v6418
      %v6420 = vlaneseq
      %v6421 = vshrl.u32 %v6420, 7
      %v6422 = vsub.s32 %v6419, %v6421
      %v6423 = vrot.slane %v6407, %v6422
      %v6425 = vunpack.c.l.s4 1966171168
      %v6426 = vunpack.c.0.s8 %v6425
      %v6427 = vlaneseq
      %v6428 = vshrl.u32 %v6427, 7
      %v6429 = vsub.s32 %v6426, %v6428
      %v6430 = vrot.slane %v6408, %v6429
      %v6432 = vunpack.c.l.s4 1966171168
      %v6433 = vunpack.c.0.s8 %v6432
      %v6434 = vlaneseq
      %v6435 = vshrl.u32 %v6434, 7
      %v6436 = vsub.s32 %v6433, %v6435
      %v6437 = vrot.slane %v6409, %v6436
      %v6438 = vcombine.low %v6416, %v6423
      %v6439 = vcombine.low %v6430, %v6437
      %v6441 = vunpack.c.l.s4 1966171168
      %v6442 = vunpack.c.0.s8 %v6441
      %v6443 = vlaneseq
      %v6444 = vshrl.u32 %v6443, 7
      %v6445 = vsub.s32 %v6442, %v6444
      %v6446 = vrot.slane %v6438, %v6445
      %v6448 = vunpack.c.l.s4 1966171168
      %v6449 = vunpack.c.0.s8 %v6448
      %v6450 = vlaneseq
      %v6451 = vshrl.u32 %v6450, 7
      %v6452 = vsub.s32 %v6449, %v6451
      %v6453 = vrot.slane %v6439, %v6452
      %v6454 = vcombine.low %v6446, %v6453
      %v6455 = vcombine.low %v6380, %v6381
      %v6456 = vcombine.low %v6382, %v6383
      %v6457 = vcombine.low %v6384, %v6385
      %v6459 = vunpack.c.l.s4 1966171168
      %v6460 = vunpack.c.0.s8 %v6459
      %v6461 = vlaneseq
      %v6462 = vshrl.u32 %v6461, 7
      %v6463 = vsub.s32 %v6460, %v6462
      %v6464 = vrot.slane %v6455, %v6463
      %v6466 = vunpack.c.l.s4 1966171168
      %v6467 = vunpack.c.0.s8 %v6466
      %v6468 = vlaneseq
      %v6469 = vshrl.u32 %v6468, 7
      %v6470 = vsub.s32 %v6467, %v6469
      %v6471 = vrot.slane %v6456, %v6470
      %v6473 = vunpack.c.l.s4 1966171168
      %v6474 = vunpack.c.0.s8 %v6473
      %v6475 = vlaneseq
      %v6476 = vshrl.u32 %v6475, 7
      %v6477 = vsub.s32 %v6474, %v6476
      %v6478 = vrot.slane %v6457, %v6477
      %v6480 = vunpack.c.l.s4 1966171168
      %v6481 = vunpack.c.0.s8 %v6480
      %v6482 = vlaneseq
      %v6483 = vshrl.u32 %v6482, 7
      %v6484 = vsub.s32 %v6481, %v6483
      %v6485 = vrot.slane %v6386, %v6484
      %v6486 = vcombine.low %v6464, %v6471
      %v6487 = vcombine.low %v6478, %v6485
      %v6489 = vunpack.c.l.s4 1966171168
      %v6490 = vunpack.c.0.s8 %v6489
      %v6491 = vlaneseq
      %v6492 = vshrl.u32 %v6491, 7
      %v6493 = vsub.s32 %v6490, %v6492
      %v6494 = vrot.slane %v6486, %v6493
      %v6496 = vunpack.c.l.s4 1966171168
      %v6497 = vunpack.c.0.s8 %v6496
      %v6498 = vlaneseq
      %v6499 = vshrl.u32 %v6498, 7
      %v6500 = vsub.s32 %v6497, %v6499
      %v6501 = vrot.slane %v6487, %v6500
      %v6502 = vcombine.low %v6494, %v6501
      %v6505 = vsel %vm1326, %v6454, 0.0
      %6506 = vadd.xlane.f32.xlu0 %v6505
      %v6507 = vpop.xlane.xlu0 %6506
      %v6508 = vsel %vm1330, %v6502, 0.0
      %6509 = vadd.xlane.f32.xlu0 %v6508
      %v6510 = vpop.xlane.xlu0 %6509
      %v6511 = vmul.f32 %v6507, %v1334
      %v6512 = vmul.f32 %v6510, %v1334
      %v6515 = vlaneseq
      %v6516 = vshrl.u32 %v6515, 7
      %v6517 = vsub.s32 0, %v6516
      %v6518 = vrot.slane %v6511, %v6517
      %v6519 = vlaneseq
      %v6520 = vshrl.u32 %v6519, 7
      %v6521 = vsub.s32 1, %v6520
      %v6522 = vrot.slane %v6511, %v6521
      %v6523 = vlaneseq
      %v6524 = vshrl.u32 %v6523, 7
      %v6525 = vsub.s32 2, %v6524
      %v6526 = vrot.slane %v6511, %v6525
      %v6527 = vlaneseq
      %v6528 = vshrl.u32 %v6527, 7
      %v6529 = vsub.s32 3, %v6528
      %v6530 = vrot.slane %v6511, %v6529
      %v6531 = vlaneseq
      %v6532 = vshrl.u32 %v6531, 7
      %v6533 = vsub.s32 4, %v6532
      %v6534 = vrot.slane %v6511, %v6533
      %v6535 = vlaneseq
      %v6536 = vshrl.u32 %v6535, 7
      %v6537 = vsub.s32 5, %v6536
      %v6538 = vrot.slane %v6511, %v6537
      %v6539 = vlaneseq
      %v6540 = vshrl.u32 %v6539, 7
      %v6541 = vsub.s32 6, %v6540
      %v6542 = vrot.slane %v6511, %v6541
      %v6543 = vlaneseq
      %v6544 = vshrl.u32 %v6543, 7
      %v6545 = vsub.s32 7, %v6544
      %v6546 = vrot.slane %v6511, %v6545
      %v6547 = vlaneseq
      %v6548 = vshrl.u32 %v6547, 7
      %v6549 = vsub.s32 0, %v6548
      %v6550 = vrot.slane %v6512, %v6549
      %v6551 = vlaneseq
      %v6552 = vshrl.u32 %v6551, 7
      %v6553 = vsub.s32 1, %v6552
      %v6554 = vrot.slane %v6512, %v6553
      %v6555 = vlaneseq
      %v6556 = vshrl.u32 %v6555, 7
      %v6557 = vsub.s32 2, %v6556
      %v6558 = vrot.slane %v6512, %v6557
      %v6559 = vlaneseq
      %v6560 = vshrl.u32 %v6559, 7
      %v6561 = vsub.s32 3, %v6560
      %v6562 = vrot.slane %v6512, %v6561
      %v6563 = vlaneseq
      %v6564 = vshrl.u32 %v6563, 7
      %v6565 = vsub.s32 4, %v6564
      %v6566 = vrot.slane %v6512, %v6565
      %v6567 = vlaneseq
      %v6568 = vshrl.u32 %v6567, 7
      %v6569 = vsub.s32 5, %v6568
      %v6570 = vrot.slane %v6512, %v6569
      %v6571 = vlaneseq
      %v6572 = vshrl.u32 %v6571, 7
      %v6573 = vsub.s32 6, %v6572
      %v6574 = vrot.slane %v6512, %v6573
      %v6590 = vsub.f32 %v6372, %v6518
      %v6591 = vsub.f32 %v6373, %v6522
      %v6592 = vsub.f32 %v6374, %v6526
      %v6593 = vsub.f32 %v6375, %v6530
      %v6594 = vsub.f32 %v6376, %v6534
      %v6595 = vsub.f32 %v6377, %v6538
      %v6596 = vsub.f32 %v6378, %v6542
      %v6597 = vsub.f32 %v6379, %v6546
      %v6598 = vsub.f32 %v6380, %v6550
      %v6599 = vsub.f32 %v6381, %v6554
      %v6600 = vsub.f32 %v6382, %v6558
      %v6601 = vsub.f32 %v6383, %v6562
      %v6602 = vsub.f32 %v6384, %v6566
      %v6603 = vsub.f32 %v6385, %v6570
      %v6604 = vsub.f32 %v6386, %v6574
      %v6605 = vmul.f32 %v6590, %v6590
      %v6606 = vmul.f32 %v6591, %v6591
      %v6607 = vmul.f32 %v6592, %v6592
      %v6608 = vmul.f32 %v6593, %v6593
      %v6609 = vmul.f32 %v6594, %v6594
      %v6610 = vmul.f32 %v6595, %v6595
      %v6611 = vmul.f32 %v6596, %v6596
      %v6612 = vmul.f32 %v6597, %v6597
      %v6613 = vmul.f32 %v6598, %v6598
      %v6614 = vmul.f32 %v6599, %v6599
      %v6615 = vmul.f32 %v6600, %v6600
      %v6616 = vmul.f32 %v6601, %v6601
      %v6617 = vmul.f32 %v6602, %v6602
      %v6618 = vmul.f32 %v6603, %v6603
      %v6619 = vmul.f32 %v6604, %v6604
      %v6635 = vcombine.low %v6605, %v6606
      %v6636 = vcombine.low %v6607, %v6608
      %v6637 = vcombine.low %v6609, %v6610
      %v6638 = vcombine.low %v6611, %v6612
      %v6640 = vunpack.c.l.s4 1966171168
      %v6641 = vunpack.c.0.s8 %v6640
      %v6642 = vlaneseq
      %v6643 = vshrl.u32 %v6642, 7
      %v6644 = vsub.s32 %v6641, %v6643
      %v6645 = vrot.slane %v6635, %v6644
      %v6647 = vunpack.c.l.s4 1966171168
      %v6648 = vunpack.c.0.s8 %v6647
      %v6649 = vlaneseq
      %v6650 = vshrl.u32 %v6649, 7
      %v6651 = vsub.s32 %v6648, %v6650
      %v6652 = vrot.slane %v6636, %v6651
      %v6654 = vunpack.c.l.s4 1966171168
      %v6655 = vunpack.c.0.s8 %v6654
      %v6656 = vlaneseq
      %v6657 = vshrl.u32 %v6656, 7
      %v6658 = vsub.s32 %v6655, %v6657
      %v6659 = vrot.slane %v6637, %v6658
      %v6661 = vunpack.c.l.s4 1966171168
      %v6662 = vunpack.c.0.s8 %v6661
      %v6663 = vlaneseq
      %v6664 = vshrl.u32 %v6663, 7
      %v6665 = vsub.s32 %v6662, %v6664
      %v6666 = vrot.slane %v6638, %v6665
      %v6667 = vcombine.low %v6645, %v6652
      %v6668 = vcombine.low %v6659, %v6666
      %v6670 = vunpack.c.l.s4 1966171168
      %v6671 = vunpack.c.0.s8 %v6670
      %v6672 = vlaneseq
      %v6673 = vshrl.u32 %v6672, 7
      %v6674 = vsub.s32 %v6671, %v6673
      %v6675 = vrot.slane %v6667, %v6674
      %v6677 = vunpack.c.l.s4 1966171168
      %v6678 = vunpack.c.0.s8 %v6677
      %v6679 = vlaneseq
      %v6680 = vshrl.u32 %v6679, 7
      %v6681 = vsub.s32 %v6678, %v6680
      %v6682 = vrot.slane %v6668, %v6681
      %v6683 = vcombine.low %v6675, %v6682
      %v6684 = vcombine.low %v6613, %v6614
      %v6685 = vcombine.low %v6615, %v6616
      %v6686 = vcombine.low %v6617, %v6618
      %v6688 = vunpack.c.l.s4 1966171168
      %v6689 = vunpack.c.0.s8 %v6688
      %v6690 = vlaneseq
      %v6691 = vshrl.u32 %v6690, 7
      %v6692 = vsub.s32 %v6689, %v6691
      %v6693 = vrot.slane %v6684, %v6692
      %v6695 = vunpack.c.l.s4 1966171168
      %v6696 = vunpack.c.0.s8 %v6695
      %v6697 = vlaneseq
      %v6698 = vshrl.u32 %v6697, 7
      %v6699 = vsub.s32 %v6696, %v6698
      %v6700 = vrot.slane %v6685, %v6699
      %v6702 = vunpack.c.l.s4 1966171168
      %v6703 = vunpack.c.0.s8 %v6702
      %v6704 = vlaneseq
      %v6705 = vshrl.u32 %v6704, 7
      %v6706 = vsub.s32 %v6703, %v6705
      %v6707 = vrot.slane %v6686, %v6706
      %v6709 = vunpack.c.l.s4 1966171168
      %v6710 = vunpack.c.0.s8 %v6709
      %v6711 = vlaneseq
      %v6712 = vshrl.u32 %v6711, 7
      %v6713 = vsub.s32 %v6710, %v6712
      %v6714 = vrot.slane %v6619, %v6713
      %v6715 = vcombine.low %v6693, %v6700
      %v6716 = vcombine.low %v6707, %v6714
      %v6718 = vunpack.c.l.s4 1966171168
      %v6719 = vunpack.c.0.s8 %v6718
      %v6720 = vlaneseq
      %v6721 = vshrl.u32 %v6720, 7
      %v6722 = vsub.s32 %v6719, %v6721
      %v6723 = vrot.slane %v6715, %v6722
      %v6725 = vunpack.c.l.s4 1966171168
      %v6726 = vunpack.c.0.s8 %v6725
      %v6727 = vlaneseq
      %v6728 = vshrl.u32 %v6727, 7
      %v6729 = vsub.s32 %v6726, %v6728
      %v6730 = vrot.slane %v6716, %v6729
      %v6731 = vcombine.low %v6723, %v6730
      %v6734 = vsel %vm1326, %v6683, 0.0
      %6735 = vadd.xlane.f32.xlu0 %v6734
      %v6736 = vpop.xlane.xlu0 %6735
      %v6737 = vsel %vm1330, %v6731, 0.0
      %6738 = vadd.xlane.f32.xlu0 %v6737
      %v6739 = vpop.xlane.xlu0 %6738
      %v6740 = vmul.f32 %v6736, %v1334
      %v6741 = vmul.f32 %v6739, %v1334
      %v6742 = vadd.f32 %v6740, 1e-06
      %v6743 = vadd.f32 %v6741, 1e-06
      %v6744 = vrsqrt.pop %v6742
      %v6745 = vrsqrt.pop %v6743
      %v6748 = vlaneseq
      %v6749 = vshrl.u32 %v6748, 7
      %v6750 = vsub.s32 0, %v6749
      %v6751 = vrot.slane %v6744, %v6750
      %v6752 = vlaneseq
      %v6753 = vshrl.u32 %v6752, 7
      %v6754 = vsub.s32 1, %v6753
      %v6755 = vrot.slane %v6744, %v6754
      %v6756 = vlaneseq
      %v6757 = vshrl.u32 %v6756, 7
      %v6758 = vsub.s32 2, %v6757
      %v6759 = vrot.slane %v6744, %v6758
      %v6760 = vlaneseq
      %v6761 = vshrl.u32 %v6760, 7
      %v6762 = vsub.s32 3, %v6761
      %v6763 = vrot.slane %v6744, %v6762
      %v6764 = vlaneseq
      %v6765 = vshrl.u32 %v6764, 7
      %v6766 = vsub.s32 4, %v6765
      %v6767 = vrot.slane %v6744, %v6766
      %v6768 = vlaneseq
      %v6769 = vshrl.u32 %v6768, 7
      %v6770 = vsub.s32 5, %v6769
      %v6771 = vrot.slane %v6744, %v6770
      %v6772 = vlaneseq
      %v6773 = vshrl.u32 %v6772, 7
      %v6774 = vsub.s32 6, %v6773
      %v6775 = vrot.slane %v6744, %v6774
      %v6776 = vlaneseq
      %v6777 = vshrl.u32 %v6776, 7
      %v6778 = vsub.s32 7, %v6777
      %v6779 = vrot.slane %v6744, %v6778
      %v6780 = vlaneseq
      %v6781 = vshrl.u32 %v6780, 7
      %v6782 = vsub.s32 0, %v6781
      %v6783 = vrot.slane %v6745, %v6782
      %v6784 = vlaneseq
      %v6785 = vshrl.u32 %v6784, 7
      %v6786 = vsub.s32 1, %v6785
      %v6787 = vrot.slane %v6745, %v6786
      %v6788 = vlaneseq
      %v6789 = vshrl.u32 %v6788, 7
      %v6790 = vsub.s32 2, %v6789
      %v6791 = vrot.slane %v6745, %v6790
      %v6792 = vlaneseq
      %v6793 = vshrl.u32 %v6792, 7
      %v6794 = vsub.s32 3, %v6793
      %v6795 = vrot.slane %v6745, %v6794
      %v6796 = vlaneseq
      %v6797 = vshrl.u32 %v6796, 7
      %v6798 = vsub.s32 4, %v6797
      %v6799 = vrot.slane %v6745, %v6798
      %v6800 = vlaneseq
      %v6801 = vshrl.u32 %v6800, 7
      %v6802 = vsub.s32 5, %v6801
      %v6803 = vrot.slane %v6745, %v6802
      %v6804 = vlaneseq
      %v6805 = vshrl.u32 %v6804, 7
      %v6806 = vsub.s32 6, %v6805
      %v6807 = vrot.slane %v6745, %v6806
      %v6823 = vmul.f32 %v6590, %v6751
      %v6824 = vmul.f32 %v6591, %v6755
      %v6825 = vmul.f32 %v6592, %v6759
      %v6826 = vmul.f32 %v6593, %v6763
      %v6827 = vmul.f32 %v6594, %v6767
      %v6828 = vmul.f32 %v6595, %v6771
      %v6829 = vmul.f32 %v6596, %v6775
      %v6830 = vmul.f32 %v6597, %v6779
      %v6831 = vmul.f32 %v6598, %v6783
      %v6832 = vmul.f32 %v6599, %v6787
      %v6833 = vmul.f32 %v6600, %v6791
      %v6834 = vmul.f32 %v6601, %v6795
      %v6835 = vmul.f32 %v6602, %v6799
      %v6836 = vmul.f32 %v6603, %v6803
      %v6837 = vmul.f32 %v6604, %v6807
      %v6839 = vlaneseq
      %v6840 = vshrl.u32 %v6839, 7
      %v6841 = vsub.s32 0, %v6840
      %v6842 = vrot.slane %v6388, %v6841
      %v6843 = vcombine.high %v6842, %v6842
      %v6845 = vunpack.c.l.s4 1966171168
      %v6846 = vunpack.c.0.s8 %v6845
      %v6847 = vlaneseq
      %v6848 = vshrl.u32 %v6847, 7
      %v6849 = vsub.s32 %v6846, %v6848
      %v6850 = vrot.slane %v6842, %v6849
      %v6852 = vunpack.c.l.s4 1966171168
      %v6853 = vunpack.c.0.s8 %v6852
      %v6854 = vlaneseq
      %v6855 = vshrl.u32 %v6854, 7
      %v6856 = vsub.s32 %v6853, %v6855
      %v6857 = vrot.slane %v6843, %v6856
      %v6858 = vcombine.high %v6850, %v6850
      %v6859 = vcombine.high %v6857, %v6857
      %v6861 = vunpack.c.l.s4 1966171168
      %v6862 = vunpack.c.0.s8 %v6861
      %v6863 = vlaneseq
      %v6864 = vshrl.u32 %v6863, 7
      %v6865 = vsub.s32 %v6862, %v6864
      %v6866 = vrot.slane %v6850, %v6865
      %v6868 = vunpack.c.l.s4 1966171168
      %v6869 = vunpack.c.0.s8 %v6868
      %v6870 = vlaneseq
      %v6871 = vshrl.u32 %v6870, 7
      %v6872 = vsub.s32 %v6869, %v6871
      %v6873 = vrot.slane %v6857, %v6872
      %v6875 = vunpack.c.l.s4 1966171168
      %v6876 = vunpack.c.0.s8 %v6875
      %v6877 = vlaneseq
      %v6878 = vshrl.u32 %v6877, 7
      %v6879 = vsub.s32 %v6876, %v6878
      %v6880 = vrot.slane %v6858, %v6879
      %v6882 = vunpack.c.l.s4 1966171168
      %v6883 = vunpack.c.0.s8 %v6882
      %v6884 = vlaneseq
      %v6885 = vshrl.u32 %v6884, 7
      %v6886 = vsub.s32 %v6883, %v6885
      %v6887 = vrot.slane %v6859, %v6886
      %v6888 = vcombine.high %v6866, %v6866
      %v6889 = vcombine.high %v6873, %v6873
      %v6890 = vcombine.high %v6880, %v6880
      %v6891 = vcombine.high %v6887, %v6887
      %v6900 = vmul.f32 %v6823, %v6866
      %v6901 = vmul.f32 %v6824, %v6880
      %v6902 = vmul.f32 %v6825, %v6888
      %v6903 = vmul.f32 %v6826, %v6890
      %v6904 = vmul.f32 %v6827, %v6873
      %v6905 = vmul.f32 %v6828, %v6887
      %v6906 = vmul.f32 %v6829, %v6889
      %v6907 = vmul.f32 %v6830, %v6891
      %v6908 = vmul.f32 %v6831, %v6866
      %v6909 = vmul.f32 %v6832, %v6880
      %v6910 = vmul.f32 %v6833, %v6888
      %v6911 = vmul.f32 %v6834, %v6890
      %v6912 = vmul.f32 %v6835, %v6873
      %v6913 = vmul.f32 %v6836, %v6887
      %v6914 = vmul.f32 %v6837, %v6889
      %v6916 = vlaneseq
      %v6917 = vshrl.u32 %v6916, 7
      %v6918 = vsub.s32 0, %v6917
      %v6919 = vrot.slane %v6390, %v6918
      %v6920 = vcombine.high %v6919, %v6919
      %v6922 = vunpack.c.l.s4 1966171168
      %v6923 = vunpack.c.0.s8 %v6922
      %v6924 = vlaneseq
      %v6925 = vshrl.u32 %v6924, 7
      %v6926 = vsub.s32 %v6923, %v6925
      %v6927 = vrot.slane %v6919, %v6926
      %v6929 = vunpack.c.l.s4 1966171168
      %v6930 = vunpack.c.0.s8 %v6929
      %v6931 = vlaneseq
      %v6932 = vshrl.u32 %v6931, 7
      %v6933 = vsub.s32 %v6930, %v6932
      %v6934 = vrot.slane %v6920, %v6933
      %v6935 = vcombine.high %v6927, %v6927
      %v6936 = vcombine.high %v6934, %v6934
      %v6938 = vunpack.c.l.s4 1966171168
      %v6939 = vunpack.c.0.s8 %v6938
      %v6940 = vlaneseq
      %v6941 = vshrl.u32 %v6940, 7
      %v6942 = vsub.s32 %v6939, %v6941
      %v6943 = vrot.slane %v6927, %v6942
      %v6945 = vunpack.c.l.s4 1966171168
      %v6946 = vunpack.c.0.s8 %v6945
      %v6947 = vlaneseq
      %v6948 = vshrl.u32 %v6947, 7
      %v6949 = vsub.s32 %v6946, %v6948
      %v6950 = vrot.slane %v6934, %v6949
      %v6952 = vunpack.c.l.s4 1966171168
      %v6953 = vunpack.c.0.s8 %v6952
      %v6954 = vlaneseq
      %v6955 = vshrl.u32 %v6954, 7
      %v6956 = vsub.s32 %v6953, %v6955
      %v6957 = vrot.slane %v6935, %v6956
      %v6959 = vunpack.c.l.s4 1966171168
      %v6960 = vunpack.c.0.s8 %v6959
      %v6961 = vlaneseq
      %v6962 = vshrl.u32 %v6961, 7
      %v6963 = vsub.s32 %v6960, %v6962
      %v6964 = vrot.slane %v6936, %v6963
      %v6965 = vcombine.high %v6943, %v6943
      %v6966 = vcombine.high %v6950, %v6950
      %v6967 = vcombine.high %v6957, %v6957
      %v6968 = vcombine.high %v6964, %v6964
      %v6977 = vadd.f32 %v6900, %v6943
      %v6978 = vadd.f32 %v6901, %v6957
      %v6979 = vadd.f32 %v6902, %v6965
      %v6980 = vadd.f32 %v6903, %v6967
      %v6981 = vadd.f32 %v6904, %v6950
      %v6982 = vadd.f32 %v6905, %v6964
      %v6983 = vadd.f32 %v6906, %v6966
      %v6984 = vadd.f32 %v6907, %v6968
      %v6985 = vadd.f32 %v6908, %v6943
      %v6986 = vadd.f32 %v6909, %v6957
      %v6987 = vadd.f32 %v6910, %v6965
      %v6988 = vadd.f32 %v6911, %v6967
      %v6989 = vadd.f32 %v6912, %v6950
      %v6990 = vadd.f32 %v6913, %v6964
      %v6991 = vadd.f32 %v6914, %v6966
      %s6992 = scalar_lea.vmem %s6, 32
      %v6993 = vld [vmem:[%s6992] sm:$0xff]
      %v6994 = vld [vmem:[%s6992 + $0x8] sm:$0xff]
      %v6995 = vld [vmem:[%s6992 + $0x10] sm:$0xff]
      %v6996 = vld [vmem:[%s6992 + $0x18] sm:$0xff]
      %s6997 = scalar_lea.vmem %s7, 1
      %v6998 = vld [vmem:[%s6997] sm:$0x1]
      %v7000 = vlaneseq
      %v7001 = vshrl.u32 %v7000, 7
      %v7002 = vsub.s32 0, %v7001
      %v7003 = vrot.slane %v6998, %v7002
      %v7020 = vcombine.low %v6977, %v6978
      %v7021 = vcombine.low %v6979, %v6980
      %v7022 = vcombine.low %v6981, %v6982
      %v7023 = vcombine.low %v6983, %v6984
      %v7025 = vunpack.c.l.s4 1966171168
      %v7026 = vunpack.c.0.s8 %v7025
      %v7027 = vlaneseq
      %v7028 = vshrl.u32 %v7027, 7
      %v7029 = vsub.s32 %v7026, %v7028
      %v7030 = vrot.slane %v7020, %v7029
      %v7032 = vunpack.c.l.s4 1966171168
      %v7033 = vunpack.c.0.s8 %v7032
      %v7034 = vlaneseq
      %v7035 = vshrl.u32 %v7034, 7
      %v7036 = vsub.s32 %v7033, %v7035
      %v7037 = vrot.slane %v7021, %v7036
      %v7039 = vunpack.c.l.s4 1966171168
      %v7040 = vunpack.c.0.s8 %v7039
      %v7041 = vlaneseq
      %v7042 = vshrl.u32 %v7041, 7
      %v7043 = vsub.s32 %v7040, %v7042
      %v7044 = vrot.slane %v7022, %v7043
      %v7046 = vunpack.c.l.s4 1966171168
      %v7047 = vunpack.c.0.s8 %v7046
      %v7048 = vlaneseq
      %v7049 = vshrl.u32 %v7048, 7
      %v7050 = vsub.s32 %v7047, %v7049
      %v7051 = vrot.slane %v7023, %v7050
      %v7052 = vcombine.low %v7030, %v7037
      %v7053 = vcombine.low %v7044, %v7051
      %v7055 = vunpack.c.l.s4 1966171168
      %v7056 = vunpack.c.0.s8 %v7055
      %v7057 = vlaneseq
      %v7058 = vshrl.u32 %v7057, 7
      %v7059 = vsub.s32 %v7056, %v7058
      %v7060 = vrot.slane %v7052, %v7059
      %v7062 = vunpack.c.l.s4 1966171168
      %v7063 = vunpack.c.0.s8 %v7062
      %v7064 = vlaneseq
      %v7065 = vshrl.u32 %v7064, 7
      %v7066 = vsub.s32 %v7063, %v7065
      %v7067 = vrot.slane %v7053, %v7066
      %v7068 = vcombine.low %v7060, %v7067
      %v7069 = vcombine.low %v6985, %v6986
      %v7070 = vcombine.low %v6987, %v6988
      %v7071 = vcombine.low %v6989, %v6990
      %v7073 = vunpack.c.l.s4 1966171168
      %v7074 = vunpack.c.0.s8 %v7073
      %v7075 = vlaneseq
      %v7076 = vshrl.u32 %v7075, 7
      %v7077 = vsub.s32 %v7074, %v7076
      %v7078 = vrot.slane %v7069, %v7077
      %v7080 = vunpack.c.l.s4 1966171168
      %v7081 = vunpack.c.0.s8 %v7080
      %v7082 = vlaneseq
      %v7083 = vshrl.u32 %v7082, 7
      %v7084 = vsub.s32 %v7081, %v7083
      %v7085 = vrot.slane %v7070, %v7084
      %v7087 = vunpack.c.l.s4 1966171168
      %v7088 = vunpack.c.0.s8 %v7087
      %v7089 = vlaneseq
      %v7090 = vshrl.u32 %v7089, 7
      %v7091 = vsub.s32 %v7088, %v7090
      %v7092 = vrot.slane %v7071, %v7091
      %v7094 = vunpack.c.l.s4 1966171168
      %v7095 = vunpack.c.0.s8 %v7094
      %v7096 = vlaneseq
      %v7097 = vshrl.u32 %v7096, 7
      %v7098 = vsub.s32 %v7095, %v7097
      %v7099 = vrot.slane %v6991, %v7098
      %v7100 = vcombine.low %v7078, %v7085
      %v7101 = vcombine.low %v7092, %v7099
      %v7103 = vunpack.c.l.s4 1966171168
      %v7104 = vunpack.c.0.s8 %v7103
      %v7105 = vlaneseq
      %v7106 = vshrl.u32 %v7105, 7
      %v7107 = vsub.s32 %v7104, %v7106
      %v7108 = vrot.slane %v7100, %v7107
      %v7110 = vunpack.c.l.s4 1966171168
      %v7111 = vunpack.c.0.s8 %v7110
      %v7112 = vlaneseq
      %v7113 = vshrl.u32 %v7112, 7
      %v7114 = vsub.s32 %v7111, %v7113
      %v7115 = vrot.slane %v7101, %v7114
      %v7116 = vcombine.low %v7108, %v7115
      %v7117 = vsel %vm1326, %v7068, 0
      %v7119 = vsel %vm1326, %v7116, 0
      %7121 = vmatprep.subr.mxu0 0.0
      %7122 = vmatpush1.msra.mxu0 %v6993
      %7123 = vmatprep.subr.mxu0 0.0
      %7124 = vmatpush1.msra.mxu0 %v6994
      %7125 = vmatprep.subr.mxu0 0.0
      %7126 = vmatpush1.msra.mxu0 %v6995
      %7127 = vmatprep.subr.mxu0 0.0
      %7128 = vmatpush1.msra.mxu0 %v6996
      %7129 = vmatprep.subr.mxu0 0.0
      %7130 = vmatpush1.msra.mxu0 0.0
      %7131 = vmatprep.subr.mxu0 0.0
      %7132 = vmatpush1.msra.mxu0 0.0
      %7133 = vmatprep.subr.mxu0 0.0
      %7134 = vmatpush1.msra.mxu0 0.0
      %7135 = vmatprep.subr.mxu0 0.0
      %7136 = vmatpush1.msra.mxu0 0.0
      %7137 = vmatprep.subr.mxu0 0.0
      %7138 = vmatpush1.msra.mxu0 0.0
      %7139 = vmatprep.subr.mxu0 0.0
      %7140 = vmatpush1.msra.mxu0 0.0
      %7141 = vmatprep.subr.mxu0 0.0
      %7142 = vmatpush1.msra.mxu0 0.0
      %7143 = vmatprep.subr.mxu0 0.0
      %7144 = vmatpush1.msra.mxu0 0.0
      %7145 = vmatprep.subr.mxu0 0.0
      %7146 = vmatpush1.msra.mxu0 0.0
      %7147 = vmatprep.subr.mxu0 0.0
      %7148 = vmatpush1.msra.mxu0 0.0
      %7149 = vmatprep.subr.mxu0 0.0
      %7150 = vmatpush1.msra.mxu0 0.0
      %7151 = vmatprep.subr.mxu0 0.0
      %7152 = vmatpush1.msra.mxu0 0.0
      %7153 = vmatprep.subr.mxu0 0.0
      %7154 = vmatpush1.msra.mxu0 0.0
      %7155 = vmatprep.subr.mxu0 0.0
      %7156 = vmatpush1.msra.mxu0 0.0
      %7157 = vmatprep.subr.mxu0 0.0
      %7158 = vmatpush1.msra.mxu0 0.0
      %7159 = vmatprep.subr.mxu0 0.0
      %7160 = vmatpush1.msra.mxu0 0.0
      %7161 = vmatprep.subr.mxu0 0.0
      %7162 = vmatpush1.msra.mxu0 0.0
      %7163 = vmatprep.subr.mxu0 0.0
      %7164 = vmatpush1.msra.mxu0 0.0
      %7165 = vmatprep.subr.mxu0 0.0
      %7166 = vmatpush1.msra.mxu0 0.0
      %7167 = vmatprep.subr.mxu0 0.0
      %7168 = vmatpush1.msra.mxu0 0.0
      %7169 = vmatprep.subr.mxu0 0.0
      %7170 = vmatpush1.msra.mxu0 0.0
      %7171 = vmatprep.subr.mxu0 0.0
      %7172 = vmatpush1.msra.mxu0 0.0
      %7173 = vmatprep.subr.mxu0 0.0
      %7174 = vmatpush1.msra.mxu0 0.0
      %7175 = vmatprep.subr.mxu0 0.0
      %7176 = vmatpush1.msra.mxu0 0.0
      %7177 = vmatprep.subr.mxu0 0.0
      %7178 = vmatpush1.msra.mxu0 0.0
      %7179 = vmatprep.subr.mxu0 0.0
      %7180 = vmatpush1.msra.mxu0 0.0
      %7181 = vmatprep.subr.mxu0 0.0
      %7182 = vmatpush1.msra.mxu0 0.0
      %7183 = vmatprep.subr.mxu0 0.0
      %7184 = vmatpush1.msra.mxu0 0.0
      %7185 = vmatprep.mubr.f32.mxu0 0.0
      %7186 = vmatmul.mubr.f32.gmra.mrb[0].mxu0 %v7117
      %v7187 = vpop.f32.mrb[0].mxu0
      %v7188 = vadd.f32 %v7003, %v7187
      %v7189 = vpop.f32.mrb[0].mxu0
      %7190 = vmatprep.mubr.f32.mxu0 0.0
      %7191 = vmatmul.mubr.f32.gmra.mrb[0].mxu0 %v7119
      %v7192 = vpop.f32.mrb[0].mxu0
      %v7193 = vadd.f32 %v7003, %v7192
      %v7194 = vpop.f32.mrb[0].mxu0
      %7195 = vdwg.mxu0
      %v7196 = vmul.f32 %v7188, 0.35355338
      %v7197 = vmul.f32 %v7193, 0.35355338
      %s7198 = scalar_lea.vmem %s8, 32
      %v7199 = vld [vmem:[%s7198] sm:$0xff]
      %v7200 = vld [vmem:[%s7198 + $0x8] sm:$0xff]
      %v7201 = vld [vmem:[%s7198 + $0x10] sm:$0xff]
      %v7202 = vld [vmem:[%s7198 + $0x18] sm:$0xff]
      %s7203 = scalar_lea.vmem %s9, 1
      %v7204 = vld [vmem:[%s7203] sm:$0x1]
      %v7206 = vlaneseq
      %v7207 = vshrl.u32 %v7206, 7
      %v7208 = vsub.s32 0, %v7207
      %v7209 = vrot.slane %v7204, %v7208
      %7211 = vmatprep.subr.mxu0 0.0
      %7212 = vmatpush1.msra.mxu0 %v7199
      %7213 = vmatprep.subr.mxu0 0.0
      %7214 = vmatpush1.msra.mxu0 %v7200
      %7215 = vmatprep.subr.mxu0 0.0
      %7216 = vmatpush1.msra.mxu0 %v7201
      %7217 = vmatprep.subr.mxu0 0.0
      %7218 = vmatpush1.msra.mxu0 %v7202
      %7219 = vmatprep.subr.mxu0 0.0
      %7220 = vmatpush1.msra.mxu0 0.0
      %7221 = vmatprep.subr.mxu0 0.0
      %7222 = vmatpush1.msra.mxu0 0.0
      %7223 = vmatprep.subr.mxu0 0.0
      %7224 = vmatpush1.msra.mxu0 0.0
      %7225 = vmatprep.subr.mxu0 0.0
      %7226 = vmatpush1.msra.mxu0 0.0
      %7227 = vmatprep.subr.mxu0 0.0
      %7228 = vmatpush1.msra.mxu0 0.0
      %7229 = vmatprep.subr.mxu0 0.0
      %7230 = vmatpush1.msra.mxu0 0.0
      %7231 = vmatprep.subr.mxu0 0.0
      %7232 = vmatpush1.msra.mxu0 0.0
      %7233 = vmatprep.subr.mxu0 0.0
      %7234 = vmatpush1.msra.mxu0 0.0
      %7235 = vmatprep.subr.mxu0 0.0
      %7236 = vmatpush1.msra.mxu0 0.0
      %7237 = vmatprep.subr.mxu0 0.0
      %7238 = vmatpush1.msra.mxu0 0.0
      %7239 = vmatprep.subr.mxu0 0.0
      %7240 = vmatpush1.msra.mxu0 0.0
      %7241 = vmatprep.subr.mxu0 0.0
      %7242 = vmatpush1.msra.mxu0 0.0
      %7243 = vmatprep.subr.mxu0 0.0
      %7244 = vmatpush1.msra.mxu0 0.0
      %7245 = vmatprep.subr.mxu0 0.0
      %7246 = vmatpush1.msra.mxu0 0.0
      %7247 = vmatprep.subr.mxu0 0.0
      %7248 = vmatpush1.msra.mxu0 0.0
      %7249 = vmatprep.subr.mxu0 0.0
      %7250 = vmatpush1.msra.mxu0 0.0
      %7251 = vmatprep.subr.mxu0 0.0
      %7252 = vmatpush1.msra.mxu0 0.0
      %7253 = vmatprep.subr.mxu0 0.0
      %7254 = vmatpush1.msra.mxu0 0.0
      %7255 = vmatprep.subr.mxu0 0.0
      %7256 = vmatpush1.msra.mxu0 0.0
      %7257 = vmatprep.subr.mxu0 0.0
      %7258 = vmatpush1.msra.mxu0 0.0
      %7259 = vmatprep.subr.mxu0 0.0
      %7260 = vmatpush1.msra.mxu0 0.0
      %7261 = vmatprep.subr.mxu0 0.0
      %7262 = vmatpush1.msra.mxu0 0.0
      %7263 = vmatprep.subr.mxu0 0.0
      %7264 = vmatpush1.msra.mxu0 0.0
      %7265 = vmatprep.subr.mxu0 0.0
      %7266 = vmatpush1.msra.mxu0 0.0
      %7267 = vmatprep.subr.mxu0 0.0
      %7268 = vmatpush1.msra.mxu0 0.0
      %7269 = vmatprep.subr.mxu0 0.0
      %7270 = vmatpush1.msra.mxu0 0.0
      %7271 = vmatprep.subr.mxu0 0.0
      %7272 = vmatpush1.msra.mxu0 0.0
      %7273 = vmatprep.subr.mxu0 0.0
      %7274 = vmatpush1.msra.mxu0 0.0
      %7275 = vmatprep.mubr.f32.mxu0 0.0
      %7276 = vmatmul.mubr.f32.gmra.mrb[0].mxu0 %v7117
      %v7277 = vpop.f32.mrb[0].mxu0
      %v7278 = vadd.f32 %v7209, %v7277
      %v7279 = vpop.f32.mrb[0].mxu0
      %7280 = vmatprep.mubr.f32.mxu0 0.0
      %7281 = vmatmul.mubr.f32.gmra.mrb[0].mxu0 %v7119
      %v7282 = vpop.f32.mrb[0].mxu0
      %v7283 = vadd.f32 %v7209, %v7282
      %v7284 = vpop.f32.mrb[0].mxu0
      %7285 = vdwg.mxu0
      %s7286 = scalar_lea.vmem %s10, 32
      %v7287 = vld [vmem:[%s7286] sm:$0xff]
      %v7288 = vld [vmem:[%s7286 + $0x8] sm:$0xff]
      %v7289 = vld [vmem:[%s7286 + $0x10] sm:$0xff]
      %v7290 = vld [vmem:[%s7286 + $0x18] sm:$0xff]
      %s7291 = scalar_lea.vmem %s11, 1
      %v7292 = vld [vmem:[%s7291] sm:$0x1]
      %v7294 = vlaneseq
      %v7295 = vshrl.u32 %v7294, 7
      %v7296 = vsub.s32 0, %v7295
      %v7297 = vrot.slane %v7292, %v7296
      %7299 = vmatprep.subr.mxu0 0.0
      %7300 = vmatpush1.msra.mxu0 %v7287
      %7301 = vmatprep.subr.mxu0 0.0
      %7302 = vmatpush1.msra.mxu0 %v7288
      %7303 = vmatprep.subr.mxu0 0.0
      %7304 = vmatpush1.msra.mxu0 %v7289
      %7305 = vmatprep.subr.mxu0 0.0
      %7306 = vmatpush1.msra.mxu0 %v7290
      %7307 = vmatprep.subr.mxu0 0.0
      %7308 = vmatpush1.msra.mxu0 0.0
      %7309 = vmatprep.subr.mxu0 0.0
      %7310 = vmatpush1.msra.mxu0 0.0
      %7311 = vmatprep.subr.mxu0 0.0
      %7312 = vmatpush1.msra.mxu0 0.0
      %7313 = vmatprep.subr.mxu0 0.0
      %7314 = vmatpush1.msra.mxu0 0.0
      %7315 = vmatprep.subr.mxu0 0.0
      %7316 = vmatpush1.msra.mxu0 0.0
      %7317 = vmatprep.subr.mxu0 0.0
      %7318 = vmatpush1.msra.mxu0 0.0
      %7319 = vmatprep.subr.mxu0 0.0
      %7320 = vmatpush1.msra.mxu0 0.0
      %7321 = vmatprep.subr.mxu0 0.0
      %7322 = vmatpush1.msra.mxu0 0.0
      %7323 = vmatprep.subr.mxu0 0.0
      %7324 = vmatpush1.msra.mxu0 0.0
      %7325 = vmatprep.subr.mxu0 0.0
      %7326 = vmatpush1.msra.mxu0 0.0
      %7327 = vmatprep.subr.mxu0 0.0
      %7328 = vmatpush1.msra.mxu0 0.0
      %7329 = vmatprep.subr.mxu0 0.0
      %7330 = vmatpush1.msra.mxu0 0.0
      %7331 = vmatprep.subr.mxu0 0.0
      %7332 = vmatpush1.msra.mxu0 0.0
      %7333 = vmatprep.subr.mxu0 0.0
      %7334 = vmatpush1.msra.mxu0 0.0
      %7335 = vmatprep.subr.mxu0 0.0
      %7336 = vmatpush1.msra.mxu0 0.0
      %7337 = vmatprep.subr.mxu0 0.0
      %7338 = vmatpush1.msra.mxu0 0.0
      %7339 = vmatprep.subr.mxu0 0.0
      %7340 = vmatpush1.msra.mxu0 0.0
      %7341 = vmatprep.subr.mxu0 0.0
      %7342 = vmatpush1.msra.mxu0 0.0
      %7343 = vmatprep.subr.mxu0 0.0
      %7344 = vmatpush1.msra.mxu0 0.0
      %7345 = vmatprep.subr.mxu0 0.0
      %7346 = vmatpush1.msra.mxu0 0.0
      %7347 = vmatprep.subr.mxu0 0.0
      %7348 = vmatpush1.msra.mxu0 0.0
      %7349 = vmatprep.subr.mxu0 0.0
      %7350 = vmatpush1.msra.mxu0 0.0
      %7351 = vmatprep.subr.mxu0 0.0
      %7352 = vmatpush1.msra.mxu0 0.0
      %7353 = vmatprep.subr.mxu0 0.0
      %7354 = vmatpush1.msra.mxu0 0.0
      %7355 = vmatprep.subr.mxu0 0.0
      %7356 = vmatpush1.msra.mxu0 0.0
      %7357 = vmatprep.subr.mxu0 0.0
      %7358 = vmatpush1.msra.mxu0 0.0
      %7359 = vmatprep.subr.mxu0 0.0
      %7360 = vmatpush1.msra.mxu0 0.0
      %7361 = vmatprep.subr.mxu0 0.0
      %7362 = vmatpush1.msra.mxu0 0.0
      %7363 = vmatprep.mubr.f32.mxu0 0.0
      %7364 = vmatmul.mubr.f32.gmra.mrb[0].mxu0 %v7117
      %v7365 = vpop.f32.mrb[0].mxu0
      %v7366 = vadd.f32 %v7297, %v7365
      %v7367 = vpop.f32.mrb[0].mxu0
      %7368 = vmatprep.mubr.f32.mxu0 0.0
      %7369 = vmatmul.mubr.f32.gmra.mrb[0].mxu0 %v7119
      %v7370 = vpop.f32.mrb[0].mxu0
      %v7371 = vadd.f32 %v7297, %v7370
      %v7372 = vpop.f32.mrb[0].mxu0
      %7373 = vdwg.mxu0
      %v7376 = vcombine.high %v7196, %v7196
      %v7378 = vunpack.c.l.s4 1966171168
      %v7379 = vunpack.c.0.s8 %v7378
      %v7380 = vlaneseq
      %v7381 = vshrl.u32 %v7380, 7
      %v7382 = vsub.s32 %v7379, %v7381
      %v7383 = vrot.slane %v7196, %v7382
      %v7385 = vunpack.c.l.s4 1966171168
      %v7386 = vunpack.c.0.s8 %v7385
      %v7387 = vlaneseq
      %v7388 = vshrl.u32 %v7387, 7
      %v7389 = vsub.s32 %v7386, %v7388
      %v7390 = vrot.slane %v7376, %v7389
      %v7391 = vcombine.high %v7383, %v7383
      %v7392 = vcombine.high %v7390, %v7390
      %v7394 = vunpack.c.l.s4 1966171168
      %v7395 = vunpack.c.0.s8 %v7394
      %v7396 = vlaneseq
      %v7397 = vshrl.u32 %v7396, 7
      %v7398 = vsub.s32 %v7395, %v7397
      %v7399 = vrot.slane %v7383, %v7398
      %v7401 = vunpack.c.l.s4 1966171168
      %v7402 = vunpack.c.0.s8 %v7401
      %v7403 = vlaneseq
      %v7404 = vshrl.u32 %v7403, 7
      %v7405 = vsub.s32 %v7402, %v7404
      %v7406 = vrot.slane %v7390, %v7405
      %v7408 = vunpack.c.l.s4 1966171168
      %v7409 = vunpack.c.0.s8 %v7408
      %v7410 = vlaneseq
      %v7411 = vshrl.u32 %v7410, 7
      %v7412 = vsub.s32 %v7409, %v7411
      %v7413 = vrot.slane %v7391, %v7412
      %v7415 = vunpack.c.l.s4 1966171168
      %v7416 = vunpack.c.0.s8 %v7415
      %v7417 = vlaneseq
      %v7418 = vshrl.u32 %v7417, 7
      %v7419 = vsub.s32 %v7416, %v7418
      %v7420 = vrot.slane %v7392, %v7419
      %v7421 = vcombine.high %v7399, %v7399
      %v7422 = vcombine.high %v7406, %v7406
      %v7423 = vcombine.high %v7413, %v7413
      %v7424 = vcombine.high %v7420, %v7420
      %v7425 = vcombine.high %v7197, %v7197
      %v7427 = vunpack.c.l.s4 1966171168
      %v7428 = vunpack.c.0.s8 %v7427
      %v7429 = vlaneseq
      %v7430 = vshrl.u32 %v7429, 7
      %v7431 = vsub.s32 %v7428, %v7430
      %v7432 = vrot.slane %v7197, %v7431
      %v7434 = vunpack.c.l.s4 1966171168
      %v7435 = vunpack.c.0.s8 %v7434
      %v7436 = vlaneseq
      %v7437 = vshrl.u32 %v7436, 7
      %v7438 = vsub.s32 %v7435, %v7437
      %v7439 = vrot.slane %v7425, %v7438
      %v7440 = vcombine.high %v7432, %v7432
      %v7441 = vcombine.high %v7439, %v7439
      %v7443 = vunpack.c.l.s4 1966171168
      %v7444 = vunpack.c.0.s8 %v7443
      %v7445 = vlaneseq
      %v7446 = vshrl.u32 %v7445, 7
      %v7447 = vsub.s32 %v7444, %v7446
      %v7448 = vrot.slane %v7432, %v7447
      %v7450 = vunpack.c.l.s4 1966171168
      %v7451 = vunpack.c.0.s8 %v7450
      %v7452 = vlaneseq
      %v7453 = vshrl.u32 %v7452, 7
      %v7454 = vsub.s32 %v7451, %v7453
      %v7455 = vrot.slane %v7439, %v7454
      %v7457 = vunpack.c.l.s4 1966171168
      %v7458 = vunpack.c.0.s8 %v7457
      %v7459 = vlaneseq
      %v7460 = vshrl.u32 %v7459, 7
      %v7461 = vsub.s32 %v7458, %v7460
      %v7462 = vrot.slane %v7440, %v7461
      %v7464 = vunpack.c.l.s4 1966171168
      %v7465 = vunpack.c.0.s8 %v7464
      %v7466 = vlaneseq
      %v7467 = vshrl.u32 %v7466, 7
      %v7468 = vsub.s32 %v7465, %v7467
      %v7469 = vrot.slane %v7441, %v7468
      %v7470 = vcombine.high %v7448, %v7448
      %v7471 = vcombine.high %v7455, %v7455
      %v7472 = vcombine.high %v7462, %v7462
      %v7475 = vcombine.high %v7278, %v7278
      %v7477 = vunpack.c.l.s4 1966171168
      %v7478 = vunpack.c.0.s8 %v7477
      %v7479 = vlaneseq
      %v7480 = vshrl.u32 %v7479, 7
      %v7481 = vsub.s32 %v7478, %v7480
      %v7482 = vrot.slane %v7278, %v7481
      %v7484 = vunpack.c.l.s4 1966171168
      %v7485 = vunpack.c.0.s8 %v7484
      %v7486 = vlaneseq
      %v7487 = vshrl.u32 %v7486, 7
      %v7488 = vsub.s32 %v7485, %v7487
      %v7489 = vrot.slane %v7475, %v7488
      %v7490 = vcombine.high %v7482, %v7482
      %v7491 = vcombine.high %v7489, %v7489
      %v7493 = vunpack.c.l.s4 1966171168
      %v7494 = vunpack.c.0.s8 %v7493
      %v7495 = vlaneseq
      %v7496 = vshrl.u32 %v7495, 7
      %v7497 = vsub.s32 %v7494, %v7496
      %v7498 = vrot.slane %v7482, %v7497
      %v7500 = vunpack.c.l.s4 1966171168
      %v7501 = vunpack.c.0.s8 %v7500
      %v7502 = vlaneseq
      %v7503 = vshrl.u32 %v7502, 7
      %v7504 = vsub.s32 %v7501, %v7503
      %v7505 = vrot.slane %v7489, %v7504
      %v7507 = vunpack.c.l.s4 1966171168
      %v7508 = vunpack.c.0.s8 %v7507
      %v7509 = vlaneseq
      %v7510 = vshrl.u32 %v7509, 7
      %v7511 = vsub.s32 %v7508, %v7510
      %v7512 = vrot.slane %v7490, %v7511
      %v7514 = vunpack.c.l.s4 1966171168
      %v7515 = vunpack.c.0.s8 %v7514
      %v7516 = vlaneseq
      %v7517 = vshrl.u32 %v7516, 7
      %v7518 = vsub.s32 %v7515, %v7517
      %v7519 = vrot.slane %v7491, %v7518
      %v7520 = vcombine.high %v7498, %v7498
      %v7521 = vcombine.high %v7505, %v7505
      %v7522 = vcombine.high %v7512, %v7512
      %v7523 = vcombine.high %v7519, %v7519
      %v7524 = vcombine.high %v7283, %v7283
      %v7526 = vunpack.c.l.s4 1966171168
      %v7527 = vunpack.c.0.s8 %v7526
      %v7528 = vlaneseq
      %v7529 = vshrl.u32 %v7528, 7
      %v7530 = vsub.s32 %v7527, %v7529
      %v7531 = vrot.slane %v7283, %v7530
      %v7533 = vunpack.c.l.s4 1966171168
      %v7534 = vunpack.c.0.s8 %v7533
      %v7535 = vlaneseq
      %v7536 = vshrl.u32 %v7535, 7
      %v7537 = vsub.s32 %v7534, %v7536
      %v7538 = vrot.slane %v7524, %v7537
      %v7539 = vcombine.high %v7531, %v7531
      %v7540 = vcombine.high %v7538, %v7538
      %v7542 = vunpack.c.l.s4 1966171168
      %v7543 = vunpack.c.0.s8 %v7542
      %v7544 = vlaneseq
      %v7545 = vshrl.u32 %v7544, 7
      %v7546 = vsub.s32 %v7543, %v7545
      %v7547 = vrot.slane %v7531, %v7546
      %v7549 = vunpack.c.l.s4 1966171168
      %v7550 = vunpack.c.0.s8 %v7549
      %v7551 = vlaneseq
      %v7552 = vshrl.u32 %v7551, 7
      %v7553 = vsub.s32 %v7550, %v7552
      %v7554 = vrot.slane %v7538, %v7553
      %v7556 = vunpack.c.l.s4 1966171168
      %v7557 = vunpack.c.0.s8 %v7556
      %v7558 = vlaneseq
      %v7559 = vshrl.u32 %v7558, 7
      %v7560 = vsub.s32 %v7557, %v7559
      %v7561 = vrot.slane %v7539, %v7560
      %v7563 = vunpack.c.l.s4 1966171168
      %v7564 = vunpack.c.0.s8 %v7563
      %v7565 = vlaneseq
      %v7566 = vshrl.u32 %v7565, 7
      %v7567 = vsub.s32 %v7564, %v7566
      %v7568 = vrot.slane %v7540, %v7567
      %v7569 = vcombine.high %v7547, %v7547
      %v7570 = vcombine.high %v7554, %v7554
      %v7571 = vcombine.high %v7561, %v7561
      %v7574 = vcombine.high %v7366, %v7366
      %v7576 = vunpack.c.l.s4 1966171168
      %v7577 = vunpack.c.0.s8 %v7576
      %v7578 = vlaneseq
      %v7579 = vshrl.u32 %v7578, 7
      %v7580 = vsub.s32 %v7577, %v7579
      %v7581 = vrot.slane %v7366, %v7580
      %v7583 = vunpack.c.l.s4 1966171168
      %v7584 = vunpack.c.0.s8 %v7583
      %v7585 = vlaneseq
      %v7586 = vshrl.u32 %v7585, 7
      %v7587 = vsub.s32 %v7584, %v7586
      %v7588 = vrot.slane %v7574, %v7587
      %v7589 = vcombine.high %v7581, %v7581
      %v7590 = vcombine.high %v7588, %v7588
      %v7592 = vunpack.c.l.s4 1966171168
      %v7593 = vunpack.c.0.s8 %v7592
      %v7594 = vlaneseq
      %v7595 = vshrl.u32 %v7594, 7
      %v7596 = vsub.s32 %v7593, %v7595
      %v7597 = vrot.slane %v7581, %v7596
      %v7599 = vunpack.c.l.s4 1966171168
      %v7600 = vunpack.c.0.s8 %v7599
      %v7601 = vlaneseq
      %v7602 = vshrl.u32 %v7601, 7
      %v7603 = vsub.s32 %v7600, %v7602
      %v7604 = vrot.slane %v7588, %v7603
      %v7606 = vunpack.c.l.s4 1966171168
      %v7607 = vunpack.c.0.s8 %v7606
      %v7608 = vlaneseq
      %v7609 = vshrl.u32 %v7608, 7
      %v7610 = vsub.s32 %v7607, %v7609
      %v7611 = vrot.slane %v7589, %v7610
      %v7613 = vunpack.c.l.s4 1966171168
      %v7614 = vunpack.c.0.s8 %v7613
      %v7615 = vlaneseq
      %v7616 = vshrl.u32 %v7615, 7
      %v7617 = vsub.s32 %v7614, %v7616
      %v7618 = vrot.slane %v7590, %v7617
      %v7619 = vcombine.high %v7597, %v7597
      %v7620 = vcombine.high %v7604, %v7604
      %v7621 = vcombine.high %v7611, %v7611
      %v7622 = vcombine.high %v7618, %v7618
      %v7623 = vcombine.high %v7371, %v7371
      %v7625 = vunpack.c.l.s4 1966171168
      %v7626 = vunpack.c.0.s8 %v7625
      %v7627 = vlaneseq
      %v7628 = vshrl.u32 %v7627, 7
      %v7629 = vsub.s32 %v7626, %v7628
      %v7630 = vrot.slane %v7371, %v7629
      %v7632 = vunpack.c.l.s4 1966171168
      %v7633 = vunpack.c.0.s8 %v7632
      %v7634 = vlaneseq
      %v7635 = vshrl.u32 %v7634, 7
      %v7636 = vsub.s32 %v7633, %v7635
      %v7637 = vrot.slane %v7623, %v7636
      %v7638 = vcombine.high %v7630, %v7630
      %v7639 = vcombine.high %v7637, %v7637
      %v7641 = vunpack.c.l.s4 1966171168
      %v7642 = vunpack.c.0.s8 %v7641
      %v7643 = vlaneseq
      %v7644 = vshrl.u32 %v7643, 7
      %v7645 = vsub.s32 %v7642, %v7644
      %v7646 = vrot.slane %v7630, %v7645
      %v7648 = vunpack.c.l.s4 1966171168
      %v7649 = vunpack.c.0.s8 %v7648
      %v7650 = vlaneseq
      %v7651 = vshrl.u32 %v7650, 7
      %v7652 = vsub.s32 %v7649, %v7651
      %v7653 = vrot.slane %v7637, %v7652
      %v7655 = vunpack.c.l.s4 1966171168
      %v7656 = vunpack.c.0.s8 %v7655
      %v7657 = vlaneseq
      %v7658 = vshrl.u32 %v7657, 7
      %v7659 = vsub.s32 %v7656, %v7658
      %v7660 = vrot.slane %v7638, %v7659
      %v7662 = vunpack.c.l.s4 1966171168
      %v7663 = vunpack.c.0.s8 %v7662
      %v7664 = vlaneseq
      %v7665 = vshrl.u32 %v7664, 7
      %v7666 = vsub.s32 %v7663, %v7665
      %v7667 = vrot.slane %v7639, %v7666
      %v7668 = vcombine.high %v7646, %v7646
      %v7669 = vcombine.high %v7653, %v7653
      %v7670 = vcombine.high %v7660, %v7660
      %v7671 = vcombine.low %v7399, %v7413
      %v7672 = vcombine.low %v7421, %v7423
      %v7674 = vunpack.c.l.s4 1966171168
      %v7675 = vunpack.c.0.s8 %v7674
      %v7676 = vlaneseq
      %v7677 = vshrl.u32 %v7676, 7
      %v7678 = vsub.s32 %v7675, %v7677
      %v7679 = vrot.slane %v7671, %v7678
      %v7681 = vunpack.c.l.s4 1966171168
      %v7682 = vunpack.c.0.s8 %v7681
      %v7683 = vlaneseq
      %v7684 = vshrl.u32 %v7683, 7
      %v7685 = vsub.s32 %v7682, %v7684
      %v7686 = vrot.slane %v7672, %v7685
      %v7688 = vunpack.c.l.s4 1966171168
      %v7689 = vunpack.c.0.s8 %v7688
      %v7690 = vlaneseq
      %v7691 = vshrl.u32 %v7690, 7
      %v7692 = vsub.s32 %v7689, %v7691
      %v7693 = vrot.slane %v7406, %v7692
      %v7694 = vcombine.low %v7679, %v7686
      %v7696 = vunpack.c.l.s4 1966171168
      %v7697 = vunpack.c.0.s8 %v7696
      %v7698 = vlaneseq
      %v7699 = vshrl.u32 %v7698, 7
      %v7700 = vsub.s32 %v7697, %v7699
      %v7701 = vrot.slane %v7694, %v7700
      %v7703 = vunpack.c.l.s4 1966171168
      %v7704 = vunpack.c.0.s8 %v7703
      %v7705 = vlaneseq
      %v7706 = vshrl.u32 %v7705, 7
      %v7707 = vsub.s32 %v7704, %v7706
      %v7708 = vrot.slane %v7693, %v7707
      %v7709 = vcombine.low %v7701, %v7708
      %v7710 = vcombine.low %v7498, %v7512
      %v7711 = vcombine.low %v7520, %v7522
      %v7713 = vunpack.c.l.s4 1966171168
      %v7714 = vunpack.c.0.s8 %v7713
      %v7715 = vlaneseq
      %v7716 = vshrl.u32 %v7715, 7
      %v7717 = vsub.s32 %v7714, %v7716
      %v7718 = vrot.slane %v7710, %v7717
      %v7720 = vunpack.c.l.s4 1966171168
      %v7721 = vunpack.c.0.s8 %v7720
      %v7722 = vlaneseq
      %v7723 = vshrl.u32 %v7722, 7
      %v7724 = vsub.s32 %v7721, %v7723
      %v7725 = vrot.slane %v7711, %v7724
      %v7727 = vunpack.c.l.s4 1966171168
      %v7728 = vunpack.c.0.s8 %v7727
      %v7729 = vlaneseq
      %v7730 = vshrl.u32 %v7729, 7
      %v7731 = vsub.s32 %v7728, %v7730
      %v7732 = vrot.slane %v7505, %v7731
      %v7733 = vcombine.low %v7718, %v7725
      %v7735 = vunpack.c.l.s4 1966171168
      %v7736 = vunpack.c.0.s8 %v7735
      %v7737 = vlaneseq
      %v7738 = vshrl.u32 %v7737, 7
      %v7739 = vsub.s32 %v7736, %v7738
      %v7740 = vrot.slane %v7733, %v7739
      %v7742 = vunpack.c.l.s4 1966171168
      %v7743 = vunpack.c.0.s8 %v7742
      %v7744 = vlaneseq
      %v7745 = vshrl.u32 %v7744, 7
      %v7746 = vsub.s32 %v7743, %v7745
      %v7747 = vrot.slane %v7732, %v7746
      %v7748 = vcombine.low %v7740, %v7747
      %v7749 = vsel %vm2567, %v7709, 0
      %v7751 = vsel %vm2567, %v7748, 0
      %7753 = vmatprep.subr.mxu0 0.0
      %7754 = vmatpush1.xpose.msra.mxu0 %v7751
      %7755 = vmatprep.subr.mxu0 0.0
      %7756 = vmatpush1.xpose.msra.mxu0 0.0
      %7757 = vmatprep.subr.mxu0 0.0
      %7758 = vmatpush1.xpose.msra.mxu0 0.0
      %7759 = vmatprep.subr.mxu0 0.0
      %7760 = vmatpush1.xpose.msra.mxu0 0.0
      %7761 = vmatprep.subr.mxu0 0.0
      %7762 = vmatpush1.xpose.msra.mxu0 0.0
      %7763 = vmatprep.subr.mxu0 0.0
      %7764 = vmatpush1.xpose.msra.mxu0 0.0
      %7765 = vmatprep.subr.mxu0 0.0
      %7766 = vmatpush1.xpose.msra.mxu0 0.0
      %7767 = vmatprep.subr.mxu0 0.0
      %7768 = vmatpush1.xpose.msra.mxu0 0.0
      %7769 = vmatprep.subr.mxu0 0.0
      %7770 = vmatpush1.xpose.msra.mxu0 0.0
      %7771 = vmatprep.subr.mxu0 0.0
      %7772 = vmatpush1.xpose.msra.mxu0 0.0
      %7773 = vmatprep.subr.mxu0 0.0
      %7774 = vmatpush1.xpose.msra.mxu0 0.0
      %7775 = vmatprep.subr.mxu0 0.0
      %7776 = vmatpush1.xpose.msra.mxu0 0.0
      %7777 = vmatprep.subr.mxu0 0.0
      %7778 = vmatpush1.xpose.msra.mxu0 0.0
      %7779 = vmatprep.subr.mxu0 0.0
      %7780 = vmatpush1.xpose.msra.mxu0 0.0
      %7781 = vmatprep.subr.mxu0 0.0
      %7782 = vmatpush1.xpose.msra.mxu0 0.0
      %7783 = vmatprep.subr.mxu0 0.0
      %7784 = vmatpush1.xpose.msra.mxu0 0.0
      %7785 = vmatprep.subr.mxu0 0.0
      %7786 = vmatpush1.xpose.msra.mxu0 0.0
      %7787 = vmatprep.subr.mxu0 0.0
      %7788 = vmatpush1.xpose.msra.mxu0 0.0
      %7789 = vmatprep.subr.mxu0 0.0
      %7790 = vmatpush1.xpose.msra.mxu0 0.0
      %7791 = vmatprep.subr.mxu0 0.0
      %7792 = vmatpush1.xpose.msra.mxu0 0.0
      %7793 = vmatprep.subr.mxu0 0.0
      %7794 = vmatpush1.xpose.msra.mxu0 0.0
      %7795 = vmatprep.subr.mxu0 0.0
      %7796 = vmatpush1.xpose.msra.mxu0 0.0
      %7797 = vmatprep.subr.mxu0 0.0
      %7798 = vmatpush1.xpose.msra.mxu0 0.0
      %7799 = vmatprep.subr.mxu0 0.0
      %7800 = vmatpush1.xpose.msra.mxu0 0.0
      %7801 = vmatprep.subr.mxu0 0.0
      %7802 = vmatpush1.xpose.msra.mxu0 0.0
      %7803 = vmatprep.subr.mxu0 0.0
      %7804 = vmatpush1.xpose.msra.mxu0 0.0
      %7805 = vmatprep.subr.mxu0 0.0
      %7806 = vmatpush1.xpose.msra.mxu0 0.0
      %7807 = vmatprep.subr.mxu0 0.0
      %7808 = vmatpush1.xpose.msra.mxu0 0.0
      %7809 = vmatprep.subr.mxu0 0.0
      %7810 = vmatpush1.xpose.msra.mxu0 0.0
      %7811 = vmatprep.subr.mxu0 0.0
      %7812 = vmatpush1.xpose.msra.mxu0 0.0
      %7813 = vmatprep.subr.mxu0 0.0
      %7814 = vmatpush1.xpose.msra.mxu0 0.0
      %7815 = vmatprep.subr.mxu0 0.0
      %7816 = vmatpush1.xpose.msra.mxu0 0.0
      %7817 = vmatprep.mubr.f32.mxu0 0.0
      %7818 = vmatmul.mubr.f32.gmra.mrb[0].mxu0 %v7749
      %v7819 = vpop.f32.mrb[0].mxu0
      %v7820 = vadd.f32 0.0, %v7819
      %v7821 = vpop.f32.mrb[0].mxu0
      %7822 = vdwg.mxu0
      %v7823 = vcombine.low %v7420, %v7422
      %v7824 = vcombine.low %v7424, %v7448
      %v7826 = vunpack.c.l.s4 1966171168
      %v7827 = vunpack.c.0.s8 %v7826
      %v7828 = vlaneseq
      %v7829 = vshrl.u32 %v7828, 7
      %v7830 = vsub.s32 %v7827, %v7829
      %v7831 = vrot.slane %v7823, %v7830
      %v7833 = vunpack.c.l.s4 1966171168
      %v7834 = vunpack.c.0.s8 %v7833
      %v7835 = vlaneseq
      %v7836 = vshrl.u32 %v7835, 7
      %v7837 = vsub.s32 %v7834, %v7836
      %v7838 = vrot.slane %v7824, %v7837
      %v7840 = vunpack.c.l.s4 1966171168
      %v7841 = vunpack.c.0.s8 %v7840
      %v7842 = vlaneseq
      %v7843 = vshrl.u32 %v7842, 7
      %v7844 = vsub.s32 %v7841, %v7843
      %v7845 = vrot.slane %v7462, %v7844
      %v7846 = vcombine.low %v7831, %v7838
      %v7848 = vunpack.c.l.s4 1966171168
      %v7849 = vunpack.c.0.s8 %v7848
      %v7850 = vlaneseq
      %v7851 = vshrl.u32 %v7850, 7
      %v7852 = vsub.s32 %v7849, %v7851
      %v7853 = vrot.slane %v7846, %v7852
      %v7855 = vunpack.c.l.s4 1966171168
      %v7856 = vunpack.c.0.s8 %v7855
      %v7857 = vlaneseq
      %v7858 = vshrl.u32 %v7857, 7
      %v7859 = vsub.s32 %v7856, %v7858
      %v7860 = vrot.slane %v7845, %v7859
      %v7861 = vcombine.low %v7853, %v7860
      %v7862 = vcombine.low %v7519, %v7521
      %v7863 = vcombine.low %v7523, %v7547
      %v7865 = vunpack.c.l.s4 1966171168
      %v7866 = vunpack.c.0.s8 %v7865
      %v7867 = vlaneseq
      %v7868 = vshrl.u32 %v7867, 7
      %v7869 = vsub.s32 %v7866, %v7868
      %v7870 = vrot.slane %v7862, %v7869
      %v7872 = vunpack.c.l.s4 1966171168
      %v7873 = vunpack.c.0.s8 %v7872
      %v7874 = vlaneseq
      %v7875 = vshrl.u32 %v7874, 7
      %v7876 = vsub.s32 %v7873, %v7875
      %v7877 = vrot.slane %v7863, %v7876
      %v7879 = vunpack.c.l.s4 1966171168
      %v7880 = vunpack.c.0.s8 %v7879
      %v7881 = vlaneseq
      %v7882 = vshrl.u32 %v7881, 7
      %v7883 = vsub.s32 %v7880, %v7882
      %v7884 = vrot.slane %v7561, %v7883
      %v7885 = vcombine.low %v7870, %v7877
      %v7887 = vunpack.c.l.s4 1966171168
      %v7888 = vunpack.c.0.s8 %v7887
      %v7889 = vlaneseq
      %v7890 = vshrl.u32 %v7889, 7
      %v7891 = vsub.s32 %v7888, %v7890
      %v7892 = vrot.slane %v7885, %v7891
      %v7894 = vunpack.c.l.s4 1966171168
      %v7895 = vunpack.c.0.s8 %v7894
      %v7896 = vlaneseq
      %v7897 = vshrl.u32 %v7896, 7
      %v7898 = vsub.s32 %v7895, %v7897
      %v7899 = vrot.slane %v7884, %v7898
      %v7900 = vcombine.low %v7892, %v7899
      %v7901 = vsel %vm2567, %v7861, 0
      %v7903 = vsel %vm2567, %v7900, 0
      %7905 = vmatprep.subr.mxu0 0.0
      %7906 = vmatpush1.xpose.msra.mxu0 %v7903
      %7907 = vmatprep.subr.mxu0 0.0
      %7908 = vmatpush1.xpose.msra.mxu0 0.0
      %7909 = vmatprep.subr.mxu0 0.0
      %7910 = vmatpush1.xpose.msra.mxu0 0.0
      %7911 = vmatprep.subr.mxu0 0.0
      %7912 = vmatpush1.xpose.msra.mxu0 0.0
      %7913 = vmatprep.subr.mxu0 0.0
      %7914 = vmatpush1.xpose.msra.mxu0 0.0
      %7915 = vmatprep.subr.mxu0 0.0
      %7916 = vmatpush1.xpose.msra.mxu0 0.0
      %7917 = vmatprep.subr.mxu0 0.0
      %7918 = vmatpush1.xpose.msra.mxu0 0.0
      %7919 = vmatprep.subr.mxu0 0.0
      %7920 = vmatpush1.xpose.msra.mxu0 0.0
      %7921 = vmatprep.subr.mxu0 0.0
      %7922 = vmatpush1.xpose.msra.mxu0 0.0
      %7923 = vmatprep.subr.mxu0 0.0
      %7924 = vmatpush1.xpose.msra.mxu0 0.0
      %7925 = vmatprep.subr.mxu0 0.0
      %7926 = vmatpush1.xpose.msra.mxu0 0.0
      %7927 = vmatprep.subr.mxu0 0.0
      %7928 = vmatpush1.xpose.msra.mxu0 0.0
      %7929 = vmatprep.subr.mxu0 0.0
      %7930 = vmatpush1.xpose.msra.mxu0 0.0
      %7931 = vmatprep.subr.mxu0 0.0
      %7932 = vmatpush1.xpose.msra.mxu0 0.0
      %7933 = vmatprep.subr.mxu0 0.0
      %7934 = vmatpush1.xpose.msra.mxu0 0.0
      %7935 = vmatprep.subr.mxu0 0.0
      %7936 = vmatpush1.xpose.msra.mxu0 0.0
      %7937 = vmatprep.subr.mxu0 0.0
      %7938 = vmatpush1.xpose.msra.mxu0 0.0
      %7939 = vmatprep.subr.mxu0 0.0
      %7940 = vmatpush1.xpose.msra.mxu0 0.0
      %7941 = vmatprep.subr.mxu0 0.0
      %7942 = vmatpush1.xpose.msra.mxu0 0.0
      %7943 = vmatprep.subr.mxu0 0.0
      %7944 = vmatpush1.xpose.msra.mxu0 0.0
      %7945 = vmatprep.subr.mxu0 0.0
      %7946 = vmatpush1.xpose.msra.mxu0 0.0
      %7947 = vmatprep.subr.mxu0 0.0
      %7948 = vmatpush1.xpose.msra.mxu0 0.0
      %7949 = vmatprep.subr.mxu0 0.0
      %7950 = vmatpush1.xpose.msra.mxu0 0.0
      %7951 = vmatprep.subr.mxu0 0.0
      %7952 = vmatpush1.xpose.msra.mxu0 0.0
      %7953 = vmatprep.subr.mxu0 0.0
      %7954 = vmatpush1.xpose.msra.mxu0 0.0
      %7955 = vmatprep.subr.mxu0 0.0
      %7956 = vmatpush1.xpose.msra.mxu0 0.0
      %7957 = vmatprep.subr.mxu0 0.0
      %7958 = vmatpush1.xpose.msra.mxu0 0.0
      %7959 = vmatprep.subr.mxu0 0.0
      %7960 = vmatpush1.xpose.msra.mxu0 0.0
      %7961 = vmatprep.subr.mxu0 0.0
      %7962 = vmatpush1.xpose.msra.mxu0 0.0
      %7963 = vmatprep.subr.mxu0 0.0
      %7964 = vmatpush1.xpose.msra.mxu0 0.0
      %7965 = vmatprep.subr.mxu0 0.0
      %7966 = vmatpush1.xpose.msra.mxu0 0.0
      %7967 = vmatprep.subr.mxu0 0.0
      %7968 = vmatpush1.xpose.msra.mxu0 0.0
      %7969 = vmatprep.mubr.f32.mxu0 0.0
      %7970 = vmatmul.mubr.f32.gmra.mrb[0].mxu0 %v7901
      %v7971 = vpop.f32.mrb[0].mxu0
      %v7972 = vadd.f32 0.0, %v7971
      %v7973 = vpop.f32.mrb[0].mxu0
      %7974 = vdwg.mxu0
      %v7975 = vcombine.low %v7470, %v7472
      %v7976 = vcombine.low %v7455, %v7469
      %v7978 = vunpack.c.l.s4 1966171168
      %v7979 = vunpack.c.0.s8 %v7978
      %v7980 = vlaneseq
      %v7981 = vshrl.u32 %v7980, 7
      %v7982 = vsub.s32 %v7979, %v7981
      %v7983 = vrot.slane %v7975, %v7982
      %v7985 = vunpack.c.l.s4 1966171168
      %v7986 = vunpack.c.0.s8 %v7985
      %v7987 = vlaneseq
      %v7988 = vshrl.u32 %v7987, 7
      %v7989 = vsub.s32 %v7986, %v7988
      %v7990 = vrot.slane %v7976, %v7989
      %v7992 = vunpack.c.l.s4 1966171168
      %v7993 = vunpack.c.0.s8 %v7992
      %v7994 = vlaneseq
      %v7995 = vshrl.u32 %v7994, 7
      %v7996 = vsub.s32 %v7993, %v7995
      %v7997 = vrot.slane %v7471, %v7996
      %v7998 = vcombine.low %v7983, %v7990
      %v8000 = vunpack.c.l.s4 1966171168
      %v8001 = vunpack.c.0.s8 %v8000
      %v8002 = vlaneseq
      %v8003 = vshrl.u32 %v8002, 7
      %v8004 = vsub.s32 %v8001, %v8003
      %v8005 = vrot.slane %v7998, %v8004
      %v8007 = vunpack.c.l.s4 1966171168
      %v8008 = vunpack.c.0.s8 %v8007
      %v8009 = vlaneseq
      %v8010 = vshrl.u32 %v8009, 7
      %v8011 = vsub.s32 %v8008, %v8010
      %v8012 = vrot.slane %v7997, %v8011
      %v8013 = vcombine.low %v8005, %v8012
      %v8014 = vcombine.low %v7569, %v7571
      %v8015 = vcombine.low %v7554, %v7568
      %v8017 = vunpack.c.l.s4 1966171168
      %v8018 = vunpack.c.0.s8 %v8017
      %v8019 = vlaneseq
      %v8020 = vshrl.u32 %v8019, 7
      %v8021 = vsub.s32 %v8018, %v8020
      %v8022 = vrot.slane %v8014, %v8021
      %v8024 = vunpack.c.l.s4 1966171168
      %v8025 = vunpack.c.0.s8 %v8024
      %v8026 = vlaneseq
      %v8027 = vshrl.u32 %v8026, 7
      %v8028 = vsub.s32 %v8025, %v8027
      %v8029 = vrot.slane %v8015, %v8028
      %v8031 = vunpack.c.l.s4 1966171168
      %v8032 = vunpack.c.0.s8 %v8031
      %v8033 = vlaneseq
      %v8034 = vshrl.u32 %v8033, 7
      %v8035 = vsub.s32 %v8032, %v8034
      %v8036 = vrot.slane %v7570, %v8035
      %v8037 = vcombine.low %v8022, %v8029
      %v8039 = vunpack.c.l.s4 1966171168
      %v8040 = vunpack.c.0.s8 %v8039
      %v8041 = vlaneseq
      %v8042 = vshrl.u32 %v8041, 7
      %v8043 = vsub.s32 %v8040, %v8042
      %v8044 = vrot.slane %v8037, %v8043
      %v8046 = vunpack.c.l.s4 1966171168
      %v8047 = vunpack.c.0.s8 %v8046
      %v8048 = vlaneseq
      %v8049 = vshrl.u32 %v8048, 7
      %v8050 = vsub.s32 %v8047, %v8049
      %v8051 = vrot.slane %v8036, %v8050
      %v8052 = vcombine.low %v8044, %v8051
      %v8053 = vsel %vm2567, %v8013, 0
      %v8055 = vsel %vm2567, %v8052, 0
      %8057 = vmatprep.subr.mxu0 0.0
      %8058 = vmatpush1.xpose.msra.mxu0 %v8055
      %8059 = vmatprep.subr.mxu0 0.0
      %8060 = vmatpush1.xpose.msra.mxu0 0.0
      %8061 = vmatprep.subr.mxu0 0.0
      %8062 = vmatpush1.xpose.msra.mxu0 0.0
      %8063 = vmatprep.subr.mxu0 0.0
      %8064 = vmatpush1.xpose.msra.mxu0 0.0
      %8065 = vmatprep.subr.mxu0 0.0
      %8066 = vmatpush1.xpose.msra.mxu0 0.0
      %8067 = vmatprep.subr.mxu0 0.0
      %8068 = vmatpush1.xpose.msra.mxu0 0.0
      %8069 = vmatprep.subr.mxu0 0.0
      %8070 = vmatpush1.xpose.msra.mxu0 0.0
      %8071 = vmatprep.subr.mxu0 0.0
      %8072 = vmatpush1.xpose.msra.mxu0 0.0
      %8073 = vmatprep.subr.mxu0 0.0
      %8074 = vmatpush1.xpose.msra.mxu0 0.0
      %8075 = vmatprep.subr.mxu0 0.0
      %8076 = vmatpush1.xpose.msra.mxu0 0.0
      %8077 = vmatprep.subr.mxu0 0.0
      %8078 = vmatpush1.xpose.msra.mxu0 0.0
      %8079 = vmatprep.subr.mxu0 0.0
      %8080 = vmatpush1.xpose.msra.mxu0 0.0
      %8081 = vmatprep.subr.mxu0 0.0
      %8082 = vmatpush1.xpose.msra.mxu0 0.0
      %8083 = vmatprep.subr.mxu0 0.0
      %8084 = vmatpush1.xpose.msra.mxu0 0.0
      %8085 = vmatprep.subr.mxu0 0.0
      %8086 = vmatpush1.xpose.msra.mxu0 0.0
      %8087 = vmatprep.subr.mxu0 0.0
      %8088 = vmatpush1.xpose.msra.mxu0 0.0
      %8089 = vmatprep.subr.mxu0 0.0
      %8090 = vmatpush1.xpose.msra.mxu0 0.0
      %8091 = vmatprep.subr.mxu0 0.0
      %8092 = vmatpush1.xpose.msra.mxu0 0.0
      %8093 = vmatprep.subr.mxu0 0.0
      %8094 = vmatpush1.xpose.msra.mxu0 0.0
      %8095 = vmatprep.subr.mxu0 0.0
      %8096 = vmatpush1.xpose.msra.mxu0 0.0
      %8097 = vmatprep.subr.mxu0 0.0
      %8098 = vmatpush1.xpose.msra.mxu0 0.0
      %8099 = vmatprep.subr.mxu0 0.0
      %8100 = vmatpush1.xpose.msra.mxu0 0.0
      %8101 = vmatprep.subr.mxu0 0.0
      %8102 = vmatpush1.xpose.msra.mxu0 0.0
      %8103 = vmatprep.subr.mxu0 0.0
      %8104 = vmatpush1.xpose.msra.mxu0 0.0
      %8105 = vmatprep.subr.mxu0 0.0
      %8106 = vmatpush1.xpose.msra.mxu0 0.0
      %8107 = vmatprep.subr.mxu0 0.0
      %8108 = vmatpush1.xpose.msra.mxu0 0.0
      %8109 = vmatprep.subr.mxu0 0.0
      %8110 = vmatpush1.xpose.msra.mxu0 0.0
      %8111 = vmatprep.subr.mxu0 0.0
      %8112 = vmatpush1.xpose.msra.mxu0 0.0
      %8113 = vmatprep.subr.mxu0 0.0
      %8114 = vmatpush1.xpose.msra.mxu0 0.0
      %8115 = vmatprep.subr.mxu0 0.0
      %8116 = vmatpush1.xpose.msra.mxu0 0.0
      %8117 = vmatprep.subr.mxu0 0.0
      %8118 = vmatpush1.xpose.msra.mxu0 0.0
      %8119 = vmatprep.subr.mxu0 0.0
      %8120 = vmatpush1.xpose.msra.mxu0 0.0
      %8121 = vmatprep.mubr.f32.mxu0 0.0
      %8122 = vmatmul.mubr.f32.gmra.mrb[0].mxu0 %v8053
      %v8123 = vpop.f32.mrb[0].mxu0
      %v8124 = vadd.f32 0.0, %v8123
      %v8125 = vpop.f32.mrb[0].mxu0
      %8126 = vdwg.mxu0
      %v8127 = vsel %vm2946, %v7820, -inf
      %8128 = vmax.xlane.f32.xlu0 %v8127
      %v8129 = vpop.xlane.xlu0 %8128
      %v8130 = vsel %vm2946, %v7972, -inf
      %8131 = vmax.xlane.f32.xlu0 %v8130
      %v8132 = vpop.xlane.xlu0 %8131
      %v8133 = vsel %vm2946, %v8124, -inf
      %8134 = vmax.xlane.f32.xlu0 %v8133
      %v8135 = vpop.xlane.xlu0 %8134
      %v8136 = vsub.f32 %v7820, %v8129
      %v8137 = vsub.f32 %v7972, %v8132
      %v8138 = vsub.f32 %v8124, %v8135
      %v8139 = vmul.f32 %v8136, 1.442695
      %v8140 = vpow.pop %v8139
      %v8141 = vmul.f32 %v8137, 1.442695
      %v8142 = vpow.pop %v8141
      %v8143 = vmul.f32 %v8138, 1.442695
      %v8144 = vpow.pop %v8143
      %v8145 = vsel %vm2946, %v8140, 0.0
      %8146 = vadd.xlane.f32.xlu0 %v8145
      %v8147 = vpop.xlane.xlu0 %8146
      %v8148 = vsel %vm2946, %v8142, 0.0
      %8149 = vadd.xlane.f32.xlu0 %v8148
      %v8150 = vpop.xlane.xlu0 %8149
      %v8151 = vsel %vm2946, %v8144, 0.0
      %8152 = vadd.xlane.f32.xlu0 %v8151
      %v8153 = vpop.xlane.xlu0 %8152
      %v8154 = vrcp.pop %v8147
      %v8155 = vrcp.pop %v8150
      %v8156 = vrcp.pop %v8153
      %v8157 = vmul.f32 %v8140, %v8154
      %v8158 = vmul.f32 %v8142, %v8155
      %v8159 = vmul.f32 %v8144, %v8156
      %v8160 = vcombine.low %v7597, %v7611
      %v8161 = vcombine.low %v7619, %v7621
      %v8163 = vunpack.c.l.s4 1966171168
      %v8164 = vunpack.c.0.s8 %v8163
      %v8165 = vlaneseq
      %v8166 = vshrl.u32 %v8165, 7
      %v8167 = vsub.s32 %v8164, %v8166
      %v8168 = vrot.slane %v8160, %v8167
      %v8170 = vunpack.c.l.s4 1966171168
      %v8171 = vunpack.c.0.s8 %v8170
      %v8172 = vlaneseq
      %v8173 = vshrl.u32 %v8172, 7
      %v8174 = vsub.s32 %v8171, %v8173
      %v8175 = vrot.slane %v8161, %v8174
      %v8177 = vunpack.c.l.s4 1966171168
      %v8178 = vunpack.c.0.s8 %v8177
      %v8179 = vlaneseq
      %v8180 = vshrl.u32 %v8179, 7
      %v8181 = vsub.s32 %v8178, %v8180
      %v8182 = vrot.slane %v7604, %v8181
      %v8183 = vcombine.low %v8168, %v8175
      %v8185 = vunpack.c.l.s4 1966171168
      %v8186 = vunpack.c.0.s8 %v8185
      %v8187 = vlaneseq
      %v8188 = vshrl.u32 %v8187, 7
      %v8189 = vsub.s32 %v8186, %v8188
      %v8190 = vrot.slane %v8183, %v8189
      %v8192 = vunpack.c.l.s4 1966171168
      %v8193 = vunpack.c.0.s8 %v8192
      %v8194 = vlaneseq
      %v8195 = vshrl.u32 %v8194, 7
      %v8196 = vsub.s32 %v8193, %v8195
      %v8197 = vrot.slane %v8182, %v8196
      %v8198 = vcombine.low %v8190, %v8197
      %v8200 = vsel %vm3019, %v8157, 0
      %v8202 = vsel %vm3023, %v8198, 0
      %8204 = vmatprep.subr.mxu0 0.0
      %8205 = vmatpush1.msra.mxu0 %v8202
      %8206 = vmatprep.subr.mxu0 0.0
      %8207 = vmatpush1.msra.mxu0 0.0
      %8208 = vmatprep.subr.mxu0 0.0
      %8209 = vmatpush1.msra.mxu0 0.0
      %8210 = vmatprep.subr.mxu0 0.0
      %8211 = vmatpush1.msra.mxu0 0.0
      %8212 = vmatprep.subr.mxu0 0.0
      %8213 = vmatpush1.msra.mxu0 0.0
      %8214 = vmatprep.subr.mxu0 0.0
      %8215 = vmatpush1.msra.mxu0 0.0
      %8216 = vmatprep.subr.mxu0 0.0
      %8217 = vmatpush1.msra.mxu0 0.0
      %8218 = vmatprep.subr.mxu0 0.0
      %8219 = vmatpush1.msra.mxu0 0.0
      %8220 = vmatprep.subr.mxu0 0.0
      %8221 = vmatpush1.msra.mxu0 0.0
      %8222 = vmatprep.subr.mxu0 0.0
      %8223 = vmatpush1.msra.mxu0 0.0
      %8224 = vmatprep.subr.mxu0 0.0
      %8225 = vmatpush1.msra.mxu0 0.0
      %8226 = vmatprep.subr.mxu0 0.0
      %8227 = vmatpush1.msra.mxu0 0.0
      %8228 = vmatprep.subr.mxu0 0.0
      %8229 = vmatpush1.msra.mxu0 0.0
      %8230 = vmatprep.subr.mxu0 0.0
      %8231 = vmatpush1.msra.mxu0 0.0
      %8232 = vmatprep.subr.mxu0 0.0
      %8233 = vmatpush1.msra.mxu0 0.0
      %8234 = vmatprep.subr.mxu0 0.0
      %8235 = vmatpush1.msra.mxu0 0.0
      %8236 = vmatprep.subr.mxu0 0.0
      %8237 = vmatpush1.msra.mxu0 0.0
      %8238 = vmatprep.subr.mxu0 0.0
      %8239 = vmatpush1.msra.mxu0 0.0
      %8240 = vmatprep.subr.mxu0 0.0
      %8241 = vmatpush1.msra.mxu0 0.0
      %8242 = vmatprep.subr.mxu0 0.0
      %8243 = vmatpush1.msra.mxu0 0.0
      %8244 = vmatprep.subr.mxu0 0.0
      %8245 = vmatpush1.msra.mxu0 0.0
      %8246 = vmatprep.subr.mxu0 0.0
      %8247 = vmatpush1.msra.mxu0 0.0
      %8248 = vmatprep.subr.mxu0 0.0
      %8249 = vmatpush1.msra.mxu0 0.0
      %8250 = vmatprep.subr.mxu0 0.0
      %8251 = vmatpush1.msra.mxu0 0.0
      %8252 = vmatprep.subr.mxu0 0.0
      %8253 = vmatpush1.msra.mxu0 0.0
      %8254 = vmatprep.subr.mxu0 0.0
      %8255 = vmatpush1.msra.mxu0 0.0
      %8256 = vmatprep.subr.mxu0 0.0
      %8257 = vmatpush1.msra.mxu0 0.0
      %8258 = vmatprep.subr.mxu0 0.0
      %8259 = vmatpush1.msra.mxu0 0.0
      %8260 = vmatprep.subr.mxu0 0.0
      %8261 = vmatpush1.msra.mxu0 0.0
      %8262 = vmatprep.subr.mxu0 0.0
      %8263 = vmatpush1.msra.mxu0 0.0
      %8264 = vmatprep.subr.mxu0 0.0
      %8265 = vmatpush1.msra.mxu0 0.0
      %8266 = vmatprep.subr.mxu0 0.0
      %8267 = vmatpush1.msra.mxu0 0.0
      %8268 = vmatprep.mubr.f32.mxu0 0.0
      %8269 = vmatmul.mubr.f32.gmra.mrb[0].mxu0 %v8200
      %v8270 = vpop.f32.mrb[0].mxu0
      %v8271 = vadd.f32 0.0, %v8270
      %v8272 = vpop.f32.mrb[0].mxu0
      %8273 = vdwg.mxu0
      %v8274 = vcombine.low %v7618, %v7620
      %v8275 = vcombine.low %v7622, %v7646
      %v8277 = vunpack.c.l.s4 1966171168
      %v8278 = vunpack.c.0.s8 %v8277
      %v8279 = vlaneseq
      %v8280 = vshrl.u32 %v8279, 7
      %v8281 = vsub.s32 %v8278, %v8280
      %v8282 = vrot.slane %v8274, %v8281
      %v8284 = vunpack.c.l.s4 1966171168
      %v8285 = vunpack.c.0.s8 %v8284
      %v8286 = vlaneseq
      %v8287 = vshrl.u32 %v8286, 7
      %v8288 = vsub.s32 %v8285, %v8287
      %v8289 = vrot.slane %v8275, %v8288
      %v8291 = vunpack.c.l.s4 1966171168
      %v8292 = vunpack.c.0.s8 %v8291
      %v8293 = vlaneseq
      %v8294 = vshrl.u32 %v8293, 7
      %v8295 = vsub.s32 %v8292, %v8294
      %v8296 = vrot.slane %v7660, %v8295
      %v8297 = vcombine.low %v8282, %v8289
      %v8299 = vunpack.c.l.s4 1966171168
      %v8300 = vunpack.c.0.s8 %v8299
      %v8301 = vlaneseq
      %v8302 = vshrl.u32 %v8301, 7
      %v8303 = vsub.s32 %v8300, %v8302
      %v8304 = vrot.slane %v8297, %v8303
      %v8306 = vunpack.c.l.s4 1966171168
      %v8307 = vunpack.c.0.s8 %v8306
      %v8308 = vlaneseq
      %v8309 = vshrl.u32 %v8308, 7
      %v8310 = vsub.s32 %v8307, %v8309
      %v8311 = vrot.slane %v8296, %v8310
      %v8312 = vcombine.low %v8304, %v8311
      %v8314 = vsel %vm3019, %v8158, 0
      %v8316 = vsel %vm3023, %v8312, 0
      %8318 = vmatprep.subr.mxu0 0.0
      %8319 = vmatpush1.msra.mxu0 %v8316
      %8320 = vmatprep.subr.mxu0 0.0
      %8321 = vmatpush1.msra.mxu0 0.0
      %8322 = vmatprep.subr.mxu0 0.0
      %8323 = vmatpush1.msra.mxu0 0.0
      %8324 = vmatprep.subr.mxu0 0.0
      %8325 = vmatpush1.msra.mxu0 0.0
      %8326 = vmatprep.subr.mxu0 0.0
      %8327 = vmatpush1.msra.mxu0 0.0
      %8328 = vmatprep.subr.mxu0 0.0
      %8329 = vmatpush1.msra.mxu0 0.0
      %8330 = vmatprep.subr.mxu0 0.0
      %8331 = vmatpush1.msra.mxu0 0.0
      %8332 = vmatprep.subr.mxu0 0.0
      %8333 = vmatpush1.msra.mxu0 0.0
      %8334 = vmatprep.subr.mxu0 0.0
      %8335 = vmatpush1.msra.mxu0 0.0
      %8336 = vmatprep.subr.mxu0 0.0
      %8337 = vmatpush1.msra.mxu0 0.0
      %8338 = vmatprep.subr.mxu0 0.0
      %8339 = vmatpush1.msra.mxu0 0.0
      %8340 = vmatprep.subr.mxu0 0.0
      %8341 = vmatpush1.msra.mxu0 0.0
      %8342 = vmatprep.subr.mxu0 0.0
      %8343 = vmatpush1.msra.mxu0 0.0
      %8344 = vmatprep.subr.mxu0 0.0
      %8345 = vmatpush1.msra.mxu0 0.0
      %8346 = vmatprep.subr.mxu0 0.0
      %8347 = vmatpush1.msra.mxu0 0.0
      %8348 = vmatprep.subr.mxu0 0.0
      %8349 = vmatpush1.msra.mxu0 0.0
      %8350 = vmatprep.subr.mxu0 0.0
      %8351 = vmatpush1.msra.mxu0 0.0
      %8352 = vmatprep.subr.mxu0 0.0
      %8353 = vmatpush1.msra.mxu0 0.0
      %8354 = vmatprep.subr.mxu0 0.0
      %8355 = vmatpush1.msra.mxu0 0.0
      %8356 = vmatprep.subr.mxu0 0.0
      %8357 = vmatpush1.msra.mxu0 0.0
      %8358 = vmatprep.subr.mxu0 0.0
      %8359 = vmatpush1.msra.mxu0 0.0
      %8360 = vmatprep.subr.mxu0 0.0
      %8361 = vmatpush1.msra.mxu0 0.0
      %8362 = vmatprep.subr.mxu0 0.0
      %8363 = vmatpush1.msra.mxu0 0.0
      %8364 = vmatprep.subr.mxu0 0.0
      %8365 = vmatpush1.msra.mxu0 0.0
      %8366 = vmatprep.subr.mxu0 0.0
      %8367 = vmatpush1.msra.mxu0 0.0
      %8368 = vmatprep.subr.mxu0 0.0
      %8369 = vmatpush1.msra.mxu0 0.0
      %8370 = vmatprep.subr.mxu0 0.0
      %8371 = vmatpush1.msra.mxu0 0.0
      %8372 = vmatprep.subr.mxu0 0.0
      %8373 = vmatpush1.msra.mxu0 0.0
      %8374 = vmatprep.subr.mxu0 0.0
      %8375 = vmatpush1.msra.mxu0 0.0
      %8376 = vmatprep.subr.mxu0 0.0
      %8377 = vmatpush1.msra.mxu0 0.0
      %8378 = vmatprep.subr.mxu0 0.0
      %8379 = vmatpush1.msra.mxu0 0.0
      %8380 = vmatprep.subr.mxu0 0.0
      %8381 = vmatpush1.msra.mxu0 0.0
      %8382 = vmatprep.mubr.f32.mxu0 0.0
      %8383 = vmatmul.mubr.f32.gmra.mrb[0].mxu0 %v8314
      %v8384 = vpop.f32.mrb[0].mxu0
      %v8385 = vadd.f32 0.0, %v8384
      %v8386 = vpop.f32.mrb[0].mxu0
      %8387 = vdwg.mxu0
      %v8388 = vcombine.low %v7668, %v7670
      %v8389 = vcombine.low %v7653, %v7667
      %v8391 = vunpack.c.l.s4 1966171168
      %v8392 = vunpack.c.0.s8 %v8391
      %v8393 = vlaneseq
      %v8394 = vshrl.u32 %v8393, 7
      %v8395 = vsub.s32 %v8392, %v8394
      %v8396 = vrot.slane %v8388, %v8395
      %v8398 = vunpack.c.l.s4 1966171168
      %v8399 = vunpack.c.0.s8 %v8398
      %v8400 = vlaneseq
      %v8401 = vshrl.u32 %v8400, 7
      %v8402 = vsub.s32 %v8399, %v8401
      %v8403 = vrot.slane %v8389, %v8402
      %v8405 = vunpack.c.l.s4 1966171168
      %v8406 = vunpack.c.0.s8 %v8405
      %v8407 = vlaneseq
      %v8408 = vshrl.u32 %v8407, 7
      %v8409 = vsub.s32 %v8406, %v8408
      %v8410 = vrot.slane %v7669, %v8409
      %v8411 = vcombine.low %v8396, %v8403
      %v8413 = vunpack.c.l.s4 1966171168
      %v8414 = vunpack.c.0.s8 %v8413
      %v8415 = vlaneseq
      %v8416 = vshrl.u32 %v8415, 7
      %v8417 = vsub.s32 %v8414, %v8416
      %v8418 = vrot.slane %v8411, %v8417
      %v8420 = vunpack.c.l.s4 1966171168
      %v8421 = vunpack.c.0.s8 %v8420
      %v8422 = vlaneseq
      %v8423 = vshrl.u32 %v8422, 7
      %v8424 = vsub.s32 %v8421, %v8423
      %v8425 = vrot.slane %v8410, %v8424
      %v8426 = vcombine.low %v8418, %v8425
      %v8428 = vsel %vm3019, %v8159, 0
      %v8430 = vsel %vm3023, %v8426, 0
      %8432 = vmatprep.subr.mxu0 0.0
      %8433 = vmatpush1.msra.mxu0 %v8430
      %8434 = vmatprep.subr.mxu0 0.0
      %8435 = vmatpush1.msra.mxu0 0.0
      %8436 = vmatprep.subr.mxu0 0.0
      %8437 = vmatpush1.msra.mxu0 0.0
      %8438 = vmatprep.subr.mxu0 0.0
      %8439 = vmatpush1.msra.mxu0 0.0
      %8440 = vmatprep.subr.mxu0 0.0
      %8441 = vmatpush1.msra.mxu0 0.0
      %8442 = vmatprep.subr.mxu0 0.0
      %8443 = vmatpush1.msra.mxu0 0.0
      %8444 = vmatprep.subr.mxu0 0.0
      %8445 = vmatpush1.msra.mxu0 0.0
      %8446 = vmatprep.subr.mxu0 0.0
      %8447 = vmatpush1.msra.mxu0 0.0
      %8448 = vmatprep.subr.mxu0 0.0
      %8449 = vmatpush1.msra.mxu0 0.0
      %8450 = vmatprep.subr.mxu0 0.0
      %8451 = vmatpush1.msra.mxu0 0.0
      %8452 = vmatprep.subr.mxu0 0.0
      %8453 = vmatpush1.msra.mxu0 0.0
      %8454 = vmatprep.subr.mxu0 0.0
      %8455 = vmatpush1.msra.mxu0 0.0
      %8456 = vmatprep.subr.mxu0 0.0
      %8457 = vmatpush1.msra.mxu0 0.0
      %8458 = vmatprep.subr.mxu0 0.0
      %8459 = vmatpush1.msra.mxu0 0.0
      %8460 = vmatprep.subr.mxu0 0.0
      %8461 = vmatpush1.msra.mxu0 0.0
      %8462 = vmatprep.subr.mxu0 0.0
      %8463 = vmatpush1.msra.mxu0 0.0
      %8464 = vmatprep.subr.mxu0 0.0
      %8465 = vmatpush1.msra.mxu0 0.0
      %8466 = vmatprep.subr.mxu0 0.0
      %8467 = vmatpush1.msra.mxu0 0.0
      %8468 = vmatprep.subr.mxu0 0.0
      %8469 = vmatpush1.msra.mxu0 0.0
      %8470 = vmatprep.subr.mxu0 0.0
      %8471 = vmatpush1.msra.mxu0 0.0
      %8472 = vmatprep.subr.mxu0 0.0
      %8473 = vmatpush1.msra.mxu0 0.0
      %8474 = vmatprep.subr.mxu0 0.0
      %8475 = vmatpush1.msra.mxu0 0.0
      %8476 = vmatprep.subr.mxu0 0.0
      %8477 = vmatpush1.msra.mxu0 0.0
      %8478 = vmatprep.subr.mxu0 0.0
      %8479 = vmatpush1.msra.mxu0 0.0
      %8480 = vmatprep.subr.mxu0 0.0
      %8481 = vmatpush1.msra.mxu0 0.0
      %8482 = vmatprep.subr.mxu0 0.0
      %8483 = vmatpush1.msra.mxu0 0.0
      %8484 = vmatprep.subr.mxu0 0.0
      %8485 = vmatpush1.msra.mxu0 0.0
      %8486 = vmatprep.subr.mxu0 0.0
      %8487 = vmatpush1.msra.mxu0 0.0
      %8488 = vmatprep.subr.mxu0 0.0
      %8489 = vmatpush1.msra.mxu0 0.0
      %8490 = vmatprep.subr.mxu0 0.0
      %8491 = vmatpush1.msra.mxu0 0.0
      %8492 = vmatprep.subr.mxu0 0.0
      %8493 = vmatpush1.msra.mxu0 0.0
      %8494 = vmatprep.subr.mxu0 0.0
      %8495 = vmatpush1.msra.mxu0 0.0
      %8496 = vmatprep.mubr.f32.mxu0 0.0
      %8497 = vmatmul.mubr.f32.gmra.mrb[0].mxu0 %v8428
      %v8498 = vpop.f32.mrb[0].mxu0
      %v8499 = vadd.f32 0.0, %v8498
      %v8500 = vpop.f32.mrb[0].mxu0
      %8501 = vdwg.mxu0
      %8502 = vrot.lane.b32.xlu0 %v7709, 120
      %v8503 = vpop.permute.xlu0 %8502
      %8504 = vrot.lane.b32.xlu0 %v7748, 120
      %v8505 = vpop.permute.xlu0 %8504
      %v8506 = vsel %vm2567, %v8503, 0
      %v8508 = vsel %vm2567, %v8505, 0
      %8510 = vmatprep.subr.mxu0 0.0
      %8511 = vmatpush1.xpose.msra.mxu0 %v8508
      %8512 = vmatprep.subr.mxu0 0.0
      %8513 = vmatpush1.xpose.msra.mxu0 0.0
      %8514 = vmatprep.subr.mxu0 0.0
      %8515 = vmatpush1.xpose.msra.mxu0 0.0
      %8516 = vmatprep.subr.mxu0 0.0
      %8517 = vmatpush1.xpose.msra.mxu0 0.0
      %8518 = vmatprep.subr.mxu0 0.0
      %8519 = vmatpush1.xpose.msra.mxu0 0.0
      %8520 = vmatprep.subr.mxu0 0.0
      %8521 = vmatpush1.xpose.msra.mxu0 0.0
      %8522 = vmatprep.subr.mxu0 0.0
      %8523 = vmatpush1.xpose.msra.mxu0 0.0
      %8524 = vmatprep.subr.mxu0 0.0
      %8525 = vmatpush1.xpose.msra.mxu0 0.0
      %8526 = vmatprep.subr.mxu0 0.0
      %8527 = vmatpush1.xpose.msra.mxu0 0.0
      %8528 = vmatprep.subr.mxu0 0.0
      %8529 = vmatpush1.xpose.msra.mxu0 0.0
      %8530 = vmatprep.subr.mxu0 0.0
      %8531 = vmatpush1.xpose.msra.mxu0 0.0
      %8532 = vmatprep.subr.mxu0 0.0
      %8533 = vmatpush1.xpose.msra.mxu0 0.0
      %8534 = vmatprep.subr.mxu0 0.0
      %8535 = vmatpush1.xpose.msra.mxu0 0.0
      %8536 = vmatprep.subr.mxu0 0.0
      %8537 = vmatpush1.xpose.msra.mxu0 0.0
      %8538 = vmatprep.subr.mxu0 0.0
      %8539 = vmatpush1.xpose.msra.mxu0 0.0
      %8540 = vmatprep.subr.mxu0 0.0
      %8541 = vmatpush1.xpose.msra.mxu0 0.0
      %8542 = vmatprep.subr.mxu0 0.0
      %8543 = vmatpush1.xpose.msra.mxu0 0.0
      %8544 = vmatprep.subr.mxu0 0.0
      %8545 = vmatpush1.xpose.msra.mxu0 0.0
      %8546 = vmatprep.subr.mxu0 0.0
      %8547 = vmatpush1.xpose.msra.mxu0 0.0
      %8548 = vmatprep.subr.mxu0 0.0
      %8549 = vmatpush1.xpose.msra.mxu0 0.0
      %8550 = vmatprep.subr.mxu0 0.0
      %8551 = vmatpush1.xpose.msra.mxu0 0.0
      %8552 = vmatprep.subr.mxu0 0.0
      %8553 = vmatpush1.xpose.msra.mxu0 0.0
      %8554 = vmatprep.subr.mxu0 0.0
      %8555 = vmatpush1.xpose.msra.mxu0 0.0
      %8556 = vmatprep.subr.mxu0 0.0
      %8557 = vmatpush1.xpose.msra.mxu0 0.0
      %8558 = vmatprep.subr.mxu0 0.0
      %8559 = vmatpush1.xpose.msra.mxu0 0.0
      %8560 = vmatprep.subr.mxu0 0.0
      %8561 = vmatpush1.xpose.msra.mxu0 0.0
      %8562 = vmatprep.subr.mxu0 0.0
      %8563 = vmatpush1.xpose.msra.mxu0 0.0
      %8564 = vmatprep.subr.mxu0 0.0
      %8565 = vmatpush1.xpose.msra.mxu0 0.0
      %8566 = vmatprep.subr.mxu0 0.0
      %8567 = vmatpush1.xpose.msra.mxu0 0.0
      %8568 = vmatprep.subr.mxu0 0.0
      %8569 = vmatpush1.xpose.msra.mxu0 0.0
      %8570 = vmatprep.subr.mxu0 0.0
      %8571 = vmatpush1.xpose.msra.mxu0 0.0
      %8572 = vmatprep.subr.mxu0 0.0
      %8573 = vmatpush1.xpose.msra.mxu0 0.0
      %8574 = vmatprep.mubr.f32.mxu0 0.0
      %8575 = vmatmul.mubr.f32.gmra.mrb[0].mxu0 %v8506
      %v8576 = vpop.f32.mrb[0].mxu0
      %v8577 = vadd.f32 0.0, %v8576
      %v8578 = vpop.f32.mrb[0].mxu0
      %8579 = vdwg.mxu0
      %8580 = vrot.lane.b32.xlu0 %v7861, 120
      %v8581 = vpop.permute.xlu0 %8580
      %8582 = vrot.lane.b32.xlu0 %v7900, 120
      %v8583 = vpop.permute.xlu0 %8582
      %v8584 = vsel %vm2567, %v8581, 0
      %v8586 = vsel %vm2567, %v8583, 0
      %8588 = vmatprep.subr.mxu0 0.0
      %8589 = vmatpush1.xpose.msra.mxu0 %v8586
      %8590 = vmatprep.subr.mxu0 0.0
      %8591 = vmatpush1.xpose.msra.mxu0 0.0
      %8592 = vmatprep.subr.mxu0 0.0
      %8593 = vmatpush1.xpose.msra.mxu0 0.0
      %8594 = vmatprep.subr.mxu0 0.0
      %8595 = vmatpush1.xpose.msra.mxu0 0.0
      %8596 = vmatprep.subr.mxu0 0.0
      %8597 = vmatpush1.xpose.msra.mxu0 0.0
      %8598 = vmatprep.subr.mxu0 0.0
      %8599 = vmatpush1.xpose.msra.mxu0 0.0
      %8600 = vmatprep.subr.mxu0 0.0
      %8601 = vmatpush1.xpose.msra.mxu0 0.0
      %8602 = vmatprep.subr.mxu0 0.0
      %8603 = vmatpush1.xpose.msra.mxu0 0.0
      %8604 = vmatprep.subr.mxu0 0.0
      %8605 = vmatpush1.xpose.msra.mxu0 0.0
      %8606 = vmatprep.subr.mxu0 0.0
      %8607 = vmatpush1.xpose.msra.mxu0 0.0
      %8608 = vmatprep.subr.mxu0 0.0
      %8609 = vmatpush1.xpose.msra.mxu0 0.0
      %8610 = vmatprep.subr.mxu0 0.0
      %8611 = vmatpush1.xpose.msra.mxu0 0.0
      %8612 = vmatprep.subr.mxu0 0.0
      %8613 = vmatpush1.xpose.msra.mxu0 0.0
      %8614 = vmatprep.subr.mxu0 0.0
      %8615 = vmatpush1.xpose.msra.mxu0 0.0
      %8616 = vmatprep.subr.mxu0 0.0
      %8617 = vmatpush1.xpose.msra.mxu0 0.0
      %8618 = vmatprep.subr.mxu0 0.0
      %8619 = vmatpush1.xpose.msra.mxu0 0.0
      %8620 = vmatprep.subr.mxu0 0.0
      %8621 = vmatpush1.xpose.msra.mxu0 0.0
      %8622 = vmatprep.subr.mxu0 0.0
      %8623 = vmatpush1.xpose.msra.mxu0 0.0
      %8624 = vmatprep.subr.mxu0 0.0
      %8625 = vmatpush1.xpose.msra.mxu0 0.0
      %8626 = vmatprep.subr.mxu0 0.0
      %8627 = vmatpush1.xpose.msra.mxu0 0.0
      %8628 = vmatprep.subr.mxu0 0.0
      %8629 = vmatpush1.xpose.msra.mxu0 0.0
      %8630 = vmatprep.subr.mxu0 0.0
      %8631 = vmatpush1.xpose.msra.mxu0 0.0
      %8632 = vmatprep.subr.mxu0 0.0
      %8633 = vmatpush1.xpose.msra.mxu0 0.0
      %8634 = vmatprep.subr.mxu0 0.0
      %8635 = vmatpush1.xpose.msra.mxu0 0.0
      %8636 = vmatprep.subr.mxu0 0.0
      %8637 = vmatpush1.xpose.msra.mxu0 0.0
      %8638 = vmatprep.subr.mxu0 0.0
      %8639 = vmatpush1.xpose.msra.mxu0 0.0
      %8640 = vmatprep.subr.mxu0 0.0
      %8641 = vmatpush1.xpose.msra.mxu0 0.0
      %8642 = vmatprep.subr.mxu0 0.0
      %8643 = vmatpush1.xpose.msra.mxu0 0.0
      %8644 = vmatprep.subr.mxu0 0.0
      %8645 = vmatpush1.xpose.msra.mxu0 0.0
      %8646 = vmatprep.subr.mxu0 0.0
      %8647 = vmatpush1.xpose.msra.mxu0 0.0
      %8648 = vmatprep.subr.mxu0 0.0
      %8649 = vmatpush1.xpose.msra.mxu0 0.0
      %8650 = vmatprep.subr.mxu0 0.0
      %8651 = vmatpush1.xpose.msra.mxu0 0.0
      %8652 = vmatprep.mubr.f32.mxu0 0.0
      %8653 = vmatmul.mubr.f32.gmra.mrb[0].mxu0 %v8584
      %v8654 = vpop.f32.mrb[0].mxu0
      %v8655 = vadd.f32 0.0, %v8654
      %v8656 = vpop.f32.mrb[0].mxu0
      %8657 = vdwg.mxu0
      %8658 = vrot.lane.b32.xlu0 %v8013, 120
      %v8659 = vpop.permute.xlu0 %8658
      %8660 = vrot.lane.b32.xlu0 %v8052, 120
      %v8661 = vpop.permute.xlu0 %8660
      %v8662 = vsel %vm2567, %v8659, 0
      %v8664 = vsel %vm2567, %v8661, 0
      %8666 = vmatprep.subr.mxu0 0.0
      %8667 = vmatpush1.xpose.msra.mxu0 %v8664
      %8668 = vmatprep.subr.mxu0 0.0
      %8669 = vmatpush1.xpose.msra.mxu0 0.0
      %8670 = vmatprep.subr.mxu0 0.0
      %8671 = vmatpush1.xpose.msra.mxu0 0.0
      %8672 = vmatprep.subr.mxu0 0.0
      %8673 = vmatpush1.xpose.msra.mxu0 0.0
      %8674 = vmatprep.subr.mxu0 0.0
      %8675 = vmatpush1.xpose.msra.mxu0 0.0
      %8676 = vmatprep.subr.mxu0 0.0
      %8677 = vmatpush1.xpose.msra.mxu0 0.0
      %8678 = vmatprep.subr.mxu0 0.0
      %8679 = vmatpush1.xpose.msra.mxu0 0.0
      %8680 = vmatprep.subr.mxu0 0.0
      %8681 = vmatpush1.xpose.msra.mxu0 0.0
      %8682 = vmatprep.subr.mxu0 0.0
      %8683 = vmatpush1.xpose.msra.mxu0 0.0
      %8684 = vmatprep.subr.mxu0 0.0
      %8685 = vmatpush1.xpose.msra.mxu0 0.0
      %8686 = vmatprep.subr.mxu0 0.0
      %8687 = vmatpush1.xpose.msra.mxu0 0.0
      %8688 = vmatprep.subr.mxu0 0.0
      %8689 = vmatpush1.xpose.msra.mxu0 0.0
      %8690 = vmatprep.subr.mxu0 0.0
      %8691 = vmatpush1.xpose.msra.mxu0 0.0
      %8692 = vmatprep.subr.mxu0 0.0
      %8693 = vmatpush1.xpose.msra.mxu0 0.0
      %8694 = vmatprep.subr.mxu0 0.0
      %8695 = vmatpush1.xpose.msra.mxu0 0.0
      %8696 = vmatprep.subr.mxu0 0.0
      %8697 = vmatpush1.xpose.msra.mxu0 0.0
      %8698 = vmatprep.subr.mxu0 0.0
      %8699 = vmatpush1.xpose.msra.mxu0 0.0
      %8700 = vmatprep.subr.mxu0 0.0
      %8701 = vmatpush1.xpose.msra.mxu0 0.0
      %8702 = vmatprep.subr.mxu0 0.0
      %8703 = vmatpush1.xpose.msra.mxu0 0.0
      %8704 = vmatprep.subr.mxu0 0.0
      %8705 = vmatpush1.xpose.msra.mxu0 0.0
      %8706 = vmatprep.subr.mxu0 0.0
      %8707 = vmatpush1.xpose.msra.mxu0 0.0
      %8708 = vmatprep.subr.mxu0 0.0
      %8709 = vmatpush1.xpose.msra.mxu0 0.0
      %8710 = vmatprep.subr.mxu0 0.0
      %8711 = vmatpush1.xpose.msra.mxu0 0.0
      %8712 = vmatprep.subr.mxu0 0.0
      %8713 = vmatpush1.xpose.msra.mxu0 0.0
      %8714 = vmatprep.subr.mxu0 0.0
      %8715 = vmatpush1.xpose.msra.mxu0 0.0
      %8716 = vmatprep.subr.mxu0 0.0
      %8717 = vmatpush1.xpose.msra.mxu0 0.0
      %8718 = vmatprep.subr.mxu0 0.0
      %8719 = vmatpush1.xpose.msra.mxu0 0.0
      %8720 = vmatprep.subr.mxu0 0.0
      %8721 = vmatpush1.xpose.msra.mxu0 0.0
      %8722 = vmatprep.subr.mxu0 0.0
      %8723 = vmatpush1.xpose.msra.mxu0 0.0
      %8724 = vmatprep.subr.mxu0 0.0
      %8725 = vmatpush1.xpose.msra.mxu0 0.0
      %8726 = vmatprep.subr.mxu0 0.0
      %8727 = vmatpush1.xpose.msra.mxu0 0.0
      %8728 = vmatprep.subr.mxu0 0.0
      %8729 = vmatpush1.xpose.msra.mxu0 0.0
      %8730 = vmatprep.mubr.f32.mxu0 0.0
      %8731 = vmatmul.mubr.f32.gmra.mrb[0].mxu0 %v8662
      %v8732 = vpop.f32.mrb[0].mxu0
      %v8733 = vadd.f32 0.0, %v8732
      %v8734 = vpop.f32.mrb[0].mxu0
      %8735 = vdwg.mxu0
      %v8736 = vsel %vm2946, %v8577, -inf
      %8737 = vmax.xlane.f32.xlu0 %v8736
      %v8738 = vpop.xlane.xlu0 %8737
      %v8739 = vsel %vm2946, %v8655, -inf
      %8740 = vmax.xlane.f32.xlu0 %v8739
      %v8741 = vpop.xlane.xlu0 %8740
      %v8742 = vsel %vm2946, %v8733, -inf
      %8743 = vmax.xlane.f32.xlu0 %v8742
      %v8744 = vpop.xlane.xlu0 %8743
      %v8745 = vsub.f32 %v8577, %v8738
      %v8746 = vsub.f32 %v8655, %v8741
      %v8747 = vsub.f32 %v8733, %v8744
      %v8748 = vmul.f32 %v8745, 1.442695
      %v8749 = vpow.pop %v8748
      %v8750 = vmul.f32 %v8746, 1.442695
      %v8751 = vpow.pop %v8750
      %v8752 = vmul.f32 %v8747, 1.442695
      %v8753 = vpow.pop %v8752
      %v8754 = vsel %vm2946, %v8749, 0.0
      %8755 = vadd.xlane.f32.xlu0 %v8754
      %v8756 = vpop.xlane.xlu0 %8755
      %v8757 = vsel %vm2946, %v8751, 0.0
      %8758 = vadd.xlane.f32.xlu0 %v8757
      %v8759 = vpop.xlane.xlu0 %8758
      %v8760 = vsel %vm2946, %v8753, 0.0
      %8761 = vadd.xlane.f32.xlu0 %v8760
      %v8762 = vpop.xlane.xlu0 %8761
      %v8763 = vrcp.pop %v8756
      %v8764 = vrcp.pop %v8759
      %v8765 = vrcp.pop %v8762
      %v8766 = vmul.f32 %v8749, %v8763
      %v8767 = vmul.f32 %v8751, %v8764
      %v8768 = vmul.f32 %v8753, %v8765
      %8769 = vrot.lane.b32.xlu0 %v8198, 120
      %v8770 = vpop.permute.xlu0 %8769
      %v8772 = vsel %vm3019, %v8766, 0
      %v8774 = vsel %vm3023, %v8770, 0
      %8776 = vmatprep.subr.mxu0 0.0
      %8777 = vmatpush1.msra.mxu0 %v8774
      %8778 = vmatprep.subr.mxu0 0.0
      %8779 = vmatpush1.msra.mxu0 0.0
      %8780 = vmatprep.subr.mxu0 0.0
      %8781 = vmatpush1.msra.mxu0 0.0
      %8782 = vmatprep.subr.mxu0 0.0
      %8783 = vmatpush1.msra.mxu0 0.0
      %8784 = vmatprep.subr.mxu0 0.0
      %8785 = vmatpush1.msra.mxu0 0.0
      %8786 = vmatprep.subr.mxu0 0.0
      %8787 = vmatpush1.msra.mxu0 0.0
      %8788 = vmatprep.subr.mxu0 0.0
      %8789 = vmatpush1.msra.mxu0 0.0
      %8790 = vmatprep.subr.mxu0 0.0
      %8791 = vmatpush1.msra.mxu0 0.0
      %8792 = vmatprep.subr.mxu0 0.0
      %8793 = vmatpush1.msra.mxu0 0.0
      %8794 = vmatprep.subr.mxu0 0.0
      %8795 = vmatpush1.msra.mxu0 0.0
      %8796 = vmatprep.subr.mxu0 0.0
      %8797 = vmatpush1.msra.mxu0 0.0
      %8798 = vmatprep.subr.mxu0 0.0
      %8799 = vmatpush1.msra.mxu0 0.0
      %8800 = vmatprep.subr.mxu0 0.0
      %8801 = vmatpush1.msra.mxu0 0.0
      %8802 = vmatprep.subr.mxu0 0.0
      %8803 = vmatpush1.msra.mxu0 0.0
      %8804 = vmatprep.subr.mxu0 0.0
      %8805 = vmatpush1.msra.mxu0 0.0
      %8806 = vmatprep.subr.mxu0 0.0
      %8807 = vmatpush1.msra.mxu0 0.0
      %8808 = vmatprep.subr.mxu0 0.0
      %8809 = vmatpush1.msra.mxu0 0.0
      %8810 = vmatprep.subr.mxu0 0.0
      %8811 = vmatpush1.msra.mxu0 0.0
      %8812 = vmatprep.subr.mxu0 0.0
      %8813 = vmatpush1.msra.mxu0 0.0
      %8814 = vmatprep.subr.mxu0 0.0
      %8815 = vmatpush1.msra.mxu0 0.0
      %8816 = vmatprep.subr.mxu0 0.0
      %8817 = vmatpush1.msra.mxu0 0.0
      %8818 = vmatprep.subr.mxu0 0.0
      %8819 = vmatpush1.msra.mxu0 0.0
      %8820 = vmatprep.subr.mxu0 0.0
      %8821 = vmatpush1.msra.mxu0 0.0
      %8822 = vmatprep.subr.mxu0 0.0
      %8823 = vmatpush1.msra.mxu0 0.0
      %8824 = vmatprep.subr.mxu0 0.0
      %8825 = vmatpush1.msra.mxu0 0.0
      %8826 = vmatprep.subr.mxu0 0.0
      %8827 = vmatpush1.msra.mxu0 0.0
      %8828 = vmatprep.subr.mxu0 0.0
      %8829 = vmatpush1.msra.mxu0 0.0
      %8830 = vmatprep.subr.mxu0 0.0
      %8831 = vmatpush1.msra.mxu0 0.0
      %8832 = vmatprep.subr.mxu0 0.0
      %8833 = vmatpush1.msra.mxu0 0.0
      %8834 = vmatprep.subr.mxu0 0.0
      %8835 = vmatpush1.msra.mxu0 0.0
      %8836 = vmatprep.subr.mxu0 0.0
      %8837 = vmatpush1.msra.mxu0 0.0
      %8838 = vmatprep.subr.mxu0 0.0
      %8839 = vmatpush1.msra.mxu0 0.0
      %8840 = vmatprep.mubr.f32.mxu0 0.0
      %8841 = vmatmul.mubr.f32.gmra.mrb[0].mxu0 %v8772
      %v8842 = vpop.f32.mrb[0].mxu0
      %v8843 = vadd.f32 0.0, %v8842
      %v8844 = vpop.f32.mrb[0].mxu0
      %8845 = vdwg.mxu0
      %8846 = vrot.lane.b32.xlu0 %v8312, 120
      %v8847 = vpop.permute.xlu0 %8846
      %v8849 = vsel %vm3019, %v8767, 0
      %v8851 = vsel %vm3023, %v8847, 0
      %8853 = vmatprep.subr.mxu0 0.0
      %8854 = vmatpush1.msra.mxu0 %v8851
      %8855 = vmatprep.subr.mxu0 0.0
      %8856 = vmatpush1.msra.mxu0 0.0
      %8857 = vmatprep.subr.mxu0 0.0
      %8858 = vmatpush1.msra.mxu0 0.0
      %8859 = vmatprep.subr.mxu0 0.0
      %8860 = vmatpush1.msra.mxu0 0.0
      %8861 = vmatprep.subr.mxu0 0.0
      %8862 = vmatpush1.msra.mxu0 0.0
      %8863 = vmatprep.subr.mxu0 0.0
      %8864 = vmatpush1.msra.mxu0 0.0
      %8865 = vmatprep.subr.mxu0 0.0
      %8866 = vmatpush1.msra.mxu0 0.0
      %8867 = vmatprep.subr.mxu0 0.0
      %8868 = vmatpush1.msra.mxu0 0.0
      %8869 = vmatprep.subr.mxu0 0.0
      %8870 = vmatpush1.msra.mxu0 0.0
      %8871 = vmatprep.subr.mxu0 0.0
      %8872 = vmatpush1.msra.mxu0 0.0
      %8873 = vmatprep.subr.mxu0 0.0
      %8874 = vmatpush1.msra.mxu0 0.0
      %8875 = vmatprep.subr.mxu0 0.0
      %8876 = vmatpush1.msra.mxu0 0.0
      %8877 = vmatprep.subr.mxu0 0.0
      %8878 = vmatpush1.msra.mxu0 0.0
      %8879 = vmatprep.subr.mxu0 0.0
      %8880 = vmatpush1.msra.mxu0 0.0
      %8881 = vmatprep.subr.mxu0 0.0
      %8882 = vmatpush1.msra.mxu0 0.0
      %8883 = vmatprep.subr.mxu0 0.0
      %8884 = vmatpush1.msra.mxu0 0.0
      %8885 = vmatprep.subr.mxu0 0.0
      %8886 = vmatpush1.msra.mxu0 0.0
      %8887 = vmatprep.subr.mxu0 0.0
      %8888 = vmatpush1.msra.mxu0 0.0
      %8889 = vmatprep.subr.mxu0 0.0
      %8890 = vmatpush1.msra.mxu0 0.0
      %8891 = vmatprep.subr.mxu0 0.0
      %8892 = vmatpush1.msra.mxu0 0.0
      %8893 = vmatprep.subr.mxu0 0.0
      %8894 = vmatpush1.msra.mxu0 0.0
      %8895 = vmatprep.subr.mxu0 0.0
      %8896 = vmatpush1.msra.mxu0 0.0
      %8897 = vmatprep.subr.mxu0 0.0
      %8898 = vmatpush1.msra.mxu0 0.0
      %8899 = vmatprep.subr.mxu0 0.0
      %8900 = vmatpush1.msra.mxu0 0.0
      %8901 = vmatprep.subr.mxu0 0.0
      %8902 = vmatpush1.msra.mxu0 0.0
      %8903 = vmatprep.subr.mxu0 0.0
      %8904 = vmatpush1.msra.mxu0 0.0
      %8905 = vmatprep.subr.mxu0 0.0
      %8906 = vmatpush1.msra.mxu0 0.0
      %8907 = vmatprep.subr.mxu0 0.0
      %8908 = vmatpush1.msra.mxu0 0.0
      %8909 = vmatprep.subr.mxu0 0.0
      %8910 = vmatpush1.msra.mxu0 0.0
      %8911 = vmatprep.subr.mxu0 0.0
      %8912 = vmatpush1.msra.mxu0 0.0
      %8913 = vmatprep.subr.mxu0 0.0
      %8914 = vmatpush1.msra.mxu0 0.0
      %8915 = vmatprep.subr.mxu0 0.0
      %8916 = vmatpush1.msra.mxu0 0.0
      %8917 = vmatprep.mubr.f32.mxu0 0.0
      %8918 = vmatmul.mubr.f32.gmra.mrb[0].mxu0 %v8849
      %v8919 = vpop.f32.mrb[0].mxu0
      %v8920 = vadd.f32 0.0, %v8919
      %v8921 = vpop.f32.mrb[0].mxu0
      %8922 = vdwg.mxu0
      %8923 = vrot.lane.b32.xlu0 %v8426, 120
      %v8924 = vpop.permute.xlu0 %8923
      %v8926 = vsel %vm3019, %v8768, 0
      %v8928 = vsel %vm3023, %v8924, 0
      %8930 = vmatprep.subr.mxu0 0.0
      %8931 = vmatpush1.msra.mxu0 %v8928
      %8932 = vmatprep.subr.mxu0 0.0
      %8933 = vmatpush1.msra.mxu0 0.0
      %8934 = vmatprep.subr.mxu0 0.0
      %8935 = vmatpush1.msra.mxu0 0.0
      %8936 = vmatprep.subr.mxu0 0.0
      %8937 = vmatpush1.msra.mxu0 0.0
      %8938 = vmatprep.subr.mxu0 0.0
      %8939 = vmatpush1.msra.mxu0 0.0
      %8940 = vmatprep.subr.mxu0 0.0
      %8941 = vmatpush1.msra.mxu0 0.0
      %8942 = vmatprep.subr.mxu0 0.0
      %8943 = vmatpush1.msra.mxu0 0.0
      %8944 = vmatprep.subr.mxu0 0.0
      %8945 = vmatpush1.msra.mxu0 0.0
      %8946 = vmatprep.subr.mxu0 0.0
      %8947 = vmatpush1.msra.mxu0 0.0
      %8948 = vmatprep.subr.mxu0 0.0
      %8949 = vmatpush1.msra.mxu0 0.0
      %8950 = vmatprep.subr.mxu0 0.0
      %8951 = vmatpush1.msra.mxu0 0.0
      %8952 = vmatprep.subr.mxu0 0.0
      %8953 = vmatpush1.msra.mxu0 0.0
      %8954 = vmatprep.subr.mxu0 0.0
      %8955 = vmatpush1.msra.mxu0 0.0
      %8956 = vmatprep.subr.mxu0 0.0
      %8957 = vmatpush1.msra.mxu0 0.0
      %8958 = vmatprep.subr.mxu0 0.0
      %8959 = vmatpush1.msra.mxu0 0.0
      %8960 = vmatprep.subr.mxu0 0.0
      %8961 = vmatpush1.msra.mxu0 0.0
      %8962 = vmatprep.subr.mxu0 0.0
      %8963 = vmatpush1.msra.mxu0 0.0
      %8964 = vmatprep.subr.mxu0 0.0
      %8965 = vmatpush1.msra.mxu0 0.0
      %8966 = vmatprep.subr.mxu0 0.0
      %8967 = vmatpush1.msra.mxu0 0.0
      %8968 = vmatprep.subr.mxu0 0.0
      %8969 = vmatpush1.msra.mxu0 0.0
      %8970 = vmatprep.subr.mxu0 0.0
      %8971 = vmatpush1.msra.mxu0 0.0
      %8972 = vmatprep.subr.mxu0 0.0
      %8973 = vmatpush1.msra.mxu0 0.0
      %8974 = vmatprep.subr.mxu0 0.0
      %8975 = vmatpush1.msra.mxu0 0.0
      %8976 = vmatprep.subr.mxu0 0.0
      %8977 = vmatpush1.msra.mxu0 0.0
      %8978 = vmatprep.subr.mxu0 0.0
      %8979 = vmatpush1.msra.mxu0 0.0
      %8980 = vmatprep.subr.mxu0 0.0
      %8981 = vmatpush1.msra.mxu0 0.0
      %8982 = vmatprep.subr.mxu0 0.0
      %8983 = vmatpush1.msra.mxu0 0.0
      %8984 = vmatprep.subr.mxu0 0.0
      %8985 = vmatpush1.msra.mxu0 0.0
      %8986 = vmatprep.subr.mxu0 0.0
      %8987 = vmatpush1.msra.mxu0 0.0
      %8988 = vmatprep.subr.mxu0 0.0
      %8989 = vmatpush1.msra.mxu0 0.0
      %8990 = vmatprep.subr.mxu0 0.0
      %8991 = vmatpush1.msra.mxu0 0.0
      %8992 = vmatprep.subr.mxu0 0.0
      %8993 = vmatpush1.msra.mxu0 0.0
      %8994 = vmatprep.mubr.f32.mxu0 0.0
      %8995 = vmatmul.mubr.f32.gmra.mrb[0].mxu0 %v8926
      %v8996 = vpop.f32.mrb[0].mxu0
      %v8997 = vadd.f32 0.0, %v8996
      %v8998 = vpop.f32.mrb[0].mxu0
      %8999 = vdwg.mxu0
      %9000 = vrot.lane.b32.xlu0 %v7709, 112
      %v9001 = vpop.permute.xlu0 %9000
      %9002 = vrot.lane.b32.xlu0 %v7748, 112
      %v9003 = vpop.permute.xlu0 %9002
      %v9004 = vsel %vm2567, %v9001, 0
      %v9006 = vsel %vm2567, %v9003, 0
      %9008 = vmatprep.subr.mxu0 0.0
      %9009 = vmatpush1.xpose.msra.mxu0 %v9006
      %9010 = vmatprep.subr.mxu0 0.0
      %9011 = vmatpush1.xpose.msra.mxu0 0.0
      %9012 = vmatprep.subr.mxu0 0.0
      %9013 = vmatpush1.xpose.msra.mxu0 0.0
      %9014 = vmatprep.subr.mxu0 0.0
      %9015 = vmatpush1.xpose.msra.mxu0 0.0
      %9016 = vmatprep.subr.mxu0 0.0
      %9017 = vmatpush1.xpose.msra.mxu0 0.0
      %9018 = vmatprep.subr.mxu0 0.0
      %9019 = vmatpush1.xpose.msra.mxu0 0.0
      %9020 = vmatprep.subr.mxu0 0.0
      %9021 = vmatpush1.xpose.msra.mxu0 0.0
      %9022 = vmatprep.subr.mxu0 0.0
      %9023 = vmatpush1.xpose.msra.mxu0 0.0
      %9024 = vmatprep.subr.mxu0 0.0
      %9025 = vmatpush1.xpose.msra.mxu0 0.0
      %9026 = vmatprep.subr.mxu0 0.0
      %9027 = vmatpush1.xpose.msra.mxu0 0.0
      %9028 = vmatprep.subr.mxu0 0.0
      %9029 = vmatpush1.xpose.msra.mxu0 0.0
      %9030 = vmatprep.subr.mxu0 0.0
      %9031 = vmatpush1.xpose.msra.mxu0 0.0
      %9032 = vmatprep.subr.mxu0 0.0
      %9033 = vmatpush1.xpose.msra.mxu0 0.0
      %9034 = vmatprep.subr.mxu0 0.0
      %9035 = vmatpush1.xpose.msra.mxu0 0.0
      %9036 = vmatprep.subr.mxu0 0.0
      %9037 = vmatpush1.xpose.msra.mxu0 0.0
      %9038 = vmatprep.subr.mxu0 0.0
      %9039 = vmatpush1.xpose.msra.mxu0 0.0
      %9040 = vmatprep.subr.mxu0 0.0
      %9041 = vmatpush1.xpose.msra.mxu0 0.0
      %9042 = vmatprep.subr.mxu0 0.0
      %9043 = vmatpush1.xpose.msra.mxu0 0.0
      %9044 = vmatprep.subr.mxu0 0.0
      %9045 = vmatpush1.xpose.msra.mxu0 0.0
      %9046 = vmatprep.subr.mxu0 0.0
      %9047 = vmatpush1.xpose.msra.mxu0 0.0
      %9048 = vmatprep.subr.mxu0 0.0
      %9049 = vmatpush1.xpose.msra.mxu0 0.0
      %9050 = vmatprep.subr.mxu0 0.0
      %9051 = vmatpush1.xpose.msra.mxu0 0.0
      %9052 = vmatprep.subr.mxu0 0.0
      %9053 = vmatpush1.xpose.msra.mxu0 0.0
      %9054 = vmatprep.subr.mxu0 0.0
      %9055 = vmatpush1.xpose.msra.mxu0 0.0
      %9056 = vmatprep.subr.mxu0 0.0
      %9057 = vmatpush1.xpose.msra.mxu0 0.0
      %9058 = vmatprep.subr.mxu0 0.0
      %9059 = vmatpush1.xpose.msra.mxu0 0.0
      %9060 = vmatprep.subr.mxu0 0.0
      %9061 = vmatpush1.xpose.msra.mxu0 0.0
      %9062 = vmatprep.subr.mxu0 0.0
      %9063 = vmatpush1.xpose.msra.mxu0 0.0
      %9064 = vmatprep.subr.mxu0 0.0
      %9065 = vmatpush1.xpose.msra.mxu0 0.0
      %9066 = vmatprep.subr.mxu0 0.0
      %9067 = vmatpush1.xpose.msra.mxu0 0.0
      %9068 = vmatprep.subr.mxu0 0.0
      %9069 = vmatpush1.xpose.msra.mxu0 0.0
      %9070 = vmatprep.subr.mxu0 0.0
      %9071 = vmatpush1.xpose.msra.mxu0 0.0
      %9072 = vmatprep.mubr.f32.mxu0 0.0
      %9073 = vmatmul.mubr.f32.gmra.mrb[0].mxu0 %v9004
      %v9074 = vpop.f32.mrb[0].mxu0
      %v9075 = vadd.f32 0.0, %v9074
      %v9076 = vpop.f32.mrb[0].mxu0
      %9077 = vdwg.mxu0
      %9078 = vrot.lane.b32.xlu0 %v7861, 112
      %v9079 = vpop.permute.xlu0 %9078
      %9080 = vrot.lane.b32.xlu0 %v7900, 112
      %v9081 = vpop.permute.xlu0 %9080
      %v9082 = vsel %vm2567, %v9079, 0
      %v9084 = vsel %vm2567, %v9081, 0
      %9086 = vmatprep.subr.mxu0 0.0
      %9087 = vmatpush1.xpose.msra.mxu0 %v9084
      %9088 = vmatprep.subr.mxu0 0.0
      %9089 = vmatpush1.xpose.msra.mxu0 0.0
      %9090 = vmatprep.subr.mxu0 0.0
      %9091 = vmatpush1.xpose.msra.mxu0 0.0
      %9092 = vmatprep.subr.mxu0 0.0
      %9093 = vmatpush1.xpose.msra.mxu0 0.0
      %9094 = vmatprep.subr.mxu0 0.0
      %9095 = vmatpush1.xpose.msra.mxu0 0.0
      %9096 = vmatprep.subr.mxu0 0.0
      %9097 = vmatpush1.xpose.msra.mxu0 0.0
      %9098 = vmatprep.subr.mxu0 0.0
      %9099 = vmatpush1.xpose.msra.mxu0 0.0
      %9100 = vmatprep.subr.mxu0 0.0
      %9101 = vmatpush1.xpose.msra.mxu0 0.0
      %9102 = vmatprep.subr.mxu0 0.0
      %9103 = vmatpush1.xpose.msra.mxu0 0.0
      %9104 = vmatprep.subr.mxu0 0.0
      %9105 = vmatpush1.xpose.msra.mxu0 0.0
      %9106 = vmatprep.subr.mxu0 0.0
      %9107 = vmatpush1.xpose.msra.mxu0 0.0
      %9108 = vmatprep.subr.mxu0 0.0
      %9109 = vmatpush1.xpose.msra.mxu0 0.0
      %9110 = vmatprep.subr.mxu0 0.0
      %9111 = vmatpush1.xpose.msra.mxu0 0.0
      %9112 = vmatprep.subr.mxu0 0.0
      %9113 = vmatpush1.xpose.msra.mxu0 0.0
      %9114 = vmatprep.subr.mxu0 0.0
      %9115 = vmatpush1.xpose.msra.mxu0 0.0
      %9116 = vmatprep.subr.mxu0 0.0
      %9117 = vmatpush1.xpose.msra.mxu0 0.0
      %9118 = vmatprep.subr.mxu0 0.0
      %9119 = vmatpush1.xpose.msra.mxu0 0.0
      %9120 = vmatprep.subr.mxu0 0.0
      %9121 = vmatpush1.xpose.msra.mxu0 0.0
      %9122 = vmatprep.subr.mxu0 0.0
      %9123 = vmatpush1.xpose.msra.mxu0 0.0
      %9124 = vmatprep.subr.mxu0 0.0
      %9125 = vmatpush1.xpose.msra.mxu0 0.0
      %9126 = vmatprep.subr.mxu0 0.0
      %9127 = vmatpush1.xpose.msra.mxu0 0.0
      %9128 = vmatprep.subr.mxu0 0.0
      %9129 = vmatpush1.xpose.msra.mxu0 0.0
      %9130 = vmatprep.subr.mxu0 0.0
      %9131 = vmatpush1.xpose.msra.mxu0 0.0
      %9132 = vmatprep.subr.mxu0 0.0
      %9133 = vmatpush1.xpose.msra.mxu0 0.0
      %9134 = vmatprep.subr.mxu0 0.0
      %9135 = vmatpush1.xpose.msra.mxu0 0.0
      %9136 = vmatprep.subr.mxu0 0.0
      %9137 = vmatpush1.xpose.msra.mxu0 0.0
      %9138 = vmatprep.subr.mxu0 0.0
      %9139 = vmatpush1.xpose.msra.mxu0 0.0
      %9140 = vmatprep.subr.mxu0 0.0
      %9141 = vmatpush1.xpose.msra.mxu0 0.0
      %9142 = vmatprep.subr.mxu0 0.0
      %9143 = vmatpush1.xpose.msra.mxu0 0.0
      %9144 = vmatprep.subr.mxu0 0.0
      %9145 = vmatpush1.xpose.msra.mxu0 0.0
      %9146 = vmatprep.subr.mxu0 0.0
      %9147 = vmatpush1.xpose.msra.mxu0 0.0
      %9148 = vmatprep.subr.mxu0 0.0
      %9149 = vmatpush1.xpose.msra.mxu0 0.0
      %9150 = vmatprep.mubr.f32.mxu0 0.0
      %9151 = vmatmul.mubr.f32.gmra.mrb[0].mxu0 %v9082
      %v9152 = vpop.f32.mrb[0].mxu0
      %v9153 = vadd.f32 0.0, %v9152
      %v9154 = vpop.f32.mrb[0].mxu0
      %9155 = vdwg.mxu0
      %9156 = vrot.lane.b32.xlu0 %v8013, 112
      %v9157 = vpop.permute.xlu0 %9156
      %9158 = vrot.lane.b32.xlu0 %v8052, 112
      %v9159 = vpop.permute.xlu0 %9158
      %v9160 = vsel %vm2567, %v9157, 0
      %v9162 = vsel %vm2567, %v9159, 0
      %9164 = vmatprep.subr.mxu0 0.0
      %9165 = vmatpush1.xpose.msra.mxu0 %v9162
      %9166 = vmatprep.subr.mxu0 0.0
      %9167 = vmatpush1.xpose.msra.mxu0 0.0
      %9168 = vmatprep.subr.mxu0 0.0
      %9169 = vmatpush1.xpose.msra.mxu0 0.0
      %9170 = vmatprep.subr.mxu0 0.0
      %9171 = vmatpush1.xpose.msra.mxu0 0.0
      %9172 = vmatprep.subr.mxu0 0.0
      %9173 = vmatpush1.xpose.msra.mxu0 0.0
      %9174 = vmatprep.subr.mxu0 0.0
      %9175 = vmatpush1.xpose.msra.mxu0 0.0
      %9176 = vmatprep.subr.mxu0 0.0
      %9177 = vmatpush1.xpose.msra.mxu0 0.0
      %9178 = vmatprep.subr.mxu0 0.0
      %9179 = vmatpush1.xpose.msra.mxu0 0.0
      %9180 = vmatprep.subr.mxu0 0.0
      %9181 = vmatpush1.xpose.msra.mxu0 0.0
      %9182 = vmatprep.subr.mxu0 0.0
      %9183 = vmatpush1.xpose.msra.mxu0 0.0
      %9184 = vmatprep.subr.mxu0 0.0
      %9185 = vmatpush1.xpose.msra.mxu0 0.0
      %9186 = vmatprep.subr.mxu0 0.0
      %9187 = vmatpush1.xpose.msra.mxu0 0.0
      %9188 = vmatprep.subr.mxu0 0.0
      %9189 = vmatpush1.xpose.msra.mxu0 0.0
      %9190 = vmatprep.subr.mxu0 0.0
      %9191 = vmatpush1.xpose.msra.mxu0 0.0
      %9192 = vmatprep.subr.mxu0 0.0
      %9193 = vmatpush1.xpose.msra.mxu0 0.0
      %9194 = vmatprep.subr.mxu0 0.0
      %9195 = vmatpush1.xpose.msra.mxu0 0.0
      %9196 = vmatprep.subr.mxu0 0.0
      %9197 = vmatpush1.xpose.msra.mxu0 0.0
      %9198 = vmatprep.subr.mxu0 0.0
      %9199 = vmatpush1.xpose.msra.mxu0 0.0
      %9200 = vmatprep.subr.mxu0 0.0
      %9201 = vmatpush1.xpose.msra.mxu0 0.0
      %9202 = vmatprep.subr.mxu0 0.0
      %9203 = vmatpush1.xpose.msra.mxu0 0.0
      %9204 = vmatprep.subr.mxu0 0.0
      %9205 = vmatpush1.xpose.msra.mxu0 0.0
      %9206 = vmatprep.subr.mxu0 0.0
      %9207 = vmatpush1.xpose.msra.mxu0 0.0
      %9208 = vmatprep.subr.mxu0 0.0
      %9209 = vmatpush1.xpose.msra.mxu0 0.0
      %9210 = vmatprep.subr.mxu0 0.0
      %9211 = vmatpush1.xpose.msra.mxu0 0.0
      %9212 = vmatprep.subr.mxu0 0.0
      %9213 = vmatpush1.xpose.msra.mxu0 0.0
      %9214 = vmatprep.subr.mxu0 0.0
      %9215 = vmatpush1.xpose.msra.mxu0 0.0
      %9216 = vmatprep.subr.mxu0 0.0
      %9217 = vmatpush1.xpose.msra.mxu0 0.0
      %9218 = vmatprep.subr.mxu0 0.0
      %9219 = vmatpush1.xpose.msra.mxu0 0.0
      %9220 = vmatprep.subr.mxu0 0.0
      %9221 = vmatpush1.xpose.msra.mxu0 0.0
      %9222 = vmatprep.subr.mxu0 0.0
      %9223 = vmatpush1.xpose.msra.mxu0 0.0
      %9224 = vmatprep.subr.mxu0 0.0
      %9225 = vmatpush1.xpose.msra.mxu0 0.0
      %9226 = vmatprep.subr.mxu0 0.0
      %9227 = vmatpush1.xpose.msra.mxu0 0.0
      %9228 = vmatprep.mubr.f32.mxu0 0.0
      %9229 = vmatmul.mubr.f32.gmra.mrb[0].mxu0 %v9160
      %v9230 = vpop.f32.mrb[0].mxu0
      %v9231 = vadd.f32 0.0, %v9230
      %v9232 = vpop.f32.mrb[0].mxu0
      %9233 = vdwg.mxu0
      %v9234 = vsel %vm2946, %v9075, -inf
      %9235 = vmax.xlane.f32.xlu0 %v9234
      %v9236 = vpop.xlane.xlu0 %9235
      %v9237 = vsel %vm2946, %v9153, -inf
      %9238 = vmax.xlane.f32.xlu0 %v9237
      %v9239 = vpop.xlane.xlu0 %9238
      %v9240 = vsel %vm2946, %v9231, -inf
      %9241 = vmax.xlane.f32.xlu0 %v9240
      %v9242 = vpop.xlane.xlu0 %9241
      %v9243 = vsub.f32 %v9075, %v9236
      %v9244 = vsub.f32 %v9153, %v9239
      %v9245 = vsub.f32 %v9231, %v9242
      %v9246 = vmul.f32 %v9243, 1.442695
      %v9247 = vpow.pop %v9246
      %v9248 = vmul.f32 %v9244, 1.442695
      %v9249 = vpow.pop %v9248
      %v9250 = vmul.f32 %v9245, 1.442695
      %v9251 = vpow.pop %v9250
      %v9252 = vsel %vm2946, %v9247, 0.0
      %9253 = vadd.xlane.f32.xlu0 %v9252
      %v9254 = vpop.xlane.xlu0 %9253
      %v9255 = vsel %vm2946, %v9249, 0.0
      %9256 = vadd.xlane.f32.xlu0 %v9255
      %v9257 = vpop.xlane.xlu0 %9256
      %v9258 = vsel %vm2946, %v9251, 0.0
      %9259 = vadd.xlane.f32.xlu0 %v9258
      %v9260 = vpop.xlane.xlu0 %9259
      %v9261 = vrcp.pop %v9254
      %v9262 = vrcp.pop %v9257
      %v9263 = vrcp.pop %v9260
      %v9264 = vmul.f32 %v9247, %v9261
      %v9265 = vmul.f32 %v9249, %v9262
      %v9266 = vmul.f32 %v9251, %v9263
      %9267 = vrot.lane.b32.xlu0 %v8198, 112
      %v9268 = vpop.permute.xlu0 %9267
      %v9270 = vsel %vm3019, %v9264, 0
      %v9272 = vsel %vm3023, %v9268, 0
      %9274 = vmatprep.subr.mxu0 0.0
      %9275 = vmatpush1.msra.mxu0 %v9272
      %9276 = vmatprep.subr.mxu0 0.0
      %9277 = vmatpush1.msra.mxu0 0.0
      %9278 = vmatprep.subr.mxu0 0.0
      %9279 = vmatpush1.msra.mxu0 0.0
      %9280 = vmatprep.subr.mxu0 0.0
      %9281 = vmatpush1.msra.mxu0 0.0
      %9282 = vmatprep.subr.mxu0 0.0
      %9283 = vmatpush1.msra.mxu0 0.0
      %9284 = vmatprep.subr.mxu0 0.0
      %9285 = vmatpush1.msra.mxu0 0.0
      %9286 = vmatprep.subr.mxu0 0.0
      %9287 = vmatpush1.msra.mxu0 0.0
      %9288 = vmatprep.subr.mxu0 0.0
      %9289 = vmatpush1.msra.mxu0 0.0
      %9290 = vmatprep.subr.mxu0 0.0
      %9291 = vmatpush1.msra.mxu0 0.0
      %9292 = vmatprep.subr.mxu0 0.0
      %9293 = vmatpush1.msra.mxu0 0.0
      %9294 = vmatprep.subr.mxu0 0.0
      %9295 = vmatpush1.msra.mxu0 0.0
      %9296 = vmatprep.subr.mxu0 0.0
      %9297 = vmatpush1.msra.mxu0 0.0
      %9298 = vmatprep.subr.mxu0 0.0
      %9299 = vmatpush1.msra.mxu0 0.0
      %9300 = vmatprep.subr.mxu0 0.0
      %9301 = vmatpush1.msra.mxu0 0.0
      %9302 = vmatprep.subr.mxu0 0.0
      %9303 = vmatpush1.msra.mxu0 0.0
      %9304 = vmatprep.subr.mxu0 0.0
      %9305 = vmatpush1.msra.mxu0 0.0
      %9306 = vmatprep.subr.mxu0 0.0
      %9307 = vmatpush1.msra.mxu0 0.0
      %9308 = vmatprep.subr.mxu0 0.0
      %9309 = vmatpush1.msra.mxu0 0.0
      %9310 = vmatprep.subr.mxu0 0.0
      %9311 = vmatpush1.msra.mxu0 0.0
      %9312 = vmatprep.subr.mxu0 0.0
      %9313 = vmatpush1.msra.mxu0 0.0
      %9314 = vmatprep.subr.mxu0 0.0
      %9315 = vmatpush1.msra.mxu0 0.0
      %9316 = vmatprep.subr.mxu0 0.0
      %9317 = vmatpush1.msra.mxu0 0.0
      %9318 = vmatprep.subr.mxu0 0.0
      %9319 = vmatpush1.msra.mxu0 0.0
      %9320 = vmatprep.subr.mxu0 0.0
      %9321 = vmatpush1.msra.mxu0 0.0
      %9322 = vmatprep.subr.mxu0 0.0
      %9323 = vmatpush1.msra.mxu0 0.0
      %9324 = vmatprep.subr.mxu0 0.0
      %9325 = vmatpush1.msra.mxu0 0.0
      %9326 = vmatprep.subr.mxu0 0.0
      %9327 = vmatpush1.msra.mxu0 0.0
      %9328 = vmatprep.subr.mxu0 0.0
      %9329 = vmatpush1.msra.mxu0 0.0
      %9330 = vmatprep.subr.mxu0 0.0
      %9331 = vmatpush1.msra.mxu0 0.0
      %9332 = vmatprep.subr.mxu0 0.0
      %9333 = vmatpush1.msra.mxu0 0.0
      %9334 = vmatprep.subr.mxu0 0.0
      %9335 = vmatpush1.msra.mxu0 0.0
      %9336 = vmatprep.subr.mxu0 0.0
      %9337 = vmatpush1.msra.mxu0 0.0
      %9338 = vmatprep.mubr.f32.mxu0 0.0
      %9339 = vmatmul.mubr.f32.gmra.mrb[0].mxu0 %v9270
      %v9340 = vpop.f32.mrb[0].mxu0
      %v9341 = vadd.f32 0.0, %v9340
      %v9342 = vpop.f32.mrb[0].mxu0
      %9343 = vdwg.mxu0
      %9344 = vrot.lane.b32.xlu0 %v8312, 112
      %v9345 = vpop.permute.xlu0 %9344
      %v9347 = vsel %vm3019, %v9265, 0
      %v9349 = vsel %vm3023, %v9345, 0
      %9351 = vmatprep.subr.mxu0 0.0
      %9352 = vmatpush1.msra.mxu0 %v9349
      %9353 = vmatprep.subr.mxu0 0.0
      %9354 = vmatpush1.msra.mxu0 0.0
      %9355 = vmatprep.subr.mxu0 0.0
      %9356 = vmatpush1.msra.mxu0 0.0
      %9357 = vmatprep.subr.mxu0 0.0
      %9358 = vmatpush1.msra.mxu0 0.0
      %9359 = vmatprep.subr.mxu0 0.0
      %9360 = vmatpush1.msra.mxu0 0.0
      %9361 = vmatprep.subr.mxu0 0.0
      %9362 = vmatpush1.msra.mxu0 0.0
      %9363 = vmatprep.subr.mxu0 0.0
      %9364 = vmatpush1.msra.mxu0 0.0
      %9365 = vmatprep.subr.mxu0 0.0
      %9366 = vmatpush1.msra.mxu0 0.0
      %9367 = vmatprep.subr.mxu0 0.0
      %9368 = vmatpush1.msra.mxu0 0.0
      %9369 = vmatprep.subr.mxu0 0.0
      %9370 = vmatpush1.msra.mxu0 0.0
      %9371 = vmatprep.subr.mxu0 0.0
      %9372 = vmatpush1.msra.mxu0 0.0
      %9373 = vmatprep.subr.mxu0 0.0
      %9374 = vmatpush1.msra.mxu0 0.0
      %9375 = vmatprep.subr.mxu0 0.0
      %9376 = vmatpush1.msra.mxu0 0.0
      %9377 = vmatprep.subr.mxu0 0.0
      %9378 = vmatpush1.msra.mxu0 0.0
      %9379 = vmatprep.subr.mxu0 0.0
      %9380 = vmatpush1.msra.mxu0 0.0
      %9381 = vmatprep.subr.mxu0 0.0
      %9382 = vmatpush1.msra.mxu0 0.0
      %9383 = vmatprep.subr.mxu0 0.0
      %9384 = vmatpush1.msra.mxu0 0.0
      %9385 = vmatprep.subr.mxu0 0.0
      %9386 = vmatpush1.msra.mxu0 0.0
      %9387 = vmatprep.subr.mxu0 0.0
      %9388 = vmatpush1.msra.mxu0 0.0
      %9389 = vmatprep.subr.mxu0 0.0
      %9390 = vmatpush1.msra.mxu0 0.0
      %9391 = vmatprep.subr.mxu0 0.0
      %9392 = vmatpush1.msra.mxu0 0.0
      %9393 = vmatprep.subr.mxu0 0.0
      %9394 = vmatpush1.msra.mxu0 0.0
      %9395 = vmatprep.subr.mxu0 0.0
      %9396 = vmatpush1.msra.mxu0 0.0
      %9397 = vmatprep.subr.mxu0 0.0
      %9398 = vmatpush1.msra.mxu0 0.0
      %9399 = vmatprep.subr.mxu0 0.0
      %9400 = vmatpush1.msra.mxu0 0.0
      %9401 = vmatprep.subr.mxu0 0.0
      %9402 = vmatpush1.msra.mxu0 0.0
      %9403 = vmatprep.subr.mxu0 0.0
      %9404 = vmatpush1.msra.mxu0 0.0
      %9405 = vmatprep.subr.mxu0 0.0
      %9406 = vmatpush1.msra.mxu0 0.0
      %9407 = vmatprep.subr.mxu0 0.0
      %9408 = vmatpush1.msra.mxu0 0.0
      %9409 = vmatprep.subr.mxu0 0.0
      %9410 = vmatpush1.msra.mxu0 0.0
      %9411 = vmatprep.subr.mxu0 0.0
      %9412 = vmatpush1.msra.mxu0 0.0
      %9413 = vmatprep.subr.mxu0 0.0
      %9414 = vmatpush1.msra.mxu0 0.0
      %9415 = vmatprep.mubr.f32.mxu0 0.0
      %9416 = vmatmul.mubr.f32.gmra.mrb[0].mxu0 %v9347
      %v9417 = vpop.f32.mrb[0].mxu0
      %v9418 = vadd.f32 0.0, %v9417
      %v9419 = vpop.f32.mrb[0].mxu0
      %9420 = vdwg.mxu0
      %9421 = vrot.lane.b32.xlu0 %v8426, 112
      %v9422 = vpop.permute.xlu0 %9421
      %v9424 = vsel %vm3019, %v9266, 0
      %v9426 = vsel %vm3023, %v9422, 0
      %9428 = vmatprep.subr.mxu0 0.0
      %9429 = vmatpush1.msra.mxu0 %v9426
      %9430 = vmatprep.subr.mxu0 0.0
      %9431 = vmatpush1.msra.mxu0 0.0
      %9432 = vmatprep.subr.mxu0 0.0
      %9433 = vmatpush1.msra.mxu0 0.0
      %9434 = vmatprep.subr.mxu0 0.0
      %9435 = vmatpush1.msra.mxu0 0.0
      %9436 = vmatprep.subr.mxu0 0.0
      %9437 = vmatpush1.msra.mxu0 0.0
      %9438 = vmatprep.subr.mxu0 0.0
      %9439 = vmatpush1.msra.mxu0 0.0
      %9440 = vmatprep.subr.mxu0 0.0
      %9441 = vmatpush1.msra.mxu0 0.0
      %9442 = vmatprep.subr.mxu0 0.0
      %9443 = vmatpush1.msra.mxu0 0.0
      %9444 = vmatprep.subr.mxu0 0.0
      %9445 = vmatpush1.msra.mxu0 0.0
      %9446 = vmatprep.subr.mxu0 0.0
      %9447 = vmatpush1.msra.mxu0 0.0
      %9448 = vmatprep.subr.mxu0 0.0
      %9449 = vmatpush1.msra.mxu0 0.0
      %9450 = vmatprep.subr.mxu0 0.0
      %9451 = vmatpush1.msra.mxu0 0.0
      %9452 = vmatprep.subr.mxu0 0.0
      %9453 = vmatpush1.msra.mxu0 0.0
      %9454 = vmatprep.subr.mxu0 0.0
      %9455 = vmatpush1.msra.mxu0 0.0
      %9456 = vmatprep.subr.mxu0 0.0
      %9457 = vmatpush1.msra.mxu0 0.0
      %9458 = vmatprep.subr.mxu0 0.0
      %9459 = vmatpush1.msra.mxu0 0.0
      %9460 = vmatprep.subr.mxu0 0.0
      %9461 = vmatpush1.msra.mxu0 0.0
      %9462 = vmatprep.subr.mxu0 0.0
      %9463 = vmatpush1.msra.mxu0 0.0
      %9464 = vmatprep.subr.mxu0 0.0
      %9465 = vmatpush1.msra.mxu0 0.0
      %9466 = vmatprep.subr.mxu0 0.0
      %9467 = vmatpush1.msra.mxu0 0.0
      %9468 = vmatprep.subr.mxu0 0.0
      %9469 = vmatpush1.msra.mxu0 0.0
      %9470 = vmatprep.subr.mxu0 0.0
      %9471 = vmatpush1.msra.mxu0 0.0
      %9472 = vmatprep.subr.mxu0 0.0
      %9473 = vmatpush1.msra.mxu0 0.0
      %9474 = vmatprep.subr.mxu0 0.0
      %9475 = vmatpush1.msra.mxu0 0.0
      %9476 = vmatprep.subr.mxu0 0.0
      %9477 = vmatpush1.msra.mxu0 0.0
      %9478 = vmatprep.subr.mxu0 0.0
      %9479 = vmatpush1.msra.mxu0 0.0
      %9480 = vmatprep.subr.mxu0 0.0
      %9481 = vmatpush1.msra.mxu0 0.0
      %9482 = vmatprep.subr.mxu0 0.0
      %9483 = vmatpush1.msra.mxu0 0.0
      %9484 = vmatprep.subr.mxu0 0.0
      %9485 = vmatpush1.msra.mxu0 0.0
      %9486 = vmatprep.subr.mxu0 0.0
      %9487 = vmatpush1.msra.mxu0 0.0
      %9488 = vmatprep.subr.mxu0 0.0
      %9489 = vmatpush1.msra.mxu0 0.0
      %9490 = vmatprep.subr.mxu0 0.0
      %9491 = vmatpush1.msra.mxu0 0.0
      %9492 = vmatprep.mubr.f32.mxu0 0.0
      %9493 = vmatmul.mubr.f32.gmra.mrb[0].mxu0 %v9424
      %v9494 = vpop.f32.mrb[0].mxu0
      %v9495 = vadd.f32 0.0, %v9494
      %v9496 = vpop.f32.mrb[0].mxu0
      %9497 = vdwg.mxu0
      %9498 = vrot.lane.b32.xlu0 %v7709, 104
      %v9499 = vpop.permute.xlu0 %9498
      %9500 = vrot.lane.b32.xlu0 %v7748, 104
      %v9501 = vpop.permute.xlu0 %9500
      %v9502 = vsel %vm2567, %v9499, 0
      %v9504 = vsel %vm2567, %v9501, 0
      %9506 = vmatprep.subr.mxu0 0.0
      %9507 = vmatpush1.xpose.msra.mxu0 %v9504
      %9508 = vmatprep.subr.mxu0 0.0
      %9509 = vmatpush1.xpose.msra.mxu0 0.0
      %9510 = vmatprep.subr.mxu0 0.0
      %9511 = vmatpush1.xpose.msra.mxu0 0.0
      %9512 = vmatprep.subr.mxu0 0.0
      %9513 = vmatpush1.xpose.msra.mxu0 0.0
      %9514 = vmatprep.subr.mxu0 0.0
      %9515 = vmatpush1.xpose.msra.mxu0 0.0
      %9516 = vmatprep.subr.mxu0 0.0
      %9517 = vmatpush1.xpose.msra.mxu0 0.0
      %9518 = vmatprep.subr.mxu0 0.0
      %9519 = vmatpush1.xpose.msra.mxu0 0.0
      %9520 = vmatprep.subr.mxu0 0.0
      %9521 = vmatpush1.xpose.msra.mxu0 0.0
      %9522 = vmatprep.subr.mxu0 0.0
      %9523 = vmatpush1.xpose.msra.mxu0 0.0
      %9524 = vmatprep.subr.mxu0 0.0
      %9525 = vmatpush1.xpose.msra.mxu0 0.0
      %9526 = vmatprep.subr.mxu0 0.0
      %9527 = vmatpush1.xpose.msra.mxu0 0.0
      %9528 = vmatprep.subr.mxu0 0.0
      %9529 = vmatpush1.xpose.msra.mxu0 0.0
      %9530 = vmatprep.subr.mxu0 0.0
      %9531 = vmatpush1.xpose.msra.mxu0 0.0
      %9532 = vmatprep.subr.mxu0 0.0
      %9533 = vmatpush1.xpose.msra.mxu0 0.0
      %9534 = vmatprep.subr.mxu0 0.0
      %9535 = vmatpush1.xpose.msra.mxu0 0.0
      %9536 = vmatprep.subr.mxu0 0.0
      %9537 = vmatpush1.xpose.msra.mxu0 0.0
      %9538 = vmatprep.subr.mxu0 0.0
      %9539 = vmatpush1.xpose.msra.mxu0 0.0
      %9540 = vmatprep.subr.mxu0 0.0
      %9541 = vmatpush1.xpose.msra.mxu0 0.0
      %9542 = vmatprep.subr.mxu0 0.0
      %9543 = vmatpush1.xpose.msra.mxu0 0.0
      %9544 = vmatprep.subr.mxu0 0.0
      %9545 = vmatpush1.xpose.msra.mxu0 0.0
      %9546 = vmatprep.subr.mxu0 0.0
      %9547 = vmatpush1.xpose.msra.mxu0 0.0
      %9548 = vmatprep.subr.mxu0 0.0
      %9549 = vmatpush1.xpose.msra.mxu0 0.0
      %9550 = vmatprep.subr.mxu0 0.0
      %9551 = vmatpush1.xpose.msra.mxu0 0.0
      %9552 = vmatprep.subr.mxu0 0.0
      %9553 = vmatpush1.xpose.msra.mxu0 0.0
      %9554 = vmatprep.subr.mxu0 0.0
      %9555 = vmatpush1.xpose.msra.mxu0 0.0
      %9556 = vmatprep.subr.mxu0 0.0
      %9557 = vmatpush1.xpose.msra.mxu0 0.0
      %9558 = vmatprep.subr.mxu0 0.0
      %9559 = vmatpush1.xpose.msra.mxu0 0.0
      %9560 = vmatprep.subr.mxu0 0.0
      %9561 = vmatpush1.xpose.msra.mxu0 0.0
      %9562 = vmatprep.subr.mxu0 0.0
      %9563 = vmatpush1.xpose.msra.mxu0 0.0
      %9564 = vmatprep.subr.mxu0 0.0
      %9565 = vmatpush1.xpose.msra.mxu0 0.0
      %9566 = vmatprep.subr.mxu0 0.0
      %9567 = vmatpush1.xpose.msra.mxu0 0.0
      %9568 = vmatprep.subr.mxu0 0.0
      %9569 = vmatpush1.xpose.msra.mxu0 0.0
      %9570 = vmatprep.mubr.f32.mxu0 0.0
      %9571 = vmatmul.mubr.f32.gmra.mrb[0].mxu0 %v9502
      %v9572 = vpop.f32.mrb[0].mxu0
      %v9573 = vadd.f32 0.0, %v9572
      %v9574 = vpop.f32.mrb[0].mxu0
      %9575 = vdwg.mxu0
      %9576 = vrot.lane.b32.xlu0 %v7861, 104
      %v9577 = vpop.permute.xlu0 %9576
      %9578 = vrot.lane.b32.xlu0 %v7900, 104
      %v9579 = vpop.permute.xlu0 %9578
      %v9580 = vsel %vm2567, %v9577, 0
      %v9582 = vsel %vm2567, %v9579, 0
      %9584 = vmatprep.subr.mxu0 0.0
      %9585 = vmatpush1.xpose.msra.mxu0 %v9582
      %9586 = vmatprep.subr.mxu0 0.0
      %9587 = vmatpush1.xpose.msra.mxu0 0.0
      %9588 = vmatprep.subr.mxu0 0.0
      %9589 = vmatpush1.xpose.msra.mxu0 0.0
      %9590 = vmatprep.subr.mxu0 0.0
      %9591 = vmatpush1.xpose.msra.mxu0 0.0
      %9592 = vmatprep.subr.mxu0 0.0
      %9593 = vmatpush1.xpose.msra.mxu0 0.0
      %9594 = vmatprep.subr.mxu0 0.0
      %9595 = vmatpush1.xpose.msra.mxu0 0.0
      %9596 = vmatprep.subr.mxu0 0.0
      %9597 = vmatpush1.xpose.msra.mxu0 0.0
      %9598 = vmatprep.subr.mxu0 0.0
      %9599 = vmatpush1.xpose.msra.mxu0 0.0
      %9600 = vmatprep.subr.mxu0 0.0
      %9601 = vmatpush1.xpose.msra.mxu0 0.0
      %9602 = vmatprep.subr.mxu0 0.0
      %9603 = vmatpush1.xpose.msra.mxu0 0.0
      %9604 = vmatprep.subr.mxu0 0.0
      %9605 = vmatpush1.xpose.msra.mxu0 0.0
      %9606 = vmatprep.subr.mxu0 0.0
      %9607 = vmatpush1.xpose.msra.mxu0 0.0
      %9608 = vmatprep.subr.mxu0 0.0
      %9609 = vmatpush1.xpose.msra.mxu0 0.0
      %9610 = vmatprep.subr.mxu0 0.0
      %9611 = vmatpush1.xpose.msra.mxu0 0.0
      %9612 = vmatprep.subr.mxu0 0.0
      %9613 = vmatpush1.xpose.msra.mxu0 0.0
      %9614 = vmatprep.subr.mxu0 0.0
      %9615 = vmatpush1.xpose.msra.mxu0 0.0
      %9616 = vmatprep.subr.mxu0 0.0
      %9617 = vmatpush1.xpose.msra.mxu0 0.0
      %9618 = vmatprep.subr.mxu0 0.0
      %9619 = vmatpush1.xpose.msra.mxu0 0.0
      %9620 = vmatprep.subr.mxu0 0.0
      %9621 = vmatpush1.xpose.msra.mxu0 0.0
      %9622 = vmatprep.subr.mxu0 0.0
      %9623 = vmatpush1.xpose.msra.mxu0 0.0
      %9624 = vmatprep.subr.mxu0 0.0
      %9625 = vmatpush1.xpose.msra.mxu0 0.0
      %9626 = vmatprep.subr.mxu0 0.0
      %9627 = vmatpush1.xpose.msra.mxu0 0.0
      %9628 = vmatprep.subr.mxu0 0.0
      %9629 = vmatpush1.xpose.msra.mxu0 0.0
      %9630 = vmatprep.subr.mxu0 0.0
      %9631 = vmatpush1.xpose.msra.mxu0 0.0
      %9632 = vmatprep.subr.mxu0 0.0
      %9633 = vmatpush1.xpose.msra.mxu0 0.0
      %9634 = vmatprep.subr.mxu0 0.0
      %9635 = vmatpush1.xpose.msra.mxu0 0.0
      %9636 = vmatprep.subr.mxu0 0.0
      %9637 = vmatpush1.xpose.msra.mxu0 0.0
      %9638 = vmatprep.subr.mxu0 0.0
      %9639 = vmatpush1.xpose.msra.mxu0 0.0
      %9640 = vmatprep.subr.mxu0 0.0
      %9641 = vmatpush1.xpose.msra.mxu0 0.0
      %9642 = vmatprep.subr.mxu0 0.0
      %9643 = vmatpush1.xpose.msra.mxu0 0.0
      %9644 = vmatprep.subr.mxu0 0.0
      %9645 = vmatpush1.xpose.msra.mxu0 0.0
      %9646 = vmatprep.subr.mxu0 0.0
      %9647 = vmatpush1.xpose.msra.mxu0 0.0
      %9648 = vmatprep.mubr.f32.mxu0 0.0
      %9649 = vmatmul.mubr.f32.gmra.mrb[0].mxu0 %v9580
      %v9650 = vpop.f32.mrb[0].mxu0
      %v9651 = vadd.f32 0.0, %v9650
      %v9652 = vpop.f32.mrb[0].mxu0
      %9653 = vdwg.mxu0
      %9654 = vrot.lane.b32.xlu0 %v8013, 104
      %v9655 = vpop.permute.xlu0 %9654
      %9656 = vrot.lane.b32.xlu0 %v8052, 104
      %v9657 = vpop.permute.xlu0 %9656
      %v9658 = vsel %vm2567, %v9655, 0
      %v9660 = vsel %vm2567, %v9657, 0
      %9662 = vmatprep.subr.mxu0 0.0
      %9663 = vmatpush1.xpose.msra.mxu0 %v9660
      %9664 = vmatprep.subr.mxu0 0.0
      %9665 = vmatpush1.xpose.msra.mxu0 0.0
      %9666 = vmatprep.subr.mxu0 0.0
      %9667 = vmatpush1.xpose.msra.mxu0 0.0
      %9668 = vmatprep.subr.mxu0 0.0
      %9669 = vmatpush1.xpose.msra.mxu0 0.0
      %9670 = vmatprep.subr.mxu0 0.0
      %9671 = vmatpush1.xpose.msra.mxu0 0.0
      %9672 = vmatprep.subr.mxu0 0.0
      %9673 = vmatpush1.xpose.msra.mxu0 0.0
      %9674 = vmatprep.subr.mxu0 0.0
      %9675 = vmatpush1.xpose.msra.mxu0 0.0
      %9676 = vmatprep.subr.mxu0 0.0
      %9677 = vmatpush1.xpose.msra.mxu0 0.0
      %9678 = vmatprep.subr.mxu0 0.0
      %9679 = vmatpush1.xpose.msra.mxu0 0.0
      %9680 = vmatprep.subr.mxu0 0.0
      %9681 = vmatpush1.xpose.msra.mxu0 0.0
      %9682 = vmatprep.subr.mxu0 0.0
      %9683 = vmatpush1.xpose.msra.mxu0 0.0
      %9684 = vmatprep.subr.mxu0 0.0
      %9685 = vmatpush1.xpose.msra.mxu0 0.0
      %9686 = vmatprep.subr.mxu0 0.0
      %9687 = vmatpush1.xpose.msra.mxu0 0.0
      %9688 = vmatprep.subr.mxu0 0.0
      %9689 = vmatpush1.xpose.msra.mxu0 0.0
      %9690 = vmatprep.subr.mxu0 0.0
      %9691 = vmatpush1.xpose.msra.mxu0 0.0
      %9692 = vmatprep.subr.mxu0 0.0
      %9693 = vmatpush1.xpose.msra.mxu0 0.0
      %9694 = vmatprep.subr.mxu0 0.0
      %9695 = vmatpush1.xpose.msra.mxu0 0.0
      %9696 = vmatprep.subr.mxu0 0.0
      %9697 = vmatpush1.xpose.msra.mxu0 0.0
      %9698 = vmatprep.subr.mxu0 0.0
      %9699 = vmatpush1.xpose.msra.mxu0 0.0
      %9700 = vmatprep.subr.mxu0 0.0
      %9701 = vmatpush1.xpose.msra.mxu0 0.0
      %9702 = vmatprep.subr.mxu0 0.0
      %9703 = vmatpush1.xpose.msra.mxu0 0.0
      %9704 = vmatprep.subr.mxu0 0.0
      %9705 = vmatpush1.xpose.msra.mxu0 0.0
      %9706 = vmatprep.subr.mxu0 0.0
      %9707 = vmatpush1.xpose.msra.mxu0 0.0
      %9708 = vmatprep.subr.mxu0 0.0
      %9709 = vmatpush1.xpose.msra.mxu0 0.0
      %9710 = vmatprep.subr.mxu0 0.0
      %9711 = vmatpush1.xpose.msra.mxu0 0.0
      %9712 = vmatprep.subr.mxu0 0.0
      %9713 = vmatpush1.xpose.msra.mxu0 0.0
      %9714 = vmatprep.subr.mxu0 0.0
      %9715 = vmatpush1.xpose.msra.mxu0 0.0
      %9716 = vmatprep.subr.mxu0 0.0
      %9717 = vmatpush1.xpose.msra.mxu0 0.0
      %9718 = vmatprep.subr.mxu0 0.0
      %9719 = vmatpush1.xpose.msra.mxu0 0.0
      %9720 = vmatprep.subr.mxu0 0.0
      %9721 = vmatpush1.xpose.msra.mxu0 0.0
      %9722 = vmatprep.subr.mxu0 0.0
      %9723 = vmatpush1.xpose.msra.mxu0 0.0
      %9724 = vmatprep.subr.mxu0 0.0
      %9725 = vmatpush1.xpose.msra.mxu0 0.0
      %9726 = vmatprep.mubr.f32.mxu0 0.0
      %9727 = vmatmul.mubr.f32.gmra.mrb[0].mxu0 %v9658
      %v9728 = vpop.f32.mrb[0].mxu0
      %v9729 = vadd.f32 0.0, %v9728
      %v9730 = vpop.f32.mrb[0].mxu0
      %9731 = vdwg.mxu0
      %v9732 = vsel %vm2946, %v9573, -inf
      %9733 = vmax.xlane.f32.xlu0 %v9732
      %v9734 = vpop.xlane.xlu0 %9733
      %v9735 = vsel %vm2946, %v9651, -inf
      %9736 = vmax.xlane.f32.xlu0 %v9735
      %v9737 = vpop.xlane.xlu0 %9736
      %v9738 = vsel %vm2946, %v9729, -inf
      %9739 = vmax.xlane.f32.xlu0 %v9738
      %v9740 = vpop.xlane.xlu0 %9739
      %v9741 = vsub.f32 %v9573, %v9734
      %v9742 = vsub.f32 %v9651, %v9737
      %v9743 = vsub.f32 %v9729, %v9740
      %v9744 = vmul.f32 %v9741, 1.442695
      %v9745 = vpow.pop %v9744
      %v9746 = vmul.f32 %v9742, 1.442695
      %v9747 = vpow.pop %v9746
      %v9748 = vmul.f32 %v9743, 1.442695
      %v9749 = vpow.pop %v9748
      %v9750 = vsel %vm2946, %v9745, 0.0
      %9751 = vadd.xlane.f32.xlu0 %v9750
      %v9752 = vpop.xlane.xlu0 %9751
      %v9753 = vsel %vm2946, %v9747, 0.0
      %9754 = vadd.xlane.f32.xlu0 %v9753
      %v9755 = vpop.xlane.xlu0 %9754
      %v9756 = vsel %vm2946, %v9749, 0.0
      %9757 = vadd.xlane.f32.xlu0 %v9756
      %v9758 = vpop.xlane.xlu0 %9757
      %v9759 = vrcp.pop %v9752
      %v9760 = vrcp.pop %v9755
      %v9761 = vrcp.pop %v9758
      %v9762 = vmul.f32 %v9745, %v9759
      %v9763 = vmul.f32 %v9747, %v9760
      %v9764 = vmul.f32 %v9749, %v9761
      %9765 = vrot.lane.b32.xlu0 %v8198, 104
      %v9766 = vpop.permute.xlu0 %9765
      %v9768 = vsel %vm3019, %v9762, 0
      %v9770 = vsel %vm3023, %v9766, 0
      %9772 = vmatprep.subr.mxu0 0.0
      %9773 = vmatpush1.msra.mxu0 %v9770
      %9774 = vmatprep.subr.mxu0 0.0
      %9775 = vmatpush1.msra.mxu0 0.0
      %9776 = vmatprep.subr.mxu0 0.0
      %9777 = vmatpush1.msra.mxu0 0.0
      %9778 = vmatprep.subr.mxu0 0.0
      %9779 = vmatpush1.msra.mxu0 0.0
      %9780 = vmatprep.subr.mxu0 0.0
      %9781 = vmatpush1.msra.mxu0 0.0
      %9782 = vmatprep.subr.mxu0 0.0
      %9783 = vmatpush1.msra.mxu0 0.0
      %9784 = vmatprep.subr.mxu0 0.0
      %9785 = vmatpush1.msra.mxu0 0.0
      %9786 = vmatprep.subr.mxu0 0.0
      %9787 = vmatpush1.msra.mxu0 0.0
      %9788 = vmatprep.subr.mxu0 0.0
      %9789 = vmatpush1.msra.mxu0 0.0
      %9790 = vmatprep.subr.mxu0 0.0
      %9791 = vmatpush1.msra.mxu0 0.0
      %9792 = vmatprep.subr.mxu0 0.0
      %9793 = vmatpush1.msra.mxu0 0.0
      %9794 = vmatprep.subr.mxu0 0.0
      %9795 = vmatpush1.msra.mxu0 0.0
      %9796 = vmatprep.subr.mxu0 0.0
      %9797 = vmatpush1.msra.mxu0 0.0
      %9798 = vmatprep.subr.mxu0 0.0
      %9799 = vmatpush1.msra.mxu0 0.0
      %9800 = vmatprep.subr.mxu0 0.0
      %9801 = vmatpush1.msra.mxu0 0.0
      %9802 = vmatprep.subr.mxu0 0.0
      %9803 = vmatpush1.msra.mxu0 0.0
      %9804 = vmatprep.subr.mxu0 0.0
      %9805 = vmatpush1.msra.mxu0 0.0
      %9806 = vmatprep.subr.mxu0 0.0
      %9807 = vmatpush1.msra.mxu0 0.0
      %9808 = vmatprep.subr.mxu0 0.0
      %9809 = vmatpush1.msra.mxu0 0.0
      %9810 = vmatprep.subr.mxu0 0.0
      %9811 = vmatpush1.msra.mxu0 0.0
      %9812 = vmatprep.subr.mxu0 0.0
      %9813 = vmatpush1.msra.mxu0 0.0
      %9814 = vmatprep.subr.mxu0 0.0
      %9815 = vmatpush1.msra.mxu0 0.0
      %9816 = vmatprep.subr.mxu0 0.0
      %9817 = vmatpush1.msra.mxu0 0.0
      %9818 = vmatprep.subr.mxu0 0.0
      %9819 = vmatpush1.msra.mxu0 0.0
      %9820 = vmatprep.subr.mxu0 0.0
      %9821 = vmatpush1.msra.mxu0 0.0
      %9822 = vmatprep.subr.mxu0 0.0
      %9823 = vmatpush1.msra.mxu0 0.0
      %9824 = vmatprep.subr.mxu0 0.0
      %9825 = vmatpush1.msra.mxu0 0.0
      %9826 = vmatprep.subr.mxu0 0.0
      %9827 = vmatpush1.msra.mxu0 0.0
      %9828 = vmatprep.subr.mxu0 0.0
      %9829 = vmatpush1.msra.mxu0 0.0
      %9830 = vmatprep.subr.mxu0 0.0
      %9831 = vmatpush1.msra.mxu0 0.0
      %9832 = vmatprep.subr.mxu0 0.0
      %9833 = vmatpush1.msra.mxu0 0.0
      %9834 = vmatprep.subr.mxu0 0.0
      %9835 = vmatpush1.msra.mxu0 0.0
      %9836 = vmatprep.mubr.f32.mxu0 0.0
      %9837 = vmatmul.mubr.f32.gmra.mrb[0].mxu0 %v9768
      %v9838 = vpop.f32.mrb[0].mxu0
      %v9839 = vadd.f32 0.0, %v9838
      %v9840 = vpop.f32.mrb[0].mxu0
      %9841 = vdwg.mxu0
      %9842 = vrot.lane.b32.xlu0 %v8312, 104
      %v9843 = vpop.permute.xlu0 %9842
      %v9845 = vsel %vm3019, %v9763, 0
      %v9847 = vsel %vm3023, %v9843, 0
      %9849 = vmatprep.subr.mxu0 0.0
      %9850 = vmatpush1.msra.mxu0 %v9847
      %9851 = vmatprep.subr.mxu0 0.0
      %9852 = vmatpush1.msra.mxu0 0.0
      %9853 = vmatprep.subr.mxu0 0.0
      %9854 = vmatpush1.msra.mxu0 0.0
      %9855 = vmatprep.subr.mxu0 0.0
      %9856 = vmatpush1.msra.mxu0 0.0
      %9857 = vmatprep.subr.mxu0 0.0
      %9858 = vmatpush1.msra.mxu0 0.0
      %9859 = vmatprep.subr.mxu0 0.0
      %9860 = vmatpush1.msra.mxu0 0.0
      %9861 = vmatprep.subr.mxu0 0.0
      %9862 = vmatpush1.msra.mxu0 0.0
      %9863 = vmatprep.subr.mxu0 0.0
      %9864 = vmatpush1.msra.mxu0 0.0
      %9865 = vmatprep.subr.mxu0 0.0
      %9866 = vmatpush1.msra.mxu0 0.0
      %9867 = vmatprep.subr.mxu0 0.0
      %9868 = vmatpush1.msra.mxu0 0.0
      %9869 = vmatprep.subr.mxu0 0.0
      %9870 = vmatpush1.msra.mxu0 0.0
      %9871 = vmatprep.subr.mxu0 0.0
      %9872 = vmatpush1.msra.mxu0 0.0
      %9873 = vmatprep.subr.mxu0 0.0
      %9874 = vmatpush1.msra.mxu0 0.0
      %9875 = vmatprep.subr.mxu0 0.0
      %9876 = vmatpush1.msra.mxu0 0.0
      %9877 = vmatprep.subr.mxu0 0.0
      %9878 = vmatpush1.msra.mxu0 0.0
      %9879 = vmatprep.subr.mxu0 0.0
      %9880 = vmatpush1.msra.mxu0 0.0
      %9881 = vmatprep.subr.mxu0 0.0
      %9882 = vmatpush1.msra.mxu0 0.0
      %9883 = vmatprep.subr.mxu0 0.0
      %9884 = vmatpush1.msra.mxu0 0.0
      %9885 = vmatprep.subr.mxu0 0.0
      %9886 = vmatpush1.msra.mxu0 0.0
      %9887 = vmatprep.subr.mxu0 0.0
      %9888 = vmatpush1.msra.mxu0 0.0
      %9889 = vmatprep.subr.mxu0 0.0
      %9890 = vmatpush1.msra.mxu0 0.0
      %9891 = vmatprep.subr.mxu0 0.0
      %9892 = vmatpush1.msra.mxu0 0.0
      %9893 = vmatprep.subr.mxu0 0.0
      %9894 = vmatpush1.msra.mxu0 0.0
      %9895 = vmatprep.subr.mxu0 0.0
      %9896 = vmatpush1.msra.mxu0 0.0
      %9897 = vmatprep.subr.mxu0 0.0
      %9898 = vmatpush1.msra.mxu0 0.0
      %9899 = vmatprep.subr.mxu0 0.0
      %9900 = vmatpush1.msra.mxu0 0.0
      %9901 = vmatprep.subr.mxu0 0.0
      %9902 = vmatpush1.msra.mxu0 0.0
      %9903 = vmatprep.subr.mxu0 0.0
      %9904 = vmatpush1.msra.mxu0 0.0
      %9905 = vmatprep.subr.mxu0 0.0
      %9906 = vmatpush1.msra.mxu0 0.0
      %9907 = vmatprep.subr.mxu0 0.0
      %9908 = vmatpush1.msra.mxu0 0.0
      %9909 = vmatprep.subr.mxu0 0.0
      %9910 = vmatpush1.msra.mxu0 0.0
      %9911 = vmatprep.subr.mxu0 0.0
      %9912 = vmatpush1.msra.mxu0 0.0
      %9913 = vmatprep.mubr.f32.mxu0 0.0
      %9914 = vmatmul.mubr.f32.gmra.mrb[0].mxu0 %v9845
      %v9915 = vpop.f32.mrb[0].mxu0
      %v9916 = vadd.f32 0.0, %v9915
      %v9917 = vpop.f32.mrb[0].mxu0
      %9918 = vdwg.mxu0
      %9919 = vrot.lane.b32.xlu0 %v8426, 104
      %v9920 = vpop.permute.xlu0 %9919
      %v9922 = vsel %vm3019, %v9764, 0
      %v9924 = vsel %vm3023, %v9920, 0
      %9926 = vmatprep.subr.mxu0 0.0
      %9927 = vmatpush1.msra.mxu0 %v9924
      %9928 = vmatprep.subr.mxu0 0.0
      %9929 = vmatpush1.msra.mxu0 0.0
      %9930 = vmatprep.subr.mxu0 0.0
      %9931 = vmatpush1.msra.mxu0 0.0
      %9932 = vmatprep.subr.mxu0 0.0
      %9933 = vmatpush1.msra.mxu0 0.0
      %9934 = vmatprep.subr.mxu0 0.0
      %9935 = vmatpush1.msra.mxu0 0.0
      %9936 = vmatprep.subr.mxu0 0.0
      %9937 = vmatpush1.msra.mxu0 0.0
      %9938 = vmatprep.subr.mxu0 0.0
      %9939 = vmatpush1.msra.mxu0 0.0
      %9940 = vmatprep.subr.mxu0 0.0
      %9941 = vmatpush1.msra.mxu0 0.0
      %9942 = vmatprep.subr.mxu0 0.0
      %9943 = vmatpush1.msra.mxu0 0.0
      %9944 = vmatprep.subr.mxu0 0.0
      %9945 = vmatpush1.msra.mxu0 0.0
      %9946 = vmatprep.subr.mxu0 0.0
      %9947 = vmatpush1.msra.mxu0 0.0
      %9948 = vmatprep.subr.mxu0 0.0
      %9949 = vmatpush1.msra.mxu0 0.0
      %9950 = vmatprep.subr.mxu0 0.0
      %9951 = vmatpush1.msra.mxu0 0.0
      %9952 = vmatprep.subr.mxu0 0.0
      %9953 = vmatpush1.msra.mxu0 0.0
      %9954 = vmatprep.subr.mxu0 0.0
      %9955 = vmatpush1.msra.mxu0 0.0
      %9956 = vmatprep.subr.mxu0 0.0
      %9957 = vmatpush1.msra.mxu0 0.0
      %9958 = vmatprep.subr.mxu0 0.0
      %9959 = vmatpush1.msra.mxu0 0.0
      %9960 = vmatprep.subr.mxu0 0.0
      %9961 = vmatpush1.msra.mxu0 0.0
      %9962 = vmatprep.subr.mxu0 0.0
      %9963 = vmatpush1.msra.mxu0 0.0
      %9964 = vmatprep.subr.mxu0 0.0
      %9965 = vmatpush1.msra.mxu0 0.0
      %9966 = vmatprep.subr.mxu0 0.0
      %9967 = vmatpush1.msra.mxu0 0.0
      %9968 = vmatprep.subr.mxu0 0.0
      %9969 = vmatpush1.msra.mxu0 0.0
      %9970 = vmatprep.subr.mxu0 0.0
      %9971 = vmatpush1.msra.mxu0 0.0
      %9972 = vmatprep.subr.mxu0 0.0
      %9973 = vmatpush1.msra.mxu0 0.0
      %9974 = vmatprep.subr.mxu0 0.0
      %9975 = vmatpush1.msra.mxu0 0.0
      %9976 = vmatprep.subr.mxu0 0.0
      %9977 = vmatpush1.msra.mxu0 0.0
      %9978 = vmatprep.subr.mxu0 0.0
      %9979 = vmatpush1.msra.mxu0 0.0
      %9980 = vmatprep.subr.mxu0 0.0
      %9981 = vmatpush1.msra.mxu0 0.0
      %9982 = vmatprep.subr.mxu0 0.0
      %9983 = vmatpush1.msra.mxu0 0.0
      %9984 = vmatprep.subr.mxu0 0.0
      %9985 = vmatpush1.msra.mxu0 0.0
      %9986 = vmatprep.subr.mxu0 0.0
      %9987 = vmatpush1.msra.mxu0 0.0
      %9988 = vmatprep.subr.mxu0 0.0
      %9989 = vmatpush1.msra.mxu0 0.0
      %9990 = vmatprep.mubr.f32.mxu0 0.0
      %9991 = vmatmul.mubr.f32.gmra.mrb[0].mxu0 %v9922
      %v9992 = vpop.f32.mrb[0].mxu0
      %v9993 = vadd.f32 0.0, %v9992
      %v9994 = vpop.f32.mrb[0].mxu0
      %9995 = vdwg.mxu0
      %9999 = vrot.lane.b32.xlu0 %v8843, 8
      %v10000 = vpop.permute.xlu0 %9999
      %10001 = vrot.lane.b32.xlu0 %v8920, 8
      %v10002 = vpop.permute.xlu0 %10001
      %10003 = vrot.lane.b32.xlu0 %v8997, 8
      %v10004 = vpop.permute.xlu0 %10003
      %10011 = vrot.lane.b32.xlu0 %v9341, 16
      %v10012 = vpop.permute.xlu0 %10011
      %10013 = vrot.lane.b32.xlu0 %v9418, 16
      %v10014 = vpop.permute.xlu0 %10013
      %10015 = vrot.lane.b32.xlu0 %v9495, 16
      %v10016 = vpop.permute.xlu0 %10015
      %10023 = vrot.lane.b32.xlu0 %v9839, 24
      %v10024 = vpop.permute.xlu0 %10023
      %10025 = vrot.lane.b32.xlu0 %v9916, 24
      %v10026 = vpop.permute.xlu0 %10025
      %10027 = vrot.lane.b32.xlu0 %v9993, 24
      %v10028 = vpop.permute.xlu0 %10027
      %v10032 = vsel %vm2567, %v8271, %v10000
      %v10033 = vsel %vm2567, %v8385, %v10002
      %v10034 = vsel %vm2567, %v8499, %v10004
      %v10035 = vsel %vm4857, %v10032, %v10012
      %v10036 = vsel %vm4857, %v10033, %v10014
      %v10037 = vsel %vm4857, %v10034, %v10016
      %v10038 = vsel %vm4861, %v10035, %v10024
      %v10039 = vsel %vm4861, %v10036, %v10026
      %v10040 = vsel %vm4861, %v10037, %v10028
      %v10044 = vcombine.high %v10038, %v10038
      %v10046 = vunpack.c.l.s4 1966171168
      %v10047 = vunpack.c.0.s8 %v10046
      %v10048 = vlaneseq
      %v10049 = vshrl.u32 %v10048, 7
      %v10050 = vsub.s32 %v10047, %v10049
      %v10051 = vrot.slane %v10038, %v10050
      %v10053 = vunpack.c.l.s4 1966171168
      %v10054 = vunpack.c.0.s8 %v10053
      %v10055 = vlaneseq
      %v10056 = vshrl.u32 %v10055, 7
      %v10057 = vsub.s32 %v10054, %v10056
      %v10058 = vrot.slane %v10044, %v10057
      %v10059 = vcombine.high %v10051, %v10051
      %v10061 = vunpack.c.l.s4 1966171168
      %v10062 = vunpack.c.0.s8 %v10061
      %v10063 = vlaneseq
      %v10064 = vshrl.u32 %v10063, 7
      %v10065 = vsub.s32 %v10062, %v10064
      %v10066 = vrot.slane %v10051, %v10065
      %v10068 = vunpack.c.l.s4 1966171168
      %v10069 = vunpack.c.0.s8 %v10068
      %v10070 = vlaneseq
      %v10071 = vshrl.u32 %v10070, 7
      %v10072 = vsub.s32 %v10069, %v10071
      %v10073 = vrot.slane %v10058, %v10072
      %v10075 = vunpack.c.l.s4 1966171168
      %v10076 = vunpack.c.0.s8 %v10075
      %v10077 = vlaneseq
      %v10078 = vshrl.u32 %v10077, 7
      %v10079 = vsub.s32 %v10076, %v10078
      %v10080 = vrot.slane %v10059, %v10079
      %v10081 = vcombine.high %v10066, %v10066
      %v10082 = vcombine.high %v10080, %v10080
      %v10083 = vcombine.high %v10039, %v10039
      %v10085 = vunpack.c.l.s4 1966171168
      %v10086 = vunpack.c.0.s8 %v10085
      %v10087 = vlaneseq
      %v10088 = vshrl.u32 %v10087, 7
      %v10089 = vsub.s32 %v10086, %v10088
      %v10090 = vrot.slane %v10039, %v10089
      %v10092 = vunpack.c.l.s4 1966171168
      %v10093 = vunpack.c.0.s8 %v10092
      %v10094 = vlaneseq
      %v10095 = vshrl.u32 %v10094, 7
      %v10096 = vsub.s32 %v10093, %v10095
      %v10097 = vrot.slane %v10083, %v10096
      %v10098 = vcombine.high %v10090, %v10090
      %v10100 = vunpack.c.l.s4 1966171168
      %v10101 = vunpack.c.0.s8 %v10100
      %v10102 = vlaneseq
      %v10103 = vshrl.u32 %v10102, 7
      %v10104 = vsub.s32 %v10101, %v10103
      %v10105 = vrot.slane %v10090, %v10104
      %v10107 = vunpack.c.l.s4 1966171168
      %v10108 = vunpack.c.0.s8 %v10107
      %v10109 = vlaneseq
      %v10110 = vshrl.u32 %v10109, 7
      %v10111 = vsub.s32 %v10108, %v10110
      %v10112 = vrot.slane %v10097, %v10111
      %v10114 = vunpack.c.l.s4 1966171168
      %v10115 = vunpack.c.0.s8 %v10114
      %v10116 = vlaneseq
      %v10117 = vshrl.u32 %v10116, 7
      %v10118 = vsub.s32 %v10115, %v10117
      %v10119 = vrot.slane %v10098, %v10118
      %v10120 = vcombine.high %v10105, %v10105
      %v10121 = vcombine.high %v10119, %v10119
      %v10122 = vcombine.high %v10040, %v10040
      %v10124 = vunpack.c.l.s4 1966171168
      %v10125 = vunpack.c.0.s8 %v10124
      %v10126 = vlaneseq
      %v10127 = vshrl.u32 %v10126, 7
      %v10128 = vsub.s32 %v10125, %v10127
      %v10129 = vrot.slane %v10040, %v10128
      %v10131 = vunpack.c.l.s4 1966171168
      %v10132 = vunpack.c.0.s8 %v10131
      %v10133 = vlaneseq
      %v10134 = vshrl.u32 %v10133, 7
      %v10135 = vsub.s32 %v10132, %v10134
      %v10136 = vrot.slane %v10122, %v10135
      %v10137 = vcombine.high %v10129, %v10129
      %v10139 = vunpack.c.l.s4 1966171168
      %v10140 = vunpack.c.0.s8 %v10139
      %v10141 = vlaneseq
      %v10142 = vshrl.u32 %v10141, 7
      %v10143 = vsub.s32 %v10140, %v10142
      %v10144 = vrot.slane %v10129, %v10143
      %v10146 = vunpack.c.l.s4 1966171168
      %v10147 = vunpack.c.0.s8 %v10146
      %v10148 = vlaneseq
      %v10149 = vshrl.u32 %v10148, 7
      %v10150 = vsub.s32 %v10147, %v10149
      %v10151 = vrot.slane %v10136, %v10150
      %v10153 = vunpack.c.l.s4 1966171168
      %v10154 = vunpack.c.0.s8 %v10153
      %v10155 = vlaneseq
      %v10156 = vshrl.u32 %v10155, 7
      %v10157 = vsub.s32 %v10154, %v10156
      %v10158 = vrot.slane %v10137, %v10157
      %v10159 = vcombine.high %v10144, %v10144
      %v10160 = vcombine.high %v10158, %v10158
      %s10161 = scalar_lea.vmem %s12, 32
      %v10162 = vld [vmem:[%s10161] sm:$0xff]
      %v10163 = vld [vmem:[%s10161 + $0x8] sm:$0xff]
      %v10164 = vld [vmem:[%s10161 + $0x10] sm:$0xff]
      %v10165 = vld [vmem:[%s10161 + $0x18] sm:$0xff]
      %s10166 = scalar_lea.vmem %s13, 1
      %v10167 = vld [vmem:[%s10166] sm:$0x1]
      %v10169 = vlaneseq
      %v10170 = vshrl.u32 %v10169, 7
      %v10171 = vsub.s32 0, %v10170
      %v10172 = vrot.slane %v10167, %v10171
      %v10174 = vcombine.low %v10066, %v10080
      %v10175 = vcombine.low %v10081, %v10082
      %v10176 = vcombine.low %v10073, %v10105
      %v10177 = vcombine.low %v10119, %v10120
      %v10179 = vunpack.c.l.s4 1966171168
      %v10180 = vunpack.c.0.s8 %v10179
      %v10181 = vlaneseq
      %v10182 = vshrl.u32 %v10181, 7
      %v10183 = vsub.s32 %v10180, %v10182
      %v10184 = vrot.slane %v10174, %v10183
      %v10186 = vunpack.c.l.s4 1966171168
      %v10187 = vunpack.c.0.s8 %v10186
      %v10188 = vlaneseq
      %v10189 = vshrl.u32 %v10188, 7
      %v10190 = vsub.s32 %v10187, %v10189
      %v10191 = vrot.slane %v10175, %v10190
      %v10193 = vunpack.c.l.s4 1966171168
      %v10194 = vunpack.c.0.s8 %v10193
      %v10195 = vlaneseq
      %v10196 = vshrl.u32 %v10195, 7
      %v10197 = vsub.s32 %v10194, %v10196
      %v10198 = vrot.slane %v10176, %v10197
      %v10200 = vunpack.c.l.s4 1966171168
      %v10201 = vunpack.c.0.s8 %v10200
      %v10202 = vlaneseq
      %v10203 = vshrl.u32 %v10202, 7
      %v10204 = vsub.s32 %v10201, %v10203
      %v10205 = vrot.slane %v10177, %v10204
      %v10206 = vcombine.low %v10184, %v10191
      %v10207 = vcombine.low %v10198, %v10205
      %v10209 = vunpack.c.l.s4 1966171168
      %v10210 = vunpack.c.0.s8 %v10209
      %v10211 = vlaneseq
      %v10212 = vshrl.u32 %v10211, 7
      %v10213 = vsub.s32 %v10210, %v10212
      %v10214 = vrot.slane %v10206, %v10213
      %v10216 = vunpack.c.l.s4 1966171168
      %v10217 = vunpack.c.0.s8 %v10216
      %v10218 = vlaneseq
      %v10219 = vshrl.u32 %v10218, 7
      %v10220 = vsub.s32 %v10217, %v10219
      %v10221 = vrot.slane %v10207, %v10220
      %v10222 = vcombine.low %v10214, %v10221
      %v10223 = vcombine.low %v10121, %v10112
      %v10224 = vcombine.low %v10144, %v10158
      %v10225 = vcombine.low %v10159, %v10160
      %v10227 = vunpack.c.l.s4 1966171168
      %v10228 = vunpack.c.0.s8 %v10227
      %v10229 = vlaneseq
      %v10230 = vshrl.u32 %v10229, 7
      %v10231 = vsub.s32 %v10228, %v10230
      %v10232 = vrot.slane %v10223, %v10231
      %v10234 = vunpack.c.l.s4 1966171168
      %v10235 = vunpack.c.0.s8 %v10234
      %v10236 = vlaneseq
      %v10237 = vshrl.u32 %v10236, 7
      %v10238 = vsub.s32 %v10235, %v10237
      %v10239 = vrot.slane %v10224, %v10238
      %v10241 = vunpack.c.l.s4 1966171168
      %v10242 = vunpack.c.0.s8 %v10241
      %v10243 = vlaneseq
      %v10244 = vshrl.u32 %v10243, 7
      %v10245 = vsub.s32 %v10242, %v10244
      %v10246 = vrot.slane %v10225, %v10245
      %v10248 = vunpack.c.l.s4 1966171168
      %v10249 = vunpack.c.0.s8 %v10248
      %v10250 = vlaneseq
      %v10251 = vshrl.u32 %v10250, 7
      %v10252 = vsub.s32 %v10249, %v10251
      %v10253 = vrot.slane %v10151, %v10252
      %v10254 = vcombine.low %v10232, %v10239
      %v10255 = vcombine.low %v10246, %v10253
      %v10257 = vunpack.c.l.s4 1966171168
      %v10258 = vunpack.c.0.s8 %v10257
      %v10259 = vlaneseq
      %v10260 = vshrl.u32 %v10259, 7
      %v10261 = vsub.s32 %v10258, %v10260
      %v10262 = vrot.slane %v10254, %v10261
      %v10264 = vunpack.c.l.s4 1966171168
      %v10265 = vunpack.c.0.s8 %v10264
      %v10266 = vlaneseq
      %v10267 = vshrl.u32 %v10266, 7
      %v10268 = vsub.s32 %v10265, %v10267
      %v10269 = vrot.slane %v10255, %v10268
      %v10270 = vcombine.low %v10262, %v10269
      %v10271 = vsel %vm1326, %v10222, 0
      %v10273 = vsel %vm1326, %v10270, 0
      %10275 = vmatprep.subr.mxu0 0.0
      %10276 = vmatpush1.msra.mxu0 %v10162
      %10277 = vmatprep.subr.mxu0 0.0
      %10278 = vmatpush1.msra.mxu0 %v10163
      %10279 = vmatprep.subr.mxu0 0.0
      %10280 = vmatpush1.msra.mxu0 %v10164
      %10281 = vmatprep.subr.mxu0 0.0
      %10282 = vmatpush1.msra.mxu0 %v10165
      %10283 = vmatprep.subr.mxu0 0.0
      %10284 = vmatpush1.msra.mxu0 0.0
      %10285 = vmatprep.subr.mxu0 0.0
      %10286 = vmatpush1.msra.mxu0 0.0
      %10287 = vmatprep.subr.mxu0 0.0
      %10288 = vmatpush1.msra.mxu0 0.0
      %10289 = vmatprep.subr.mxu0 0.0
      %10290 = vmatpush1.msra.mxu0 0.0
      %10291 = vmatprep.subr.mxu0 0.0
      %10292 = vmatpush1.msra.mxu0 0.0
      %10293 = vmatprep.subr.mxu0 0.0
      %10294 = vmatpush1.msra.mxu0 0.0
      %10295 = vmatprep.subr.mxu0 0.0
      %10296 = vmatpush1.msra.mxu0 0.0
      %10297 = vmatprep.subr.mxu0 0.0
      %10298 = vmatpush1.msra.mxu0 0.0
      %10299 = vmatprep.subr.mxu0 0.0
      %10300 = vmatpush1.msra.mxu0 0.0
      %10301 = vmatprep.subr.mxu0 0.0
      %10302 = vmatpush1.msra.mxu0 0.0
      %10303 = vmatprep.subr.mxu0 0.0
      %10304 = vmatpush1.msra.mxu0 0.0
      %10305 = vmatprep.subr.mxu0 0.0
      %10306 = vmatpush1.msra.mxu0 0.0
      %10307 = vmatprep.subr.mxu0 0.0
      %10308 = vmatpush1.msra.mxu0 0.0
      %10309 = vmatprep.subr.mxu0 0.0
      %10310 = vmatpush1.msra.mxu0 0.0
      %10311 = vmatprep.subr.mxu0 0.0
      %10312 = vmatpush1.msra.mxu0 0.0
      %10313 = vmatprep.subr.mxu0 0.0
      %10314 = vmatpush1.msra.mxu0 0.0
      %10315 = vmatprep.subr.mxu0 0.0
      %10316 = vmatpush1.msra.mxu0 0.0
      %10317 = vmatprep.subr.mxu0 0.0
      %10318 = vmatpush1.msra.mxu0 0.0
      %10319 = vmatprep.subr.mxu0 0.0
      %10320 = vmatpush1.msra.mxu0 0.0
      %10321 = vmatprep.subr.mxu0 0.0
      %10322 = vmatpush1.msra.mxu0 0.0
      %10323 = vmatprep.subr.mxu0 0.0
      %10324 = vmatpush1.msra.mxu0 0.0
      %10325 = vmatprep.subr.mxu0 0.0
      %10326 = vmatpush1.msra.mxu0 0.0
      %10327 = vmatprep.subr.mxu0 0.0
      %10328 = vmatpush1.msra.mxu0 0.0
      %10329 = vmatprep.subr.mxu0 0.0
      %10330 = vmatpush1.msra.mxu0 0.0
      %10331 = vmatprep.subr.mxu0 0.0
      %10332 = vmatpush1.msra.mxu0 0.0
      %10333 = vmatprep.subr.mxu0 0.0
      %10334 = vmatpush1.msra.mxu0 0.0
      %10335 = vmatprep.subr.mxu0 0.0
      %10336 = vmatpush1.msra.mxu0 0.0
      %10337 = vmatprep.subr.mxu0 0.0
      %10338 = vmatpush1.msra.mxu0 0.0
      %10339 = vmatprep.mubr.f32.mxu0 0.0
      %10340 = vmatmul.mubr.f32.gmra.mrb[0].mxu0 %v10271
      %v10341 = vpop.f32.mrb[0].mxu0
      %v10342 = vadd.f32 %v10172, %v10341
      %v10343 = vpop.f32.mrb[0].mxu0
      %10344 = vmatprep.mubr.f32.mxu0 0.0
      %10345 = vmatmul.mubr.f32.gmra.mrb[0].mxu0 %v10273
      %v10346 = vpop.f32.mrb[0].mxu0
      %v10347 = vadd.f32 %v10172, %v10346
      %v10348 = vpop.f32.mrb[0].mxu0
      %10349 = vdwg.mxu0
      %v10352 = vcombine.high %v10342, %v10342
      %v10354 = vunpack.c.l.s4 1966171168
      %v10355 = vunpack.c.0.s8 %v10354
      %v10356 = vlaneseq
      %v10357 = vshrl.u32 %v10356, 7
      %v10358 = vsub.s32 %v10355, %v10357
      %v10359 = vrot.slane %v10342, %v10358
      %v10361 = vunpack.c.l.s4 1966171168
      %v10362 = vunpack.c.0.s8 %v10361
      %v10363 = vlaneseq
      %v10364 = vshrl.u32 %v10363, 7
      %v10365 = vsub.s32 %v10362, %v10364
      %v10366 = vrot.slane %v10352, %v10365
      %v10367 = vcombine.high %v10359, %v10359
      %v10368 = vcombine.high %v10366, %v10366
      %v10370 = vunpack.c.l.s4 1966171168
      %v10371 = vunpack.c.0.s8 %v10370
      %v10372 = vlaneseq
      %v10373 = vshrl.u32 %v10372, 7
      %v10374 = vsub.s32 %v10371, %v10373
      %v10375 = vrot.slane %v10359, %v10374
      %v10377 = vunpack.c.l.s4 1966171168
      %v10378 = vunpack.c.0.s8 %v10377
      %v10379 = vlaneseq
      %v10380 = vshrl.u32 %v10379, 7
      %v10381 = vsub.s32 %v10378, %v10380
      %v10382 = vrot.slane %v10366, %v10381
      %v10384 = vunpack.c.l.s4 1966171168
      %v10385 = vunpack.c.0.s8 %v10384
      %v10386 = vlaneseq
      %v10387 = vshrl.u32 %v10386, 7
      %v10388 = vsub.s32 %v10385, %v10387
      %v10389 = vrot.slane %v10367, %v10388
      %v10391 = vunpack.c.l.s4 1966171168
      %v10392 = vunpack.c.0.s8 %v10391
      %v10393 = vlaneseq
      %v10394 = vshrl.u32 %v10393, 7
      %v10395 = vsub.s32 %v10392, %v10394
      %v10396 = vrot.slane %v10368, %v10395
      %v10397 = vcombine.high %v10375, %v10375
      %v10398 = vcombine.high %v10382, %v10382
      %v10399 = vcombine.high %v10389, %v10389
      %v10400 = vcombine.high %v10396, %v10396
      %v10401 = vcombine.high %v10347, %v10347
      %v10403 = vunpack.c.l.s4 1966171168
      %v10404 = vunpack.c.0.s8 %v10403
      %v10405 = vlaneseq
      %v10406 = vshrl.u32 %v10405, 7
      %v10407 = vsub.s32 %v10404, %v10406
      %v10408 = vrot.slane %v10347, %v10407
      %v10410 = vunpack.c.l.s4 1966171168
      %v10411 = vunpack.c.0.s8 %v10410
      %v10412 = vlaneseq
      %v10413 = vshrl.u32 %v10412, 7
      %v10414 = vsub.s32 %v10411, %v10413
      %v10415 = vrot.slane %v10401, %v10414
      %v10416 = vcombine.high %v10408, %v10408
      %v10417 = vcombine.high %v10415, %v10415
      %v10419 = vunpack.c.l.s4 1966171168
      %v10420 = vunpack.c.0.s8 %v10419
      %v10421 = vlaneseq
      %v10422 = vshrl.u32 %v10421, 7
      %v10423 = vsub.s32 %v10420, %v10422
      %v10424 = vrot.slane %v10408, %v10423
      %v10426 = vunpack.c.l.s4 1966171168
      %v10427 = vunpack.c.0.s8 %v10426
      %v10428 = vlaneseq
      %v10429 = vshrl.u32 %v10428, 7
      %v10430 = vsub.s32 %v10427, %v10429
      %v10431 = vrot.slane %v10415, %v10430
      %v10433 = vunpack.c.l.s4 1966171168
      %v10434 = vunpack.c.0.s8 %v10433
      %v10435 = vlaneseq
      %v10436 = vshrl.u32 %v10435, 7
      %v10437 = vsub.s32 %v10434, %v10436
      %v10438 = vrot.slane %v10416, %v10437
      %v10440 = vunpack.c.l.s4 1966171168
      %v10441 = vunpack.c.0.s8 %v10440
      %v10442 = vlaneseq
      %v10443 = vshrl.u32 %v10442, 7
      %v10444 = vsub.s32 %v10441, %v10443
      %v10445 = vrot.slane %v10417, %v10444
      %v10446 = vcombine.high %v10424, %v10424
      %v10447 = vcombine.high %v10431, %v10431
      %v10448 = vcombine.high %v10438, %v10438
      %v10464 = vadd.f32 %v6372, %v10375
      %v10465 = vadd.f32 %v6373, %v10389
      %v10466 = vadd.f32 %v6374, %v10397
      %v10467 = vadd.f32 %v6375, %v10399
      %v10468 = vadd.f32 %v6376, %v10382
      %v10469 = vadd.f32 %v6377, %v10396
      %v10470 = vadd.f32 %v6378, %v10398
      %v10471 = vadd.f32 %v6379, %v10400
      %v10472 = vadd.f32 %v6380, %v10424
      %v10473 = vadd.f32 %v6381, %v10438
      %v10474 = vadd.f32 %v6382, %v10446
      %v10475 = vadd.f32 %v6383, %v10448
      %v10476 = vadd.f32 %v6384, %v10431
      %v10477 = vadd.f32 %v6385, %v10445
      %v10478 = vadd.f32 %v6386, %v10447
      %s10479 = scalar_lea.vmem %s14, 1
      %v10480 = vld [vmem:[%s10479] sm:$0x1]
      %s10481 = scalar_lea.vmem %s15, 1
      %v10482 = vld [vmem:[%s10481] sm:$0x1]
      %v10498 = vcombine.low %v10464, %v10465
      %v10499 = vcombine.low %v10466, %v10467
      %v10500 = vcombine.low %v10468, %v10469
      %v10501 = vcombine.low %v10470, %v10471
      %v10503 = vunpack.c.l.s4 1966171168
      %v10504 = vunpack.c.0.s8 %v10503
      %v10505 = vlaneseq
      %v10506 = vshrl.u32 %v10505, 7
      %v10507 = vsub.s32 %v10504, %v10506
      %v10508 = vrot.slane %v10498, %v10507
      %v10510 = vunpack.c.l.s4 1966171168
      %v10511 = vunpack.c.0.s8 %v10510
      %v10512 = vlaneseq
      %v10513 = vshrl.u32 %v10512, 7
      %v10514 = vsub.s32 %v10511, %v10513
      %v10515 = vrot.slane %v10499, %v10514
      %v10517 = vunpack.c.l.s4 1966171168
      %v10518 = vunpack.c.0.s8 %v10517
      %v10519 = vlaneseq
      %v10520 = vshrl.u32 %v10519, 7
      %v10521 = vsub.s32 %v10518, %v10520
      %v10522 = vrot.slane %v10500, %v10521
      %v10524 = vunpack.c.l.s4 1966171168
      %v10525 = vunpack.c.0.s8 %v10524
      %v10526 = vlaneseq
      %v10527 = vshrl.u32 %v10526, 7
      %v10528 = vsub.s32 %v10525, %v10527
      %v10529 = vrot.slane %v10501, %v10528
      %v10530 = vcombine.low %v10508, %v10515
      %v10531 = vcombine.low %v10522, %v10529
      %v10533 = vunpack.c.l.s4 1966171168
      %v10534 = vunpack.c.0.s8 %v10533
      %v10535 = vlaneseq
      %v10536 = vshrl.u32 %v10535, 7
      %v10537 = vsub.s32 %v10534, %v10536
      %v10538 = vrot.slane %v10530, %v10537
      %v10540 = vunpack.c.l.s4 1966171168
      %v10541 = vunpack.c.0.s8 %v10540
      %v10542 = vlaneseq
      %v10543 = vshrl.u32 %v10542, 7
      %v10544 = vsub.s32 %v10541, %v10543
      %v10545 = vrot.slane %v10531, %v10544
      %v10546 = vcombine.low %v10538, %v10545
      %v10547 = vcombine.low %v10472, %v10473
      %v10548 = vcombine.low %v10474, %v10475
      %v10549 = vcombine.low %v10476, %v10477
      %v10551 = vunpack.c.l.s4 1966171168
      %v10552 = vunpack.c.0.s8 %v10551
      %v10553 = vlaneseq
      %v10554 = vshrl.u32 %v10553, 7
      %v10555 = vsub.s32 %v10552, %v10554
      %v10556 = vrot.slane %v10547, %v10555
      %v10558 = vunpack.c.l.s4 1966171168
      %v10559 = vunpack.c.0.s8 %v10558
      %v10560 = vlaneseq
      %v10561 = vshrl.u32 %v10560, 7
      %v10562 = vsub.s32 %v10559, %v10561
      %v10563 = vrot.slane %v10548, %v10562
      %v10565 = vunpack.c.l.s4 1966171168
      %v10566 = vunpack.c.0.s8 %v10565
      %v10567 = vlaneseq
      %v10568 = vshrl.u32 %v10567, 7
      %v10569 = vsub.s32 %v10566, %v10568
      %v10570 = vrot.slane %v10549, %v10569
      %v10572 = vunpack.c.l.s4 1966171168
      %v10573 = vunpack.c.0.s8 %v10572
      %v10574 = vlaneseq
      %v10575 = vshrl.u32 %v10574, 7
      %v10576 = vsub.s32 %v10573, %v10575
      %v10577 = vrot.slane %v10478, %v10576
      %v10578 = vcombine.low %v10556, %v10563
      %v10579 = vcombine.low %v10570, %v10577
      %v10581 = vunpack.c.l.s4 1966171168
      %v10582 = vunpack.c.0.s8 %v10581
      %v10583 = vlaneseq
      %v10584 = vshrl.u32 %v10583, 7
      %v10585 = vsub.s32 %v10582, %v10584
      %v10586 = vrot.slane %v10578, %v10585
      %v10588 = vunpack.c.l.s4 1966171168
      %v10589 = vunpack.c.0.s8 %v10588
      %v10590 = vlaneseq
      %v10591 = vshrl.u32 %v10590, 7
      %v10592 = vsub.s32 %v10589, %v10591
      %v10593 = vrot.slane %v10579, %v10592
      %v10594 = vcombine.low %v10586, %v10593
      %v10597 = vsel %vm1326, %v10546, 0.0
      %10598 = vadd.xlane.f32.xlu0 %v10597
      %v10599 = vpop.xlane.xlu0 %10598
      %v10600 = vsel %vm1330, %v10594, 0.0
      %10601 = vadd.xlane.f32.xlu0 %v10600
      %v10602 = vpop.xlane.xlu0 %10601
      %v10603 = vmul.f32 %v10599, %v1334
      %v10604 = vmul.f32 %v10602, %v1334
      %v10607 = vlaneseq
      %v10608 = vshrl.u32 %v10607, 7
      %v10609 = vsub.s32 0, %v10608
      %v10610 = vrot.slane %v10603, %v10609
      %v10611 = vlaneseq
      %v10612 = vshrl.u32 %v10611, 7
      %v10613 = vsub.s32 1, %v10612
      %v10614 = vrot.slane %v10603, %v10613
      %v10615 = vlaneseq
      %v10616 = vshrl.u32 %v10615, 7
      %v10617 = vsub.s32 2, %v10616
      %v10618 = vrot.slane %v10603, %v10617
      %v10619 = vlaneseq
      %v10620 = vshrl.u32 %v10619, 7
      %v10621 = vsub.s32 3, %v10620
      %v10622 = vrot.slane %v10603, %v10621
      %v10623 = vlaneseq
      %v10624 = vshrl.u32 %v10623, 7
      %v10625 = vsub.s32 4, %v10624
      %v10626 = vrot.slane %v10603, %v10625
      %v10627 = vlaneseq
      %v10628 = vshrl.u32 %v10627, 7
      %v10629 = vsub.s32 5, %v10628
      %v10630 = vrot.slane %v10603, %v10629
      %v10631 = vlaneseq
      %v10632 = vshrl.u32 %v10631, 7
      %v10633 = vsub.s32 6, %v10632
      %v10634 = vrot.slane %v10603, %v10633
      %v10635 = vlaneseq
      %v10636 = vshrl.u32 %v10635, 7
      %v10637 = vsub.s32 7, %v10636
      %v10638 = vrot.slane %v10603, %v10637
      %v10639 = vlaneseq
      %v10640 = vshrl.u32 %v10639, 7
      %v10641 = vsub.s32 0, %v10640
      %v10642 = vrot.slane %v10604, %v10641
      %v10643 = vlaneseq
      %v10644 = vshrl.u32 %v10643, 7
      %v10645 = vsub.s32 1, %v10644
      %v10646 = vrot.slane %v10604, %v10645
      %v10647 = vlaneseq
      %v10648 = vshrl.u32 %v10647, 7
      %v10649 = vsub.s32 2, %v10648
      %v10650 = vrot.slane %v10604, %v10649
      %v10651 = vlaneseq
      %v10652 = vshrl.u32 %v10651, 7
      %v10653 = vsub.s32 3, %v10652
      %v10654 = vrot.slane %v10604, %v10653
      %v10655 = vlaneseq
      %v10656 = vshrl.u32 %v10655, 7
      %v10657 = vsub.s32 4, %v10656
      %v10658 = vrot.slane %v10604, %v10657
      %v10659 = vlaneseq
      %v10660 = vshrl.u32 %v10659, 7
      %v10661 = vsub.s32 5, %v10660
      %v10662 = vrot.slane %v10604, %v10661
      %v10663 = vlaneseq
      %v10664 = vshrl.u32 %v10663, 7
      %v10665 = vsub.s32 6, %v10664
      %v10666 = vrot.slane %v10604, %v10665
      %v10682 = vsub.f32 %v10464, %v10610
      %v10683 = vsub.f32 %v10465, %v10614
      %v10684 = vsub.f32 %v10466, %v10618
      %v10685 = vsub.f32 %v10467, %v10622
      %v10686 = vsub.f32 %v10468, %v10626
      %v10687 = vsub.f32 %v10469, %v10630
      %v10688 = vsub.f32 %v10470, %v10634
      %v10689 = vsub.f32 %v10471, %v10638
      %v10690 = vsub.f32 %v10472, %v10642
      %v10691 = vsub.f32 %v10473, %v10646
      %v10692 = vsub.f32 %v10474, %v10650
      %v10693 = vsub.f32 %v10475, %v10654
      %v10694 = vsub.f32 %v10476, %v10658
      %v10695 = vsub.f32 %v10477, %v10662
      %v10696 = vsub.f32 %v10478, %v10666
      %v10697 = vmul.f32 %v10682, %v10682
      %v10698 = vmul.f32 %v10683, %v10683
      %v10699 = vmul.f32 %v10684, %v10684
      %v10700 = vmul.f32 %v10685, %v10685
      %v10701 = vmul.f32 %v10686, %v10686
      %v10702 = vmul.f32 %v10687, %v10687
      %v10703 = vmul.f32 %v10688, %v10688
      %v10704 = vmul.f32 %v10689, %v10689
      %v10705 = vmul.f32 %v10690, %v10690
      %v10706 = vmul.f32 %v10691, %v10691
      %v10707 = vmul.f32 %v10692, %v10692
      %v10708 = vmul.f32 %v10693, %v10693
      %v10709 = vmul.f32 %v10694, %v10694
      %v10710 = vmul.f32 %v10695, %v10695
      %v10711 = vmul.f32 %v10696, %v10696
      %v10727 = vcombine.low %v10697, %v10698
      %v10728 = vcombine.low %v10699, %v10700
      %v10729 = vcombine.low %v10701, %v10702
      %v10730 = vcombine.low %v10703, %v10704
      %v10732 = vunpack.c.l.s4 1966171168
      %v10733 = vunpack.c.0.s8 %v10732
      %v10734 = vlaneseq
      %v10735 = vshrl.u32 %v10734, 7
      %v10736 = vsub.s32 %v10733, %v10735
      %v10737 = vrot.slane %v10727, %v10736
      %v10739 = vunpack.c.l.s4 1966171168
      %v10740 = vunpack.c.0.s8 %v10739
      %v10741 = vlaneseq
      %v10742 = vshrl.u32 %v10741, 7
      %v10743 = vsub.s32 %v10740, %v10742
      %v10744 = vrot.slane %v10728, %v10743
      %v10746 = vunpack.c.l.s4 1966171168
      %v10747 = vunpack.c.0.s8 %v10746
      %v10748 = vlaneseq
      %v10749 = vshrl.u32 %v10748, 7
      %v10750 = vsub.s32 %v10747, %v10749
      %v10751 = vrot.slane %v10729, %v10750
      %v10753 = vunpack.c.l.s4 1966171168
      %v10754 = vunpack.c.0.s8 %v10753
      %v10755 = vlaneseq
      %v10756 = vshrl.u32 %v10755, 7
      %v10757 = vsub.s32 %v10754, %v10756
      %v10758 = vrot.slane %v10730, %v10757
      %v10759 = vcombine.low %v10737, %v10744
      %v10760 = vcombine.low %v10751, %v10758
      %v10762 = vunpack.c.l.s4 1966171168
      %v10763 = vunpack.c.0.s8 %v10762
      %v10764 = vlaneseq
      %v10765 = vshrl.u32 %v10764, 7
      %v10766 = vsub.s32 %v10763, %v10765
      %v10767 = vrot.slane %v10759, %v10766
      %v10769 = vunpack.c.l.s4 1966171168
      %v10770 = vunpack.c.0.s8 %v10769
      %v10771 = vlaneseq
      %v10772 = vshrl.u32 %v10771, 7
      %v10773 = vsub.s32 %v10770, %v10772
      %v10774 = vrot.slane %v10760, %v10773
      %v10775 = vcombine.low %v10767, %v10774
      %v10776 = vcombine.low %v10705, %v10706
      %v10777 = vcombine.low %v10707, %v10708
      %v10778 = vcombine.low %v10709, %v10710
      %v10780 = vunpack.c.l.s4 1966171168
      %v10781 = vunpack.c.0.s8 %v10780
      %v10782 = vlaneseq
      %v10783 = vshrl.u32 %v10782, 7
      %v10784 = vsub.s32 %v10781, %v10783
      %v10785 = vrot.slane %v10776, %v10784
      %v10787 = vunpack.c.l.s4 1966171168
      %v10788 = vunpack.c.0.s8 %v10787
      %v10789 = vlaneseq
      %v10790 = vshrl.u32 %v10789, 7
      %v10791 = vsub.s32 %v10788, %v10790
      %v10792 = vrot.slane %v10777, %v10791
      %v10794 = vunpack.c.l.s4 1966171168
      %v10795 = vunpack.c.0.s8 %v10794
      %v10796 = vlaneseq
      %v10797 = vshrl.u32 %v10796, 7
      %v10798 = vsub.s32 %v10795, %v10797
      %v10799 = vrot.slane %v10778, %v10798
      %v10801 = vunpack.c.l.s4 1966171168
      %v10802 = vunpack.c.0.s8 %v10801
      %v10803 = vlaneseq
      %v10804 = vshrl.u32 %v10803, 7
      %v10805 = vsub.s32 %v10802, %v10804
      %v10806 = vrot.slane %v10711, %v10805
      %v10807 = vcombine.low %v10785, %v10792
      %v10808 = vcombine.low %v10799, %v10806
      %v10810 = vunpack.c.l.s4 1966171168
      %v10811 = vunpack.c.0.s8 %v10810
      %v10812 = vlaneseq
      %v10813 = vshrl.u32 %v10812, 7
      %v10814 = vsub.s32 %v10811, %v10813
      %v10815 = vrot.slane %v10807, %v10814
      %v10817 = vunpack.c.l.s4 1966171168
      %v10818 = vunpack.c.0.s8 %v10817
      %v10819 = vlaneseq
      %v10820 = vshrl.u32 %v10819, 7
      %v10821 = vsub.s32 %v10818, %v10820
      %v10822 = vrot.slane %v10808, %v10821
      %v10823 = vcombine.low %v10815, %v10822
      %v10826 = vsel %vm1326, %v10775, 0.0
      %10827 = vadd.xlane.f32.xlu0 %v10826
      %v10828 = vpop.xlane.xlu0 %10827
      %v10829 = vsel %vm1330, %v10823, 0.0
      %10830 = vadd.xlane.f32.xlu0 %v10829
      %v10831 = vpop.xlane.xlu0 %10830
      %v10832 = vmul.f32 %v10828, %v1334
      %v10833 = vmul.f32 %v10831, %v1334
      %v10834 = vadd.f32 %v10832, 1e-06
      %v10835 = vadd.f32 %v10833, 1e-06
      %v10836 = vrsqrt.pop %v10834
      %v10837 = vrsqrt.pop %v10835
      %v10840 = vlaneseq
      %v10841 = vshrl.u32 %v10840, 7
      %v10842 = vsub.s32 0, %v10841
      %v10843 = vrot.slane %v10836, %v10842
      %v10844 = vlaneseq
      %v10845 = vshrl.u32 %v10844, 7
      %v10846 = vsub.s32 1, %v10845
      %v10847 = vrot.slane %v10836, %v10846
      %v10848 = vlaneseq
      %v10849 = vshrl.u32 %v10848, 7
      %v10850 = vsub.s32 2, %v10849
      %v10851 = vrot.slane %v10836, %v10850
      %v10852 = vlaneseq
      %v10853 = vshrl.u32 %v10852, 7
      %v10854 = vsub.s32 3, %v10853
      %v10855 = vrot.slane %v10836, %v10854
      %v10856 = vlaneseq
      %v10857 = vshrl.u32 %v10856, 7
      %v10858 = vsub.s32 4, %v10857
      %v10859 = vrot.slane %v10836, %v10858
      %v10860 = vlaneseq
      %v10861 = vshrl.u32 %v10860, 7
      %v10862 = vsub.s32 5, %v10861
      %v10863 = vrot.slane %v10836, %v10862
      %v10864 = vlaneseq
      %v10865 = vshrl.u32 %v10864, 7
      %v10866 = vsub.s32 6, %v10865
      %v10867 = vrot.slane %v10836, %v10866
      %v10868 = vlaneseq
      %v10869 = vshrl.u32 %v10868, 7
      %v10870 = vsub.s32 7, %v10869
      %v10871 = vrot.slane %v10836, %v10870
      %v10872 = vlaneseq
      %v10873 = vshrl.u32 %v10872, 7
      %v10874 = vsub.s32 0, %v10873
      %v10875 = vrot.slane %v10837, %v10874
      %v10876 = vlaneseq
      %v10877 = vshrl.u32 %v10876, 7
      %v10878 = vsub.s32 1, %v10877
      %v10879 = vrot.slane %v10837, %v10878
      %v10880 = vlaneseq
      %v10881 = vshrl.u32 %v10880, 7
      %v10882 = vsub.s32 2, %v10881
      %v10883 = vrot.slane %v10837, %v10882
      %v10884 = vlaneseq
      %v10885 = vshrl.u32 %v10884, 7
      %v10886 = vsub.s32 3, %v10885
      %v10887 = vrot.slane %v10837, %v10886
      %v10888 = vlaneseq
      %v10889 = vshrl.u32 %v10888, 7
      %v10890 = vsub.s32 4, %v10889
      %v10891 = vrot.slane %v10837, %v10890
      %v10892 = vlaneseq
      %v10893 = vshrl.u32 %v10892, 7
      %v10894 = vsub.s32 5, %v10893
      %v10895 = vrot.slane %v10837, %v10894
      %v10896 = vlaneseq
      %v10897 = vshrl.u32 %v10896, 7
      %v10898 = vsub.s32 6, %v10897
      %v10899 = vrot.slane %v10837, %v10898
      %v10915 = vmul.f32 %v10682, %v10843
      %v10916 = vmul.f32 %v10683, %v10847
      %v10917 = vmul.f32 %v10684, %v10851
      %v10918 = vmul.f32 %v10685, %v10855
      %v10919 = vmul.f32 %v10686, %v10859
      %v10920 = vmul.f32 %v10687, %v10863
      %v10921 = vmul.f32 %v10688, %v10867
      %v10922 = vmul.f32 %v10689, %v10871
      %v10923 = vmul.f32 %v10690, %v10875
      %v10924 = vmul.f32 %v10691, %v10879
      %v10925 = vmul.f32 %v10692, %v10883
      %v10926 = vmul.f32 %v10693, %v10887
      %v10927 = vmul.f32 %v10694, %v10891
      %v10928 = vmul.f32 %v10695, %v10895
      %v10929 = vmul.f32 %v10696, %v10899
      %v10931 = vlaneseq
      %v10932 = vshrl.u32 %v10931, 7
      %v10933 = vsub.s32 0, %v10932
      %v10934 = vrot.slane %v10480, %v10933
      %v10935 = vcombine.high %v10934, %v10934
      %v10937 = vunpack.c.l.s4 1966171168
      %v10938 = vunpack.c.0.s8 %v10937
      %v10939 = vlaneseq
      %v10940 = vshrl.u32 %v10939, 7
      %v10941 = vsub.s32 %v10938, %v10940
      %v10942 = vrot.slane %v10934, %v10941
      %v10944 = vunpack.c.l.s4 1966171168
      %v10945 = vunpack.c.0.s8 %v10944
      %v10946 = vlaneseq
      %v10947 = vshrl.u32 %v10946, 7
      %v10948 = vsub.s32 %v10945, %v10947
      %v10949 = vrot.slane %v10935, %v10948
      %v10950 = vcombine.high %v10942, %v10942
      %v10951 = vcombine.high %v10949, %v10949
      %v10953 = vunpack.c.l.s4 1966171168
      %v10954 = vunpack.c.0.s8 %v10953
      %v10955 = vlaneseq
      %v10956 = vshrl.u32 %v10955, 7
      %v10957 = vsub.s32 %v10954, %v10956
      %v10958 = vrot.slane %v10942, %v10957
      %v10960 = vunpack.c.l.s4 1966171168
      %v10961 = vunpack.c.0.s8 %v10960
      %v10962 = vlaneseq
      %v10963 = vshrl.u32 %v10962, 7
      %v10964 = vsub.s32 %v10961, %v10963
      %v10965 = vrot.slane %v10949, %v10964
      %v10967 = vunpack.c.l.s4 1966171168
      %v10968 = vunpack.c.0.s8 %v10967
      %v10969 = vlaneseq
      %v10970 = vshrl.u32 %v10969, 7
      %v10971 = vsub.s32 %v10968, %v10970
      %v10972 = vrot.slane %v10950, %v10971
      %v10974 = vunpack.c.l.s4 1966171168
      %v10975 = vunpack.c.0.s8 %v10974
      %v10976 = vlaneseq
      %v10977 = vshrl.u32 %v10976, 7
      %v10978 = vsub.s32 %v10975, %v10977
      %v10979 = vrot.slane %v10951, %v10978
      %v10980 = vcombine.high %v10958, %v10958
      %v10981 = vcombine.high %v10965, %v10965
      %v10982 = vcombine.high %v10972, %v10972
      %v10983 = vcombine.high %v10979, %v10979
      %v10992 = vmul.f32 %v10915, %v10958
      %v10993 = vmul.f32 %v10916, %v10972
      %v10994 = vmul.f32 %v10917, %v10980
      %v10995 = vmul.f32 %v10918, %v10982
      %v10996 = vmul.f32 %v10919, %v10965
      %v10997 = vmul.f32 %v10920, %v10979
      %v10998 = vmul.f32 %v10921, %v10981
      %v10999 = vmul.f32 %v10922, %v10983
      %v11000 = vmul.f32 %v10923, %v10958
      %v11001 = vmul.f32 %v10924, %v10972
      %v11002 = vmul.f32 %v10925, %v10980
      %v11003 = vmul.f32 %v10926, %v10982
      %v11004 = vmul.f32 %v10927, %v10965
      %v11005 = vmul.f32 %v10928, %v10979
      %v11006 = vmul.f32 %v10929, %v10981
      %v11008 = vlaneseq
      %v11009 = vshrl.u32 %v11008, 7
      %v11010 = vsub.s32 0, %v11009
      %v11011 = vrot.slane %v10482, %v11010
      %v11012 = vcombine.high %v11011, %v11011
      %v11014 = vunpack.c.l.s4 1966171168
      %v11015 = vunpack.c.0.s8 %v11014
      %v11016 = vlaneseq
      %v11017 = vshrl.u32 %v11016, 7
      %v11018 = vsub.s32 %v11015, %v11017
      %v11019 = vrot.slane %v11011, %v11018
      %v11021 = vunpack.c.l.s4 1966171168
      %v11022 = vunpack.c.0.s8 %v11021
      %v11023 = vlaneseq
      %v11024 = vshrl.u32 %v11023, 7
      %v11025 = vsub.s32 %v11022, %v11024
      %v11026 = vrot.slane %v11012, %v11025
      %v11027 = vcombine.high %v11019, %v11019
      %v11028 = vcombine.high %v11026, %v11026
      %v11030 = vunpack.c.l.s4 1966171168
      %v11031 = vunpack.c.0.s8 %v11030
      %v11032 = vlaneseq
      %v11033 = vshrl.u32 %v11032, 7
      %v11034 = vsub.s32 %v11031, %v11033
      %v11035 = vrot.slane %v11019, %v11034
      %v11037 = vunpack.c.l.s4 1966171168
      %v11038 = vunpack.c.0.s8 %v11037
      %v11039 = vlaneseq
      %v11040 = vshrl.u32 %v11039, 7
      %v11041 = vsub.s32 %v11038, %v11040
      %v11042 = vrot.slane %v11026, %v11041
      %v11044 = vunpack.c.l.s4 1966171168
      %v11045 = vunpack.c.0.s8 %v11044
      %v11046 = vlaneseq
      %v11047 = vshrl.u32 %v11046, 7
      %v11048 = vsub.s32 %v11045, %v11047
      %v11049 = vrot.slane %v11027, %v11048
      %v11051 = vunpack.c.l.s4 1966171168
      %v11052 = vunpack.c.0.s8 %v11051
      %v11053 = vlaneseq
      %v11054 = vshrl.u32 %v11053, 7
      %v11055 = vsub.s32 %v11052, %v11054
      %v11056 = vrot.slane %v11028, %v11055
      %v11057 = vcombine.high %v11035, %v11035
      %v11058 = vcombine.high %v11042, %v11042
      %v11059 = vcombine.high %v11049, %v11049
      %v11060 = vcombine.high %v11056, %v11056
      %v11069 = vadd.f32 %v10992, %v11035
      %v11070 = vadd.f32 %v10993, %v11049
      %v11071 = vadd.f32 %v10994, %v11057
      %v11072 = vadd.f32 %v10995, %v11059
      %v11073 = vadd.f32 %v10996, %v11042
      %v11074 = vadd.f32 %v10997, %v11056
      %v11075 = vadd.f32 %v10998, %v11058
      %v11076 = vadd.f32 %v10999, %v11060
      %v11077 = vadd.f32 %v11000, %v11035
      %v11078 = vadd.f32 %v11001, %v11049
      %v11079 = vadd.f32 %v11002, %v11057
      %v11080 = vadd.f32 %v11003, %v11059
      %v11081 = vadd.f32 %v11004, %v11042
      %v11082 = vadd.f32 %v11005, %v11056
      %v11083 = vadd.f32 %v11006, %v11058
      %s11084 = scalar_lea.vmem %s16, 32
      %v11085 = vld [vmem:[%s11084] sm:$0xff]
      %v11086 = vld [vmem:[%s11084 + $0x8] sm:$0xff]
      %v11087 = vld [vmem:[%s11084 + $0x10] sm:$0xff]
      %v11088 = vld [vmem:[%s11084 + $0x18] sm:$0xff]
      %s11089 = scalar_lea.vmem %s17, 1
      %v11090 = vld [vmem:[%s11089] sm:$0x1]
      %v11092 = vlaneseq
      %v11093 = vshrl.u32 %v11092, 7
      %v11094 = vsub.s32 0, %v11093
      %v11095 = vrot.slane %v11090, %v11094
      %v11112 = vcombine.low %v11069, %v11070
      %v11113 = vcombine.low %v11071, %v11072
      %v11114 = vcombine.low %v11073, %v11074
      %v11115 = vcombine.low %v11075, %v11076
      %v11117 = vunpack.c.l.s4 1966171168
      %v11118 = vunpack.c.0.s8 %v11117
      %v11119 = vlaneseq
      %v11120 = vshrl.u32 %v11119, 7
      %v11121 = vsub.s32 %v11118, %v11120
      %v11122 = vrot.slane %v11112, %v11121
      %v11124 = vunpack.c.l.s4 1966171168
      %v11125 = vunpack.c.0.s8 %v11124
      %v11126 = vlaneseq
      %v11127 = vshrl.u32 %v11126, 7
      %v11128 = vsub.s32 %v11125, %v11127
      %v11129 = vrot.slane %v11113, %v11128
      %v11131 = vunpack.c.l.s4 1966171168
      %v11132 = vunpack.c.0.s8 %v11131
      %v11133 = vlaneseq
      %v11134 = vshrl.u32 %v11133, 7
      %v11135 = vsub.s32 %v11132, %v11134
      %v11136 = vrot.slane %v11114, %v11135
      %v11138 = vunpack.c.l.s4 1966171168
      %v11139 = vunpack.c.0.s8 %v11138
      %v11140 = vlaneseq
      %v11141 = vshrl.u32 %v11140, 7
      %v11142 = vsub.s32 %v11139, %v11141
      %v11143 = vrot.slane %v11115, %v11142
      %v11144 = vcombine.low %v11122, %v11129
      %v11145 = vcombine.low %v11136, %v11143
      %v11147 = vunpack.c.l.s4 1966171168
      %v11148 = vunpack.c.0.s8 %v11147
      %v11149 = vlaneseq
      %v11150 = vshrl.u32 %v11149, 7
      %v11151 = vsub.s32 %v11148, %v11150
      %v11152 = vrot.slane %v11144, %v11151
      %v11154 = vunpack.c.l.s4 1966171168
      %v11155 = vunpack.c.0.s8 %v11154
      %v11156 = vlaneseq
      %v11157 = vshrl.u32 %v11156, 7
      %v11158 = vsub.s32 %v11155, %v11157
      %v11159 = vrot.slane %v11145, %v11158
      %v11160 = vcombine.low %v11152, %v11159
      %v11161 = vcombine.low %v11077, %v11078
      %v11162 = vcombine.low %v11079, %v11080
      %v11163 = vcombine.low %v11081, %v11082
      %v11165 = vunpack.c.l.s4 1966171168
      %v11166 = vunpack.c.0.s8 %v11165
      %v11167 = vlaneseq
      %v11168 = vshrl.u32 %v11167, 7
      %v11169 = vsub.s32 %v11166, %v11168
      %v11170 = vrot.slane %v11161, %v11169
      %v11172 = vunpack.c.l.s4 1966171168
      %v11173 = vunpack.c.0.s8 %v11172
      %v11174 = vlaneseq
      %v11175 = vshrl.u32 %v11174, 7
      %v11176 = vsub.s32 %v11173, %v11175
      %v11177 = vrot.slane %v11162, %v11176
      %v11179 = vunpack.c.l.s4 1966171168
      %v11180 = vunpack.c.0.s8 %v11179
      %v11181 = vlaneseq
      %v11182 = vshrl.u32 %v11181, 7
      %v11183 = vsub.s32 %v11180, %v11182
      %v11184 = vrot.slane %v11163, %v11183
      %v11186 = vunpack.c.l.s4 1966171168
      %v11187 = vunpack.c.0.s8 %v11186
      %v11188 = vlaneseq
      %v11189 = vshrl.u32 %v11188, 7
      %v11190 = vsub.s32 %v11187, %v11189
      %v11191 = vrot.slane %v11083, %v11190
      %v11192 = vcombine.low %v11170, %v11177
      %v11193 = vcombine.low %v11184, %v11191
      %v11195 = vunpack.c.l.s4 1966171168
      %v11196 = vunpack.c.0.s8 %v11195
      %v11197 = vlaneseq
      %v11198 = vshrl.u32 %v11197, 7
      %v11199 = vsub.s32 %v11196, %v11198
      %v11200 = vrot.slane %v11192, %v11199
      %v11202 = vunpack.c.l.s4 1966171168
      %v11203 = vunpack.c.0.s8 %v11202
      %v11204 = vlaneseq
      %v11205 = vshrl.u32 %v11204, 7
      %v11206 = vsub.s32 %v11203, %v11205
      %v11207 = vrot.slane %v11193, %v11206
      %v11208 = vcombine.low %v11200, %v11207
      %v11209 = vsel %vm1326, %v11160, 0
      %v11211 = vsel %vm1326, %v11208, 0
      %11213 = vmatprep.subr.mxu0 0.0
      %11214 = vmatpush1.msra.mxu0 %v11085
      %11215 = vmatprep.subr.mxu0 0.0
      %11216 = vmatpush1.msra.mxu0 %v11086
      %11217 = vmatprep.subr.mxu0 0.0
      %11218 = vmatpush1.msra.mxu0 %v11087
      %11219 = vmatprep.subr.mxu0 0.0
      %11220 = vmatpush1.msra.mxu0 %v11088
      %11221 = vmatprep.subr.mxu0 0.0
      %11222 = vmatpush1.msra.mxu0 0.0
      %11223 = vmatprep.subr.mxu0 0.0
      %11224 = vmatpush1.msra.mxu0 0.0
      %11225 = vmatprep.subr.mxu0 0.0
      %11226 = vmatpush1.msra.mxu0 0.0
      %11227 = vmatprep.subr.mxu0 0.0
      %11228 = vmatpush1.msra.mxu0 0.0
      %11229 = vmatprep.subr.mxu0 0.0
      %11230 = vmatpush1.msra.mxu0 0.0
      %11231 = vmatprep.subr.mxu0 0.0
      %11232 = vmatpush1.msra.mxu0 0.0
      %11233 = vmatprep.subr.mxu0 0.0
      %11234 = vmatpush1.msra.mxu0 0.0
      %11235 = vmatprep.subr.mxu0 0.0
      %11236 = vmatpush1.msra.mxu0 0.0
      %11237 = vmatprep.subr.mxu0 0.0
      %11238 = vmatpush1.msra.mxu0 0.0
      %11239 = vmatprep.subr.mxu0 0.0
      %11240 = vmatpush1.msra.mxu0 0.0
      %11241 = vmatprep.subr.mxu0 0.0
      %11242 = vmatpush1.msra.mxu0 0.0
      %11243 = vmatprep.subr.mxu0 0.0
      %11244 = vmatpush1.msra.mxu0 0.0
      %11245 = vmatprep.subr.mxu0 0.0
      %11246 = vmatpush1.msra.mxu0 0.0
      %11247 = vmatprep.subr.mxu0 0.0
      %11248 = vmatpush1.msra.mxu0 0.0
      %11249 = vmatprep.subr.mxu0 0.0
      %11250 = vmatpush1.msra.mxu0 0.0
      %11251 = vmatprep.subr.mxu0 0.0
      %11252 = vmatpush1.msra.mxu0 0.0
      %11253 = vmatprep.subr.mxu0 0.0
      %11254 = vmatpush1.msra.mxu0 0.0
      %11255 = vmatprep.subr.mxu0 0.0
      %11256 = vmatpush1.msra.mxu0 0.0
      %11257 = vmatprep.subr.mxu0 0.0
      %11258 = vmatpush1.msra.mxu0 0.0
      %11259 = vmatprep.subr.mxu0 0.0
      %11260 = vmatpush1.msra.mxu0 0.0
      %11261 = vmatprep.subr.mxu0 0.0
      %11262 = vmatpush1.msra.mxu0 0.0
      %11263 = vmatprep.subr.mxu0 0.0
      %11264 = vmatpush1.msra.mxu0 0.0
      %11265 = vmatprep.subr.mxu0 0.0
      %11266 = vmatpush1.msra.mxu0 0.0
      %11267 = vmatprep.subr.mxu0 0.0
      %11268 = vmatpush1.msra.mxu0 0.0
      %11269 = vmatprep.subr.mxu0 0.0
      %11270 = vmatpush1.msra.mxu0 0.0
      %11271 = vmatprep.subr.mxu0 0.0
      %11272 = vmatpush1.msra.mxu0 0.0
      %11273 = vmatprep.subr.mxu0 0.0
      %11274 = vmatpush1.msra.mxu0 0.0
      %11275 = vmatprep.subr.mxu0 0.0
      %11276 = vmatpush1.msra.mxu0 0.0
      %11277 = vmatprep.mubr.f32.mxu0 0.0
      %11278 = vmatmul.mubr.f32.gmra.mrb[0].mxu0 %v11209
      %v11279 = vpop.f32.mrb[0].mxu0
      %v11280 = vadd.f32 %v11095, %v11279
      %v11281 = vpop.f32.mrb[0].mxu0
      %11282 = vmatprep.mubr.f32.mxu0 0.0
      %11283 = vmatmul.mubr.f32.gmra.mrb[0].mxu0 %v11211
      %v11284 = vpop.f32.mrb[0].mxu0
      %v11285 = vadd.f32 %v11095, %v11284
      %v11286 = vpop.f32.mrb[0].mxu0
      %11287 = vdwg.mxu0
      %v11288 = vmul.f32 %v11280, 0.5
      %v11289 = vmul.f32 %v11285, 0.5
      %v11290 = vmul.f32 %v11280, 0.70710677
      %v11291 = vmul.f32 %v11285, 0.70710677
      %v11292 = vand.u32 2147483647, %v11290
      %v11293 = vand.u32 2147483647, %v11291
      %v11294 = vmul.f32 %v11292, 0.3275911
      %v11295 = vmul.f32 %v11293, 0.3275911
      %v11296 = vadd.f32 %v11294, 1.0
      %v11297 = vadd.f32 %v11295, 1.0
      %v11298 = vrcp.pop %v11296
      %v11299 = vmul.f32 1.0, %v11298
      %v11300 = vrcp.pop %v11297
      %v11301 = vmul.f32 1.0, %v11300
      %v11302 = vmul.f32 %v11299, 1.0614054
      %v11303 = vmul.f32 %v11301, 1.0614054
      %v11304 = vadd.f32 %v11302, -1.4531521
      %v11305 = vadd.f32 %v11303, -1.4531521
      %v11306 = vmul.f32 %v11304, %v11299
      %v11307 = vmul.f32 %v11305, %v11301
      %v11308 = vadd.f32 %v11306, 1.4214138
      %v11309 = vadd.f32 %v11307, 1.4214138
      %v11310 = vmul.f32 %v11308, %v11299
      %v11311 = vmul.f32 %v11309, %v11301
      %v11312 = vadd.f32 %v11310, -0.28449672
      %v11313 = vadd.f32 %v11311, -0.28449672
      %v11314 = vmul.f32 %v11312, %v11299
      %v11315 = vmul.f32 %v11313, %v11301
      %v11316 = vadd.f32 %v11314, 0.2548296
      %v11317 = vadd.f32 %v11315, 0.2548296
      %v11318 = vmul.f32 %v11316, %v11299
      %v11319 = vmul.f32 %v11317, %v11301
      %v11320 = vsub.f32 0.0, %v11292
      %v11321 = vsub.f32 0.0, %v11293
      %v11322 = vmul.f32 %v11320, %v11292
      %v11323 = vmul.f32 %v11321, %v11293
      %v11324 = vmul.f32 %v11322, 1.442695
      %v11325 = vpow.pop %v11324
      %v11326 = vmul.f32 %v11323, 1.442695
      %v11327 = vpow.pop %v11326
      %v11328 = vmul.f32 %v11318, %v11325
      %v11329 = vmul.f32 %v11319, %v11327
      %v11330 = vsub.f32 1.0, %v11328
      %v11331 = vsub.f32 1.0, %v11329
      %vm11332 = vcmp.ge.f32.partialorder %v11290, 0.0
      %vm11333 = vcmp.ge.f32.partialorder %v11291, 0.0
      %v11334 = vsub.f32 0.0, %v11330
      %v11335 = vsub.f32 0.0, %v11331
      %v11336 = vsel %vm11332, %v11330, %v11334
      %v11337 = vsel %vm11333, %v11331, %v11335
      %v11338 = vadd.f32 %v11336, 1.0
      %v11339 = vadd.f32 %v11337, 1.0
      %v11340 = vmul.f32 %v11288, %v11338
      %v11341 = vmul.f32 %v11289, %v11339
      %s11342 = scalar_lea.vmem %s18, 128
      %v11343 = vld [vmem:[%s11342] sm:$0xff]
      %v11344 = vld [vmem:[%s11342 + $0x8] sm:$0xff]
      %v11345 = vld [vmem:[%s11342 + $0x10] sm:$0xff]
      %v11346 = vld [vmem:[%s11342 + $0x18] sm:$0xff]
      %v11347 = vld [vmem:[%s11342 + $0x20] sm:$0xff]
      %v11348 = vld [vmem:[%s11342 + $0x28] sm:$0xff]
      %v11349 = vld [vmem:[%s11342 + $0x30] sm:$0xff]
      %v11350 = vld [vmem:[%s11342 + $0x38] sm:$0xff]
      %v11351 = vld [vmem:[%s11342 + $0x40] sm:$0xff]
      %v11352 = vld [vmem:[%s11342 + $0x48] sm:$0xff]
      %v11353 = vld [vmem:[%s11342 + $0x50] sm:$0xff]
      %v11354 = vld [vmem:[%s11342 + $0x58] sm:$0xff]
      %v11355 = vld [vmem:[%s11342 + $0x60] sm:$0xff]
      %v11356 = vld [vmem:[%s11342 + $0x68] sm:$0xff]
      %v11357 = vld [vmem:[%s11342 + $0x70] sm:$0xff]
      %v11358 = vld [vmem:[%s11342 + $0x78] sm:$0xff]
      %s11359 = scalar_lea.vmem %s19, 1
      %v11360 = vld [vmem:[%s11359] sm:$0x1]
      %v11362 = vlaneseq
      %v11363 = vshrl.u32 %v11362, 7
      %v11364 = vsub.s32 0, %v11363
      %v11365 = vrot.slane %v11360, %v11364
      %11367 = vmatprep.subr.mxu0 0.0
      %11368 = vmatpush1.msra.mxu0 %v11343
      %11369 = vmatprep.subr.mxu0 0.0
      %11370 = vmatpush1.msra.mxu0 %v11344
      %11371 = vmatprep.subr.mxu0 0.0
      %11372 = vmatpush1.msra.mxu0 %v11345
      %11373 = vmatprep.subr.mxu0 0.0
      %11374 = vmatpush1.msra.mxu0 %v11346
      %11375 = vmatprep.subr.mxu0 0.0
      %11376 = vmatpush1.msra.mxu0 %v11347
      %11377 = vmatprep.subr.mxu0 0.0
      %11378 = vmatpush1.msra.mxu0 %v11348
      %11379 = vmatprep.subr.mxu0 0.0
      %11380 = vmatpush1.msra.mxu0 %v11349
      %11381 = vmatprep.subr.mxu0 0.0
      %11382 = vmatpush1.msra.mxu0 %v11350
      %11383 = vmatprep.subr.mxu0 0.0
      %11384 = vmatpush1.msra.mxu0 %v11351
      %11385 = vmatprep.subr.mxu0 0.0
      %11386 = vmatpush1.msra.mxu0 %v11352
      %11387 = vmatprep.subr.mxu0 0.0
      %11388 = vmatpush1.msra.mxu0 %v11353
      %11389 = vmatprep.subr.mxu0 0.0
      %11390 = vmatpush1.msra.mxu0 %v11354
      %11391 = vmatprep.subr.mxu0 0.0
      %11392 = vmatpush1.msra.mxu0 %v11355
      %11393 = vmatprep.subr.mxu0 0.0
      %11394 = vmatpush1.msra.mxu0 %v11356
      %11395 = vmatprep.subr.mxu0 0.0
      %11396 = vmatpush1.msra.mxu0 %v11357
      %11397 = vmatprep.subr.mxu0 0.0
      %11398 = vmatpush1.msra.mxu0 %v11358
      %11399 = vmatprep.subr.mxu0 0.0
      %11400 = vmatpush1.msra.mxu0 0.0
      %11401 = vmatprep.subr.mxu0 0.0
      %11402 = vmatpush1.msra.mxu0 0.0
      %11403 = vmatprep.subr.mxu0 0.0
      %11404 = vmatpush1.msra.mxu0 0.0
      %11405 = vmatprep.subr.mxu0 0.0
      %11406 = vmatpush1.msra.mxu0 0.0
      %11407 = vmatprep.subr.mxu0 0.0
      %11408 = vmatpush1.msra.mxu0 0.0
      %11409 = vmatprep.subr.mxu0 0.0
      %11410 = vmatpush1.msra.mxu0 0.0
      %11411 = vmatprep.subr.mxu0 0.0
      %11412 = vmatpush1.msra.mxu0 0.0
      %11413 = vmatprep.subr.mxu0 0.0
      %11414 = vmatpush1.msra.mxu0 0.0
      %11415 = vmatprep.subr.mxu0 0.0
      %11416 = vmatpush1.msra.mxu0 0.0
      %11417 = vmatprep.subr.mxu0 0.0
      %11418 = vmatpush1.msra.mxu0 0.0
      %11419 = vmatprep.subr.mxu0 0.0
      %11420 = vmatpush1.msra.mxu0 0.0
      %11421 = vmatprep.subr.mxu0 0.0
      %11422 = vmatpush1.msra.mxu0 0.0
      %11423 = vmatprep.subr.mxu0 0.0
      %11424 = vmatpush1.msra.mxu0 0.0
      %11425 = vmatprep.subr.mxu0 0.0
      %11426 = vmatpush1.msra.mxu0 0.0
      %11427 = vmatprep.subr.mxu0 0.0
      %11428 = vmatpush1.msra.mxu0 0.0
      %11429 = vmatprep.subr.mxu0 0.0
      %11430 = vmatpush1.msra.mxu0 0.0
      %11431 = vmatprep.mubr.f32.mxu0 0.0
      %11432 = vmatmul.mubr.f32.gmra.mrb[0].mxu0 %v11340
      %v11433 = vpop.f32.mrb[0].mxu0
      %v11434 = vadd.f32 %v11365, %v11433
      %v11435 = vpop.f32.mrb[0].mxu0
      %11436 = vmatprep.mubr.f32.mxu0 0.0
      %11437 = vmatmul.mubr.f32.gmra.mrb[0].mxu0 %v11341
      %v11438 = vpop.f32.mrb[0].mxu0
      %v11439 = vadd.f32 %v11365, %v11438
      %v11440 = vpop.f32.mrb[0].mxu0
      %11441 = vdwg.mxu0
      %v11444 = vcombine.high %v11434, %v11434
      %v11446 = vunpack.c.l.s4 1966171168
      %v11447 = vunpack.c.0.s8 %v11446
      %v11448 = vlaneseq
      %v11449 = vshrl.u32 %v11448, 7
      %v11450 = vsub.s32 %v11447, %v11449
      %v11451 = vrot.slane %v11434, %v11450
      %v11453 = vunpack.c.l.s4 1966171168
      %v11454 = vunpack.c.0.s8 %v11453
      %v11455 = vlaneseq
      %v11456 = vshrl.u32 %v11455, 7
      %v11457 = vsub.s32 %v11454, %v11456
      %v11458 = vrot.slane %v11444, %v11457
      %v11459 = vcombine.high %v11458, %v11458
      %v11461 = vunpack.c.l.s4 1966171168
      %v11462 = vunpack.c.0.s8 %v11461
      %v11463 = vlaneseq
      %v11464 = vshrl.u32 %v11463, 7
      %v11465 = vsub.s32 %v11462, %v11464
      %v11466 = vrot.slane %v11451, %v11465
      %v11468 = vunpack.c.l.s4 1966171168
      %v11469 = vunpack.c.0.s8 %v11468
      %v11470 = vlaneseq
      %v11471 = vshrl.u32 %v11470, 7
      %v11472 = vsub.s32 %v11469, %v11471
      %v11473 = vrot.slane %v11459, %v11472
      %v11475 = vunpack.c.l.s4 1966171168
      %v11476 = vunpack.c.0.s8 %v11475
      %v11477 = vlaneseq
      %v11478 = vshrl.u32 %v11477, 7
      %v11479 = vsub.s32 %v11476, %v11478
      %v11480 = vrot.slane %v11439, %v11479
      %v11482 = vunpack.c.l.s4 1966171168
      %v11483 = vunpack.c.0.s8 %v11482
      %v11484 = vlaneseq
      %v11485 = vshrl.u32 %v11484, 7
      %v11486 = vsub.s32 %v11483, %v11485
      %v11487 = vrot.slane %v11480, %v11486
      %v11488 = vcombine.high %v11487, %v11487
      %v11492 = vadd.f32 %v10464, %v11466
      %v11493 = vadd.f32 %v10469, %v11473
      %v11494 = vadd.f32 %v10474, %v11488
      %v11495 = vld [vmem:[%s20] sm:$0x1]
      %v11496 = vld [vmem:[%s21] sm:$0x1]
      %v11500 = vcombine.low %v11492, %v11493
      %v11502 = vunpack.c.l.s4 1966171168
      %v11503 = vunpack.c.0.s8 %v11502
      %v11504 = vlaneseq
      %v11505 = vshrl.u32 %v11504, 7
      %v11506 = vsub.s32 %v11503, %v11505
      %v11507 = vrot.slane %v11500, %v11506
      %v11509 = vunpack.c.l.s4 1966171168
      %v11510 = vunpack.c.0.s8 %v11509
      %v11511 = vlaneseq
      %v11512 = vshrl.u32 %v11511, 7
      %v11513 = vsub.s32 %v11510, %v11512
      %v11514 = vrot.slane %v11494, %v11513
      %v11515 = vcombine.low %v11507, %v11514
      %v11517 = vunpack.c.l.s4 1966171168
      %v11518 = vunpack.c.0.s8 %v11517
      %v11519 = vlaneseq
      %v11520 = vshrl.u32 %v11519, 7
      %v11521 = vsub.s32 %v11518, %v11520
      %v11522 = vrot.slane %v11515, %v11521
      %vm11524 = vcmask 256000
      %v11525 = vsel %vm11524, %v11522, 0.0
      %11526 = vadd.xlane.f32.xlu0 %v11525
      %v11527 = vpop.xlane.xlu0 %11526
      %v11528 = vmul.f32 %v11527, %v1334
      %v11530 = vlaneseq
      %v11531 = vshrl.u32 %v11530, 7
      %v11532 = vsub.s32 0, %v11531
      %v11533 = vrot.slane %v11528, %v11532
      %v11534 = vlaneseq
      %v11535 = vshrl.u32 %v11534, 7
      %v11536 = vsub.s32 1, %v11535
      %v11537 = vrot.slane %v11528, %v11536
      %v11538 = vlaneseq
      %v11539 = vshrl.u32 %v11538, 7
      %v11540 = vsub.s32 2, %v11539
      %v11541 = vrot.slane %v11528, %v11540
      %v11545 = vsub.f32 %v11492, %v11533
      %v11546 = vsub.f32 %v11493, %v11537
      %v11547 = vsub.f32 %v11494, %v11541
      %v11548 = vmul.f32 %v11545, %v11545
      %v11549 = vmul.f32 %v11546, %v11546
      %v11550 = vmul.f32 %v11547, %v11547
      %v11554 = vcombine.low %v11548, %v11549
      %v11556 = vunpack.c.l.s4 1966171168
      %v11557 = vunpack.c.0.s8 %v11556
      %v11558 = vlaneseq
      %v11559 = vshrl.u32 %v11558, 7
      %v11560 = vsub.s32 %v11557, %v11559
      %v11561 = vrot.slane %v11554, %v11560
      %v11563 = vunpack.c.l.s4 1966171168
      %v11564 = vunpack.c.0.s8 %v11563
      %v11565 = vlaneseq
      %v11566 = vshrl.u32 %v11565, 7
      %v11567 = vsub.s32 %v11564, %v11566
      %v11568 = vrot.slane %v11550, %v11567
      %v11569 = vcombine.low %v11561, %v11568
      %v11571 = vunpack.c.l.s4 1966171168
      %v11572 = vunpack.c.0.s8 %v11571
      %v11573 = vlaneseq
      %v11574 = vshrl.u32 %v11573, 7
      %v11575 = vsub.s32 %v11572, %v11574
      %v11576 = vrot.slane %v11569, %v11575
      %v11578 = vsel %vm11524, %v11576, 0.0
      %11579 = vadd.xlane.f32.xlu0 %v11578
      %v11580 = vpop.xlane.xlu0 %11579
      %v11581 = vmul.f32 %v11580, %v1334
      %v11582 = vadd.f32 %v11581, 1e-06
      %v11583 = vrsqrt.pop %v11582
      %v11585 = vlaneseq
      %v11586 = vshrl.u32 %v11585, 7
      %v11587 = vsub.s32 0, %v11586
      %v11588 = vrot.slane %v11583, %v11587
      %v11589 = vlaneseq
      %v11590 = vshrl.u32 %v11589, 7
      %v11591 = vsub.s32 1, %v11590
      %v11592 = vrot.slane %v11583, %v11591
      %v11593 = vlaneseq
      %v11594 = vshrl.u32 %v11593, 7
      %v11595 = vsub.s32 2, %v11594
      %v11596 = vrot.slane %v11583, %v11595
      %v11600 = vmul.f32 %v11545, %v11588
      %v11601 = vmul.f32 %v11546, %v11592
      %v11602 = vmul.f32 %v11547, %v11596
      %v11604 = vlaneseq
      %v11605 = vshrl.u32 %v11604, 7
      %v11606 = vsub.s32 0, %v11605
      %v11607 = vrot.slane %v11495, %v11606
      %v11609 = vunpack.c.l.s4 1966171168
      %v11610 = vunpack.c.0.s8 %v11609
      %v11611 = vlaneseq
      %v11612 = vshrl.u32 %v11611, 7
      %v11613 = vsub.s32 %v11610, %v11612
      %v11614 = vrot.slane %v11607, %v11613
      %v11615 = vcombine.high %v11614, %v11614
      %v11617 = vunpack.c.l.s4 1966171168
      %v11618 = vunpack.c.0.s8 %v11617
      %v11619 = vlaneseq
      %v11620 = vshrl.u32 %v11619, 7
      %v11621 = vsub.s32 %v11618, %v11620
      %v11622 = vrot.slane %v11614, %v11621
      %v11624 = vunpack.c.l.s4 1966171168
      %v11625 = vunpack.c.0.s8 %v11624
      %v11626 = vlaneseq
      %v11627 = vshrl.u32 %v11626, 7
      %v11628 = vsub.s32 %v11625, %v11627
      %v11629 = vrot.slane %v11615, %v11628
      %v11630 = vcombine.high %v11622, %v11622
      %v11634 = vmul.f32 %v11600, %v11622
      %v11635 = vmul.f32 %v11601, %v11629
      %v11636 = vmul.f32 %v11602, %v11630
      %v11638 = vlaneseq
      %v11639 = vshrl.u32 %v11638, 7
      %v11640 = vsub.s32 0, %v11639
      %v11641 = vrot.slane %v11496, %v11640
      %v11643 = vunpack.c.l.s4 1966171168
      %v11644 = vunpack.c.0.s8 %v11643
      %v11645 = vlaneseq
      %v11646 = vshrl.u32 %v11645, 7
      %v11647 = vsub.s32 %v11644, %v11646
      %v11648 = vrot.slane %v11641, %v11647
      %v11649 = vcombine.high %v11648, %v11648
      %v11651 = vunpack.c.l.s4 1966171168
      %v11652 = vunpack.c.0.s8 %v11651
      %v11653 = vlaneseq
      %v11654 = vshrl.u32 %v11653, 7
      %v11655 = vsub.s32 %v11652, %v11654
      %v11656 = vrot.slane %v11648, %v11655
      %v11658 = vunpack.c.l.s4 1966171168
      %v11659 = vunpack.c.0.s8 %v11658
      %v11660 = vlaneseq
      %v11661 = vshrl.u32 %v11660, 7
      %v11662 = vsub.s32 %v11659, %v11661
      %v11663 = vrot.slane %v11649, %v11662
      %v11664 = vcombine.high %v11656, %v11656
      %v11668 = vadd.f32 %v11634, %v11656
      %v11669 = vadd.f32 %v11635, %v11663
      %v11670 = vadd.f32 %v11636, %v11664
      %v11671 = vld [vmem:[%s22] sm:$0xff]
      %v11672 = vld [vmem:[%s22 + $0x8] sm:$0xff]
      %v11673 = vld [vmem:[%s22 + $0x10] sm:$0xff]
      %v11674 = vld [vmem:[%s22 + $0x18] sm:$0xff]
      %v11675 = vld [vmem:[%s23] sm:$0x1]
      %v11677 = vlaneseq
      %v11678 = vshrl.u32 %v11677, 7
      %v11679 = vsub.s32 0, %v11678
      %v11680 = vrot.slane %v11675, %v11679
      %v11685 = vcombine.low %v11668, %v11669
      %v11687 = vunpack.c.l.s4 1966171168
      %v11688 = vunpack.c.0.s8 %v11687
      %v11689 = vlaneseq
      %v11690 = vshrl.u32 %v11689, 7
      %v11691 = vsub.s32 %v11688, %v11690
      %v11692 = vrot.slane %v11685, %v11691
      %v11694 = vunpack.c.l.s4 1966171168
      %v11695 = vunpack.c.0.s8 %v11694
      %v11696 = vlaneseq
      %v11697 = vshrl.u32 %v11696, 7
      %v11698 = vsub.s32 %v11695, %v11697
      %v11699 = vrot.slane %v11670, %v11698
      %v11700 = vcombine.low %v11692, %v11699
      %v11702 = vunpack.c.l.s4 1966171168
      %v11703 = vunpack.c.0.s8 %v11702
      %v11704 = vlaneseq
      %v11705 = vshrl.u32 %v11704, 7
      %v11706 = vsub.s32 %v11703, %v11705
      %v11707 = vrot.slane %v11700, %v11706
      %v11708 = vsel %vm1326, %v11707, 0
      %11710 = vmatprep.subr.mxu0 0.0
      %11711 = vmatpush1.msra.mxu0 %v11671
      %11712 = vmatprep.subr.mxu0 0.0
      %11713 = vmatpush1.msra.mxu0 %v11672
      %11714 = vmatprep.subr.mxu0 0.0
      %11715 = vmatpush1.msra.mxu0 %v11673
      %11716 = vmatprep.subr.mxu0 0.0
      %11717 = vmatpush1.msra.mxu0 %v11674
      %11718 = vmatprep.subr.mxu0 0.0
      %11719 = vmatpush1.msra.mxu0 0.0
      %11720 = vmatprep.subr.mxu0 0.0
      %11721 = vmatpush1.msra.mxu0 0.0
      %11722 = vmatprep.subr.mxu0 0.0
      %11723 = vmatpush1.msra.mxu0 0.0
      %11724 = vmatprep.subr.mxu0 0.0
      %11725 = vmatpush1.msra.mxu0 0.0
      %11726 = vmatprep.subr.mxu0 0.0
      %11727 = vmatpush1.msra.mxu0 0.0
      %11728 = vmatprep.subr.mxu0 0.0
      %11729 = vmatpush1.msra.mxu0 0.0
      %11730 = vmatprep.subr.mxu0 0.0
      %11731 = vmatpush1.msra.mxu0 0.0
      %11732 = vmatprep.subr.mxu0 0.0
      %11733 = vmatpush1.msra.mxu0 0.0
      %11734 = vmatprep.subr.mxu0 0.0
      %11735 = vmatpush1.msra.mxu0 0.0
      %11736 = vmatprep.subr.mxu0 0.0
      %11737 = vmatpush1.msra.mxu0 0.0
      %11738 = vmatprep.subr.mxu0 0.0
      %11739 = vmatpush1.msra.mxu0 0.0
      %11740 = vmatprep.subr.mxu0 0.0
      %11741 = vmatpush1.msra.mxu0 0.0
      %11742 = vmatprep.subr.mxu0 0.0
      %11743 = vmatpush1.msra.mxu0 0.0
      %11744 = vmatprep.subr.mxu0 0.0
      %11745 = vmatpush1.msra.mxu0 0.0
      %11746 = vmatprep.subr.mxu0 0.0
      %11747 = vmatpush1.msra.mxu0 0.0
      %11748 = vmatprep.subr.mxu0 0.0
      %11749 = vmatpush1.msra.mxu0 0.0
      %11750 = vmatprep.subr.mxu0 0.0
      %11751 = vmatpush1.msra.mxu0 0.0
      %11752 = vmatprep.subr.mxu0 0.0
      %11753 = vmatpush1.msra.mxu0 0.0
      %11754 = vmatprep.subr.mxu0 0.0
      %11755 = vmatpush1.msra.mxu0 0.0
      %11756 = vmatprep.subr.mxu0 0.0
      %11757 = vmatpush1.msra.mxu0 0.0
      %11758 = vmatprep.subr.mxu0 0.0
      %11759 = vmatpush1.msra.mxu0 0.0
      %11760 = vmatprep.subr.mxu0 0.0
      %11761 = vmatpush1.msra.mxu0 0.0
      %11762 = vmatprep.subr.mxu0 0.0
      %11763 = vmatpush1.msra.mxu0 0.0
      %11764 = vmatprep.subr.mxu0 0.0
      %11765 = vmatpush1.msra.mxu0 0.0
      %11766 = vmatprep.subr.mxu0 0.0
      %11767 = vmatpush1.msra.mxu0 0.0
      %11768 = vmatprep.subr.mxu0 0.0
      %11769 = vmatpush1.msra.mxu0 0.0
      %11770 = vmatprep.subr.mxu0 0.0
      %11771 = vmatpush1.msra.mxu0 0.0
      %11772 = vmatprep.subr.mxu0 0.0
      %11773 = vmatpush1.msra.mxu0 0.0
      %11774 = vmatprep.mubr.f32.mxu0 0.0
      %11775 = vmatmul.mubr.f32.gmra.mrb[0].mxu0 %v11708
      %v11776 = vpop.f32.mrb[0].mxu0
      %v11777 = vadd.f32 %v11680, %v11776
      %v11778 = vpop.f32.mrb[0].mxu0
      %11779 = vdwg.mxu0
      %vm11780 = vcmask 59392
      %11781 = vst.msk [vmem:[%s735] sm:$0x7] %vm11780, %v11777
      %p11782 = scmp.lt.s32.totalorder %s35, 1
      %s11783 = scalar_select %p11782, %s35, 1
      %s11784 = smul.addr %s11783, 4
      %s11785 = scalar_lea.vmem %s24, %s11784
      // Predicated region
      $region117: #{_features.1} parent=115 // pred_check
        %p11786 = pneg %p562
      $region118: #{_features.1} parent=115 // pred_check_branch
        %11788 = sbr.rel (%p11786) target = $region120
      $region119: #{_features.1} parent=115 // pred_region
        _
      $region120: #{_features.1} parent=115 // pred_fallthru
        _
    $region116: #{_features.1} parent=5 // pred_fallthru
      _
    %p11789 = scmp.le.s32.totalorder 2, %s30
    // Predicated region
    $region121: #{_features.1} parent=5 // pred_check
      %p11790 = pneg %p11789
    $region122: #{_features.1} parent=5 // pred_check_branch
      %11792 = sbr.rel (%p11790) target = $region124
    $region123: #{_features.1} parent=5 // pred_region
      %s11793 = ssub.s32 %s30, 2
      // Predicated region
      $region125: #{_features.1} parent=123 // pred_check
        %p11794 = pneg %p568
      $region126: #{_features.1} parent=123 // pred_check_branch
        %11796 = sbr.rel (%p11794) target = $region128
      $region127: #{_features.1} parent=123 // pred_region
        %p11797 = scmp.lt.s32.totalorder %s36, 1
        %s11798 = scalar_select %p11797, %s36, 1
        %s11799 = smul.addr %s11798, 4
        %s11800 = scalar_lea.vmem %s24, %s11799
      $region128: #{_features.1} parent=123 // pred_fallthru
        _
    $region124: #{_features.1} parent=5 // pred_fallthru
      _
  $region6: #{_features.1} parent=0 // loop_footer
    %s34 = sadd.s32 1, %s30
  $region7: #{_features.1} parent=0 // loop_footer_branch
    %29 = sbr.rel target = $region3
  $region8: #{_features.1} parent=0 // loop_exit
    _

</llo_original>
